<compile_context>
chip_gen: v5e
topology: v5e:2x2
jax: 0.10.0
libtpu: 0.0.40
codegen_flags: <defaults>
</compile_context>

<pallas_src>
import math

import jax
import jax.numpy as jnp
from jax import lax
from jax.experimental import pallas as pl
from jax.experimental.pallas import tpu as pltpu


def plain_attention_kernel(x_ref, wqkv_ref, wo_ref, bo_ref,
                           out_ref, attn_ref, qkv_scratch, y_scratch):
    """One (batch, q-tile) grid step.

    x_ref:       (1, S, D)  f32   full sequence for this batch row
    wqkv_ref:    (D, 3D)    bf16  fused [Q|K|V] weights (Q pre-scaled by hd^-0.5)
    wo_ref:      (D, D)     bf16
    bo_ref:      (1, D)     f32
    out_ref:     (1, tq, D)
    attn_ref:    (1, H, tq, S)
    qkv_scratch: (S, 3D)    bf16  cached fused projection (whole batch row)
    y_scratch:   (tq, D)    bf16  per-head context slabs (head-major columns)
    """
    H = attn_ref.shape[1]
    tq = out_ref.shape[1]
    D = out_ref.shape[2]
    S = attn_ref.shape[3]
    hd = D // H

    # Fused q|k|v projection for the whole sequence, once per batch row.
    # Correctness of this cache relies on the q-tile axis being the innermost
    # ("arbitrary") grid axis; only the batch axis may be split across cores.
    @pl.when(pl.program_id(1) == 0)
    def _():
        xb = x_ref[0].astype(jnp.bfloat16)                                # (S, D)
        qkv_scratch[...] = jnp.dot(
            xb, wqkv_ref[...], preferred_element_type=jnp.float32
        ).astype(jnp.bfloat16)
        # TODO(synk): for VMEM-tight v7x, this projection can be hoisted out
        #             of the kernel (pass a bf16 (B,S,3D) qkv input instead).

    row0 = pl.multiple_of(pl.program_id(1) * tq, tq)

    # Static unroll over heads (H is small).  All per-head data is read through
    # ref slices (static column offsets, dynamic row window) so nothing larger
    # than one head's tiles is ever live in vregs.
    # TODO(synk): use lax.fori_loop / a head grid axis when H > ~8, and a
    #             head-major (3,H,S,hd) scratch when head_dim < 128.
    for h in range(H):
        c0 = h * hd
        qh = qkv_scratch[pl.ds(row0, tq), c0:c0 + hd]                     # (tq, hd)
        kh = qkv_scratch[:, D + c0:D + c0 + hd]                           # (S, hd)
        vh = qkv_scratch[:, 2 * D + c0:2 * D + c0 + hd]                   # (S, hd)

        # (q*scale) @ k^T — scale already folded into Wq; contract last-last so
        # the MXU consumes the transposed RHS directly.
        s = lax.dot_general(qh, kh, (((1,), (1,)), ((), ())),
                            preferred_element_type=jnp.float32)           # (tq, S)
        s = s - jnp.max(s, axis=-1, keepdims=True)
        e = jnp.exp(s)                                                    # f32 (v5e-safe)
        # Exact reciprocal on the (tq,1) denominator: stored rows sum to 1.
        p = e * (1.0 / jnp.sum(e, axis=-1, keepdims=True))
        attn_ref[0, h] = p.astype(attn_ref.dtype)

        yh = jnp.dot(p.astype(jnp.bfloat16), vh,
                     preferred_element_type=jnp.float32)                  # (tq, hd)
        y_scratch[:, c0:c0 + hd] = yh.astype(jnp.bfloat16)

    out = jnp.dot(y_scratch[...], wo_ref[...],
                  preferred_element_type=jnp.float32)                     # (tq, D)
    out_ref[0] = (out + bo_ref[...]).astype(out_ref.dtype)


def prepare_plain_attention_params(params, num_heads):
    """One-time parameter prep: fuse Wq|Wkv, fold softmax scale, cast to bf16."""
    D = params["wq"].shape[1]
    hd = D // num_heads
    scale = 1.0 / math.sqrt(hd)
    return {
        "wqkv": jnp.concatenate([params["wq"] * scale, params["wkv"]],
                                axis=1).astype(jnp.bfloat16),             # (D, 3D)
        "wo": params["wo"].astype(jnp.bfloat16),                          # (D, D)
        "bo": params["bo"].reshape(1, -1).astype(jnp.float32),            # (1, D)
    }


def _vmem_estimate_bytes(S, D, H, tq, attn_itemsize):
    x_blk = 2 * S * D * 4                                 # double-buffered x block
    w_blk = 2 * (D * 3 * D + D * D) * 2 + 2 * D * 4       # weights (worst-case 2x) + bias
    out_blk = 2 * tq * D * 4
    attn_blk = 2 * H * tq * S * attn_itemsize             # largest per-step DMA (keep 2-buffered)
    scratch = S * 3 * D * 2 + tq * D * 2
    return x_blk + w_blk + out_blk + attn_blk + scratch


def plain_attention_forward(x, prepared, num_heads, *, tq=None,
                            attn_dtype=jnp.float32,
                            single_buffer_weights=True):
    """x: (B,S,D) f32; prepared: prepare_plain_attention_params() output.

    Returns (out (B,S,D) f32, attn (B,H,S,S) attn_dtype).  attn_dtype=bf16
    halves the dominant HBM writeback if the caller tolerates bf16 maps.
    """
    B, S, D = x.shape
    H = num_heads
    assert D % H == 0
    hd = D // H
    attn_itemsize = jnp.dtype(attn_dtype).itemsize

    # VMEM budget: derive the limit from the actual buffer sizes and keep it
    # below physical capacity (64 MiB/TC on v7x, 128 MiB on v5e/v6e).
    try:
        phys = pltpu.get_tpu_info().vmem_capacity_bytes
    except Exception:
        phys = 64 << 20                                   # conservative (v7x per-core)
    cap = max(phys - (8 << 20), 16 << 20)

    if tq is None:
        tq = min(S, 256)
    # Shrink the q tile until the working set fits the budget (attn block is
    # the dominant double-buffered consumer).
    while (_vmem_estimate_bytes(S, D, H, tq, attn_itemsize) > cap
           and tq > 128 and S % (tq // 2) == 0):
        tq //= 2
    assert S % tq == 0
    n_qt = S // tq

    vmem_limit = int(min(cap, max(
        32 << 20,
        2 * _vmem_estimate_bytes(S, D, H, tq, attn_itemsize) + (4 << 20))))

    def weight_spec(shape):
        idx = lambda b, qi, _n=len(shape): (0,) * _n
        if single_buffer_weights:
            # Constant block index across the whole grid -> one buffer suffices.
            return pl.BlockSpec(shape, idx, pipeline_mode=pl.Buffered(1))
        return pl.BlockSpec(shape, idx)

    grid_spec = pltpu.PrefetchScalarGridSpec(
        num_scalar_prefetch=0,
        grid=(B, n_qt),
        in_specs=[
            pl.BlockSpec((1, S, D), lambda b, qi: (b, 0, 0)),   # full seq per batch
            weight_spec((D, 3 * D)),                            # fused Wqkv (bf16)
            weight_spec((D, D)),                                # Wo (bf16)
            weight_spec((1, D)),                                # bias (f32)
        ],
        out_specs=(
            pl.BlockSpec((1, tq, D), lambda b, qi: (b, qi, 0)),
            # Keep the attn block at default double buffering: it is the
            # largest per-step store and must overlap the next tile's softmax.
            pl.BlockSpec((1, H, tq, S), lambda b, qi: (b, 0, qi, 0)),
        ),
        scratch_shapes=[
            pltpu.VMEM((S, 3 * D), jnp.bfloat16),   # cached fused q|k|v
            pltpu.VMEM((tq, D), jnp.bfloat16),      # per-tile context (y)
        ],
    )

    out_shape = (
        jax.ShapeDtypeStruct((B, S, D), jnp.float32),
        jax.ShapeDtypeStruct((B, H, S, S), attn_dtype),
    )

    cost = pl.CostEstimate(
        flops=int(2 * B * S * D * 3 * D            # qkv projection
                  + 4 * B * H * S * S * hd         # QK^T + PV
                  + 2 * B * S * D * D),            # output projection
        transcendentals=int(B * H * S * S),
        bytes_accessed=int(B * S * D * 4 + (D * 3 * D + D * D) * 2 + D * 4
                           + B * S * D * 4 + B * H * S * S * attn_itemsize),
    )

    # NOTE: the qkv_scratch cache is only valid because the q-tile axis is the
    # innermost grid axis and marked "arbitrary"; batch is the only "parallel"
    # (megacore) axis.  TODO(synk): if B == 1 on v7x, hoist the projection out
    # of the kernel and make the q-tile axis parallel so both cores are used.
    return pl.pallas_call(
        plain_attention_kernel,
        grid_spec=grid_spec,
        out_shape=out_shape,
        cost_estimate=cost,
        compiler_params=pltpu.CompilerParams(
            dimension_semantics=("parallel", "arbitrary"),
            vmem_limit_bytes=vmem_limit,
        ),
    )(x, prepared["wqkv"], prepared["wo"], prepared["bo"])


def plain_attention_reference(x, params, num_heads):
    """Pure-JAX f32 reference mirroring the PyTorch forward."""
    B, S, D = x.shape
    H = num_heads
    hd = D // H
    q = x @ params["wq"]
    kv = x @ params["wkv"]
    k, v = kv[..., :D], kv[..., D:]
    q = q.reshape(B, S, H, hd).transpose(0, 2, 1, 3)
    k = k.reshape(B, S, H, hd).transpose(0, 2, 1, 3)
    v = v.reshape(B, S, H, hd).transpose(0, 2, 1, 3)
    dots = jnp.einsum("bhqd,bhkd->bhqk", q * (hd ** -0.5), k)
    attn = jax.nn.softmax(dots, axis=-1)
    y = jnp.einsum("bhqk,bhkd->bhqd", attn, v)
    y = y.transpose(0, 2, 1, 3).reshape(B, S, D)
    out = y @ params["wo"] + params["bo"]
    return out, attn


if __name__ == "__main__":
    # Small, lane-aligned shapes: head_dim = 128 so per-head slices are
    # 128-lane aligned and MXU contractions are full-width.
    B, S, D, H = 2, 256, 256, 2
    key = jax.random.PRNGKey(0)
    kx, kq, kkv, kwo, kbo = jax.random.split(key, 5)
    x = jax.random.normal(kx, (B, S, D), jnp.float32)

    def lin(k, fan_in, fan_out):
        bound = 1.0 / math.sqrt(fan_in)
        return jax.random.uniform(k, (fan_in, fan_out), jnp.float32, -bound, bound)

    params = {
        "wq": lin(kq, D, D),          # to_q (bias=False)
        "wkv": lin(kkv, D, 2 * D),    # to_kv (bias=False)
        "wo": lin(kwo, D, D),         # to_out weight
        "bo": jax.random.uniform(kbo, (D,), jnp.float32,
                                 -1.0 / math.sqrt(D), 1.0 / math.sqrt(D)),
    }
    prepared = prepare_plain_attention_params(params, H)   # one-time prep

    try:
        out, attn = plain_attention_forward(x, prepared, H, tq=128,
                                            single_buffer_weights=True)
        jax.block_until_ready((out, attn))
    except Exception:
        # Fallback if pl.Buffered(1) is not supported by this JAX/Mosaic build.
        out, attn = plain_attention_forward(x, prepared, H, tq=128,
                                            single_buffer_weights=False)
        jax.block_until_ready((out, attn))

    ref_out, ref_attn = plain_attention_reference(x, params, H)

    assert out.shape == (B, S, D) and attn.shape == (B, H, S, S)
    assert bool(jnp.all(jnp.isfinite(out))) and bool(jnp.all(jnp.isfinite(attn)))
    # softmax rows sum to 1 (exact reciprocal on the stored map)
    assert bool(jnp.allclose(jnp.sum(attn, axis=-1), 1.0, atol=1e-3))
    # numerics vs f32 reference (bf16 matmul inputs, f32 accumulation)
    assert float(jnp.max(jnp.abs(out - ref_out))) < 5e-2
    assert float(jnp.max(jnp.abs(attn - ref_attn))) < 5e-3
    print("KERNEL_OK")
</pallas_src>

<mosaic_0001>
module attributes {stable_mosaic.version = 11 : i64} {
  func.func @plain_attention_kernel(%arg0: i32, %arg1: i32, %arg2: memref<1x256x256xf32, #tpu.memory_space<vmem>>, %arg3: memref<256x768xbf16, #tpu.memory_space<vmem>>, %arg4: memref<256x256xbf16, #tpu.memory_space<vmem>>, %arg5: memref<1x256xf32, #tpu.memory_space<vmem>>, %arg6: memref<1x128x256xf32, #tpu.memory_space<vmem>>, %arg7: memref<1x2x128x256xf32, #tpu.memory_space<vmem>>, %arg8: memref<256x768xbf16, #tpu.memory_space<vmem>>, %arg9: memref<128x256xbf16, #tpu.memory_space<vmem>>) attributes {dimension_semantics = [#tpu.dimension_semantics<parallel>, #tpu.dimension_semantics<arbitrary>], iteration_bounds = array<i64: 2, 2>, scalar_prefetch = 0 : i64, scratch_operands = 2 : i64, tpu.core_type = #tpu.core_type<tc>, window_params = [{transform_indices = @transform_0, window_bounds = array<i64: 1, 256, 256>}, {pipeline_mode = #tpu.pipeline_mode<synchronous>, transform_indices = @transform_1, window_bounds = array<i64: 256, 768>}, {pipeline_mode = #tpu.pipeline_mode<synchronous>, transform_indices = @transform_2, window_bounds = array<i64: 256, 256>}, {pipeline_mode = #tpu.pipeline_mode<synchronous>, transform_indices = @transform_3, window_bounds = array<i64: 1, 256>}, {transform_indices = @transform_4, window_bounds = array<i64: 1, 128, 256>}, {transform_indices = @transform_5, window_bounds = array<i64: 1, 2, 128, 256>}]} {
    %c0_i32 = arith.constant 0 : i32
    %0 = arith.cmpi eq, %arg1, %c0_i32 : i32
    %1 = arith.extui %0 : i1 to i32
    %c0_i32_0 = arith.constant 0 : i32
    %2 = arith.cmpi ne, %1, %c0_i32_0 : i32
    scf.if %2 {
      %c0_35 = arith.constant 0 : index
      %c0_36 = arith.constant 0 : index
      %c0_37 = arith.constant 0 : index
      %60 = vector.load %arg2[%c0_35, %c0_36, %c0_37] : memref<1x256x256xf32, #tpu.memory_space<vmem>>, vector<1x256x256xf32>
      %61 = vector.shape_cast %60 : vector<1x256x256xf32> to vector<256x256xf32>
      %62 = arith.truncf %61 : vector<256x256xf32> to vector<256x256xbf16>
      %c0_38 = arith.constant 0 : index
      %c0_39 = arith.constant 0 : index
      %63 = vector.load %arg3[%c0_38, %c0_39] : memref<256x768xbf16, #tpu.memory_space<vmem>>, vector<256x768xbf16>
      %cst_40 = arith.constant dense<0.000000e+00> : vector<256x768xf32>
      %64 = tpu.matmul %62, %63, %cst_40 {dimension_numbers = #tpu.dot_dimension_numbers<[1], [0], [0], [1], [0, 0, 1, 1], [], []>} : vector<256x256xbf16>, vector<256x768xbf16>, vector<256x768xf32> -> vector<256x768xf32>
      %65 = arith.truncf %64 : vector<256x768xf32> to vector<256x768xbf16>
      %c0_41 = arith.constant 0 : index
      %c0_42 = arith.constant 0 : index
      %66 = vector.load %arg8[%c0_41, %c0_42] : memref<256x768xbf16, #tpu.memory_space<vmem>>, vector<256x768xbf16>
      tpu.vector_store %arg8[%c0_41, %c0_42], %65 {strides = array<i32>} : memref<256x768xbf16, #tpu.memory_space<vmem>>, vector<256x768xbf16>,
    } else {
    }
    %c128_i32 = arith.constant 128 : i32
    %3 = arith.muli %arg1, %c128_i32 : i32
    %4 = tpu.assume_multiple %3, 128 : i32
    %5 = arith.index_cast %4 : i32 to index
    %c0 = arith.constant 0 : index
    %6 = vector.load %arg8[%5, %c0] : memref<256x768xbf16, #tpu.memory_space<vmem>>, vector<128x128xbf16>
    %c0_1 = arith.constant 0 : index
    %c256 = arith.constant 256 : index
    %7 = vector.load %arg8[%c0_1, %c256] : memref<256x768xbf16, #tpu.memory_space<vmem>>, vector<256x128xbf16>
    %c0_2 = arith.constant 0 : index
    %c512 = arith.constant 512 : index
    %8 = vector.load %arg8[%c0_2, %c512] : memref<256x768xbf16, #tpu.memory_space<vmem>>, vector<256x128xbf16>
    %cst = arith.constant dense<0.000000e+00> : vector<128x256xf32>
    %9 = tpu.matmul %6, %7, %cst {dimension_numbers = #tpu.dot_dimension_numbers<[1], [1], [0], [0], [0, 0, 1, 0], [], []>} : vector<128x128xbf16>, vector<256x128xbf16>, vector<128x256xf32> -> vector<128x256xf32>
    %cst_3 = arith.constant dense<0xFF800000> : vector<128xf32>
    %10 = vector.multi_reduction <maximumf>, %9, %cst_3 [1] : vector<128x256xf32> to vector<128xf32>
    %11 = vector.shape_cast %10 : vector<128xf32> to vector<128x1xf32>
    %12 = vector.broadcast %11 : vector<128x1xf32> to vector<128x256xf32>
    %13 = arith.subf %9, %12 : vector<128x256xf32>
    %14 = math.exp %13 : vector<128x256xf32>
    %cst_4 = arith.constant dense<0.000000e+00> : vector<128xf32>
    %15 = vector.multi_reduction <add>, %14, %cst_4 [1] : vector<128x256xf32> to vector<128xf32>
    %16 = vector.shape_cast %15 : vector<128xf32> to vector<128x1xf32>
    %cst_5 = arith.constant 1.000000e+00 : f32
    %17 = vector.broadcast %cst_5 : f32 to vector<128x1xf32>
    %18 = arith.divf %17, %16 : vector<128x1xf32>
    %19 = vector.broadcast %18 : vector<128x1xf32> to vector<128x256xf32>
    %20 = arith.mulf %14, %19 : vector<128x256xf32>
    %c0_6 = arith.constant 0 : index
    %c0_7 = arith.constant 0 : index
    %c0_8 = arith.constant 0 : index
    %c0_9 = arith.constant 0 : index
    %21 = vector.load %arg7[%c0_6, %c0_7, %c0_8, %c0_9] : memref<1x2x128x256xf32, #tpu.memory_space<vmem>>, vector<1x1x128x256xf32>
    %22 = vector.shape_cast %21 : vector<1x1x128x256xf32> to vector<128x256xf32>
    %23 = vector.shape_cast %20 : vector<128x256xf32> to vector<1x1x128x256xf32>
    tpu.vector_store %arg7[%c0_6, %c0_7, %c0_8, %c0_9], %23 {strides = array<i32>} : memref<1x2x128x256xf32, #tpu.memory_space<vmem>>, vector<1x1x128x256xf32>,
    %24 = arith.truncf %20 : vector<128x256xf32> to vector<128x256xbf16>
    %cst_10 = arith.constant dense<0.000000e+00> : vector<128x128xf32>
    %25 = tpu.matmul %24, %8, %cst_10 {dimension_numbers = #tpu.dot_dimension_numbers<[1], [0], [0], [1], [0, 0, 1, 1], [], []>} : vector<128x256xbf16>, vector<256x128xbf16>, vector<128x128xf32> -> vector<128x128xf32>
    %26 = arith.truncf %25 : vector<128x128xf32> to vector<128x128xbf16>
    %c0_11 = arith.constant 0 : index
    %c0_12 = arith.constant 0 : index
    %27 = vector.load %arg9[%c0_11, %c0_12] : memref<128x256xbf16, #tpu.memory_space<vmem>>, vector<128x128xbf16>
    tpu.vector_store %arg9[%c0_11, %c0_12], %26 {strides = array<i32>} : memref<128x256xbf16, #tpu.memory_space<vmem>>, vector<128x128xbf16>,
    %28 = arith.index_cast %4 : i32 to index
    %c128 = arith.constant 128 : index
    %29 = vector.load %arg8[%28, %c128] : memref<256x768xbf16, #tpu.memory_space<vmem>>, vector<128x128xbf16>
    %c0_13 = arith.constant 0 : index
    %c384 = arith.constant 384 : index
    %30 = vector.load %arg8[%c0_13, %c384] : memref<256x768xbf16, #tpu.memory_space<vmem>>, vector<256x128xbf16>
    %c0_14 = arith.constant 0 : index
    %c640 = arith.constant 640 : index
    %31 = vector.load %arg8[%c0_14, %c640] : memref<256x768xbf16, #tpu.memory_space<vmem>>, vector<256x128xbf16>
    %cst_15 = arith.constant dense<0.000000e+00> : vector<128x256xf32>
    %32 = tpu.matmul %29, %30, %cst_15 {dimension_numbers = #tpu.dot_dimension_numbers<[1], [1], [0], [0], [0, 0, 1, 0], [], []>} : vector<128x128xbf16>, vector<256x128xbf16>, vector<128x256xf32> -> vector<128x256xf32>
    %cst_16 = arith.constant dense<0xFF800000> : vector<128xf32>
    %33 = vector.multi_reduction <maximumf>, %32, %cst_16 [1] : vector<128x256xf32> to vector<128xf32>
    %34 = vector.shape_cast %33 : vector<128xf32> to vector<128x1xf32>
    %35 = vector.broadcast %34 : vector<128x1xf32> to vector<128x256xf32>
    %36 = arith.subf %32, %35 : vector<128x256xf32>
    %37 = math.exp %36 : vector<128x256xf32>
    %cst_17 = arith.constant dense<0.000000e+00> : vector<128xf32>
    %38 = vector.multi_reduction <add>, %37, %cst_17 [1] : vector<128x256xf32> to vector<128xf32>
    %39 = vector.shape_cast %38 : vector<128xf32> to vector<128x1xf32>
    %cst_18 = arith.constant 1.000000e+00 : f32
    %40 = vector.broadcast %cst_18 : f32 to vector<128x1xf32>
    %41 = arith.divf %40, %39 : vector<128x1xf32>
    %42 = vector.broadcast %41 : vector<128x1xf32> to vector<128x256xf32>
    %43 = arith.mulf %37, %42 : vector<128x256xf32>
    %c0_19 = arith.constant 0 : index
    %c1 = arith.constant 1 : index
    %c0_20 = arith.constant 0 : index
    %c0_21 = arith.constant 0 : index
    %44 = vector.load %arg7[%c0_19, %c1, %c0_20, %c0_21] : memref<1x2x128x256xf32, #tpu.memory_space<vmem>>, vector<1x1x128x256xf32>
    %45 = vector.shape_cast %44 : vector<1x1x128x256xf32> to vector<128x256xf32>
    %46 = vector.shape_cast %43 : vector<128x256xf32> to vector<1x1x128x256xf32>
    tpu.vector_store %arg7[%c0_19, %c1, %c0_20, %c0_21], %46 {strides = array<i32>} : memref<1x2x128x256xf32, #tpu.memory_space<vmem>>, vector<1x1x128x256xf32>,
    %47 = arith.truncf %43 : vector<128x256xf32> to vector<128x256xbf16>
    %cst_22 = arith.constant dense<0.000000e+00> : vector<128x128xf32>
    %48 = tpu.matmul %47, %31, %cst_22 {dimension_numbers = #tpu.dot_dimension_numbers<[1], [0], [0], [1], [0, 0, 1, 1], [], []>} : vector<128x256xbf16>, vector<256x128xbf16>, vector<128x128xf32> -> vector<128x128xf32>
    %49 = arith.truncf %48 : vector<128x128xf32> to vector<128x128xbf16>
    %c0_23 = arith.constant 0 : index
    %c128_24 = arith.constant 128 : index
    %50 = vector.load %arg9[%c0_23, %c128_24] : memref<128x256xbf16, #tpu.memory_space<vmem>>, vector<128x128xbf16>
    tpu.vector_store %arg9[%c0_23, %c128_24], %49 {strides = array<i32>} : memref<128x256xbf16, #tpu.memory_space<vmem>>, vector<128x128xbf16>,
    %c0_25 = arith.constant 0 : index
    %c0_26 = arith.constant 0 : index
    %51 = vector.load %arg9[%c0_25, %c0_26] : memref<128x256xbf16, #tpu.memory_space<vmem>>, vector<128x256xbf16>
    %c0_27 = arith.constant 0 : index
    %c0_28 = arith.constant 0 : index
    %52 = vector.load %arg4[%c0_27, %c0_28] : memref<256x256xbf16, #tpu.memory_space<vmem>>, vector<256x256xbf16>
    %cst_29 = arith.constant dense<0.000000e+00> : vector<128x256xf32>
    %53 = tpu.matmul %51, %52, %cst_29 {dimension_numbers = #tpu.dot_dimension_numbers<[1], [0], [0], [1], [0, 0, 1, 1], [], []>} : vector<128x256xbf16>, vector<256x256xbf16>, vector<128x256xf32> -> vector<128x256xf32>
    %c0_30 = arith.constant 0 : index
    %c0_31 = arith.constant 0 : index
    %54 = vector.load %arg5[%c0_30, %c0_31] : memref<1x256xf32, #tpu.memory_space<vmem>>, vector<1x256xf32>
    %55 = vector.broadcast %54 : vector<1x256xf32> to vector<128x256xf32>
    %56 = arith.addf %53, %55 : vector<128x256xf32>
    %c0_32 = arith.constant 0 : index
    %c0_33 = arith.constant 0 : index
    %c0_34 = arith.constant 0 : index
    %57 = vector.load %arg6[%c0_32, %c0_33, %c0_34] : memref<1x128x256xf32, #tpu.memory_space<vmem>>, vector<1x128x256xf32>
    %58 = vector.shape_cast %57 : vector<1x128x256xf32> to vector<128x256xf32>
    %59 = vector.shape_cast %56 : vector<128x256xf32> to vector<1x128x256xf32>
    tpu.vector_store %arg6[%c0_32, %c0_33, %c0_34], %59 {strides = array<i32>} : memref<1x128x256xf32, #tpu.memory_space<vmem>>, vector<1x128x256xf32>,
    return
  }
  func.func @transform_0(%arg0: i32, %arg1: i32) -> (i32, i32, i32) {
    %c0_i32 = arith.constant 0 : i32
    %c0_i32_0 = arith.constant 0 : i32
    %c0_i32_1 = arith.constant 0 : i32
    return %arg0, %c0_i32, %c0_i32_0 : i32, i32, i32
  }
  func.func @transform_1(%arg0: i32, %arg1: i32) -> (i32, i32) {
    %c0_i32 = arith.constant 0 : i32
    %c0_i32_0 = arith.constant 0 : i32
    %c0_i32_1 = arith.constant 0 : i32
    return %c0_i32, %c0_i32_0 : i32, i32
  }
  func.func @transform_2(%arg0: i32, %arg1: i32) -> (i32, i32) {
    %c0_i32 = arith.constant 0 : i32
    %c0_i32_0 = arith.constant 0 : i32
    %c0_i32_1 = arith.constant 0 : i32
    return %c0_i32, %c0_i32_0 : i32, i32
  }
  func.func @transform_3(%arg0: i32, %arg1: i32) -> (i32, i32) {
    %c0_i32 = arith.constant 0 : i32
    %c0_i32_0 = arith.constant 0 : i32
    %c0_i32_1 = arith.constant 0 : i32
    return %c0_i32, %c0_i32_0 : i32, i32
  }
  func.func @transform_4(%arg0: i32, %arg1: i32) -> (i32, i32, i32) {
    %c0_i32 = arith.constant 0 : i32
    %c0_i32_0 = arith.constant 0 : i32
    return %arg0, %arg1, %c0_i32 : i32, i32, i32
  }
  func.func @transform_5(%arg0: i32, %arg1: i32) -> (i32, i32, i32, i32) {
    %c0_i32 = arith.constant 0 : i32
    %c0_i32_0 = arith.constant 0 : i32
    %c0_i32_1 = arith.constant 0 : i32
    return %arg0, %c0_i32, %arg1, %c0_i32_0 : i32, i32, i32, i32
  }
}

module attributes {stable_mosaic.version = 11 : i64} {
  func.func @plain_attention_kernel(%arg0: i32, %arg1: i32, %arg2: memref<1x256x256xf32, #tpu.memory_space<vmem>>, %arg3: memref<256x768xbf16, #tpu.memory_space<vmem>>, %arg4: memref<256x256xbf16, #tpu.memory_space<vmem>>, %arg5: memref<1x256xf32, #tpu.memory_space<vmem>>, %arg6: memref<1x128x256xf32, #tpu.memory_space<vmem>>, %arg7: memref<1x2x128x256xf32, #tpu.memory_space<vmem>>, %arg8: memref<256x768xbf16, #tpu.memory_space<vmem>>, %arg9: memref<128x256xbf16, #tpu.memory_space<vmem>>) attributes {dimension_semantics = [#tpu.dimension_semantics<parallel>, #tpu.dimension_semantics<arbitrary>], iteration_bounds = array<i64: 2, 2>, scalar_prefetch = 0 : i64, scratch_operands = 2 : i64, tpu.core_type = #tpu.core_type<tc>, window_params = [{transform_indices = @transform_0, window_bounds = array<i64: 1, 256, 256>}, {pipeline_mode = #tpu.pipeline_mode<synchronous>, transform_indices = @transform_1, window_bounds = array<i64: 256, 768>}, {pipeline_mode = #tpu.pipeline_mode<synchronous>, transform_indices = @transform_2, window_bounds = array<i64: 256, 256>}, {pipeline_mode = #tpu.pipeline_mode<synchronous>, transform_indices = @transform_3, window_bounds = array<i64: 1, 256>}, {transform_indices = @transform_4, window_bounds = array<i64: 1, 128, 256>}, {transform_indices = @transform_5, window_bounds = array<i64: 1, 2, 128, 256>}]} {
    %c0_i32 = arith.constant 0 : i32
    %0 = arith.cmpi eq, %arg1, %c0_i32 : i32
    %1 = arith.extui %0 : i1 to i32
    %c0_i32_0 = arith.constant 0 : i32
    %2 = arith.cmpi ne, %1, %c0_i32_0 : i32
    scf.if %2 {
      %c0_35 = arith.constant 0 : index
      %c0_36 = arith.constant 0 : index
      %c0_37 = arith.constant 0 : index
      %60 = vector.load %arg2[%c0_35, %c0_36, %c0_37] : memref<1x256x256xf32, #tpu.memory_space<vmem>>, vector<1x256x256xf32>
      %61 = vector.shape_cast %60 : vector<1x256x256xf32> to vector<256x256xf32>
      %62 = arith.truncf %61 : vector<256x256xf32> to vector<256x256xbf16>
      %c0_38 = arith.constant 0 : index
      %c0_39 = arith.constant 0 : index
      %63 = vector.load %arg3[%c0_38, %c0_39] : memref<256x768xbf16, #tpu.memory_space<vmem>>, vector<256x768xbf16>
      %cst_40 = arith.constant dense<0.000000e+00> : vector<256x768xf32>
      %64 = tpu.matmul %62, %63, %cst_40 {dimension_numbers = #tpu.dot_dimension_numbers<[1], [0], [0], [1], [0, 0, 1, 1], [], []>} : vector<256x256xbf16>, vector<256x768xbf16>, vector<256x768xf32> -> vector<256x768xf32>
      %65 = arith.truncf %64 : vector<256x768xf32> to vector<256x768xbf16>
      %c0_41 = arith.constant 0 : index
      %c0_42 = arith.constant 0 : index
      %66 = vector.load %arg8[%c0_41, %c0_42] : memref<256x768xbf16, #tpu.memory_space<vmem>>, vector<256x768xbf16>
      tpu.vector_store %arg8[%c0_41, %c0_42], %65 {strides = array<i32>} : memref<256x768xbf16, #tpu.memory_space<vmem>>, vector<256x768xbf16>,
    } else {
    }
    %c128_i32 = arith.constant 128 : i32
    %3 = arith.muli %arg1, %c128_i32 : i32
    %4 = tpu.assume_multiple %3, 128 : i32
    %5 = arith.index_cast %4 : i32 to index
    %c0 = arith.constant 0 : index
    %6 = vector.load %arg8[%5, %c0] : memref<256x768xbf16, #tpu.memory_space<vmem>>, vector<128x128xbf16>
    %c0_1 = arith.constant 0 : index
    %c256 = arith.constant 256 : index
    %7 = vector.load %arg8[%c0_1, %c256] : memref<256x768xbf16, #tpu.memory_space<vmem>>, vector<256x128xbf16>
    %c0_2 = arith.constant 0 : index
    %c512 = arith.constant 512 : index
    %8 = vector.load %arg8[%c0_2, %c512] : memref<256x768xbf16, #tpu.memory_space<vmem>>, vector<256x128xbf16>
    %cst = arith.constant dense<0.000000e+00> : vector<128x256xf32>
    %9 = tpu.matmul %6, %7, %cst {dimension_numbers = #tpu.dot_dimension_numbers<[1], [1], [0], [0], [0, 0, 1, 0], [], []>} : vector<128x128xbf16>, vector<256x128xbf16>, vector<128x256xf32> -> vector<128x256xf32>
    %cst_3 = arith.constant dense<0xFF800000> : vector<128xf32>
    %10 = vector.multi_reduction <maximumf>, %9, %cst_3 [1] : vector<128x256xf32> to vector<128xf32>
    %11 = vector.shape_cast %10 : vector<128xf32> to vector<128x1xf32>
    %12 = vector.broadcast %11 : vector<128x1xf32> to vector<128x256xf32>
    %13 = arith.subf %9, %12 : vector<128x256xf32>
    %14 = math.exp %13 : vector<128x256xf32>
    %cst_4 = arith.constant dense<0.000000e+00> : vector<128xf32>
    %15 = vector.multi_reduction <add>, %14, %cst_4 [1] : vector<128x256xf32> to vector<128xf32>
    %16 = vector.shape_cast %15 : vector<128xf32> to vector<128x1xf32>
    %cst_5 = arith.constant 1.000000e+00 : f32
    %17 = vector.broadcast %cst_5 : f32 to vector<128x1xf32>
    %18 = arith.divf %17, %16 : vector<128x1xf32>
    %19 = vector.broadcast %18 : vector<128x1xf32> to vector<128x256xf32>
    %20 = arith.mulf %14, %19 : vector<128x256xf32>
    %c0_6 = arith.constant 0 : index
    %c0_7 = arith.constant 0 : index
    %c0_8 = arith.constant 0 : index
    %c0_9 = arith.constant 0 : index
    %21 = vector.load %arg7[%c0_6, %c0_7, %c0_8, %c0_9] : memref<1x2x128x256xf32, #tpu.memory_space<vmem>>, vector<1x1x128x256xf32>
    %22 = vector.shape_cast %21 : vector<1x1x128x256xf32> to vector<128x256xf32>
    %23 = vector.shape_cast %20 : vector<128x256xf32> to vector<1x1x128x256xf32>
    tpu.vector_store %arg7[%c0_6, %c0_7, %c0_8, %c0_9], %23 {strides = array<i32>} : memref<1x2x128x256xf32, #tpu.memory_space<vmem>>, vector<1x1x128x256xf32>,
    %24 = arith.truncf %20 : vector<128x256xf32> to vector<128x256xbf16>
    %cst_10 = arith.constant dense<0.000000e+00> : vector<128x128xf32>
    %25 = tpu.matmul %24, %8, %cst_10 {dimension_numbers = #tpu.dot_dimension_numbers<[1], [0], [0], [1], [0, 0, 1, 1], [], []>} : vector<128x256xbf16>, vector<256x128xbf16>, vector<128x128xf32> -> vector<128x128xf32>
    %26 = arith.truncf %25 : vector<128x128xf32> to vector<128x128xbf16>
    %c0_11 = arith.constant 0 : index
    %c0_12 = arith.constant 0 : index
    %27 = vector.load %arg9[%c0_11, %c0_12] : memref<128x256xbf16, #tpu.memory_space<vmem>>, vector<128x128xbf16>
    tpu.vector_store %arg9[%c0_11, %c0_12], %26 {strides = array<i32>} : memref<128x256xbf16, #tpu.memory_space<vmem>>, vector<128x128xbf16>,
    %28 = arith.index_cast %4 : i32 to index
    %c128 = arith.constant 128 : index
    %29 = vector.load %arg8[%28, %c128] : memref<256x768xbf16, #tpu.memory_space<vmem>>, vector<128x128xbf16>
    %c0_13 = arith.constant 0 : index
    %c384 = arith.constant 384 : index
    %30 = vector.load %arg8[%c0_13, %c384] : memref<256x768xbf16, #tpu.memory_space<vmem>>, vector<256x128xbf16>
    %c0_14 = arith.constant 0 : index
    %c640 = arith.constant 640 : index
    %31 = vector.load %arg8[%c0_14, %c640] : memref<256x768xbf16, #tpu.memory_space<vmem>>, vector<256x128xbf16>
    %cst_15 = arith.constant dense<0.000000e+00> : vector<128x256xf32>
    %32 = tpu.matmul %29, %30, %cst_15 {dimension_numbers = #tpu.dot_dimension_numbers<[1], [1], [0], [0], [0, 0, 1, 0], [], []>} : vector<128x128xbf16>, vector<256x128xbf16>, vector<128x256xf32> -> vector<128x256xf32>
    %cst_16 = arith.constant dense<0xFF800000> : vector<128xf32>
    %33 = vector.multi_reduction <maximumf>, %32, %cst_16 [1] : vector<128x256xf32> to vector<128xf32>
    %34 = vector.shape_cast %33 : vector<128xf32> to vector<128x1xf32>
    %35 = vector.broadcast %34 : vector<128x1xf32> to vector<128x256xf32>
    %36 = arith.subf %32, %35 : vector<128x256xf32>
    %37 = math.exp %36 : vector<128x256xf32>
    %cst_17 = arith.constant dense<0.000000e+00> : vector<128xf32>
    %38 = vector.multi_reduction <add>, %37, %cst_17 [1] : vector<128x256xf32> to vector<128xf32>
    %39 = vector.shape_cast %38 : vector<128xf32> to vector<128x1xf32>
    %cst_18 = arith.constant 1.000000e+00 : f32
    %40 = vector.broadcast %cst_18 : f32 to vector<128x1xf32>
    %41 = arith.divf %40, %39 : vector<128x1xf32>
    %42 = vector.broadcast %41 : vector<128x1xf32> to vector<128x256xf32>
    %43 = arith.mulf %37, %42 : vector<128x256xf32>
    %c0_19 = arith.constant 0 : index
    %c1 = arith.constant 1 : index
    %c0_20 = arith.constant 0 : index
    %c0_21 = arith.constant 0 : index
    %44 = vector.load %arg7[%c0_19, %c1, %c0_20, %c0_21] : memref<1x2x128x256xf32, #tpu.memory_space<vmem>>, vector<1x1x128x256xf32>
    %45 = vector.shape_cast %44 : vector<1x1x128x256xf32> to vector<128x256xf32>
    %46 = vector.shape_cast %43 : vector<128x256xf32> to vector<1x1x128x256xf32>
    tpu.vector_store %arg7[%c0_19, %c1, %c0_20, %c0_21], %46 {strides = array<i32>} : memref<1x2x128x256xf32, #tpu.memory_space<vmem>>, vector<1x1x128x256xf32>,
    %47 = arith.truncf %43 : vector<128x256xf32> to vector<128x256xbf16>
    %cst_22 = arith.constant dense<0.000000e+00> : vector<128x128xf32>
    %48 = tpu.matmul %47, %31, %cst_22 {dimension_numbers = #tpu.dot_dimension_numbers<[1], [0], [0], [1], [0, 0, 1, 1], [], []>} : vector<128x256xbf16>, vector<256x128xbf16>, vector<128x128xf32> -> vector<128x128xf32>
    %49 = arith.truncf %48 : vector<128x128xf32> to vector<128x128xbf16>
    %c0_23 = arith.constant 0 : index
    %c128_24 = arith.constant 128 : index
    %50 = vector.load %arg9[%c0_23, %c128_24] : memref<128x256xbf16, #tpu.memory_space<vmem>>, vector<128x128xbf16>
    tpu.vector_store %arg9[%c0_23, %c128_24], %49 {strides = array<i32>} : memref<128x256xbf16, #tpu.memory_space<vmem>>, vector<128x128xbf16>,
    %c0_25 = arith.constant 0 : index
    %c0_26 = arith.constant 0 : index
    %51 = vector.load %arg9[%c0_25, %c0_26] : memref<128x256xbf16, #tpu.memory_space<vmem>>, vector<128x256xbf16>
    %c0_27 = arith.constant 0 : index
    %c0_28 = arith.constant 0 : index
    %52 = vector.load %arg4[%c0_27, %c0_28] : memref<256x256xbf16, #tpu.memory_space<vmem>>, vector<256x256xbf16>
    %cst_29 = arith.constant dense<0.000000e+00> : vector<128x256xf32>
    %53 = tpu.matmul %51, %52, %cst_29 {dimension_numbers = #tpu.dot_dimension_numbers<[1], [0], [0], [1], [0, 0, 1, 1], [], []>} : vector<128x256xbf16>, vector<256x256xbf16>, vector<128x256xf32> -> vector<128x256xf32>
    %c0_30 = arith.constant 0 : index
    %c0_31 = arith.constant 0 : index
    %54 = vector.load %arg5[%c0_30, %c0_31] : memref<1x256xf32, #tpu.memory_space<vmem>>, vector<1x256xf32>
    %55 = vector.broadcast %54 : vector<1x256xf32> to vector<128x256xf32>
    %56 = arith.addf %53, %55 : vector<128x256xf32>
    %c0_32 = arith.constant 0 : index
    %c0_33 = arith.constant 0 : index
    %c0_34 = arith.constant 0 : index
    %57 = vector.load %arg6[%c0_32, %c0_33, %c0_34] : memref<1x128x256xf32, #tpu.memory_space<vmem>>, vector<1x128x256xf32>
    %58 = vector.shape_cast %57 : vector<1x128x256xf32> to vector<128x256xf32>
    %59 = vector.shape_cast %56 : vector<128x256xf32> to vector<1x128x256xf32>
    tpu.vector_store %arg6[%c0_32, %c0_33, %c0_34], %59 {strides = array<i32>} : memref<1x128x256xf32, #tpu.memory_space<vmem>>, vector<1x128x256xf32>,
    return
  }
  func.func @transform_0(%arg0: i32, %arg1: i32) -> (i32, i32, i32) {
    %c0_i32 = arith.constant 0 : i32
    %c0_i32_0 = arith.constant 0 : i32
    %c0_i32_1 = arith.constant 0 : i32
    return %arg0, %c0_i32, %c0_i32_0 : i32, i32, i32
  }
  func.func @transform_1(%arg0: i32, %arg1: i32) -> (i32, i32) {
    %c0_i32 = arith.constant 0 : i32
    %c0_i32_0 = arith.constant 0 : i32
    %c0_i32_1 = arith.constant 0 : i32
    return %c0_i32, %c0_i32_0 : i32, i32
  }
  func.func @transform_2(%arg0: i32, %arg1: i32) -> (i32, i32) {
    %c0_i32 = arith.constant 0 : i32
    %c0_i32_0 = arith.constant 0 : i32
    %c0_i32_1 = arith.constant 0 : i32
    return %c0_i32, %c0_i32_0 : i32, i32
  }
  func.func @transform_3(%arg0: i32, %arg1: i32) -> (i32, i32) {
    %c0_i32 = arith.constant 0 : i32
    %c0_i32_0 = arith.constant 0 : i32
    %c0_i32_1 = arith.constant 0 : i32
    return %c0_i32, %c0_i32_0 : i32, i32
  }
  func.func @transform_4(%arg0: i32, %arg1: i32) -> (i32, i32, i32) {
    %c0_i32 = arith.constant 0 : i32
    %c0_i32_0 = arith.constant 0 : i32
    return %arg0, %arg1, %c0_i32 : i32, i32, i32
  }
  func.func @transform_5(%arg0: i32, %arg1: i32) -> (i32, i32, i32, i32) {
    %c0_i32 = arith.constant 0 : i32
    %c0_i32_0 = arith.constant 0 : i32
    %c0_i32_1 = arith.constant 0 : i32
    return %arg0, %c0_i32, %arg1, %c0_i32_0 : i32, i32, i32, i32
  }
}

</mosaic_0001>

<llo_original>
// kernel: tpu_custom_call.1
$region0: #{tpu_custom_call.1}
  #allocation0 [shape = 'u32[]', space=smem, size = 0x4, offset = 0x4, fixed_abs, tag = 'smem constant byte address 0x4 - core index']
  #allocation1 [shape = 'u32[72,128]{1,0:T(1,128)}', space=vmem, size = 0x9000, scoped, tag = 'internal scratch']
  #allocation2 [shape = 'bf16[256,768]{1,0:T(8,128)(2,1)}', space=vmem, size = 0x60000, scoped, tag = 'scratch operand']
  #allocation3 [shape = 'bf16[128,256]{1,0:T(8,128)(2,1)}', space=vmem, size = 0x10000, scoped, tag = 'scratch operand']
  #allocation13 [shape = 's32[]', space=sflag, size = 0x4, offset = 0, fixed_abs, tag = 'sflag constant byte address 0x0 - dummy sync flag']
  %s0 = inlined_call_operand.hbm [shape: f32[2,256,256], index: 0, kind: input, shape index: {}]
  %s1 = inlined_call_operand.hbm [shape: bf16[256,768], index: 1, kind: input, shape index: {}]
  %s2 = inlined_call_operand.hbm [shape: bf16[256,256], index: 2, kind: input, shape index: {}]
  %s3 = inlined_call_operand.vmem [shape: f32[1,256], index: 3, kind: input, shape index: {}]
  %s4 = inlined_call_operand.hbm [shape: f32[2,256,256], index: 4, kind: output, shape index: {0}]
  %s5 = inlined_call_operand.hbm [shape: f32[2,2,256,256], index: 5, kind: output, shape index: {1}]
  %6 = xla_tuple %s4, %s5
  %s7 = sld [smem:[#allocation0]]
  $region73: #{tpu_custom_call.1} parent=0
    _
  %s9 = ssub.s32 1, %s7
  %s10 = scalar_select 0, %s9, %s7
  $region1: #{tpu_custom_call.1} parent=0
    #allocation4 [shape = 'u8[524288]{0}', space=vmem, size = 0x80000, scoped, tag = 'input window, operand 0']
    #allocation5 [shape = 's32[2]{0}', space=sflag, size = 0x8, scoped, tag = 'scoped memory for tpu_custom_call.1']
    #allocation6 [shape = 's32[2]{0}', space=sflag, size = 0x8, scoped, tag = 'scoped memory for tpu_custom_call.1']
    #allocation7 [shape = 'u8[393216]{0}', space=vmem, size = 0x60000, scoped, tag = 'input window, operand 1, single buffered']
    #allocation8 [shape = 's32[1]{0}', space=sflag, size = 0x4, scoped, tag = 'scoped memory for tpu_custom_call.1']
    #allocation9 [shape = 'u8[131072]{0}', space=vmem, size = 0x20000, scoped, tag = 'input window, operand 2, single buffered']
    #allocation10 [shape = 'u8[262144]{0}', space=vmem, size = 0x40000, scoped, tag = 'output window, operand 0']
    #allocation11 [shape = 'u8[524288]{0}', space=vmem, size = 0x80000, scoped, tag = 'output window, operand 1']
    #allocation12 [shape = 's32[2]{0}', space=sflag, size = 0x8, scoped, tag = 'scoped memory for tpu_custom_call.1']
    %11 = vsyncpa [#allocation5], 0
    %s12 = scalar_lea.sflag [#allocation5], 1
    %13 = vsyncpa %s12, 0
    %14 = vsyncpa [#allocation8], 0
    %15 = vsyncpa [#allocation6], 0
    %s16 = scalar_lea.sflag [#allocation6], 1
    %17 = vsyncpa %s16, 0
    %18 = vsyncpa [#allocation12], 0
    %s19 = scalar_lea.sflag [#allocation12], 1
    %20 = vsyncpa %s19, 0
    loop: start=0, step=1, limit=6
    $region2: #{tpu_custom_call.1} parent=1 // loop_pre_header
      _
    $region3: #{tpu_custom_call.1} parent=1 // loop_header
      %s22 = sphi 0, %s26
      %p23 = scmp.ge.s32.totalorder %s22, 6
      %s29 = sphi 0, %s41
      %s30 = sphi 0, %s37
      %s31 = sphi 0, %s29
      %s32 = sphi 0, %s30
      %s33 = sphi 0, %s31
      %s34 = sphi 0, %s32
      %s44 = sphi 0, %s46
      %s47 = sphi 0, %s44
      %s48 = sphi 0, %s47
      %s64 = sphi 0, %s48
      %s68 = sphi 0, %s68
      %s70 = sphi 0, %s68
      %s71 = sphi 0, %s70
      %s85 = sphi 0, %s71
      %s89 = sphi 0, %s89
      %s91 = sphi 0, %s89
      %s92 = sphi 0, %s91
      %s106 = sphi 0, %s92
      %s110 = sphi 0, %s110
      %s112 = sphi 0, %s110
      %s113 = sphi 0, %s112
      %s127 = sphi 0, %s113
      %s135 = sphi 0, %s137
      %s138 = sphi 0, %s135
      %s139 = sphi 0, %s138
      %s155 = sphi 0, %s139
      %s163 = sphi 0, %s165
      %s166 = sphi 0, %s163
      %s167 = sphi 0, %s166
      %s183 = sphi 0, %s167
    $region4: #{tpu_custom_call.1} parent=1 // loop_header_branch
      %25 = sbr.rel (%p23) target = $region8
    $region5: #{tpu_custom_call.1} parent=1 // loop_body
      %s27 = ssub.s32 %s22, 1
      %s28 = ssub.s32 %s22, 2
      %s35 = sadd.s32 1, %s30
      %p36 = scmp.ge.s32.totalorder %s35, 2
      %s37 = scalar_select %p36, 0, %s35
      %s38 = sadd.s32 1, %s29
      %s39 = scalar_select %p36, %s38, %s29
      %p40 = scmp.ge.s32.totalorder %s39, 2
      %s41 = scalar_select %p40, 0, %s39
      %s42 = ssub.s32 %s29, %s41
      %p43 = scmp.eq.s32.totalorder %s42, 0
      %s45 = sadd.s32 %s44, 1
      %s46 = scalar_select %p43, %s44, %s45
      %p49 = pneg %p43
      %p50 = scmp.eq.s32.totalorder %s22, 3
      %p51 = por %p49, %p50
      %p52 = scmp.ne.s32.totalorder %s44, %s47
      %p53 = scmp.eq.s32.totalorder %s22, 0
      %p54 = por %p52, %p53
      %p55 = scmp.ne.s32.totalorder %s44, %s47
      %p56 = scmp.eq.s32.totalorder %s27, 3
      %p57 = por %p55, %p56
      %p58 = scmp.ne.s32.totalorder %s47, %s48
      %p59 = scmp.eq.s32.totalorder %s27, 0
      %p60 = por %p58, %p59
      %p61 = scmp.ne.s32.totalorder %s47, %s48
      %p62 = scmp.eq.s32.totalorder %s28, 3
      %p63 = por %p61, %p62
      %p65 = scmp.ne.s32.totalorder %s48, %s64
      %p66 = scmp.eq.s32.totalorder %s28, 0
      %p67 = por %p65, %p66
      %s69 = sadd.s32 %s68, 1
      %p72 = scmp.eq.s32.totalorder %s22, 3
      %p73 = scmp.ne.s32.totalorder %s68, %s70
      %p74 = scmp.eq.s32.totalorder %s22, 0
      %p75 = por %p73, %p74
      %p76 = scmp.ne.s32.totalorder %s68, %s70
      %p77 = scmp.eq.s32.totalorder %s27, 3
      %p78 = por %p76, %p77
      %p79 = scmp.ne.s32.totalorder %s70, %s71
      %p80 = scmp.eq.s32.totalorder %s27, 0
      %p81 = por %p79, %p80
      %p82 = scmp.ne.s32.totalorder %s70, %s71
      %p83 = scmp.eq.s32.totalorder %s28, 3
      %p84 = por %p82, %p83
      %p86 = scmp.ne.s32.totalorder %s71, %s85
      %p87 = scmp.eq.s32.totalorder %s28, 0
      %p88 = por %p86, %p87
      %s90 = sadd.s32 %s89, 1
      %p93 = scmp.eq.s32.totalorder %s22, 3
      %p94 = scmp.ne.s32.totalorder %s89, %s91
      %p95 = scmp.eq.s32.totalorder %s22, 0
      %p96 = por %p94, %p95
      %p97 = scmp.ne.s32.totalorder %s89, %s91
      %p98 = scmp.eq.s32.totalorder %s27, 3
      %p99 = por %p97, %p98
      %p100 = scmp.ne.s32.totalorder %s91, %s92
      %p101 = scmp.eq.s32.totalorder %s27, 0
      %p102 = por %p100, %p101
      %p103 = scmp.ne.s32.totalorder %s91, %s92
      %p104 = scmp.eq.s32.totalorder %s28, 3
      %p105 = por %p103, %p104
      %p107 = scmp.ne.s32.totalorder %s92, %s106
      %p108 = scmp.eq.s32.totalorder %s28, 0
      %p109 = por %p107, %p108
      %s111 = sadd.s32 %s110, 1
      %p114 = scmp.eq.s32.totalorder %s22, 3
      %p115 = scmp.ne.s32.totalorder %s110, %s112
      %p116 = scmp.eq.s32.totalorder %s22, 0
      %p117 = por %p115, %p116
      %p118 = scmp.ne.s32.totalorder %s110, %s112
      %p119 = scmp.eq.s32.totalorder %s27, 3
      %p120 = por %p118, %p119
      %p121 = scmp.ne.s32.totalorder %s112, %s113
      %p122 = scmp.eq.s32.totalorder %s27, 0
      %p123 = por %p121, %p122
      %p124 = scmp.ne.s32.totalorder %s112, %s113
      %p125 = scmp.eq.s32.totalorder %s28, 3
      %p126 = por %p124, %p125
      %p128 = scmp.ne.s32.totalorder %s113, %s127
      %p129 = scmp.eq.s32.totalorder %s28, 0
      %p130 = por %p128, %p129
      %s131 = ssub.s32 %s29, %s41
      %s132 = ssub.s32 %s30, %s37
      %s133 = sor.u32 %s131, %s132
      %p134 = scmp.eq.s32.totalorder %s133, 0
      %s136 = sadd.s32 %s135, 1
      %s137 = scalar_select %p134, %s135, %s136
      %p140 = pneg %p134
      %p141 = scmp.eq.s32.totalorder %s22, 3
      %p142 = por %p140, %p141
      %p143 = scmp.ne.s32.totalorder %s135, %s138
      %p144 = scmp.eq.s32.totalorder %s22, 0
      %p145 = por %p143, %p144
      %p146 = scmp.ne.s32.totalorder %s135, %s138
      %p147 = scmp.eq.s32.totalorder %s27, 3
      %p148 = por %p146, %p147
      %p149 = scmp.ne.s32.totalorder %s138, %s139
      %p150 = scmp.eq.s32.totalorder %s27, 0
      %p151 = por %p149, %p150
      %p152 = scmp.ne.s32.totalorder %s138, %s139
      %p153 = scmp.eq.s32.totalorder %s28, 3
      %p154 = por %p152, %p153
      %p156 = scmp.ne.s32.totalorder %s139, %s155
      %p157 = scmp.eq.s32.totalorder %s28, 0
      %p158 = por %p156, %p157
      %s159 = ssub.s32 %s29, %s41
      %s160 = ssub.s32 %s30, %s37
      %s161 = sor.u32 %s159, %s160
      %p162 = scmp.eq.s32.totalorder %s161, 0
      %s164 = sadd.s32 %s163, 1
      %s165 = scalar_select %p162, %s163, %s164
      %p168 = pneg %p162
      %p169 = scmp.eq.s32.totalorder %s22, 3
      %p170 = por %p168, %p169
      %p171 = scmp.ne.s32.totalorder %s163, %s166
      %p172 = scmp.eq.s32.totalorder %s22, 0
      %p173 = por %p171, %p172
      %p174 = scmp.ne.s32.totalorder %s163, %s166
      %p175 = scmp.eq.s32.totalorder %s27, 3
      %p176 = por %p174, %p175
      %p177 = scmp.ne.s32.totalorder %s166, %s167
      %p178 = scmp.eq.s32.totalorder %s27, 0
      %p179 = por %p177, %p178
      %p180 = scmp.ne.s32.totalorder %s166, %s167
      %p181 = scmp.eq.s32.totalorder %s28, 3
      %p182 = por %p180, %p181
      %p184 = scmp.ne.s32.totalorder %s167, %s183
      %p185 = scmp.eq.s32.totalorder %s28, 0
      %p186 = por %p184, %p185
      %p187 = scmp.le.s32.totalorder 1, %s22
      %p188 = scmp.lt.s32.totalorder %s22, 5
      %p189 = pnand %p187, %p188
      %p190 = pneg %p189
      // Predicated region
      $region9: #{tpu_custom_call.1} parent=5 // pred_check
        _
      $region10: #{tpu_custom_call.1} parent=5 // pred_check_branch
        %192 = sbr.rel (%p189) target = $region12
      $region11: #{tpu_custom_call.1} parent=5 // pred_region
        %s193 = ssub.s32 %s22, 1
        // Predicated region
        $region13: #{tpu_custom_call.1} parent=11 // pred_check
          %p194 = pneg %p81
        $region14: #{tpu_custom_call.1} parent=11 // pred_check_branch
          %196 = sbr.rel (%p194) target = $region16
        $region15: #{tpu_custom_call.1} parent=11 // pred_region
          %198 = vsyncadd [#allocation8], 0
          %s199 = sshll.u32 %s1, 4
          %s200 = int_to_ptr.hbm [resolvable:$true] %s199
          %s201 = sshll.u32 [#allocation7], 4
          %s202 = int_to_ptr.vmem [resolvable:$true] %s201
          %207 = dma.hbm_to_vmem [thread:$0]  %s200, 12288, %s202, [#allocation8], 384, 384, 24
        $region16: #{tpu_custom_call.1} parent=11 // pred_fallthru
          _
        // Predicated region
        $region17: #{tpu_custom_call.1} parent=11 // pred_check
          %p208 = pneg %p102
        $region18: #{tpu_custom_call.1} parent=11 // pred_check_branch
          %210 = sbr.rel (%p208) target = $region20
        $region19: #{tpu_custom_call.1} parent=11 // pred_region
          %212 = vsyncadd [#allocation8], 0
          %s213 = sshll.u32 %s2, 4
          %s214 = int_to_ptr.hbm [resolvable:$true] %s213
          %s215 = sshll.u32 [#allocation9], 4
          %s216 = int_to_ptr.vmem [resolvable:$true] %s215
          %221 = dma.hbm_to_vmem [thread:$0]  %s214, 4096, %s216, [#allocation8], 128, 128, 8
        $region20: #{tpu_custom_call.1} parent=11 // pred_fallthru
          _
        // Predicated region
        $region21: #{tpu_custom_call.1} parent=11 // pred_check
          %p222 = pneg %p123
        $region22: #{tpu_custom_call.1} parent=11 // pred_check_branch
          %224 = sbr.rel (%p222) target = $region24
        $region23: #{tpu_custom_call.1} parent=11 // pred_region
          _
        $region24: #{tpu_custom_call.1} parent=11 // pred_fallthru
          _
      $region12: #{tpu_custom_call.1} parent=5 // pred_fallthru
        _
      %p225 = scmp.lt.s32.totalorder %s22, 4
      // Predicated region
      $region25: #{tpu_custom_call.1} parent=5 // pred_check
        %p226 = pneg %p225
      $region26: #{tpu_custom_call.1} parent=5 // pred_check_branch
        %228 = sbr.rel (%p226) target = $region28
      $region27: #{tpu_custom_call.1} parent=5 // pred_region
        // Predicated region
        $region29: #{tpu_custom_call.1} parent=27 // pred_check
          %p229 = pneg %p54
        $region30: #{tpu_custom_call.1} parent=27 // pred_check_branch
          %231 = sbr.rel (%p229) target = $region32
        $region31: #{tpu_custom_call.1} parent=27 // pred_region
          %s232 = sand.u32 %s44, 1
          %s233 = scalar_lea.sflag [#allocation5], %s232
          %s234 = sand.u32 %s44, 1
          %s235 = smul.addr %s234, 512
          %s236 = scalar_lea.vmem [#allocation4], %s235
          %238 = vsyncadd %s233, 0
          %s239 = smul.addr %s29, 64
          %s240 = smul.addr %s239, 8
          %s241 = scalar_lea.hbm %s0, %s240
          %s242 = sshll.u32 %s241, 4
          %s243 = int_to_ptr.hbm [resolvable:$true] %s242
          %s244 = sshll.u32 %s236, 4
          %s245 = int_to_ptr.vmem [resolvable:$true] %s244
          %250 = dma.hbm_to_vmem [thread:$0]  %s243, 8192, %s245, %s233, 256, 256, 16
        $region32: #{tpu_custom_call.1} parent=27 // pred_fallthru
          _
      $region28: #{tpu_custom_call.1} parent=5 // pred_fallthru
        _
      %p251 = scmp.le.s32.totalorder 1, %s22
      %p252 = scmp.lt.s32.totalorder %s22, 5
      %p253 = pnand %p251, %p252
      %p254 = pneg %p253
      // Predicated region
      $region33: #{tpu_custom_call.1} parent=5 // pred_check
        _
      $region34: #{tpu_custom_call.1} parent=5 // pred_check_branch
        %256 = sbr.rel (%p253) target = $region36
      $region35: #{tpu_custom_call.1} parent=5 // pred_region
        %s257 = ssub.s32 %s22, 1
        %s258 = sand.u32 %s47, 1
        %s259 = scalar_lea.sflag [#allocation5], %s258
        %s260 = sand.u32 %s47, 1
        %s261 = smul.addr %s260, 512
        %s262 = scalar_lea.vmem [#allocation4], %s261
        // Predicated region
        $region37: #{tpu_custom_call.1} parent=35 // pred_check
          %p263 = pneg %p60
        $region38: #{tpu_custom_call.1} parent=35 // pred_check_branch
          %265 = sbr.rel (%p263) target = $region40
        $region39: #{tpu_custom_call.1} parent=35 // pred_region
          %267 = dma.done %s259, 8192
        $region40: #{tpu_custom_call.1} parent=35 // pred_fallthru
          _
        // Predicated region
        $region41: #{tpu_custom_call.1} parent=35 // pred_check
          %p268 = pneg %p81
        $region42: #{tpu_custom_call.1} parent=35 // pred_check_branch
          %270 = sbr.rel (%p268) target = $region44
        $region43: #{tpu_custom_call.1} parent=35 // pred_region
          %272 = dma.done [#allocation8], 12288
        $region44: #{tpu_custom_call.1} parent=35 // pred_fallthru
          _
        // Predicated region
        $region45: #{tpu_custom_call.1} parent=35 // pred_check
          %p273 = pneg %p102
        $region46: #{tpu_custom_call.1} parent=35 // pred_check_branch
          %275 = sbr.rel (%p273) target = $region48
        $region47: #{tpu_custom_call.1} parent=35 // pred_region
          %277 = dma.done [#allocation8], 4096
        $region48: #{tpu_custom_call.1} parent=35 // pred_fallthru
          _
        %s278 = sand.u32 %s47, 1
        %s279 = scalar_lea.sflag [#allocation5], %s278
        %s280 = sand.u32 %s47, 1
        %s281 = smul.addr %s280, 512
        %s282 = scalar_lea.vmem [#allocation4], %s281
        %p283 = pneg %p60
        %p284 = pneg %p57
        %p285 = pneg %p81
        %p286 = pneg %p78
        %p287 = pneg %p102
        %p288 = pneg %p99
        %p289 = pneg %p123
        %p290 = pneg %p120
        %p291 = pneg %p151
        %p292 = pneg %p148
        %s293 = sand.u32 %s138, 1
        %s294 = scalar_lea.sflag [#allocation6], %s293
        %s295 = sand.u32 %s138, 1
        %s296 = smul.addr %s295, 256
        %s297 = scalar_lea.vmem [#allocation10], %s296
        %p298 = pneg %p179
        %p299 = pneg %p176
        %s300 = sand.u32 %s166, 1
        %s301 = scalar_lea.sflag [#allocation12], %s300
        %s302 = sand.u32 %s166, 1
        %s303 = smul.addr %s302, 512
        %s304 = scalar_lea.vmem [#allocation11], %s303
        %s305 = smul.u32 16, %s32
        %s306 = smul.u32 16, %s32
        %p307 = scmp.eq.s32.totalorder %s32, 0
        // Predicated region
        $region49: #{tpu_custom_call.1} parent=35 // pred_check
          %p308 = pneg %p307
        $region50: #{tpu_custom_call.1} parent=35 // pred_check_branch
          %310 = sbr.rel (%p308) target = $region52
        $region51: #{tpu_custom_call.1} parent=35 // pred_region
          %v311 = vld [vmem:[%s262] sm:$0xff]
          %v312 = vld [vmem:[%s262 + $0x8] sm:$0xff]
          %v313 = vld [vmem:[%s262 + $0x10] sm:$0xff]
          %v314 = vld [vmem:[%s262 + $0x18] sm:$0xff]
          %v315 = vld [vmem:[%s262 + $0x20] sm:$0xff]
          %v316 = vld [vmem:[%s262 + $0x28] sm:$0xff]
          %v317 = vld [vmem:[%s262 + $0x30] sm:$0xff]
          %v318 = vld [vmem:[%s262 + $0x38] sm:$0xff]
          %v319 = vld [vmem:[%s262 + $0x40] sm:$0xff]
          %v320 = vld [vmem:[%s262 + $0x48] sm:$0xff]
          %v321 = vld [vmem:[%s262 + $0x50] sm:$0xff]
          %v322 = vld [vmem:[%s262 + $0x58] sm:$0xff]
          %v323 = vld [vmem:[%s262 + $0x60] sm:$0xff]
          %v324 = vld [vmem:[%s262 + $0x68] sm:$0xff]
          %v325 = vld [vmem:[%s262 + $0x70] sm:$0xff]
          %v326 = vld [vmem:[%s262 + $0x78] sm:$0xff]
          %v327 = vld [vmem:[%s262 + $0x80] sm:$0xff]
          %v328 = vld [vmem:[%s262 + $0x88] sm:$0xff]
          %v329 = vld [vmem:[%s262 + $0x90] sm:$0xff]
          %v330 = vld [vmem:[%s262 + $0x98] sm:$0xff]
          %v331 = vld [vmem:[%s262 + $0xa0] sm:$0xff]
          %v332 = vld [vmem:[%s262 + $0xa8] sm:$0xff]
          %v333 = vld [vmem:[%s262 + $0xb0] sm:$0xff]
          %v334 = vld [vmem:[%s262 + $0xb8] sm:$0xff]
          %v335 = vld [vmem:[%s262 + $0xc0] sm:$0xff]
          %v336 = vld [vmem:[%s262 + $0xc8] sm:$0xff]
          %v337 = vld [vmem:[%s262 + $0xd0] sm:$0xff]
          %v338 = vld [vmem:[%s262 + $0xd8] sm:$0xff]
          %v339 = vld [vmem:[%s262 + $0xe0] sm:$0xff]
          %v340 = vld [vmem:[%s262 + $0xe8] sm:$0xff]
          %v341 = vld [vmem:[%s262 + $0xf0] sm:$0xff]
          %v342 = vld [vmem:[%s262 + $0xf8] sm:$0xff]
          %v343 = vld [vmem:[%s262 + $0x100] sm:$0xff]
          %v344 = vld [vmem:[%s262 + $0x108] sm:$0xff]
          %v345 = vld [vmem:[%s262 + $0x110] sm:$0xff]
          %v346 = vld [vmem:[%s262 + $0x118] sm:$0xff]
          %v347 = vld [vmem:[%s262 + $0x120] sm:$0xff]
          %v348 = vld [vmem:[%s262 + $0x128] sm:$0xff]
          %v349 = vld [vmem:[%s262 + $0x130] sm:$0xff]
          %v350 = vld [vmem:[%s262 + $0x138] sm:$0xff]
          %v351 = vld [vmem:[%s262 + $0x140] sm:$0xff]
          %v352 = vld [vmem:[%s262 + $0x148] sm:$0xff]
          %v353 = vld [vmem:[%s262 + $0x150] sm:$0xff]
          %v354 = vld [vmem:[%s262 + $0x158] sm:$0xff]
          %v355 = vld [vmem:[%s262 + $0x160] sm:$0xff]
          %v356 = vld [vmem:[%s262 + $0x168] sm:$0xff]
          %v357 = vld [vmem:[%s262 + $0x170] sm:$0xff]
          %v358 = vld [vmem:[%s262 + $0x178] sm:$0xff]
          %v359 = vld [vmem:[%s262 + $0x180] sm:$0xff]
          %v360 = vld [vmem:[%s262 + $0x188] sm:$0xff]
          %v361 = vld [vmem:[%s262 + $0x190] sm:$0xff]
          %v362 = vld [vmem:[%s262 + $0x198] sm:$0xff]
          %v363 = vld [vmem:[%s262 + $0x1a0] sm:$0xff]
          %v364 = vld [vmem:[%s262 + $0x1a8] sm:$0xff]
          %v365 = vld [vmem:[%s262 + $0x1b0] sm:$0xff]
          %v366 = vld [vmem:[%s262 + $0x1b8] sm:$0xff]
          %v367 = vld [vmem:[%s262 + $0x1c0] sm:$0xff]
          %v368 = vld [vmem:[%s262 + $0x1c8] sm:$0xff]
          %v369 = vld [vmem:[%s262 + $0x1d0] sm:$0xff]
          %v370 = vld [vmem:[%s262 + $0x1d8] sm:$0xff]
          %v371 = vld [vmem:[%s262 + $0x1e0] sm:$0xff]
          %v372 = vld [vmem:[%s262 + $0x1e8] sm:$0xff]
          %v373 = vld [vmem:[%s262 + $0x1f0] sm:$0xff]
          %v374 = vld [vmem:[%s262 + $0x1f8] sm:$0xff]
          %v375 = vpack.c.bf16 %v313, %v311
          %v376 = vpack.c.bf16 %v314, %v312
          %v377 = vpack.c.bf16 %v317, %v315
          %v378 = vpack.c.bf16 %v318, %v316
          %v379 = vpack.c.bf16 %v321, %v319
          %v380 = vpack.c.bf16 %v322, %v320
          %v381 = vpack.c.bf16 %v325, %v323
          %v382 = vpack.c.bf16 %v326, %v324
          %v383 = vpack.c.bf16 %v329, %v327
          %v384 = vpack.c.bf16 %v330, %v328
          %v385 = vpack.c.bf16 %v333, %v331
          %v386 = vpack.c.bf16 %v334, %v332
          %v387 = vpack.c.bf16 %v337, %v335
          %v388 = vpack.c.bf16 %v338, %v336
          %v389 = vpack.c.bf16 %v341, %v339
          %v390 = vpack.c.bf16 %v342, %v340
          %v391 = vpack.c.bf16 %v345, %v343
          %v392 = vpack.c.bf16 %v346, %v344
          %v393 = vpack.c.bf16 %v349, %v347
          %v394 = vpack.c.bf16 %v350, %v348
          %v395 = vpack.c.bf16 %v353, %v351
          %v396 = vpack.c.bf16 %v354, %v352
          %v397 = vpack.c.bf16 %v357, %v355
          %v398 = vpack.c.bf16 %v358, %v356
          %v399 = vpack.c.bf16 %v361, %v359
          %v400 = vpack.c.bf16 %v362, %v360
          %v401 = vpack.c.bf16 %v365, %v363
          %v402 = vpack.c.bf16 %v366, %v364
          %v403 = vpack.c.bf16 %v369, %v367
          %v404 = vpack.c.bf16 %v370, %v368
          %v405 = vpack.c.bf16 %v373, %v371
          %v406 = vpack.c.bf16 %v374, %v372
          %v407 = vld [vmem:[#allocation7] sm:$0xff]
          %v408 = vld [vmem:[#allocation7 + $0x8] sm:$0xff]
          %v409 = vld [vmem:[#allocation7 + $0x10] sm:$0xff]
          %v410 = vld [vmem:[#allocation7 + $0x18] sm:$0xff]
          %v411 = vld [vmem:[#allocation7 + $0x20] sm:$0xff]
          %v412 = vld [vmem:[#allocation7 + $0x28] sm:$0xff]
          %v413 = vld [vmem:[#allocation7 + $0x30] sm:$0xff]
          %v414 = vld [vmem:[#allocation7 + $0x38] sm:$0xff]
          %v415 = vld [vmem:[#allocation7 + $0x40] sm:$0xff]
          %v416 = vld [vmem:[#allocation7 + $0x48] sm:$0xff]
          %v417 = vld [vmem:[#allocation7 + $0x50] sm:$0xff]
          %v418 = vld [vmem:[#allocation7 + $0x58] sm:$0xff]
          %v419 = vld [vmem:[#allocation7 + $0x60] sm:$0xff]
          %v420 = vld [vmem:[#allocation7 + $0x68] sm:$0xff]
          %v421 = vld [vmem:[#allocation7 + $0x70] sm:$0xff]
          %v422 = vld [vmem:[#allocation7 + $0x78] sm:$0xff]
          %v423 = vld [vmem:[#allocation7 + $0x80] sm:$0xff]
          %v424 = vld [vmem:[#allocation7 + $0x88] sm:$0xff]
          %v425 = vld [vmem:[#allocation7 + $0x90] sm:$0xff]
          %v426 = vld [vmem:[#allocation7 + $0x98] sm:$0xff]
          %v427 = vld [vmem:[#allocation7 + $0xa0] sm:$0xff]
          %v428 = vld [vmem:[#allocation7 + $0xa8] sm:$0xff]
          %v429 = vld [vmem:[#allocation7 + $0xb0] sm:$0xff]
          %v430 = vld [vmem:[#allocation7 + $0xb8] sm:$0xff]
          %v431 = vld [vmem:[#allocation7 + $0xc0] sm:$0xff]
          %v432 = vld [vmem:[#allocation7 + $0xc8] sm:$0xff]
          %v433 = vld [vmem:[#allocation7 + $0xd0] sm:$0xff]
          %v434 = vld [vmem:[#allocation7 + $0xd8] sm:$0xff]
          %v435 = vld [vmem:[#allocation7 + $0xe0] sm:$0xff]
          %v436 = vld [vmem:[#allocation7 + $0xe8] sm:$0xff]
          %v437 = vld [vmem:[#allocation7 + $0xf0] sm:$0xff]
          %v438 = vld [vmem:[#allocation7 + $0xf8] sm:$0xff]
          %v439 = vld [vmem:[#allocation7 + $0x100] sm:$0xff]
          %v440 = vld [vmem:[#allocation7 + $0x108] sm:$0xff]
          %v441 = vld [vmem:[#allocation7 + $0x110] sm:$0xff]
          %v442 = vld [vmem:[#allocation7 + $0x118] sm:$0xff]
          %v443 = vld [vmem:[#allocation7 + $0x120] sm:$0xff]
          %v444 = vld [vmem:[#allocation7 + $0x128] sm:$0xff]
          %v445 = vld [vmem:[#allocation7 + $0x130] sm:$0xff]
          %v446 = vld [vmem:[#allocation7 + $0x138] sm:$0xff]
          %v447 = vld [vmem:[#allocation7 + $0x140] sm:$0xff]
          %v448 = vld [vmem:[#allocation7 + $0x148] sm:$0xff]
          %v449 = vld [vmem:[#allocation7 + $0x150] sm:$0xff]
          %v450 = vld [vmem:[#allocation7 + $0x158] sm:$0xff]
          %v451 = vld [vmem:[#allocation7 + $0x160] sm:$0xff]
          %v452 = vld [vmem:[#allocation7 + $0x168] sm:$0xff]
          %v453 = vld [vmem:[#allocation7 + $0x170] sm:$0xff]
          %v454 = vld [vmem:[#allocation7 + $0x178] sm:$0xff]
          %v455 = vld [vmem:[#allocation7 + $0x180] sm:$0xff]
          %v456 = vld [vmem:[#allocation7 + $0x188] sm:$0xff]
          %v457 = vld [vmem:[#allocation7 + $0x190] sm:$0xff]
          %v458 = vld [vmem:[#allocation7 + $0x198] sm:$0xff]
          %v459 = vld [vmem:[#allocation7 + $0x1a0] sm:$0xff]
          %v460 = vld [vmem:[#allocation7 + $0x1a8] sm:$0xff]
          %v461 = vld [vmem:[#allocation7 + $0x1b0] sm:$0xff]
          %v462 = vld [vmem:[#allocation7 + $0x1b8] sm:$0xff]
          %v463 = vld [vmem:[#allocation7 + $0x1c0] sm:$0xff]
          %v464 = vld [vmem:[#allocation7 + $0x1c8] sm:$0xff]
          %v465 = vld [vmem:[#allocation7 + $0x1d0] sm:$0xff]
          %v466 = vld [vmem:[#allocation7 + $0x1d8] sm:$0xff]
          %v467 = vld [vmem:[#allocation7 + $0x1e0] sm:$0xff]
          %v468 = vld [vmem:[#allocation7 + $0x1e8] sm:$0xff]
          %v469 = vld [vmem:[#allocation7 + $0x1f0] sm:$0xff]
          %v470 = vld [vmem:[#allocation7 + $0x1f8] sm:$0xff]
          %v471 = vld [vmem:[#allocation7 + $0x200] sm:$0xff]
          %v472 = vld [vmem:[#allocation7 + $0x208] sm:$0xff]
          %v473 = vld [vmem:[#allocation7 + $0x210] sm:$0xff]
          %v474 = vld [vmem:[#allocation7 + $0x218] sm:$0xff]
          %v475 = vld [vmem:[#allocation7 + $0x220] sm:$0xff]
          %v476 = vld [vmem:[#allocation7 + $0x228] sm:$0xff]
          %v477 = vld [vmem:[#allocation7 + $0x230] sm:$0xff]
          %v478 = vld [vmem:[#allocation7 + $0x238] sm:$0xff]
          %v479 = vld [vmem:[#allocation7 + $0x240] sm:$0xff]
          %v480 = vld [vmem:[#allocation7 + $0x248] sm:$0xff]
          %v481 = vld [vmem:[#allocation7 + $0x250] sm:$0xff]
          %v482 = vld [vmem:[#allocation7 + $0x258] sm:$0xff]
          %v483 = vld [vmem:[#allocation7 + $0x260] sm:$0xff]
          %v484 = vld [vmem:[#allocation7 + $0x268] sm:$0xff]
          %v485 = vld [vmem:[#allocation7 + $0x270] sm:$0xff]
          %v486 = vld [vmem:[#allocation7 + $0x278] sm:$0xff]
          %v487 = vld [vmem:[#allocation7 + $0x280] sm:$0xff]
          %v488 = vld [vmem:[#allocation7 + $0x288] sm:$0xff]
          %v489 = vld [vmem:[#allocation7 + $0x290] sm:$0xff]
          %v490 = vld [vmem:[#allocation7 + $0x298] sm:$0xff]
          %v491 = vld [vmem:[#allocation7 + $0x2a0] sm:$0xff]
          %v492 = vld [vmem:[#allocation7 + $0x2a8] sm:$0xff]
          %v493 = vld [vmem:[#allocation7 + $0x2b0] sm:$0xff]
          %v494 = vld [vmem:[#allocation7 + $0x2b8] sm:$0xff]
          %v495 = vld [vmem:[#allocation7 + $0x2c0] sm:$0xff]
          %v496 = vld [vmem:[#allocation7 + $0x2c8] sm:$0xff]
          %v497 = vld [vmem:[#allocation7 + $0x2d0] sm:$0xff]
          %v498 = vld [vmem:[#allocation7 + $0x2d8] sm:$0xff]
          %v499 = vld [vmem:[#allocation7 + $0x2e0] sm:$0xff]
          %v500 = vld [vmem:[#allocation7 + $0x2e8] sm:$0xff]
          %v501 = vld [vmem:[#allocation7 + $0x2f0] sm:$0xff]
          %v502 = vld [vmem:[#allocation7 + $0x2f8] sm:$0xff]
          %v599 = vunpack.c.l.b16 %v407
          %v600 = vunpack.c.h.b16 %v407
          %v601 = vunpack.c.l.b16 %v408
          %v602 = vunpack.c.h.b16 %v408
          %v603 = vunpack.c.l.b16 %v409
          %v604 = vunpack.c.h.b16 %v409
          %v605 = vunpack.c.l.b16 %v410
          %v606 = vunpack.c.h.b16 %v410
          %v607 = vunpack.c.l.b16 %v411
          %v608 = vunpack.c.h.b16 %v411
          %v609 = vunpack.c.l.b16 %v412
          %v610 = vunpack.c.h.b16 %v412
          %v611 = vunpack.c.l.b16 %v413
          %v612 = vunpack.c.h.b16 %v413
          %v613 = vunpack.c.l.b16 %v414
          %v614 = vunpack.c.h.b16 %v414
          %v615 = vunpack.c.l.b16 %v415
          %v616 = vunpack.c.h.b16 %v415
          %v617 = vunpack.c.l.b16 %v416
          %v618 = vunpack.c.h.b16 %v416
          %v619 = vunpack.c.l.b16 %v417
          %v620 = vunpack.c.h.b16 %v417
          %v621 = vunpack.c.l.b16 %v418
          %v622 = vunpack.c.h.b16 %v418
          %v623 = vunpack.c.l.b16 %v419
          %v624 = vunpack.c.h.b16 %v419
          %v625 = vunpack.c.l.b16 %v420
          %v626 = vunpack.c.h.b16 %v420
          %v627 = vunpack.c.l.b16 %v421
          %v628 = vunpack.c.h.b16 %v421
          %v629 = vunpack.c.l.b16 %v422
          %v630 = vunpack.c.h.b16 %v422
          %v631 = vunpack.c.l.b16 %v423
          %v632 = vunpack.c.h.b16 %v423
          %v633 = vunpack.c.l.b16 %v424
          %v634 = vunpack.c.h.b16 %v424
          %v635 = vunpack.c.l.b16 %v425
          %v636 = vunpack.c.h.b16 %v425
          %v637 = vunpack.c.l.b16 %v426
          %v638 = vunpack.c.h.b16 %v426
          %v639 = vunpack.c.l.b16 %v427
          %v640 = vunpack.c.h.b16 %v427
          %v641 = vunpack.c.l.b16 %v428
          %v642 = vunpack.c.h.b16 %v428
          %v643 = vunpack.c.l.b16 %v429
          %v644 = vunpack.c.h.b16 %v429
          %v645 = vunpack.c.l.b16 %v430
          %v646 = vunpack.c.h.b16 %v430
          %v647 = vunpack.c.l.b16 %v431
          %v648 = vunpack.c.h.b16 %v431
          %v649 = vunpack.c.l.b16 %v432
          %v650 = vunpack.c.h.b16 %v432
          %v651 = vunpack.c.l.b16 %v433
          %v652 = vunpack.c.h.b16 %v433
          %v653 = vunpack.c.l.b16 %v434
          %v654 = vunpack.c.h.b16 %v434
          %v655 = vunpack.c.l.b16 %v435
          %v656 = vunpack.c.h.b16 %v435
          %v657 = vunpack.c.l.b16 %v436
          %v658 = vunpack.c.h.b16 %v436
          %v659 = vunpack.c.l.b16 %v437
          %v660 = vunpack.c.h.b16 %v437
          %v661 = vunpack.c.l.b16 %v438
          %v662 = vunpack.c.h.b16 %v438
          %v663 = vunpack.c.l.b16 %v439
          %v664 = vunpack.c.h.b16 %v439
          %v665 = vunpack.c.l.b16 %v440
          %v666 = vunpack.c.h.b16 %v440
          %v667 = vunpack.c.l.b16 %v441
          %v668 = vunpack.c.h.b16 %v441
          %v669 = vunpack.c.l.b16 %v442
          %v670 = vunpack.c.h.b16 %v442
          %v671 = vunpack.c.l.b16 %v443
          %v672 = vunpack.c.h.b16 %v443
          %v673 = vunpack.c.l.b16 %v444
          %v674 = vunpack.c.h.b16 %v444
          %v675 = vunpack.c.l.b16 %v445
          %v676 = vunpack.c.h.b16 %v445
          %v677 = vunpack.c.l.b16 %v446
          %v678 = vunpack.c.h.b16 %v446
          %v679 = vunpack.c.l.b16 %v447
          %v680 = vunpack.c.h.b16 %v447
          %v681 = vunpack.c.l.b16 %v448
          %v682 = vunpack.c.h.b16 %v448
          %v683 = vunpack.c.l.b16 %v449
          %v684 = vunpack.c.h.b16 %v449
          %v685 = vunpack.c.l.b16 %v450
          %v686 = vunpack.c.h.b16 %v450
          %v687 = vunpack.c.l.b16 %v451
          %v688 = vunpack.c.h.b16 %v451
          %v689 = vunpack.c.l.b16 %v452
          %v690 = vunpack.c.h.b16 %v452
          %v691 = vunpack.c.l.b16 %v453
          %v692 = vunpack.c.h.b16 %v453
          %v693 = vunpack.c.l.b16 %v454
          %v694 = vunpack.c.h.b16 %v454
          %v695 = vunpack.c.l.b16 %v455
          %v696 = vunpack.c.h.b16 %v455
          %v697 = vunpack.c.l.b16 %v456
          %v698 = vunpack.c.h.b16 %v456
          %v699 = vunpack.c.l.b16 %v457
          %v700 = vunpack.c.h.b16 %v457
          %v701 = vunpack.c.l.b16 %v458
          %v702 = vunpack.c.h.b16 %v458
          %v703 = vunpack.c.l.b16 %v459
          %v704 = vunpack.c.h.b16 %v459
          %v705 = vunpack.c.l.b16 %v460
          %v706 = vunpack.c.h.b16 %v460
          %v707 = vunpack.c.l.b16 %v461
          %v708 = vunpack.c.h.b16 %v461
          %v709 = vunpack.c.l.b16 %v462
          %v710 = vunpack.c.h.b16 %v462
          %v711 = vunpack.c.l.b16 %v463
          %v712 = vunpack.c.h.b16 %v463
          %v713 = vunpack.c.l.b16 %v464
          %v714 = vunpack.c.h.b16 %v464
          %v715 = vunpack.c.l.b16 %v465
          %v716 = vunpack.c.h.b16 %v465
          %v717 = vunpack.c.l.b16 %v466
          %v718 = vunpack.c.h.b16 %v466
          %v719 = vunpack.c.l.b16 %v467
          %v720 = vunpack.c.h.b16 %v467
          %v721 = vunpack.c.l.b16 %v468
          %v722 = vunpack.c.h.b16 %v468
          %v723 = vunpack.c.l.b16 %v469
          %v724 = vunpack.c.h.b16 %v469
          %v725 = vunpack.c.l.b16 %v470
          %v726 = vunpack.c.h.b16 %v470
          %v727 = vunpack.c.l.b16 %v471
          %v728 = vunpack.c.h.b16 %v471
          %v729 = vunpack.c.l.b16 %v472
          %v730 = vunpack.c.h.b16 %v472
          %v731 = vunpack.c.l.b16 %v473
          %v732 = vunpack.c.h.b16 %v473
          %v733 = vunpack.c.l.b16 %v474
          %v734 = vunpack.c.h.b16 %v474
          %v735 = vunpack.c.l.b16 %v475
          %v736 = vunpack.c.h.b16 %v475
          %v737 = vunpack.c.l.b16 %v476
          %v738 = vunpack.c.h.b16 %v476
          %v739 = vunpack.c.l.b16 %v477
          %v740 = vunpack.c.h.b16 %v477
          %v741 = vunpack.c.l.b16 %v478
          %v742 = vunpack.c.h.b16 %v478
          %v743 = vunpack.c.l.b16 %v479
          %v744 = vunpack.c.h.b16 %v479
          %v745 = vunpack.c.l.b16 %v480
          %v746 = vunpack.c.h.b16 %v480
          %v747 = vunpack.c.l.b16 %v481
          %v748 = vunpack.c.h.b16 %v481
          %v749 = vunpack.c.l.b16 %v482
          %v750 = vunpack.c.h.b16 %v482
          %v751 = vunpack.c.l.b16 %v483
          %v752 = vunpack.c.h.b16 %v483
          %v753 = vunpack.c.l.b16 %v484
          %v754 = vunpack.c.h.b16 %v484
          %v755 = vunpack.c.l.b16 %v485
          %v756 = vunpack.c.h.b16 %v485
          %v757 = vunpack.c.l.b16 %v486
          %v758 = vunpack.c.h.b16 %v486
          %v759 = vunpack.c.l.b16 %v487
          %v760 = vunpack.c.h.b16 %v487
          %v761 = vunpack.c.l.b16 %v488
          %v762 = vunpack.c.h.b16 %v488
          %v763 = vunpack.c.l.b16 %v489
          %v764 = vunpack.c.h.b16 %v489
          %v765 = vunpack.c.l.b16 %v490
          %v766 = vunpack.c.h.b16 %v490
          %v767 = vunpack.c.l.b16 %v491
          %v768 = vunpack.c.h.b16 %v491
          %v769 = vunpack.c.l.b16 %v492
          %v770 = vunpack.c.h.b16 %v492
          %v771 = vunpack.c.l.b16 %v493
          %v772 = vunpack.c.h.b16 %v493
          %v773 = vunpack.c.l.b16 %v494
          %v774 = vunpack.c.h.b16 %v494
          %v775 = vunpack.c.l.b16 %v495
          %v776 = vunpack.c.h.b16 %v495
          %v777 = vunpack.c.l.b16 %v496
          %v778 = vunpack.c.h.b16 %v496
          %v779 = vunpack.c.l.b16 %v497
          %v780 = vunpack.c.h.b16 %v497
          %v781 = vunpack.c.l.b16 %v498
          %v782 = vunpack.c.h.b16 %v498
          %v783 = vunpack.c.l.b16 %v499
          %v784 = vunpack.c.h.b16 %v499
          %v785 = vunpack.c.l.b16 %v500
          %v786 = vunpack.c.h.b16 %v500
          %v787 = vunpack.c.l.b16 %v501
          %v788 = vunpack.c.h.b16 %v501
          %v789 = vunpack.c.l.b16 %v502
          %v790 = vunpack.c.h.b16 %v502
          %v791 = vpack.c.b16 %v605, %v599
          %v792 = vpack.c.b16 %v606, %v600
          %v793 = vpack.c.b16 %v607, %v601
          %v794 = vpack.c.b16 %v608, %v602
          %v795 = vpack.c.b16 %v609, %v603
          %v796 = vpack.c.b16 %v610, %v604
          %v797 = vpack.c.b16 %v617, %v611
          %v798 = vpack.c.b16 %v618, %v612
          %v799 = vpack.c.b16 %v619, %v613
          %v800 = vpack.c.b16 %v620, %v614
          %v801 = vpack.c.b16 %v621, %v615
          %v802 = vpack.c.b16 %v622, %v616
          %v803 = vpack.c.b16 %v629, %v623
          %v804 = vpack.c.b16 %v630, %v624
          %v805 = vpack.c.b16 %v631, %v625
          %v806 = vpack.c.b16 %v632, %v626
          %v807 = vpack.c.b16 %v633, %v627
          %v808 = vpack.c.b16 %v634, %v628
          %v809 = vpack.c.b16 %v641, %v635
          %v810 = vpack.c.b16 %v642, %v636
          %v811 = vpack.c.b16 %v643, %v637
          %v812 = vpack.c.b16 %v644, %v638
          %v813 = vpack.c.b16 %v645, %v639
          %v814 = vpack.c.b16 %v646, %v640
          %v815 = vpack.c.b16 %v653, %v647
          %v816 = vpack.c.b16 %v654, %v648
          %v817 = vpack.c.b16 %v655, %v649
          %v818 = vpack.c.b16 %v656, %v650
          %v819 = vpack.c.b16 %v657, %v651
          %v820 = vpack.c.b16 %v658, %v652
          %v821 = vpack.c.b16 %v665, %v659
          %v822 = vpack.c.b16 %v666, %v660
          %v823 = vpack.c.b16 %v667, %v661
          %v824 = vpack.c.b16 %v668, %v662
          %v825 = vpack.c.b16 %v669, %v663
          %v826 = vpack.c.b16 %v670, %v664
          %v827 = vpack.c.b16 %v677, %v671
          %v828 = vpack.c.b16 %v678, %v672
          %v829 = vpack.c.b16 %v679, %v673
          %v830 = vpack.c.b16 %v680, %v674
          %v831 = vpack.c.b16 %v681, %v675
          %v832 = vpack.c.b16 %v682, %v676
          %v833 = vpack.c.b16 %v689, %v683
          %v834 = vpack.c.b16 %v690, %v684
          %v835 = vpack.c.b16 %v691, %v685
          %v836 = vpack.c.b16 %v692, %v686
          %v837 = vpack.c.b16 %v693, %v687
          %v838 = vpack.c.b16 %v694, %v688
          %v839 = vpack.c.b16 %v701, %v695
          %v840 = vpack.c.b16 %v702, %v696
          %v841 = vpack.c.b16 %v703, %v697
          %v842 = vpack.c.b16 %v704, %v698
          %v843 = vpack.c.b16 %v705, %v699
          %v844 = vpack.c.b16 %v706, %v700
          %v845 = vpack.c.b16 %v713, %v707
          %v846 = vpack.c.b16 %v714, %v708
          %v847 = vpack.c.b16 %v715, %v709
          %v848 = vpack.c.b16 %v716, %v710
          %v849 = vpack.c.b16 %v717, %v711
          %v850 = vpack.c.b16 %v718, %v712
          %v851 = vpack.c.b16 %v725, %v719
          %v852 = vpack.c.b16 %v726, %v720
          %v853 = vpack.c.b16 %v727, %v721
          %v854 = vpack.c.b16 %v728, %v722
          %v855 = vpack.c.b16 %v729, %v723
          %v856 = vpack.c.b16 %v730, %v724
          %v857 = vpack.c.b16 %v737, %v731
          %v858 = vpack.c.b16 %v738, %v732
          %v859 = vpack.c.b16 %v739, %v733
          %v860 = vpack.c.b16 %v740, %v734
          %v861 = vpack.c.b16 %v741, %v735
          %v862 = vpack.c.b16 %v742, %v736
          %v863 = vpack.c.b16 %v749, %v743
          %v864 = vpack.c.b16 %v750, %v744
          %v865 = vpack.c.b16 %v751, %v745
          %v866 = vpack.c.b16 %v752, %v746
          %v867 = vpack.c.b16 %v753, %v747
          %v868 = vpack.c.b16 %v754, %v748
          %v869 = vpack.c.b16 %v761, %v755
          %v870 = vpack.c.b16 %v762, %v756
          %v871 = vpack.c.b16 %v763, %v757
          %v872 = vpack.c.b16 %v764, %v758
          %v873 = vpack.c.b16 %v765, %v759
          %v874 = vpack.c.b16 %v766, %v760
          %v875 = vpack.c.b16 %v773, %v767
          %v876 = vpack.c.b16 %v774, %v768
          %v877 = vpack.c.b16 %v775, %v769
          %v878 = vpack.c.b16 %v776, %v770
          %v879 = vpack.c.b16 %v777, %v771
          %v880 = vpack.c.b16 %v778, %v772
          %v881 = vpack.c.b16 %v785, %v779
          %v882 = vpack.c.b16 %v786, %v780
          %v883 = vpack.c.b16 %v787, %v781
          %v884 = vpack.c.b16 %v788, %v782
          %v885 = vpack.c.b16 %v789, %v783
          %v886 = vpack.c.b16 %v790, %v784
          %983 = vmatpush.bf16.msra.mxu0 %v833
          %984 = vmatpush.bf16.msra.mxu0 %v827
          %985 = vmatpush.bf16.msra.mxu0 %v821
          %986 = vmatpush.bf16.msra.mxu0 %v815
          %987 = vmatpush.bf16.msra.mxu0 %v809
          %988 = vmatpush.bf16.msra.mxu0 %v803
          %989 = vmatpush.bf16.msra.mxu0 %v797
          %990 = vmatpush.bf16.msra.mxu0 %v791
          %991 = vmatmul.bf16.gmra.mxu0 %v375
          %v992 = vpop.f32.mrf.mxu0
          %v993 = vadd.f32 0.0, %v992
          %v994 = vpop.f32.mrf.mxu0
          %v995 = vadd.f32 0.0, %v994
          %996 = vmatmul.bf16.gmra.mxu0 %v377
          %v997 = vpop.f32.mrf.mxu0
          %v998 = vadd.f32 0.0, %v997
          %v999 = vpop.f32.mrf.mxu0
          %v1000 = vadd.f32 0.0, %v999
          %1001 = vmatmul.bf16.gmra.mxu0 %v379
          %v1002 = vpop.f32.mrf.mxu0
          %v1003 = vadd.f32 0.0, %v1002
          %v1004 = vpop.f32.mrf.mxu0
          %v1005 = vadd.f32 0.0, %v1004
          %1006 = vmatmul.bf16.gmra.mxu0 %v381
          %v1007 = vpop.f32.mrf.mxu0
          %v1008 = vadd.f32 0.0, %v1007
          %v1009 = vpop.f32.mrf.mxu0
          %v1010 = vadd.f32 0.0, %v1009
          %1011 = vmatmul.bf16.gmra.mxu0 %v383
          %v1012 = vpop.f32.mrf.mxu0
          %v1013 = vadd.f32 0.0, %v1012
          %v1014 = vpop.f32.mrf.mxu0
          %v1015 = vadd.f32 0.0, %v1014
          %1016 = vmatmul.bf16.gmra.mxu0 %v385
          %v1017 = vpop.f32.mrf.mxu0
          %v1018 = vadd.f32 0.0, %v1017
          %v1019 = vpop.f32.mrf.mxu0
          %v1020 = vadd.f32 0.0, %v1019
          %1021 = vmatmul.bf16.gmra.mxu0 %v387
          %v1022 = vpop.f32.mrf.mxu0
          %v1023 = vadd.f32 0.0, %v1022
          %v1024 = vpop.f32.mrf.mxu0
          %v1025 = vadd.f32 0.0, %v1024
          %1026 = vmatmul.bf16.gmra.mxu0 %v389
          %v1027 = vpop.f32.mrf.mxu0
          %v1028 = vadd.f32 0.0, %v1027
          %v1029 = vpop.f32.mrf.mxu0
          %v1030 = vadd.f32 0.0, %v1029
          %1031 = vmatmul.bf16.gmra.mxu0 %v391
          %v1032 = vpop.f32.mrf.mxu0
          %v1033 = vadd.f32 0.0, %v1032
          %v1034 = vpop.f32.mrf.mxu0
          %v1035 = vadd.f32 0.0, %v1034
          %1036 = vmatmul.bf16.gmra.mxu0 %v393
          %v1037 = vpop.f32.mrf.mxu0
          %v1038 = vadd.f32 0.0, %v1037
          %v1039 = vpop.f32.mrf.mxu0
          %v1040 = vadd.f32 0.0, %v1039
          %1041 = vmatmul.bf16.gmra.mxu0 %v395
          %v1042 = vpop.f32.mrf.mxu0
          %v1043 = vadd.f32 0.0, %v1042
          %v1044 = vpop.f32.mrf.mxu0
          %v1045 = vadd.f32 0.0, %v1044
          %1046 = vmatmul.bf16.gmra.mxu0 %v397
          %v1047 = vpop.f32.mrf.mxu0
          %v1048 = vadd.f32 0.0, %v1047
          %v1049 = vpop.f32.mrf.mxu0
          %v1050 = vadd.f32 0.0, %v1049
          %1051 = vmatmul.bf16.gmra.mxu0 %v399
          %v1052 = vpop.f32.mrf.mxu0
          %v1053 = vadd.f32 0.0, %v1052
          %v1054 = vpop.f32.mrf.mxu0
          %v1055 = vadd.f32 0.0, %v1054
          %1056 = vmatmul.bf16.gmra.mxu0 %v401
          %v1057 = vpop.f32.mrf.mxu0
          %v1058 = vadd.f32 0.0, %v1057
          %v1059 = vpop.f32.mrf.mxu0
          %v1060 = vadd.f32 0.0, %v1059
          %1061 = vmatmul.bf16.gmra.mxu0 %v403
          %v1062 = vpop.f32.mrf.mxu0
          %v1063 = vadd.f32 0.0, %v1062
          %v1064 = vpop.f32.mrf.mxu0
          %v1065 = vadd.f32 0.0, %v1064
          %1066 = vmatmul.bf16.gmra.mxu0 %v405
          %v1067 = vpop.f32.mrf.mxu0
          %v1068 = vadd.f32 0.0, %v1067
          %v1069 = vpop.f32.mrf.mxu0
          %v1070 = vadd.f32 0.0, %v1069
          %1071 = vdwg.mxu0
          %1072 = vmatpush.bf16.msra.mxu0 %v881
          %1073 = vmatpush.bf16.msra.mxu0 %v875
          %1074 = vmatpush.bf16.msra.mxu0 %v869
          %1075 = vmatpush.bf16.msra.mxu0 %v863
          %1076 = vmatpush.bf16.msra.mxu0 %v857
          %1077 = vmatpush.bf16.msra.mxu0 %v851
          %1078 = vmatpush.bf16.msra.mxu0 %v845
          %1079 = vmatpush.bf16.msra.mxu0 %v839
          %1080 = vmatmul.bf16.gmra.mxu0 %v376
          %v1081 = vpop.f32.mrf.mxu0
          %v1082 = vadd.f32 %v993, %v1081
          %v1083 = vpop.f32.mrf.mxu0
          %v1084 = vadd.f32 %v995, %v1083
          %1085 = vmatmul.bf16.gmra.mxu0 %v378
          %v1086 = vpop.f32.mrf.mxu0
          %v1087 = vadd.f32 %v998, %v1086
          %v1088 = vpop.f32.mrf.mxu0
          %v1089 = vadd.f32 %v1000, %v1088
          %1090 = vmatmul.bf16.gmra.mxu0 %v380
          %v1091 = vpop.f32.mrf.mxu0
          %v1092 = vadd.f32 %v1003, %v1091
          %v1093 = vpop.f32.mrf.mxu0
          %v1094 = vadd.f32 %v1005, %v1093
          %1095 = vmatmul.bf16.gmra.mxu0 %v382
          %v1096 = vpop.f32.mrf.mxu0
          %v1097 = vadd.f32 %v1008, %v1096
          %v1098 = vpop.f32.mrf.mxu0
          %v1099 = vadd.f32 %v1010, %v1098
          %1100 = vmatmul.bf16.gmra.mxu0 %v384
          %v1101 = vpop.f32.mrf.mxu0
          %v1102 = vadd.f32 %v1013, %v1101
          %v1103 = vpop.f32.mrf.mxu0
          %v1104 = vadd.f32 %v1015, %v1103
          %1105 = vmatmul.bf16.gmra.mxu0 %v386
          %v1106 = vpop.f32.mrf.mxu0
          %v1107 = vadd.f32 %v1018, %v1106
          %v1108 = vpop.f32.mrf.mxu0
          %v1109 = vadd.f32 %v1020, %v1108
          %1110 = vmatmul.bf16.gmra.mxu0 %v388
          %v1111 = vpop.f32.mrf.mxu0
          %v1112 = vadd.f32 %v1023, %v1111
          %v1113 = vpop.f32.mrf.mxu0
          %v1114 = vadd.f32 %v1025, %v1113
          %1115 = vmatmul.bf16.gmra.mxu0 %v390
          %v1116 = vpop.f32.mrf.mxu0
          %v1117 = vadd.f32 %v1028, %v1116
          %v1118 = vpop.f32.mrf.mxu0
          %v1119 = vadd.f32 %v1030, %v1118
          %1120 = vmatmul.bf16.gmra.mxu0 %v392
          %v1121 = vpop.f32.mrf.mxu0
          %v1122 = vadd.f32 %v1033, %v1121
          %v1123 = vpop.f32.mrf.mxu0
          %v1124 = vadd.f32 %v1035, %v1123
          %1125 = vmatmul.bf16.gmra.mxu0 %v394
          %v1126 = vpop.f32.mrf.mxu0
          %v1127 = vadd.f32 %v1038, %v1126
          %v1128 = vpop.f32.mrf.mxu0
          %v1129 = vadd.f32 %v1040, %v1128
          %1130 = vmatmul.bf16.gmra.mxu0 %v396
          %v1131 = vpop.f32.mrf.mxu0
          %v1132 = vadd.f32 %v1043, %v1131
          %v1133 = vpop.f32.mrf.mxu0
          %v1134 = vadd.f32 %v1045, %v1133
          %1135 = vmatmul.bf16.gmra.mxu0 %v398
          %v1136 = vpop.f32.mrf.mxu0
          %v1137 = vadd.f32 %v1048, %v1136
          %v1138 = vpop.f32.mrf.mxu0
          %v1139 = vadd.f32 %v1050, %v1138
          %1140 = vmatmul.bf16.gmra.mxu0 %v400
          %v1141 = vpop.f32.mrf.mxu0
          %v1142 = vadd.f32 %v1053, %v1141
          %v1143 = vpop.f32.mrf.mxu0
          %v1144 = vadd.f32 %v1055, %v1143
          %1145 = vmatmul.bf16.gmra.mxu0 %v402
          %v1146 = vpop.f32.mrf.mxu0
          %v1147 = vadd.f32 %v1058, %v1146
          %v1148 = vpop.f32.mrf.mxu0
          %v1149 = vadd.f32 %v1060, %v1148
          %1150 = vmatmul.bf16.gmra.mxu0 %v404
          %v1151 = vpop.f32.mrf.mxu0
          %v1152 = vadd.f32 %v1063, %v1151
          %v1153 = vpop.f32.mrf.mxu0
          %v1154 = vadd.f32 %v1065, %v1153
          %1155 = vmatmul.bf16.gmra.mxu0 %v406
          %v1156 = vpop.f32.mrf.mxu0
          %v1157 = vadd.f32 %v1068, %v1156
          %v1158 = vpop.f32.mrf.mxu0
          %v1159 = vadd.f32 %v1070, %v1158
          %1160 = vdwg.mxu0
          %1161 = vmatpush.bf16.msra.mxu0 %v834
          %1162 = vmatpush.bf16.msra.mxu0 %v828
          %1163 = vmatpush.bf16.msra.mxu0 %v822
          %1164 = vmatpush.bf16.msra.mxu0 %v816
          %1165 = vmatpush.bf16.msra.mxu0 %v810
          %1166 = vmatpush.bf16.msra.mxu0 %v804
          %1167 = vmatpush.bf16.msra.mxu0 %v798
          %1168 = vmatpush.bf16.msra.mxu0 %v792
          %1169 = vmatmul.bf16.gmra.mxu0 %v375
          %v1170 = vpop.f32.mrf.mxu0
          %v1171 = vadd.f32 0.0, %v1170
          %v1172 = vpop.f32.mrf.mxu0
          %v1173 = vadd.f32 0.0, %v1172
          %1174 = vmatmul.bf16.gmra.mxu0 %v377
          %v1175 = vpop.f32.mrf.mxu0
          %v1176 = vadd.f32 0.0, %v1175
          %v1177 = vpop.f32.mrf.mxu0
          %v1178 = vadd.f32 0.0, %v1177
          %1179 = vmatmul.bf16.gmra.mxu0 %v379
          %v1180 = vpop.f32.mrf.mxu0
          %v1181 = vadd.f32 0.0, %v1180
          %v1182 = vpop.f32.mrf.mxu0
          %v1183 = vadd.f32 0.0, %v1182
          %1184 = vmatmul.bf16.gmra.mxu0 %v381
          %v1185 = vpop.f32.mrf.mxu0
          %v1186 = vadd.f32 0.0, %v1185
          %v1187 = vpop.f32.mrf.mxu0
          %v1188 = vadd.f32 0.0, %v1187
          %1189 = vmatmul.bf16.gmra.mxu0 %v383
          %v1190 = vpop.f32.mrf.mxu0
          %v1191 = vadd.f32 0.0, %v1190
          %v1192 = vpop.f32.mrf.mxu0
          %v1193 = vadd.f32 0.0, %v1192
          %1194 = vmatmul.bf16.gmra.mxu0 %v385
          %v1195 = vpop.f32.mrf.mxu0
          %v1196 = vadd.f32 0.0, %v1195
          %v1197 = vpop.f32.mrf.mxu0
          %v1198 = vadd.f32 0.0, %v1197
          %1199 = vmatmul.bf16.gmra.mxu0 %v387
          %v1200 = vpop.f32.mrf.mxu0
          %v1201 = vadd.f32 0.0, %v1200
          %v1202 = vpop.f32.mrf.mxu0
          %v1203 = vadd.f32 0.0, %v1202
          %1204 = vmatmul.bf16.gmra.mxu0 %v389
          %v1205 = vpop.f32.mrf.mxu0
          %v1206 = vadd.f32 0.0, %v1205
          %v1207 = vpop.f32.mrf.mxu0
          %v1208 = vadd.f32 0.0, %v1207
          %1209 = vmatmul.bf16.gmra.mxu0 %v391
          %v1210 = vpop.f32.mrf.mxu0
          %v1211 = vadd.f32 0.0, %v1210
          %v1212 = vpop.f32.mrf.mxu0
          %v1213 = vadd.f32 0.0, %v1212
          %1214 = vmatmul.bf16.gmra.mxu0 %v393
          %v1215 = vpop.f32.mrf.mxu0
          %v1216 = vadd.f32 0.0, %v1215
          %v1217 = vpop.f32.mrf.mxu0
          %v1218 = vadd.f32 0.0, %v1217
          %1219 = vmatmul.bf16.gmra.mxu0 %v395
          %v1220 = vpop.f32.mrf.mxu0
          %v1221 = vadd.f32 0.0, %v1220
          %v1222 = vpop.f32.mrf.mxu0
          %v1223 = vadd.f32 0.0, %v1222
          %1224 = vmatmul.bf16.gmra.mxu0 %v397
          %v1225 = vpop.f32.mrf.mxu0
          %v1226 = vadd.f32 0.0, %v1225
          %v1227 = vpop.f32.mrf.mxu0
          %v1228 = vadd.f32 0.0, %v1227
          %1229 = vmatmul.bf16.gmra.mxu0 %v399
          %v1230 = vpop.f32.mrf.mxu0
          %v1231 = vadd.f32 0.0, %v1230
          %v1232 = vpop.f32.mrf.mxu0
          %v1233 = vadd.f32 0.0, %v1232
          %1234 = vmatmul.bf16.gmra.mxu0 %v401
          %v1235 = vpop.f32.mrf.mxu0
          %v1236 = vadd.f32 0.0, %v1235
          %v1237 = vpop.f32.mrf.mxu0
          %v1238 = vadd.f32 0.0, %v1237
          %1239 = vmatmul.bf16.gmra.mxu0 %v403
          %v1240 = vpop.f32.mrf.mxu0
          %v1241 = vadd.f32 0.0, %v1240
          %v1242 = vpop.f32.mrf.mxu0
          %v1243 = vadd.f32 0.0, %v1242
          %1244 = vmatmul.bf16.gmra.mxu0 %v405
          %v1245 = vpop.f32.mrf.mxu0
          %v1246 = vadd.f32 0.0, %v1245
          %v1247 = vpop.f32.mrf.mxu0
          %v1248 = vadd.f32 0.0, %v1247
          %1249 = vdwg.mxu0
          %1250 = vmatpush.bf16.msra.mxu0 %v882
          %1251 = vmatpush.bf16.msra.mxu0 %v876
          %1252 = vmatpush.bf16.msra.mxu0 %v870
          %1253 = vmatpush.bf16.msra.mxu0 %v864
          %1254 = vmatpush.bf16.msra.mxu0 %v858
          %1255 = vmatpush.bf16.msra.mxu0 %v852
          %1256 = vmatpush.bf16.msra.mxu0 %v846
          %1257 = vmatpush.bf16.msra.mxu0 %v840
          %1258 = vmatmul.bf16.gmra.mxu0 %v376
          %v1259 = vpop.f32.mrf.mxu0
          %v1260 = vadd.f32 %v1171, %v1259
          %v1261 = vpop.f32.mrf.mxu0
          %v1262 = vadd.f32 %v1173, %v1261
          %1263 = vmatmul.bf16.gmra.mxu0 %v378
          %v1264 = vpop.f32.mrf.mxu0
          %v1265 = vadd.f32 %v1176, %v1264
          %v1266 = vpop.f32.mrf.mxu0
          %v1267 = vadd.f32 %v1178, %v1266
          %1268 = vmatmul.bf16.gmra.mxu0 %v380
          %v1269 = vpop.f32.mrf.mxu0
          %v1270 = vadd.f32 %v1181, %v1269
          %v1271 = vpop.f32.mrf.mxu0
          %v1272 = vadd.f32 %v1183, %v1271
          %1273 = vmatmul.bf16.gmra.mxu0 %v382
          %v1274 = vpop.f32.mrf.mxu0
          %v1275 = vadd.f32 %v1186, %v1274
          %v1276 = vpop.f32.mrf.mxu0
          %v1277 = vadd.f32 %v1188, %v1276
          %1278 = vmatmul.bf16.gmra.mxu0 %v384
          %v1279 = vpop.f32.mrf.mxu0
          %v1280 = vadd.f32 %v1191, %v1279
          %v1281 = vpop.f32.mrf.mxu0
          %v1282 = vadd.f32 %v1193, %v1281
          %1283 = vmatmul.bf16.gmra.mxu0 %v386
          %v1284 = vpop.f32.mrf.mxu0
          %v1285 = vadd.f32 %v1196, %v1284
          %v1286 = vpop.f32.mrf.mxu0
          %v1287 = vadd.f32 %v1198, %v1286
          %1288 = vmatmul.bf16.gmra.mxu0 %v388
          %v1289 = vpop.f32.mrf.mxu0
          %v1290 = vadd.f32 %v1201, %v1289
          %v1291 = vpop.f32.mrf.mxu0
          %v1292 = vadd.f32 %v1203, %v1291
          %1293 = vmatmul.bf16.gmra.mxu0 %v390
          %v1294 = vpop.f32.mrf.mxu0
          %v1295 = vadd.f32 %v1206, %v1294
          %v1296 = vpop.f32.mrf.mxu0
          %v1297 = vadd.f32 %v1208, %v1296
          %1298 = vmatmul.bf16.gmra.mxu0 %v392
          %v1299 = vpop.f32.mrf.mxu0
          %v1300 = vadd.f32 %v1211, %v1299
          %v1301 = vpop.f32.mrf.mxu0
          %v1302 = vadd.f32 %v1213, %v1301
          %1303 = vmatmul.bf16.gmra.mxu0 %v394
          %v1304 = vpop.f32.mrf.mxu0
          %v1305 = vadd.f32 %v1216, %v1304
          %v1306 = vpop.f32.mrf.mxu0
          %v1307 = vadd.f32 %v1218, %v1306
          %1308 = vmatmul.bf16.gmra.mxu0 %v396
          %v1309 = vpop.f32.mrf.mxu0
          %v1310 = vadd.f32 %v1221, %v1309
          %v1311 = vpop.f32.mrf.mxu0
          %v1312 = vadd.f32 %v1223, %v1311
          %1313 = vmatmul.bf16.gmra.mxu0 %v398
          %v1314 = vpop.f32.mrf.mxu0
          %v1315 = vadd.f32 %v1226, %v1314
          %v1316 = vpop.f32.mrf.mxu0
          %v1317 = vadd.f32 %v1228, %v1316
          %1318 = vmatmul.bf16.gmra.mxu0 %v400
          %v1319 = vpop.f32.mrf.mxu0
          %v1320 = vadd.f32 %v1231, %v1319
          %v1321 = vpop.f32.mrf.mxu0
          %v1322 = vadd.f32 %v1233, %v1321
          %1323 = vmatmul.bf16.gmra.mxu0 %v402
          %v1324 = vpop.f32.mrf.mxu0
          %v1325 = vadd.f32 %v1236, %v1324
          %v1326 = vpop.f32.mrf.mxu0
          %v1327 = vadd.f32 %v1238, %v1326
          %1328 = vmatmul.bf16.gmra.mxu0 %v404
          %v1329 = vpop.f32.mrf.mxu0
          %v1330 = vadd.f32 %v1241, %v1329
          %v1331 = vpop.f32.mrf.mxu0
          %v1332 = vadd.f32 %v1243, %v1331
          %1333 = vmatmul.bf16.gmra.mxu0 %v406
          %v1334 = vpop.f32.mrf.mxu0
          %v1335 = vadd.f32 %v1246, %v1334
          %v1336 = vpop.f32.mrf.mxu0
          %v1337 = vadd.f32 %v1248, %v1336
          %1338 = vdwg.mxu0
          %1339 = vmatpush.bf16.msra.mxu0 %v835
          %1340 = vmatpush.bf16.msra.mxu0 %v829
          %1341 = vmatpush.bf16.msra.mxu0 %v823
          %1342 = vmatpush.bf16.msra.mxu0 %v817
          %1343 = vmatpush.bf16.msra.mxu0 %v811
          %1344 = vmatpush.bf16.msra.mxu0 %v805
          %1345 = vmatpush.bf16.msra.mxu0 %v799
          %1346 = vmatpush.bf16.msra.mxu0 %v793
          %1347 = vmatmul.bf16.gmra.mxu0 %v375
          %v1348 = vpop.f32.mrf.mxu0
          %v1349 = vadd.f32 0.0, %v1348
          %v1350 = vpop.f32.mrf.mxu0
          %v1351 = vadd.f32 0.0, %v1350
          %1352 = vmatmul.bf16.gmra.mxu0 %v377
          %v1353 = vpop.f32.mrf.mxu0
          %v1354 = vadd.f32 0.0, %v1353
          %v1355 = vpop.f32.mrf.mxu0
          %v1356 = vadd.f32 0.0, %v1355
          %1357 = vmatmul.bf16.gmra.mxu0 %v379
          %v1358 = vpop.f32.mrf.mxu0
          %v1359 = vadd.f32 0.0, %v1358
          %v1360 = vpop.f32.mrf.mxu0
          %v1361 = vadd.f32 0.0, %v1360
          %1362 = vmatmul.bf16.gmra.mxu0 %v381
          %v1363 = vpop.f32.mrf.mxu0
          %v1364 = vadd.f32 0.0, %v1363
          %v1365 = vpop.f32.mrf.mxu0
          %v1366 = vadd.f32 0.0, %v1365
          %1367 = vmatmul.bf16.gmra.mxu0 %v383
          %v1368 = vpop.f32.mrf.mxu0
          %v1369 = vadd.f32 0.0, %v1368
          %v1370 = vpop.f32.mrf.mxu0
          %v1371 = vadd.f32 0.0, %v1370
          %1372 = vmatmul.bf16.gmra.mxu0 %v385
          %v1373 = vpop.f32.mrf.mxu0
          %v1374 = vadd.f32 0.0, %v1373
          %v1375 = vpop.f32.mrf.mxu0
          %v1376 = vadd.f32 0.0, %v1375
          %1377 = vmatmul.bf16.gmra.mxu0 %v387
          %v1378 = vpop.f32.mrf.mxu0
          %v1379 = vadd.f32 0.0, %v1378
          %v1380 = vpop.f32.mrf.mxu0
          %v1381 = vadd.f32 0.0, %v1380
          %1382 = vmatmul.bf16.gmra.mxu0 %v389
          %v1383 = vpop.f32.mrf.mxu0
          %v1384 = vadd.f32 0.0, %v1383
          %v1385 = vpop.f32.mrf.mxu0
          %v1386 = vadd.f32 0.0, %v1385
          %1387 = vmatmul.bf16.gmra.mxu0 %v391
          %v1388 = vpop.f32.mrf.mxu0
          %v1389 = vadd.f32 0.0, %v1388
          %v1390 = vpop.f32.mrf.mxu0
          %v1391 = vadd.f32 0.0, %v1390
          %1392 = vmatmul.bf16.gmra.mxu0 %v393
          %v1393 = vpop.f32.mrf.mxu0
          %v1394 = vadd.f32 0.0, %v1393
          %v1395 = vpop.f32.mrf.mxu0
          %v1396 = vadd.f32 0.0, %v1395
          %1397 = vmatmul.bf16.gmra.mxu0 %v395
          %v1398 = vpop.f32.mrf.mxu0
          %v1399 = vadd.f32 0.0, %v1398
          %v1400 = vpop.f32.mrf.mxu0
          %v1401 = vadd.f32 0.0, %v1400
          %1402 = vmatmul.bf16.gmra.mxu0 %v397
          %v1403 = vpop.f32.mrf.mxu0
          %v1404 = vadd.f32 0.0, %v1403
          %v1405 = vpop.f32.mrf.mxu0
          %v1406 = vadd.f32 0.0, %v1405
          %1407 = vmatmul.bf16.gmra.mxu0 %v399
          %v1408 = vpop.f32.mrf.mxu0
          %v1409 = vadd.f32 0.0, %v1408
          %v1410 = vpop.f32.mrf.mxu0
          %v1411 = vadd.f32 0.0, %v1410
          %1412 = vmatmul.bf16.gmra.mxu0 %v401
          %v1413 = vpop.f32.mrf.mxu0
          %v1414 = vadd.f32 0.0, %v1413
          %v1415 = vpop.f32.mrf.mxu0
          %v1416 = vadd.f32 0.0, %v1415
          %1417 = vmatmul.bf16.gmra.mxu0 %v403
          %v1418 = vpop.f32.mrf.mxu0
          %v1419 = vadd.f32 0.0, %v1418
          %v1420 = vpop.f32.mrf.mxu0
          %v1421 = vadd.f32 0.0, %v1420
          %1422 = vmatmul.bf16.gmra.mxu0 %v405
          %v1423 = vpop.f32.mrf.mxu0
          %v1424 = vadd.f32 0.0, %v1423
          %v1425 = vpop.f32.mrf.mxu0
          %v1426 = vadd.f32 0.0, %v1425
          %1427 = vdwg.mxu0
          %1428 = vmatpush.bf16.msra.mxu0 %v883
          %1429 = vmatpush.bf16.msra.mxu0 %v877
          %1430 = vmatpush.bf16.msra.mxu0 %v871
          %1431 = vmatpush.bf16.msra.mxu0 %v865
          %1432 = vmatpush.bf16.msra.mxu0 %v859
          %1433 = vmatpush.bf16.msra.mxu0 %v853
          %1434 = vmatpush.bf16.msra.mxu0 %v847
          %1435 = vmatpush.bf16.msra.mxu0 %v841
          %1436 = vmatmul.bf16.gmra.mxu0 %v376
          %v1437 = vpop.f32.mrf.mxu0
          %v1438 = vadd.f32 %v1349, %v1437
          %v1439 = vpop.f32.mrf.mxu0
          %v1440 = vadd.f32 %v1351, %v1439
          %1441 = vmatmul.bf16.gmra.mxu0 %v378
          %v1442 = vpop.f32.mrf.mxu0
          %v1443 = vadd.f32 %v1354, %v1442
          %v1444 = vpop.f32.mrf.mxu0
          %v1445 = vadd.f32 %v1356, %v1444
          %1446 = vmatmul.bf16.gmra.mxu0 %v380
          %v1447 = vpop.f32.mrf.mxu0
          %v1448 = vadd.f32 %v1359, %v1447
          %v1449 = vpop.f32.mrf.mxu0
          %v1450 = vadd.f32 %v1361, %v1449
          %1451 = vmatmul.bf16.gmra.mxu0 %v382
          %v1452 = vpop.f32.mrf.mxu0
          %v1453 = vadd.f32 %v1364, %v1452
          %v1454 = vpop.f32.mrf.mxu0
          %v1455 = vadd.f32 %v1366, %v1454
          %1456 = vmatmul.bf16.gmra.mxu0 %v384
          %v1457 = vpop.f32.mrf.mxu0
          %v1458 = vadd.f32 %v1369, %v1457
          %v1459 = vpop.f32.mrf.mxu0
          %v1460 = vadd.f32 %v1371, %v1459
          %1461 = vmatmul.bf16.gmra.mxu0 %v386
          %v1462 = vpop.f32.mrf.mxu0
          %v1463 = vadd.f32 %v1374, %v1462
          %v1464 = vpop.f32.mrf.mxu0
          %v1465 = vadd.f32 %v1376, %v1464
          %1466 = vmatmul.bf16.gmra.mxu0 %v388
          %v1467 = vpop.f32.mrf.mxu0
          %v1468 = vadd.f32 %v1379, %v1467
          %v1469 = vpop.f32.mrf.mxu0
          %v1470 = vadd.f32 %v1381, %v1469
          %1471 = vmatmul.bf16.gmra.mxu0 %v390
          %v1472 = vpop.f32.mrf.mxu0
          %v1473 = vadd.f32 %v1384, %v1472
          %v1474 = vpop.f32.mrf.mxu0
          %v1475 = vadd.f32 %v1386, %v1474
          %1476 = vmatmul.bf16.gmra.mxu0 %v392
          %v1477 = vpop.f32.mrf.mxu0
          %v1478 = vadd.f32 %v1389, %v1477
          %v1479 = vpop.f32.mrf.mxu0
          %v1480 = vadd.f32 %v1391, %v1479
          %1481 = vmatmul.bf16.gmra.mxu0 %v394
          %v1482 = vpop.f32.mrf.mxu0
          %v1483 = vadd.f32 %v1394, %v1482
          %v1484 = vpop.f32.mrf.mxu0
          %v1485 = vadd.f32 %v1396, %v1484
          %1486 = vmatmul.bf16.gmra.mxu0 %v396
          %v1487 = vpop.f32.mrf.mxu0
          %v1488 = vadd.f32 %v1399, %v1487
          %v1489 = vpop.f32.mrf.mxu0
          %v1490 = vadd.f32 %v1401, %v1489
          %1491 = vmatmul.bf16.gmra.mxu0 %v398
          %v1492 = vpop.f32.mrf.mxu0
          %v1493 = vadd.f32 %v1404, %v1492
          %v1494 = vpop.f32.mrf.mxu0
          %v1495 = vadd.f32 %v1406, %v1494
          %1496 = vmatmul.bf16.gmra.mxu0 %v400
          %v1497 = vpop.f32.mrf.mxu0
          %v1498 = vadd.f32 %v1409, %v1497
          %v1499 = vpop.f32.mrf.mxu0
          %v1500 = vadd.f32 %v1411, %v1499
          %1501 = vmatmul.bf16.gmra.mxu0 %v402
          %v1502 = vpop.f32.mrf.mxu0
          %v1503 = vadd.f32 %v1414, %v1502
          %v1504 = vpop.f32.mrf.mxu0
          %v1505 = vadd.f32 %v1416, %v1504
          %1506 = vmatmul.bf16.gmra.mxu0 %v404
          %v1507 = vpop.f32.mrf.mxu0
          %v1508 = vadd.f32 %v1419, %v1507
          %v1509 = vpop.f32.mrf.mxu0
          %v1510 = vadd.f32 %v1421, %v1509
          %1511 = vmatmul.bf16.gmra.mxu0 %v406
          %v1512 = vpop.f32.mrf.mxu0
          %v1513 = vadd.f32 %v1424, %v1512
          %v1514 = vpop.f32.mrf.mxu0
          %v1515 = vadd.f32 %v1426, %v1514
          %1516 = vdwg.mxu0
          %1517 = vmatpush.bf16.msra.mxu0 %v836
          %1518 = vmatpush.bf16.msra.mxu0 %v830
          %1519 = vmatpush.bf16.msra.mxu0 %v824
          %1520 = vmatpush.bf16.msra.mxu0 %v818
          %1521 = vmatpush.bf16.msra.mxu0 %v812
          %1522 = vmatpush.bf16.msra.mxu0 %v806
          %1523 = vmatpush.bf16.msra.mxu0 %v800
          %1524 = vmatpush.bf16.msra.mxu0 %v794
          %1525 = vmatmul.bf16.gmra.mxu0 %v375
          %v1526 = vpop.f32.mrf.mxu0
          %v1527 = vadd.f32 0.0, %v1526
          %v1528 = vpop.f32.mrf.mxu0
          %v1529 = vadd.f32 0.0, %v1528
          %1530 = vmatmul.bf16.gmra.mxu0 %v377
          %v1531 = vpop.f32.mrf.mxu0
          %v1532 = vadd.f32 0.0, %v1531
          %v1533 = vpop.f32.mrf.mxu0
          %v1534 = vadd.f32 0.0, %v1533
          %1535 = vmatmul.bf16.gmra.mxu0 %v379
          %v1536 = vpop.f32.mrf.mxu0
          %v1537 = vadd.f32 0.0, %v1536
          %v1538 = vpop.f32.mrf.mxu0
          %v1539 = vadd.f32 0.0, %v1538
          %1540 = vmatmul.bf16.gmra.mxu0 %v381
          %v1541 = vpop.f32.mrf.mxu0
          %v1542 = vadd.f32 0.0, %v1541
          %v1543 = vpop.f32.mrf.mxu0
          %v1544 = vadd.f32 0.0, %v1543
          %1545 = vmatmul.bf16.gmra.mxu0 %v383
          %v1546 = vpop.f32.mrf.mxu0
          %v1547 = vadd.f32 0.0, %v1546
          %v1548 = vpop.f32.mrf.mxu0
          %v1549 = vadd.f32 0.0, %v1548
          %1550 = vmatmul.bf16.gmra.mxu0 %v385
          %v1551 = vpop.f32.mrf.mxu0
          %v1552 = vadd.f32 0.0, %v1551
          %v1553 = vpop.f32.mrf.mxu0
          %v1554 = vadd.f32 0.0, %v1553
          %1555 = vmatmul.bf16.gmra.mxu0 %v387
          %v1556 = vpop.f32.mrf.mxu0
          %v1557 = vadd.f32 0.0, %v1556
          %v1558 = vpop.f32.mrf.mxu0
          %v1559 = vadd.f32 0.0, %v1558
          %1560 = vmatmul.bf16.gmra.mxu0 %v389
          %v1561 = vpop.f32.mrf.mxu0
          %v1562 = vadd.f32 0.0, %v1561
          %v1563 = vpop.f32.mrf.mxu0
          %v1564 = vadd.f32 0.0, %v1563
          %1565 = vmatmul.bf16.gmra.mxu0 %v391
          %v1566 = vpop.f32.mrf.mxu0
          %v1567 = vadd.f32 0.0, %v1566
          %v1568 = vpop.f32.mrf.mxu0
          %v1569 = vadd.f32 0.0, %v1568
          %1570 = vmatmul.bf16.gmra.mxu0 %v393
          %v1571 = vpop.f32.mrf.mxu0
          %v1572 = vadd.f32 0.0, %v1571
          %v1573 = vpop.f32.mrf.mxu0
          %v1574 = vadd.f32 0.0, %v1573
          %1575 = vmatmul.bf16.gmra.mxu0 %v395
          %v1576 = vpop.f32.mrf.mxu0
          %v1577 = vadd.f32 0.0, %v1576
          %v1578 = vpop.f32.mrf.mxu0
          %v1579 = vadd.f32 0.0, %v1578
          %1580 = vmatmul.bf16.gmra.mxu0 %v397
          %v1581 = vpop.f32.mrf.mxu0
          %v1582 = vadd.f32 0.0, %v1581
          %v1583 = vpop.f32.mrf.mxu0
          %v1584 = vadd.f32 0.0, %v1583
          %1585 = vmatmul.bf16.gmra.mxu0 %v399
          %v1586 = vpop.f32.mrf.mxu0
          %v1587 = vadd.f32 0.0, %v1586
          %v1588 = vpop.f32.mrf.mxu0
          %v1589 = vadd.f32 0.0, %v1588
          %1590 = vmatmul.bf16.gmra.mxu0 %v401
          %v1591 = vpop.f32.mrf.mxu0
          %v1592 = vadd.f32 0.0, %v1591
          %v1593 = vpop.f32.mrf.mxu0
          %v1594 = vadd.f32 0.0, %v1593
          %1595 = vmatmul.bf16.gmra.mxu0 %v403
          %v1596 = vpop.f32.mrf.mxu0
          %v1597 = vadd.f32 0.0, %v1596
          %v1598 = vpop.f32.mrf.mxu0
          %v1599 = vadd.f32 0.0, %v1598
          %1600 = vmatmul.bf16.gmra.mxu0 %v405
          %v1601 = vpop.f32.mrf.mxu0
          %v1602 = vadd.f32 0.0, %v1601
          %v1603 = vpop.f32.mrf.mxu0
          %v1604 = vadd.f32 0.0, %v1603
          %1605 = vdwg.mxu0
          %1606 = vmatpush.bf16.msra.mxu0 %v884
          %1607 = vmatpush.bf16.msra.mxu0 %v878
          %1608 = vmatpush.bf16.msra.mxu0 %v872
          %1609 = vmatpush.bf16.msra.mxu0 %v866
          %1610 = vmatpush.bf16.msra.mxu0 %v860
          %1611 = vmatpush.bf16.msra.mxu0 %v854
          %1612 = vmatpush.bf16.msra.mxu0 %v848
          %1613 = vmatpush.bf16.msra.mxu0 %v842
          %1614 = vmatmul.bf16.gmra.mxu0 %v376
          %v1615 = vpop.f32.mrf.mxu0
          %v1616 = vadd.f32 %v1527, %v1615
          %v1617 = vpop.f32.mrf.mxu0
          %v1618 = vadd.f32 %v1529, %v1617
          %1619 = vmatmul.bf16.gmra.mxu0 %v378
          %v1620 = vpop.f32.mrf.mxu0
          %v1621 = vadd.f32 %v1532, %v1620
          %v1622 = vpop.f32.mrf.mxu0
          %v1623 = vadd.f32 %v1534, %v1622
          %1624 = vmatmul.bf16.gmra.mxu0 %v380
          %v1625 = vpop.f32.mrf.mxu0
          %v1626 = vadd.f32 %v1537, %v1625
          %v1627 = vpop.f32.mrf.mxu0
          %v1628 = vadd.f32 %v1539, %v1627
          %1629 = vmatmul.bf16.gmra.mxu0 %v382
          %v1630 = vpop.f32.mrf.mxu0
          %v1631 = vadd.f32 %v1542, %v1630
          %v1632 = vpop.f32.mrf.mxu0
          %v1633 = vadd.f32 %v1544, %v1632
          %1634 = vmatmul.bf16.gmra.mxu0 %v384
          %v1635 = vpop.f32.mrf.mxu0
          %v1636 = vadd.f32 %v1547, %v1635
          %v1637 = vpop.f32.mrf.mxu0
          %v1638 = vadd.f32 %v1549, %v1637
          %1639 = vmatmul.bf16.gmra.mxu0 %v386
          %v1640 = vpop.f32.mrf.mxu0
          %v1641 = vadd.f32 %v1552, %v1640
          %v1642 = vpop.f32.mrf.mxu0
          %v1643 = vadd.f32 %v1554, %v1642
          %1644 = vmatmul.bf16.gmra.mxu0 %v388
          %v1645 = vpop.f32.mrf.mxu0
          %v1646 = vadd.f32 %v1557, %v1645
          %v1647 = vpop.f32.mrf.mxu0
          %v1648 = vadd.f32 %v1559, %v1647
          %1649 = vmatmul.bf16.gmra.mxu0 %v390
          %v1650 = vpop.f32.mrf.mxu0
          %v1651 = vadd.f32 %v1562, %v1650
          %v1652 = vpop.f32.mrf.mxu0
          %v1653 = vadd.f32 %v1564, %v1652
          %1654 = vmatmul.bf16.gmra.mxu0 %v392
          %v1655 = vpop.f32.mrf.mxu0
          %v1656 = vadd.f32 %v1567, %v1655
          %v1657 = vpop.f32.mrf.mxu0
          %v1658 = vadd.f32 %v1569, %v1657
          %1659 = vmatmul.bf16.gmra.mxu0 %v394
          %v1660 = vpop.f32.mrf.mxu0
          %v1661 = vadd.f32 %v1572, %v1660
          %v1662 = vpop.f32.mrf.mxu0
          %v1663 = vadd.f32 %v1574, %v1662
          %1664 = vmatmul.bf16.gmra.mxu0 %v396
          %v1665 = vpop.f32.mrf.mxu0
          %v1666 = vadd.f32 %v1577, %v1665
          %v1667 = vpop.f32.mrf.mxu0
          %v1668 = vadd.f32 %v1579, %v1667
          %1669 = vmatmul.bf16.gmra.mxu0 %v398
          %v1670 = vpop.f32.mrf.mxu0
          %v1671 = vadd.f32 %v1582, %v1670
          %v1672 = vpop.f32.mrf.mxu0
          %v1673 = vadd.f32 %v1584, %v1672
          %1674 = vmatmul.bf16.gmra.mxu0 %v400
          %v1675 = vpop.f32.mrf.mxu0
          %v1676 = vadd.f32 %v1587, %v1675
          %v1677 = vpop.f32.mrf.mxu0
          %v1678 = vadd.f32 %v1589, %v1677
          %1679 = vmatmul.bf16.gmra.mxu0 %v402
          %v1680 = vpop.f32.mrf.mxu0
          %v1681 = vadd.f32 %v1592, %v1680
          %v1682 = vpop.f32.mrf.mxu0
          %v1683 = vadd.f32 %v1594, %v1682
          %1684 = vmatmul.bf16.gmra.mxu0 %v404
          %v1685 = vpop.f32.mrf.mxu0
          %v1686 = vadd.f32 %v1597, %v1685
          %v1687 = vpop.f32.mrf.mxu0
          %v1688 = vadd.f32 %v1599, %v1687
          %1689 = vmatmul.bf16.gmra.mxu0 %v406
          %v1690 = vpop.f32.mrf.mxu0
          %v1691 = vadd.f32 %v1602, %v1690
          %v1692 = vpop.f32.mrf.mxu0
          %v1693 = vadd.f32 %v1604, %v1692
          %1694 = vdwg.mxu0
          %1695 = vmatpush.bf16.msra.mxu0 %v837
          %1696 = vmatpush.bf16.msra.mxu0 %v831
          %1697 = vmatpush.bf16.msra.mxu0 %v825
          %1698 = vmatpush.bf16.msra.mxu0 %v819
          %1699 = vmatpush.bf16.msra.mxu0 %v813
          %1700 = vmatpush.bf16.msra.mxu0 %v807
          %1701 = vmatpush.bf16.msra.mxu0 %v801
          %1702 = vmatpush.bf16.msra.mxu0 %v795
          %1703 = vmatmul.bf16.gmra.mxu0 %v375
          %v1704 = vpop.f32.mrf.mxu0
          %v1705 = vadd.f32 0.0, %v1704
          %v1706 = vpop.f32.mrf.mxu0
          %v1707 = vadd.f32 0.0, %v1706
          %1708 = vmatmul.bf16.gmra.mxu0 %v377
          %v1709 = vpop.f32.mrf.mxu0
          %v1710 = vadd.f32 0.0, %v1709
          %v1711 = vpop.f32.mrf.mxu0
          %v1712 = vadd.f32 0.0, %v1711
          %1713 = vmatmul.bf16.gmra.mxu0 %v379
          %v1714 = vpop.f32.mrf.mxu0
          %v1715 = vadd.f32 0.0, %v1714
          %v1716 = vpop.f32.mrf.mxu0
          %v1717 = vadd.f32 0.0, %v1716
          %1718 = vmatmul.bf16.gmra.mxu0 %v381
          %v1719 = vpop.f32.mrf.mxu0
          %v1720 = vadd.f32 0.0, %v1719
          %v1721 = vpop.f32.mrf.mxu0
          %v1722 = vadd.f32 0.0, %v1721
          %1723 = vmatmul.bf16.gmra.mxu0 %v383
          %v1724 = vpop.f32.mrf.mxu0
          %v1725 = vadd.f32 0.0, %v1724
          %v1726 = vpop.f32.mrf.mxu0
          %v1727 = vadd.f32 0.0, %v1726
          %1728 = vmatmul.bf16.gmra.mxu0 %v385
          %v1729 = vpop.f32.mrf.mxu0
          %v1730 = vadd.f32 0.0, %v1729
          %v1731 = vpop.f32.mrf.mxu0
          %v1732 = vadd.f32 0.0, %v1731
          %1733 = vmatmul.bf16.gmra.mxu0 %v387
          %v1734 = vpop.f32.mrf.mxu0
          %v1735 = vadd.f32 0.0, %v1734
          %v1736 = vpop.f32.mrf.mxu0
          %v1737 = vadd.f32 0.0, %v1736
          %1738 = vmatmul.bf16.gmra.mxu0 %v389
          %v1739 = vpop.f32.mrf.mxu0
          %v1740 = vadd.f32 0.0, %v1739
          %v1741 = vpop.f32.mrf.mxu0
          %v1742 = vadd.f32 0.0, %v1741
          %1743 = vmatmul.bf16.gmra.mxu0 %v391
          %v1744 = vpop.f32.mrf.mxu0
          %v1745 = vadd.f32 0.0, %v1744
          %v1746 = vpop.f32.mrf.mxu0
          %v1747 = vadd.f32 0.0, %v1746
          %1748 = vmatmul.bf16.gmra.mxu0 %v393
          %v1749 = vpop.f32.mrf.mxu0
          %v1750 = vadd.f32 0.0, %v1749
          %v1751 = vpop.f32.mrf.mxu0
          %v1752 = vadd.f32 0.0, %v1751
          %1753 = vmatmul.bf16.gmra.mxu0 %v395
          %v1754 = vpop.f32.mrf.mxu0
          %v1755 = vadd.f32 0.0, %v1754
          %v1756 = vpop.f32.mrf.mxu0
          %v1757 = vadd.f32 0.0, %v1756
          %1758 = vmatmul.bf16.gmra.mxu0 %v397
          %v1759 = vpop.f32.mrf.mxu0
          %v1760 = vadd.f32 0.0, %v1759
          %v1761 = vpop.f32.mrf.mxu0
          %v1762 = vadd.f32 0.0, %v1761
          %1763 = vmatmul.bf16.gmra.mxu0 %v399
          %v1764 = vpop.f32.mrf.mxu0
          %v1765 = vadd.f32 0.0, %v1764
          %v1766 = vpop.f32.mrf.mxu0
          %v1767 = vadd.f32 0.0, %v1766
          %1768 = vmatmul.bf16.gmra.mxu0 %v401
          %v1769 = vpop.f32.mrf.mxu0
          %v1770 = vadd.f32 0.0, %v1769
          %v1771 = vpop.f32.mrf.mxu0
          %v1772 = vadd.f32 0.0, %v1771
          %1773 = vmatmul.bf16.gmra.mxu0 %v403
          %v1774 = vpop.f32.mrf.mxu0
          %v1775 = vadd.f32 0.0, %v1774
          %v1776 = vpop.f32.mrf.mxu0
          %v1777 = vadd.f32 0.0, %v1776
          %1778 = vmatmul.bf16.gmra.mxu0 %v405
          %v1779 = vpop.f32.mrf.mxu0
          %v1780 = vadd.f32 0.0, %v1779
          %v1781 = vpop.f32.mrf.mxu0
          %v1782 = vadd.f32 0.0, %v1781
          %1783 = vdwg.mxu0
          %1784 = vmatpush.bf16.msra.mxu0 %v885
          %1785 = vmatpush.bf16.msra.mxu0 %v879
          %1786 = vmatpush.bf16.msra.mxu0 %v873
          %1787 = vmatpush.bf16.msra.mxu0 %v867
          %1788 = vmatpush.bf16.msra.mxu0 %v861
          %1789 = vmatpush.bf16.msra.mxu0 %v855
          %1790 = vmatpush.bf16.msra.mxu0 %v849
          %1791 = vmatpush.bf16.msra.mxu0 %v843
          %1792 = vmatmul.bf16.gmra.mxu0 %v376
          %v1793 = vpop.f32.mrf.mxu0
          %v1794 = vadd.f32 %v1705, %v1793
          %v1795 = vpop.f32.mrf.mxu0
          %v1796 = vadd.f32 %v1707, %v1795
          %1797 = vmatmul.bf16.gmra.mxu0 %v378
          %v1798 = vpop.f32.mrf.mxu0
          %v1799 = vadd.f32 %v1710, %v1798
          %v1800 = vpop.f32.mrf.mxu0
          %v1801 = vadd.f32 %v1712, %v1800
          %1802 = vmatmul.bf16.gmra.mxu0 %v380
          %v1803 = vpop.f32.mrf.mxu0
          %v1804 = vadd.f32 %v1715, %v1803
          %v1805 = vpop.f32.mrf.mxu0
          %v1806 = vadd.f32 %v1717, %v1805
          %1807 = vmatmul.bf16.gmra.mxu0 %v382
          %v1808 = vpop.f32.mrf.mxu0
          %v1809 = vadd.f32 %v1720, %v1808
          %v1810 = vpop.f32.mrf.mxu0
          %v1811 = vadd.f32 %v1722, %v1810
          %1812 = vmatmul.bf16.gmra.mxu0 %v384
          %v1813 = vpop.f32.mrf.mxu0
          %v1814 = vadd.f32 %v1725, %v1813
          %v1815 = vpop.f32.mrf.mxu0
          %v1816 = vadd.f32 %v1727, %v1815
          %1817 = vmatmul.bf16.gmra.mxu0 %v386
          %v1818 = vpop.f32.mrf.mxu0
          %v1819 = vadd.f32 %v1730, %v1818
          %v1820 = vpop.f32.mrf.mxu0
          %v1821 = vadd.f32 %v1732, %v1820
          %1822 = vmatmul.bf16.gmra.mxu0 %v388
          %v1823 = vpop.f32.mrf.mxu0
          %v1824 = vadd.f32 %v1735, %v1823
          %v1825 = vpop.f32.mrf.mxu0
          %v1826 = vadd.f32 %v1737, %v1825
          %1827 = vmatmul.bf16.gmra.mxu0 %v390
          %v1828 = vpop.f32.mrf.mxu0
          %v1829 = vadd.f32 %v1740, %v1828
          %v1830 = vpop.f32.mrf.mxu0
          %v1831 = vadd.f32 %v1742, %v1830
          %1832 = vmatmul.bf16.gmra.mxu0 %v392
          %v1833 = vpop.f32.mrf.mxu0
          %v1834 = vadd.f32 %v1745, %v1833
          %v1835 = vpop.f32.mrf.mxu0
          %v1836 = vadd.f32 %v1747, %v1835
          %1837 = vmatmul.bf16.gmra.mxu0 %v394
          %v1838 = vpop.f32.mrf.mxu0
          %v1839 = vadd.f32 %v1750, %v1838
          %v1840 = vpop.f32.mrf.mxu0
          %v1841 = vadd.f32 %v1752, %v1840
          %1842 = vmatmul.bf16.gmra.mxu0 %v396
          %v1843 = vpop.f32.mrf.mxu0
          %v1844 = vadd.f32 %v1755, %v1843
          %v1845 = vpop.f32.mrf.mxu0
          %v1846 = vadd.f32 %v1757, %v1845
          %1847 = vmatmul.bf16.gmra.mxu0 %v398
          %v1848 = vpop.f32.mrf.mxu0
          %v1849 = vadd.f32 %v1760, %v1848
          %v1850 = vpop.f32.mrf.mxu0
          %v1851 = vadd.f32 %v1762, %v1850
          %1852 = vmatmul.bf16.gmra.mxu0 %v400
          %v1853 = vpop.f32.mrf.mxu0
          %v1854 = vadd.f32 %v1765, %v1853
          %v1855 = vpop.f32.mrf.mxu0
          %v1856 = vadd.f32 %v1767, %v1855
          %1857 = vmatmul.bf16.gmra.mxu0 %v402
          %v1858 = vpop.f32.mrf.mxu0
          %v1859 = vadd.f32 %v1770, %v1858
          %v1860 = vpop.f32.mrf.mxu0
          %v1861 = vadd.f32 %v1772, %v1860
          %1862 = vmatmul.bf16.gmra.mxu0 %v404
          %v1863 = vpop.f32.mrf.mxu0
          %v1864 = vadd.f32 %v1775, %v1863
          %v1865 = vpop.f32.mrf.mxu0
          %v1866 = vadd.f32 %v1777, %v1865
          %1867 = vmatmul.bf16.gmra.mxu0 %v406
          %v1868 = vpop.f32.mrf.mxu0
          %v1869 = vadd.f32 %v1780, %v1868
          %v1870 = vpop.f32.mrf.mxu0
          %v1871 = vadd.f32 %v1782, %v1870
          %1872 = vdwg.mxu0
          %1873 = vmatpush.bf16.msra.mxu0 %v838
          %1874 = vmatpush.bf16.msra.mxu0 %v832
          %1875 = vmatpush.bf16.msra.mxu0 %v826
          %1876 = vmatpush.bf16.msra.mxu0 %v820
          %1877 = vmatpush.bf16.msra.mxu0 %v814
          %1878 = vmatpush.bf16.msra.mxu0 %v808
          %1879 = vmatpush.bf16.msra.mxu0 %v802
          %1880 = vmatpush.bf16.msra.mxu0 %v796
          %1881 = vmatmul.bf16.gmra.mxu0 %v375
          %v1882 = vpop.f32.mrf.mxu0
          %v1883 = vadd.f32 0.0, %v1882
          %v1884 = vpop.f32.mrf.mxu0
          %v1885 = vadd.f32 0.0, %v1884
          %1886 = vmatmul.bf16.gmra.mxu0 %v377
          %v1887 = vpop.f32.mrf.mxu0
          %v1888 = vadd.f32 0.0, %v1887
          %v1889 = vpop.f32.mrf.mxu0
          %v1890 = vadd.f32 0.0, %v1889
          %1891 = vmatmul.bf16.gmra.mxu0 %v379
          %v1892 = vpop.f32.mrf.mxu0
          %v1893 = vadd.f32 0.0, %v1892
          %v1894 = vpop.f32.mrf.mxu0
          %v1895 = vadd.f32 0.0, %v1894
          %1896 = vmatmul.bf16.gmra.mxu0 %v381
          %v1897 = vpop.f32.mrf.mxu0
          %v1898 = vadd.f32 0.0, %v1897
          %v1899 = vpop.f32.mrf.mxu0
          %v1900 = vadd.f32 0.0, %v1899
          %1901 = vmatmul.bf16.gmra.mxu0 %v383
          %v1902 = vpop.f32.mrf.mxu0
          %v1903 = vadd.f32 0.0, %v1902
          %v1904 = vpop.f32.mrf.mxu0
          %v1905 = vadd.f32 0.0, %v1904
          %1906 = vmatmul.bf16.gmra.mxu0 %v385
          %v1907 = vpop.f32.mrf.mxu0
          %v1908 = vadd.f32 0.0, %v1907
          %v1909 = vpop.f32.mrf.mxu0
          %v1910 = vadd.f32 0.0, %v1909
          %1911 = vmatmul.bf16.gmra.mxu0 %v387
          %v1912 = vpop.f32.mrf.mxu0
          %v1913 = vadd.f32 0.0, %v1912
          %v1914 = vpop.f32.mrf.mxu0
          %v1915 = vadd.f32 0.0, %v1914
          %1916 = vmatmul.bf16.gmra.mxu0 %v389
          %v1917 = vpop.f32.mrf.mxu0
          %v1918 = vadd.f32 0.0, %v1917
          %v1919 = vpop.f32.mrf.mxu0
          %v1920 = vadd.f32 0.0, %v1919
          %1921 = vmatmul.bf16.gmra.mxu0 %v391
          %v1922 = vpop.f32.mrf.mxu0
          %v1923 = vadd.f32 0.0, %v1922
          %v1924 = vpop.f32.mrf.mxu0
          %v1925 = vadd.f32 0.0, %v1924
          %1926 = vmatmul.bf16.gmra.mxu0 %v393
          %v1927 = vpop.f32.mrf.mxu0
          %v1928 = vadd.f32 0.0, %v1927
          %v1929 = vpop.f32.mrf.mxu0
          %v1930 = vadd.f32 0.0, %v1929
          %1931 = vmatmul.bf16.gmra.mxu0 %v395
          %v1932 = vpop.f32.mrf.mxu0
          %v1933 = vadd.f32 0.0, %v1932
          %v1934 = vpop.f32.mrf.mxu0
          %v1935 = vadd.f32 0.0, %v1934
          %1936 = vmatmul.bf16.gmra.mxu0 %v397
          %v1937 = vpop.f32.mrf.mxu0
          %v1938 = vadd.f32 0.0, %v1937
          %v1939 = vpop.f32.mrf.mxu0
          %v1940 = vadd.f32 0.0, %v1939
          %1941 = vmatmul.bf16.gmra.mxu0 %v399
          %v1942 = vpop.f32.mrf.mxu0
          %v1943 = vadd.f32 0.0, %v1942
          %v1944 = vpop.f32.mrf.mxu0
          %v1945 = vadd.f32 0.0, %v1944
          %1946 = vmatmul.bf16.gmra.mxu0 %v401
          %v1947 = vpop.f32.mrf.mxu0
          %v1948 = vadd.f32 0.0, %v1947
          %v1949 = vpop.f32.mrf.mxu0
          %v1950 = vadd.f32 0.0, %v1949
          %1951 = vmatmul.bf16.gmra.mxu0 %v403
          %v1952 = vpop.f32.mrf.mxu0
          %v1953 = vadd.f32 0.0, %v1952
          %v1954 = vpop.f32.mrf.mxu0
          %v1955 = vadd.f32 0.0, %v1954
          %1956 = vmatmul.bf16.gmra.mxu0 %v405
          %v1957 = vpop.f32.mrf.mxu0
          %v1958 = vadd.f32 0.0, %v1957
          %v1959 = vpop.f32.mrf.mxu0
          %v1960 = vadd.f32 0.0, %v1959
          %1961 = vdwg.mxu0
          %1962 = vmatpush.bf16.msra.mxu0 %v886
          %1963 = vmatpush.bf16.msra.mxu0 %v880
          %1964 = vmatpush.bf16.msra.mxu0 %v874
          %1965 = vmatpush.bf16.msra.mxu0 %v868
          %1966 = vmatpush.bf16.msra.mxu0 %v862
          %1967 = vmatpush.bf16.msra.mxu0 %v856
          %1968 = vmatpush.bf16.msra.mxu0 %v850
          %1969 = vmatpush.bf16.msra.mxu0 %v844
          %1970 = vmatmul.bf16.gmra.mxu0 %v376
          %v1971 = vpop.f32.mrf.mxu0
          %v1972 = vadd.f32 %v1883, %v1971
          %v1973 = vpop.f32.mrf.mxu0
          %v1974 = vadd.f32 %v1885, %v1973
          %1975 = vmatmul.bf16.gmra.mxu0 %v378
          %v1976 = vpop.f32.mrf.mxu0
          %v1977 = vadd.f32 %v1888, %v1976
          %v1978 = vpop.f32.mrf.mxu0
          %v1979 = vadd.f32 %v1890, %v1978
          %1980 = vmatmul.bf16.gmra.mxu0 %v380
          %v1981 = vpop.f32.mrf.mxu0
          %v1982 = vadd.f32 %v1893, %v1981
          %v1983 = vpop.f32.mrf.mxu0
          %v1984 = vadd.f32 %v1895, %v1983
          %1985 = vmatmul.bf16.gmra.mxu0 %v382
          %v1986 = vpop.f32.mrf.mxu0
          %v1987 = vadd.f32 %v1898, %v1986
          %v1988 = vpop.f32.mrf.mxu0
          %v1989 = vadd.f32 %v1900, %v1988
          %1990 = vmatmul.bf16.gmra.mxu0 %v384
          %v1991 = vpop.f32.mrf.mxu0
          %v1992 = vadd.f32 %v1903, %v1991
          %v1993 = vpop.f32.mrf.mxu0
          %v1994 = vadd.f32 %v1905, %v1993
          %1995 = vmatmul.bf16.gmra.mxu0 %v386
          %v1996 = vpop.f32.mrf.mxu0
          %v1997 = vadd.f32 %v1908, %v1996
          %v1998 = vpop.f32.mrf.mxu0
          %v1999 = vadd.f32 %v1910, %v1998
          %2000 = vmatmul.bf16.gmra.mxu0 %v388
          %v2001 = vpop.f32.mrf.mxu0
          %v2002 = vadd.f32 %v1913, %v2001
          %v2003 = vpop.f32.mrf.mxu0
          %v2004 = vadd.f32 %v1915, %v2003
          %2005 = vmatmul.bf16.gmra.mxu0 %v390
          %v2006 = vpop.f32.mrf.mxu0
          %v2007 = vadd.f32 %v1918, %v2006
          %v2008 = vpop.f32.mrf.mxu0
          %v2009 = vadd.f32 %v1920, %v2008
          %2010 = vmatmul.bf16.gmra.mxu0 %v392
          %v2011 = vpop.f32.mrf.mxu0
          %v2012 = vadd.f32 %v1923, %v2011
          %v2013 = vpop.f32.mrf.mxu0
          %v2014 = vadd.f32 %v1925, %v2013
          %2015 = vmatmul.bf16.gmra.mxu0 %v394
          %v2016 = vpop.f32.mrf.mxu0
          %v2017 = vadd.f32 %v1928, %v2016
          %v2018 = vpop.f32.mrf.mxu0
          %v2019 = vadd.f32 %v1930, %v2018
          %2020 = vmatmul.bf16.gmra.mxu0 %v396
          %v2021 = vpop.f32.mrf.mxu0
          %v2022 = vadd.f32 %v1933, %v2021
          %v2023 = vpop.f32.mrf.mxu0
          %v2024 = vadd.f32 %v1935, %v2023
          %2025 = vmatmul.bf16.gmra.mxu0 %v398
          %v2026 = vpop.f32.mrf.mxu0
          %v2027 = vadd.f32 %v1938, %v2026
          %v2028 = vpop.f32.mrf.mxu0
          %v2029 = vadd.f32 %v1940, %v2028
          %2030 = vmatmul.bf16.gmra.mxu0 %v400
          %v2031 = vpop.f32.mrf.mxu0
          %v2032 = vadd.f32 %v1943, %v2031
          %v2033 = vpop.f32.mrf.mxu0
          %v2034 = vadd.f32 %v1945, %v2033
          %2035 = vmatmul.bf16.gmra.mxu0 %v402
          %v2036 = vpop.f32.mrf.mxu0
          %v2037 = vadd.f32 %v1948, %v2036
          %v2038 = vpop.f32.mrf.mxu0
          %v2039 = vadd.f32 %v1950, %v2038
          %2040 = vmatmul.bf16.gmra.mxu0 %v404
          %v2041 = vpop.f32.mrf.mxu0
          %v2042 = vadd.f32 %v1953, %v2041
          %v2043 = vpop.f32.mrf.mxu0
          %v2044 = vadd.f32 %v1955, %v2043
          %2045 = vmatmul.bf16.gmra.mxu0 %v406
          %v2046 = vpop.f32.mrf.mxu0
          %v2047 = vadd.f32 %v1958, %v2046
          %v2048 = vpop.f32.mrf.mxu0
          %v2049 = vadd.f32 %v1960, %v2048
          %2050 = vdwg.mxu0
          %v2051 = vpack.c.bf16 %v1260, %v1082
          %v2052 = vpack.c.bf16 %v1616, %v1438
          %v2053 = vpack.c.bf16 %v1972, %v1794
          %v2054 = vpack.c.bf16 %v1262, %v1084
          %v2055 = vpack.c.bf16 %v1618, %v1440
          %v2056 = vpack.c.bf16 %v1974, %v1796
          %v2057 = vpack.c.bf16 %v1265, %v1087
          %v2058 = vpack.c.bf16 %v1621, %v1443
          %v2059 = vpack.c.bf16 %v1977, %v1799
          %v2060 = vpack.c.bf16 %v1267, %v1089
          %v2061 = vpack.c.bf16 %v1623, %v1445
          %v2062 = vpack.c.bf16 %v1979, %v1801
          %v2063 = vpack.c.bf16 %v1270, %v1092
          %v2064 = vpack.c.bf16 %v1626, %v1448
          %v2065 = vpack.c.bf16 %v1982, %v1804
          %v2066 = vpack.c.bf16 %v1272, %v1094
          %v2067 = vpack.c.bf16 %v1628, %v1450
          %v2068 = vpack.c.bf16 %v1984, %v1806
          %v2069 = vpack.c.bf16 %v1275, %v1097
          %v2070 = vpack.c.bf16 %v1631, %v1453
          %v2071 = vpack.c.bf16 %v1987, %v1809
          %v2072 = vpack.c.bf16 %v1277, %v1099
          %v2073 = vpack.c.bf16 %v1633, %v1455
          %v2074 = vpack.c.bf16 %v1989, %v1811
          %v2075 = vpack.c.bf16 %v1280, %v1102
          %v2076 = vpack.c.bf16 %v1636, %v1458
          %v2077 = vpack.c.bf16 %v1992, %v1814
          %v2078 = vpack.c.bf16 %v1282, %v1104
          %v2079 = vpack.c.bf16 %v1638, %v1460
          %v2080 = vpack.c.bf16 %v1994, %v1816
          %v2081 = vpack.c.bf16 %v1285, %v1107
          %v2082 = vpack.c.bf16 %v1641, %v1463
          %v2083 = vpack.c.bf16 %v1997, %v1819
          %v2084 = vpack.c.bf16 %v1287, %v1109
          %v2085 = vpack.c.bf16 %v1643, %v1465
          %v2086 = vpack.c.bf16 %v1999, %v1821
          %v2087 = vpack.c.bf16 %v1290, %v1112
          %v2088 = vpack.c.bf16 %v1646, %v1468
          %v2089 = vpack.c.bf16 %v2002, %v1824
          %v2090 = vpack.c.bf16 %v1292, %v1114
          %v2091 = vpack.c.bf16 %v1648, %v1470
          %v2092 = vpack.c.bf16 %v2004, %v1826
          %v2093 = vpack.c.bf16 %v1295, %v1117
          %v2094 = vpack.c.bf16 %v1651, %v1473
          %v2095 = vpack.c.bf16 %v2007, %v1829
          %v2096 = vpack.c.bf16 %v1297, %v1119
          %v2097 = vpack.c.bf16 %v1653, %v1475
          %v2098 = vpack.c.bf16 %v2009, %v1831
          %v2099 = vpack.c.bf16 %v1300, %v1122
          %v2100 = vpack.c.bf16 %v1656, %v1478
          %v2101 = vpack.c.bf16 %v2012, %v1834
          %v2102 = vpack.c.bf16 %v1302, %v1124
          %v2103 = vpack.c.bf16 %v1658, %v1480
          %v2104 = vpack.c.bf16 %v2014, %v1836
          %v2105 = vpack.c.bf16 %v1305, %v1127
          %v2106 = vpack.c.bf16 %v1661, %v1483
          %v2107 = vpack.c.bf16 %v2017, %v1839
          %v2108 = vpack.c.bf16 %v1307, %v1129
          %v2109 = vpack.c.bf16 %v1663, %v1485
          %v2110 = vpack.c.bf16 %v2019, %v1841
          %v2111 = vpack.c.bf16 %v1310, %v1132
          %v2112 = vpack.c.bf16 %v1666, %v1488
          %v2113 = vpack.c.bf16 %v2022, %v1844
          %v2114 = vpack.c.bf16 %v1312, %v1134
          %v2115 = vpack.c.bf16 %v1668, %v1490
          %v2116 = vpack.c.bf16 %v2024, %v1846
          %v2117 = vpack.c.bf16 %v1315, %v1137
          %v2118 = vpack.c.bf16 %v1671, %v1493
          %v2119 = vpack.c.bf16 %v2027, %v1849
          %v2120 = vpack.c.bf16 %v1317, %v1139
          %v2121 = vpack.c.bf16 %v1673, %v1495
          %v2122 = vpack.c.bf16 %v2029, %v1851
          %v2123 = vpack.c.bf16 %v1320, %v1142
          %v2124 = vpack.c.bf16 %v1676, %v1498
          %v2125 = vpack.c.bf16 %v2032, %v1854
          %v2126 = vpack.c.bf16 %v1322, %v1144
          %v2127 = vpack.c.bf16 %v1678, %v1500
          %v2128 = vpack.c.bf16 %v2034, %v1856
          %v2129 = vpack.c.bf16 %v1325, %v1147
          %v2130 = vpack.c.bf16 %v1681, %v1503
          %v2131 = vpack.c.bf16 %v2037, %v1859
          %v2132 = vpack.c.bf16 %v1327, %v1149
          %v2133 = vpack.c.bf16 %v1683, %v1505
          %v2134 = vpack.c.bf16 %v2039, %v1861
          %v2135 = vpack.c.bf16 %v1330, %v1152
          %v2136 = vpack.c.bf16 %v1686, %v1508
          %v2137 = vpack.c.bf16 %v2042, %v1864
          %v2138 = vpack.c.bf16 %v1332, %v1154
          %v2139 = vpack.c.bf16 %v1688, %v1510
          %v2140 = vpack.c.bf16 %v2044, %v1866
          %v2141 = vpack.c.bf16 %v1335, %v1157
          %v2142 = vpack.c.bf16 %v1691, %v1513
          %v2143 = vpack.c.bf16 %v2047, %v1869
          %v2144 = vpack.c.bf16 %v1337, %v1159
          %v2145 = vpack.c.bf16 %v1693, %v1515
          %v2146 = vpack.c.bf16 %v2049, %v1871
          %2147 = vst [vmem:[#allocation2] sm:$0xff] %v2051
          %2148 = vst [vmem:[#allocation2 + $0x8] sm:$0xff] %v2052
          %2149 = vst [vmem:[#allocation2 + $0x10] sm:$0xff] %v2053
          %2150 = vst [vmem:[#allocation2 + $0x18] sm:$0xff] %v2054
          %2151 = vst [vmem:[#allocation2 + $0x20] sm:$0xff] %v2055
          %2152 = vst [vmem:[#allocation2 + $0x28] sm:$0xff] %v2056
          %2153 = vst [vmem:[#allocation2 + $0x30] sm:$0xff] %v2057
          %2154 = vst [vmem:[#allocation2 + $0x38] sm:$0xff] %v2058
          %2155 = vst [vmem:[#allocation2 + $0x40] sm:$0xff] %v2059
          %2156 = vst [vmem:[#allocation2 + $0x48] sm:$0xff] %v2060
          %2157 = vst [vmem:[#allocation2 + $0x50] sm:$0xff] %v2061
          %2158 = vst [vmem:[#allocation2 + $0x58] sm:$0xff] %v2062
          %2159 = vst [vmem:[#allocation2 + $0x60] sm:$0xff] %v2063
          %2160 = vst [vmem:[#allocation2 + $0x68] sm:$0xff] %v2064
          %2161 = vst [vmem:[#allocation2 + $0x70] sm:$0xff] %v2065
          %2162 = vst [vmem:[#allocation2 + $0x78] sm:$0xff] %v2066
          %2163 = vst [vmem:[#allocation2 + $0x80] sm:$0xff] %v2067
          %2164 = vst [vmem:[#allocation2 + $0x88] sm:$0xff] %v2068
          %2165 = vst [vmem:[#allocation2 + $0x90] sm:$0xff] %v2069
          %2166 = vst [vmem:[#allocation2 + $0x98] sm:$0xff] %v2070
          %2167 = vst [vmem:[#allocation2 + $0xa0] sm:$0xff] %v2071
          %2168 = vst [vmem:[#allocation2 + $0xa8] sm:$0xff] %v2072
          %2169 = vst [vmem:[#allocation2 + $0xb0] sm:$0xff] %v2073
          %2170 = vst [vmem:[#allocation2 + $0xb8] sm:$0xff] %v2074
          %2171 = vst [vmem:[#allocation2 + $0xc0] sm:$0xff] %v2075
          %2172 = vst [vmem:[#allocation2 + $0xc8] sm:$0xff] %v2076
          %2173 = vst [vmem:[#allocation2 + $0xd0] sm:$0xff] %v2077
          %2174 = vst [vmem:[#allocation2 + $0xd8] sm:$0xff] %v2078
          %2175 = vst [vmem:[#allocation2 + $0xe0] sm:$0xff] %v2079
          %2176 = vst [vmem:[#allocation2 + $0xe8] sm:$0xff] %v2080
          %2177 = vst [vmem:[#allocation2 + $0xf0] sm:$0xff] %v2081
          %2178 = vst [vmem:[#allocation2 + $0xf8] sm:$0xff] %v2082
          %2179 = vst [vmem:[#allocation2 + $0x100] sm:$0xff] %v2083
          %2180 = vst [vmem:[#allocation2 + $0x108] sm:$0xff] %v2084
          %2181 = vst [vmem:[#allocation2 + $0x110] sm:$0xff] %v2085
          %2182 = vst [vmem:[#allocation2 + $0x118] sm:$0xff] %v2086
          %2183 = vst [vmem:[#allocation2 + $0x120] sm:$0xff] %v2087
          %2184 = vst [vmem:[#allocation2 + $0x128] sm:$0xff] %v2088
          %2185 = vst [vmem:[#allocation2 + $0x130] sm:$0xff] %v2089
          %2186 = vst [vmem:[#allocation2 + $0x138] sm:$0xff] %v2090
          %2187 = vst [vmem:[#allocation2 + $0x140] sm:$0xff] %v2091
          %2188 = vst [vmem:[#allocation2 + $0x148] sm:$0xff] %v2092
          %2189 = vst [vmem:[#allocation2 + $0x150] sm:$0xff] %v2093
          %2190 = vst [vmem:[#allocation2 + $0x158] sm:$0xff] %v2094
          %2191 = vst [vmem:[#allocation2 + $0x160] sm:$0xff] %v2095
          %2192 = vst [vmem:[#allocation2 + $0x168] sm:$0xff] %v2096
          %2193 = vst [vmem:[#allocation2 + $0x170] sm:$0xff] %v2097
          %2194 = vst [vmem:[#allocation2 + $0x178] sm:$0xff] %v2098
          %2195 = vst [vmem:[#allocation2 + $0x180] sm:$0xff] %v2099
          %2196 = vst [vmem:[#allocation2 + $0x188] sm:$0xff] %v2100
          %2197 = vst [vmem:[#allocation2 + $0x190] sm:$0xff] %v2101
          %2198 = vst [vmem:[#allocation2 + $0x198] sm:$0xff] %v2102
          %2199 = vst [vmem:[#allocation2 + $0x1a0] sm:$0xff] %v2103
          %2200 = vst [vmem:[#allocation2 + $0x1a8] sm:$0xff] %v2104
          %2201 = vst [vmem:[#allocation2 + $0x1b0] sm:$0xff] %v2105
          %2202 = vst [vmem:[#allocation2 + $0x1b8] sm:$0xff] %v2106
          %2203 = vst [vmem:[#allocation2 + $0x1c0] sm:$0xff] %v2107
          %2204 = vst [vmem:[#allocation2 + $0x1c8] sm:$0xff] %v2108
          %2205 = vst [vmem:[#allocation2 + $0x1d0] sm:$0xff] %v2109
          %2206 = vst [vmem:[#allocation2 + $0x1d8] sm:$0xff] %v2110
          %2207 = vst [vmem:[#allocation2 + $0x1e0] sm:$0xff] %v2111
          %2208 = vst [vmem:[#allocation2 + $0x1e8] sm:$0xff] %v2112
          %2209 = vst [vmem:[#allocation2 + $0x1f0] sm:$0xff] %v2113
          %2210 = vst [vmem:[#allocation2 + $0x1f8] sm:$0xff] %v2114
          %2211 = vst [vmem:[#allocation2 + $0x200] sm:$0xff] %v2115
          %2212 = vst [vmem:[#allocation2 + $0x208] sm:$0xff] %v2116
          %2213 = vst [vmem:[#allocation2 + $0x210] sm:$0xff] %v2117
          %2214 = vst [vmem:[#allocation2 + $0x218] sm:$0xff] %v2118
          %2215 = vst [vmem:[#allocation2 + $0x220] sm:$0xff] %v2119
          %2216 = vst [vmem:[#allocation2 + $0x228] sm:$0xff] %v2120
          %2217 = vst [vmem:[#allocation2 + $0x230] sm:$0xff] %v2121
          %2218 = vst [vmem:[#allocation2 + $0x238] sm:$0xff] %v2122
          %2219 = vst [vmem:[#allocation2 + $0x240] sm:$0xff] %v2123
          %2220 = vst [vmem:[#allocation2 + $0x248] sm:$0xff] %v2124
          %2221 = vst [vmem:[#allocation2 + $0x250] sm:$0xff] %v2125
          %2222 = vst [vmem:[#allocation2 + $0x258] sm:$0xff] %v2126
          %2223 = vst [vmem:[#allocation2 + $0x260] sm:$0xff] %v2127
          %2224 = vst [vmem:[#allocation2 + $0x268] sm:$0xff] %v2128
          %2225 = vst [vmem:[#allocation2 + $0x270] sm:$0xff] %v2129
          %2226 = vst [vmem:[#allocation2 + $0x278] sm:$0xff] %v2130
          %2227 = vst [vmem:[#allocation2 + $0x280] sm:$0xff] %v2131
          %2228 = vst [vmem:[#allocation2 + $0x288] sm:$0xff] %v2132
          %2229 = vst [vmem:[#allocation2 + $0x290] sm:$0xff] %v2133
          %2230 = vst [vmem:[#allocation2 + $0x298] sm:$0xff] %v2134
          %2231 = vst [vmem:[#allocation2 + $0x2a0] sm:$0xff] %v2135
          %2232 = vst [vmem:[#allocation2 + $0x2a8] sm:$0xff] %v2136
          %2233 = vst [vmem:[#allocation2 + $0x2b0] sm:$0xff] %v2137
          %2234 = vst [vmem:[#allocation2 + $0x2b8] sm:$0xff] %v2138
          %2235 = vst [vmem:[#allocation2 + $0x2c0] sm:$0xff] %v2139
          %2236 = vst [vmem:[#allocation2 + $0x2c8] sm:$0xff] %v2140
          %2237 = vst [vmem:[#allocation2 + $0x2d0] sm:$0xff] %v2141
          %2238 = vst [vmem:[#allocation2 + $0x2d8] sm:$0xff] %v2142
          %2239 = vst [vmem:[#allocation2 + $0x2e0] sm:$0xff] %v2143
          %2240 = vst [vmem:[#allocation2 + $0x2e8] sm:$0xff] %v2144
          %2241 = vst [vmem:[#allocation2 + $0x2f0] sm:$0xff] %v2145
          %2242 = vst [vmem:[#allocation2 + $0x2f8] sm:$0xff] %v2146
        $region52: #{tpu_custom_call.1} parent=35 // pred_fallthru
          _
        %s2243 = smul.u32 %s32, 128
        %s2244 = sshra.s32 %s2243, 3
        %s2245 = sand.u32 %s2243, 7
        %s2246 = smul.u32 %s2244, 6
        %s2247 = smul.addr %s2246, 4
        %s2248 = scalar_lea.vmem [#allocation2], %s2247
        %v2249 = vld [vmem:[%s2248] sm:$0xf]
        %v2250 = vld [vmem:[%s2248 + $0x18] sm:$0xf]
        %v2251 = vld [vmem:[%s2248 + $0x30] sm:$0xf]
        %v2252 = vld [vmem:[%s2248 + $0x48] sm:$0xf]
        %v2253 = vld [vmem:[%s2248 + $0x60] sm:$0xf]
        %v2254 = vld [vmem:[%s2248 + $0x78] sm:$0xf]
        %v2255 = vld [vmem:[%s2248 + $0x90] sm:$0xf]
        %v2256 = vld [vmem:[%s2248 + $0xa8] sm:$0xf]
        %v2257 = vld [vmem:[%s2248 + $0xc0] sm:$0xf]
        %v2258 = vld [vmem:[%s2248 + $0xd8] sm:$0xf]
        %v2259 = vld [vmem:[%s2248 + $0xf0] sm:$0xf]
        %v2260 = vld [vmem:[%s2248 + $0x108] sm:$0xf]
        %v2261 = vld [vmem:[%s2248 + $0x120] sm:$0xf]
        %v2262 = vld [vmem:[%s2248 + $0x138] sm:$0xf]
        %v2263 = vld [vmem:[%s2248 + $0x150] sm:$0xf]
        %v2264 = vld [vmem:[%s2248 + $0x168] sm:$0xf]
        %v2265 = vld [vmem:[#allocation2 + $0x8] sm:$0xf]
        %v2266 = vld [vmem:[#allocation2 + $0x20] sm:$0xf]
        %v2267 = vld [vmem:[#allocation2 + $0x38] sm:$0xf]
        %v2268 = vld [vmem:[#allocation2 + $0x50] sm:$0xf]
        %v2269 = vld [vmem:[#allocation2 + $0x68] sm:$0xf]
        %v2270 = vld [vmem:[#allocation2 + $0x80] sm:$0xf]
        %v2271 = vld [vmem:[#allocation2 + $0x98] sm:$0xf]
        %v2272 = vld [vmem:[#allocation2 + $0xb0] sm:$0xf]
        %v2273 = vld [vmem:[#allocation2 + $0xc8] sm:$0xf]
        %v2274 = vld [vmem:[#allocation2 + $0xe0] sm:$0xf]
        %v2275 = vld [vmem:[#allocation2 + $0xf8] sm:$0xf]
        %v2276 = vld [vmem:[#allocation2 + $0x110] sm:$0xf]
        %v2277 = vld [vmem:[#allocation2 + $0x128] sm:$0xf]
        %v2278 = vld [vmem:[#allocation2 + $0x140] sm:$0xf]
        %v2279 = vld [vmem:[#allocation2 + $0x158] sm:$0xf]
        %v2280 = vld [vmem:[#allocation2 + $0x170] sm:$0xf]
        %v2281 = vld [vmem:[#allocation2 + $0x188] sm:$0xf]
        %v2282 = vld [vmem:[#allocation2 + $0x1a0] sm:$0xf]
        %v2283 = vld [vmem:[#allocation2 + $0x1b8] sm:$0xf]
        %v2284 = vld [vmem:[#allocation2 + $0x1d0] sm:$0xf]
        %v2285 = vld [vmem:[#allocation2 + $0x1e8] sm:$0xf]
        %v2286 = vld [vmem:[#allocation2 + $0x200] sm:$0xf]
        %v2287 = vld [vmem:[#allocation2 + $0x218] sm:$0xf]
        %v2288 = vld [vmem:[#allocation2 + $0x230] sm:$0xf]
        %v2289 = vld [vmem:[#allocation2 + $0x248] sm:$0xf]
        %v2290 = vld [vmem:[#allocation2 + $0x260] sm:$0xf]
        %v2291 = vld [vmem:[#allocation2 + $0x278] sm:$0xf]
        %v2292 = vld [vmem:[#allocation2 + $0x290] sm:$0xf]
        %v2293 = vld [vmem:[#allocation2 + $0x2a8] sm:$0xf]
        %v2294 = vld [vmem:[#allocation2 + $0x2c0] sm:$0xf]
        %v2295 = vld [vmem:[#allocation2 + $0x2d8] sm:$0xf]
        %v2296 = vld [vmem:[#allocation2 + $0x2f0] sm:$0xf]
        %v2297 = vld [vmem:[#allocation2 + $0x10] sm:$0xf]
        %v2298 = vld [vmem:[#allocation2 + $0x28] sm:$0xf]
        %v2299 = vld [vmem:[#allocation2 + $0x40] sm:$0xf]
        %v2300 = vld [vmem:[#allocation2 + $0x58] sm:$0xf]
        %v2301 = vld [vmem:[#allocation2 + $0x70] sm:$0xf]
        %v2302 = vld [vmem:[#allocation2 + $0x88] sm:$0xf]
        %v2303 = vld [vmem:[#allocation2 + $0xa0] sm:$0xf]
        %v2304 = vld [vmem:[#allocation2 + $0xb8] sm:$0xf]
        %v2305 = vld [vmem:[#allocation2 + $0xd0] sm:$0xf]
        %v2306 = vld [vmem:[#allocation2 + $0xe8] sm:$0xf]
        %v2307 = vld [vmem:[#allocation2 + $0x100] sm:$0xf]
        %v2308 = vld [vmem:[#allocation2 + $0x118] sm:$0xf]
        %v2309 = vld [vmem:[#allocation2 + $0x130] sm:$0xf]
        %v2310 = vld [vmem:[#allocation2 + $0x148] sm:$0xf]
        %v2311 = vld [vmem:[#allocation2 + $0x160] sm:$0xf]
        %v2312 = vld [vmem:[#allocation2 + $0x178] sm:$0xf]
        %v2313 = vld [vmem:[#allocation2 + $0x190] sm:$0xf]
        %v2314 = vld [vmem:[#allocation2 + $0x1a8] sm:$0xf]
        %v2315 = vld [vmem:[#allocation2 + $0x1c0] sm:$0xf]
        %v2316 = vld [vmem:[#allocation2 + $0x1d8] sm:$0xf]
        %v2317 = vld [vmem:[#allocation2 + $0x1f0] sm:$0xf]
        %v2318 = vld [vmem:[#allocation2 + $0x208] sm:$0xf]
        %v2319 = vld [vmem:[#allocation2 + $0x220] sm:$0xf]
        %v2320 = vld [vmem:[#allocation2 + $0x238] sm:$0xf]
        %v2321 = vld [vmem:[#allocation2 + $0x250] sm:$0xf]
        %v2322 = vld [vmem:[#allocation2 + $0x268] sm:$0xf]
        %v2323 = vld [vmem:[#allocation2 + $0x280] sm:$0xf]
        %v2324 = vld [vmem:[#allocation2 + $0x298] sm:$0xf]
        %v2325 = vld [vmem:[#allocation2 + $0x2b0] sm:$0xf]
        %v2326 = vld [vmem:[#allocation2 + $0x2c8] sm:$0xf]
        %v2327 = vld [vmem:[#allocation2 + $0x2e0] sm:$0xf]
        %v2328 = vld [vmem:[#allocation2 + $0x2f8] sm:$0xf]
        %v2345 = vunpack.c.l.b16 %v2249
        %v2346 = vunpack.c.l.b16 %v2250
        %v2347 = vunpack.c.l.b16 %v2251
        %v2348 = vunpack.c.l.b16 %v2252
        %v2349 = vunpack.c.l.b16 %v2253
        %v2350 = vunpack.c.l.b16 %v2254
        %v2351 = vunpack.c.l.b16 %v2255
        %v2352 = vunpack.c.l.b16 %v2256
        %v2353 = vunpack.c.l.b16 %v2257
        %v2354 = vunpack.c.l.b16 %v2258
        %v2355 = vunpack.c.l.b16 %v2259
        %v2356 = vunpack.c.l.b16 %v2260
        %v2357 = vunpack.c.l.b16 %v2261
        %v2358 = vunpack.c.l.b16 %v2262
        %v2359 = vunpack.c.l.b16 %v2263
        %v2360 = vunpack.c.l.b16 %v2264
        %v2361 = vpack.c.b16 %v2346, %v2345
        %v2362 = vpack.c.b16 %v2348, %v2347
        %v2363 = vpack.c.b16 %v2350, %v2349
        %v2364 = vpack.c.b16 %v2352, %v2351
        %v2365 = vpack.c.b16 %v2354, %v2353
        %v2366 = vpack.c.b16 %v2356, %v2355
        %v2367 = vpack.c.b16 %v2358, %v2357
        %v2368 = vpack.c.b16 %v2360, %v2359
        %v2409 = vunpack.c.l.b16 %v2265
        %v2410 = vunpack.c.l.b16 %v2266
        %v2411 = vunpack.c.l.b16 %v2267
        %v2412 = vunpack.c.l.b16 %v2268
        %v2413 = vunpack.c.l.b16 %v2269
        %v2414 = vunpack.c.l.b16 %v2270
        %v2415 = vunpack.c.l.b16 %v2271
        %v2416 = vunpack.c.l.b16 %v2272
        %v2417 = vunpack.c.l.b16 %v2273
        %v2418 = vunpack.c.l.b16 %v2274
        %v2419 = vunpack.c.l.b16 %v2275
        %v2420 = vunpack.c.l.b16 %v2276
        %v2421 = vunpack.c.l.b16 %v2277
        %v2422 = vunpack.c.l.b16 %v2278
        %v2423 = vunpack.c.l.b16 %v2279
        %v2424 = vunpack.c.l.b16 %v2280
        %v2425 = vunpack.c.l.b16 %v2281
        %v2426 = vunpack.c.l.b16 %v2282
        %v2427 = vunpack.c.l.b16 %v2283
        %v2428 = vunpack.c.l.b16 %v2284
        %v2429 = vunpack.c.l.b16 %v2285
        %v2430 = vunpack.c.l.b16 %v2286
        %v2431 = vunpack.c.l.b16 %v2287
        %v2432 = vunpack.c.l.b16 %v2288
        %v2433 = vunpack.c.l.b16 %v2289
        %v2434 = vunpack.c.l.b16 %v2290
        %v2435 = vunpack.c.l.b16 %v2291
        %v2436 = vunpack.c.l.b16 %v2292
        %v2437 = vunpack.c.l.b16 %v2293
        %v2438 = vunpack.c.l.b16 %v2294
        %v2439 = vunpack.c.l.b16 %v2295
        %v2440 = vunpack.c.l.b16 %v2296
        %v2441 = vpack.c.b16 %v2410, %v2409
        %v2442 = vpack.c.b16 %v2412, %v2411
        %v2443 = vpack.c.b16 %v2414, %v2413
        %v2444 = vpack.c.b16 %v2416, %v2415
        %v2445 = vpack.c.b16 %v2418, %v2417
        %v2446 = vpack.c.b16 %v2420, %v2419
        %v2447 = vpack.c.b16 %v2422, %v2421
        %v2448 = vpack.c.b16 %v2424, %v2423
        %v2449 = vpack.c.b16 %v2426, %v2425
        %v2450 = vpack.c.b16 %v2428, %v2427
        %v2451 = vpack.c.b16 %v2430, %v2429
        %v2452 = vpack.c.b16 %v2432, %v2431
        %v2453 = vpack.c.b16 %v2434, %v2433
        %v2454 = vpack.c.b16 %v2436, %v2435
        %v2455 = vpack.c.b16 %v2438, %v2437
        %v2456 = vpack.c.b16 %v2440, %v2439
        %2473 = vmatpush.bf16.xpose.msra.mxu0 %v2448
        %2474 = vmatpush.bf16.xpose.msra.mxu0 %v2447
        %2475 = vmatpush.bf16.xpose.msra.mxu0 %v2446
        %2476 = vmatpush.bf16.xpose.msra.mxu0 %v2445
        %2477 = vmatpush.bf16.xpose.msra.mxu0 %v2444
        %2478 = vmatpush.bf16.xpose.msra.mxu0 %v2443
        %2479 = vmatpush.bf16.xpose.msra.mxu0 %v2442
        %2480 = vmatpush.bf16.xpose.msra.mxu0 %v2441
        %2481 = vmatmul.bf16.gmra.mxu0 %v2361
        %v2482 = vpop.f32.mrf.mxu0
        %v2483 = vadd.f32 0.0, %v2482
        %v2484 = vpop.f32.mrf.mxu0
        %v2485 = vadd.f32 0.0, %v2484
        %2486 = vmatmul.bf16.gmra.mxu0 %v2362
        %v2487 = vpop.f32.mrf.mxu0
        %v2488 = vadd.f32 0.0, %v2487
        %v2489 = vpop.f32.mrf.mxu0
        %v2490 = vadd.f32 0.0, %v2489
        %2491 = vmatmul.bf16.gmra.mxu0 %v2363
        %v2492 = vpop.f32.mrf.mxu0
        %v2493 = vadd.f32 0.0, %v2492
        %v2494 = vpop.f32.mrf.mxu0
        %v2495 = vadd.f32 0.0, %v2494
        %2496 = vmatmul.bf16.gmra.mxu0 %v2364
        %v2497 = vpop.f32.mrf.mxu0
        %v2498 = vadd.f32 0.0, %v2497
        %v2499 = vpop.f32.mrf.mxu0
        %v2500 = vadd.f32 0.0, %v2499
        %2501 = vmatmul.bf16.gmra.mxu0 %v2365
        %v2502 = vpop.f32.mrf.mxu0
        %v2503 = vadd.f32 0.0, %v2502
        %v2504 = vpop.f32.mrf.mxu0
        %v2505 = vadd.f32 0.0, %v2504
        %2506 = vmatmul.bf16.gmra.mxu0 %v2366
        %v2507 = vpop.f32.mrf.mxu0
        %v2508 = vadd.f32 0.0, %v2507
        %v2509 = vpop.f32.mrf.mxu0
        %v2510 = vadd.f32 0.0, %v2509
        %2511 = vmatmul.bf16.gmra.mxu0 %v2367
        %v2512 = vpop.f32.mrf.mxu0
        %v2513 = vadd.f32 0.0, %v2512
        %v2514 = vpop.f32.mrf.mxu0
        %v2515 = vadd.f32 0.0, %v2514
        %2516 = vmatmul.bf16.gmra.mxu0 %v2368
        %v2517 = vpop.f32.mrf.mxu0
        %v2518 = vadd.f32 0.0, %v2517
        %v2519 = vpop.f32.mrf.mxu0
        %v2520 = vadd.f32 0.0, %v2519
        %2521 = vdwg.mxu0
        %2522 = vmatpush.bf16.xpose.msra.mxu0 %v2456
        %2523 = vmatpush.bf16.xpose.msra.mxu0 %v2455
        %2524 = vmatpush.bf16.xpose.msra.mxu0 %v2454
        %2525 = vmatpush.bf16.xpose.msra.mxu0 %v2453
        %2526 = vmatpush.bf16.xpose.msra.mxu0 %v2452
        %2527 = vmatpush.bf16.xpose.msra.mxu0 %v2451
        %2528 = vmatpush.bf16.xpose.msra.mxu0 %v2450
        %2529 = vmatpush.bf16.xpose.msra.mxu0 %v2449
        %2530 = vmatmul.bf16.gmra.mxu0 %v2361
        %v2531 = vpop.f32.mrf.mxu0
        %v2532 = vadd.f32 0.0, %v2531
        %v2533 = vpop.f32.mrf.mxu0
        %v2534 = vadd.f32 0.0, %v2533
        %2535 = vmatmul.bf16.gmra.mxu0 %v2362
        %v2536 = vpop.f32.mrf.mxu0
        %v2537 = vadd.f32 0.0, %v2536
        %v2538 = vpop.f32.mrf.mxu0
        %v2539 = vadd.f32 0.0, %v2538
        %2540 = vmatmul.bf16.gmra.mxu0 %v2363
        %v2541 = vpop.f32.mrf.mxu0
        %v2542 = vadd.f32 0.0, %v2541
        %v2543 = vpop.f32.mrf.mxu0
        %v2544 = vadd.f32 0.0, %v2543
        %2545 = vmatmul.bf16.gmra.mxu0 %v2364
        %v2546 = vpop.f32.mrf.mxu0
        %v2547 = vadd.f32 0.0, %v2546
        %v2548 = vpop.f32.mrf.mxu0
        %v2549 = vadd.f32 0.0, %v2548
        %2550 = vmatmul.bf16.gmra.mxu0 %v2365
        %v2551 = vpop.f32.mrf.mxu0
        %v2552 = vadd.f32 0.0, %v2551
        %v2553 = vpop.f32.mrf.mxu0
        %v2554 = vadd.f32 0.0, %v2553
        %2555 = vmatmul.bf16.gmra.mxu0 %v2366
        %v2556 = vpop.f32.mrf.mxu0
        %v2557 = vadd.f32 0.0, %v2556
        %v2558 = vpop.f32.mrf.mxu0
        %v2559 = vadd.f32 0.0, %v2558
        %2560 = vmatmul.bf16.gmra.mxu0 %v2367
        %v2561 = vpop.f32.mrf.mxu0
        %v2562 = vadd.f32 0.0, %v2561
        %v2563 = vpop.f32.mrf.mxu0
        %v2564 = vadd.f32 0.0, %v2563
        %2565 = vmatmul.bf16.gmra.mxu0 %v2368
        %v2566 = vpop.f32.mrf.mxu0
        %v2567 = vadd.f32 0.0, %v2566
        %v2568 = vpop.f32.mrf.mxu0
        %v2569 = vadd.f32 0.0, %v2568
        %2570 = vdwg.mxu0
        %v2571 = vmax.f32 %v2483, %v2532
        %2572 = vmax.xlane.f32.xlu0 %v2571
        %v2573 = vpop.xlane.xlu0 %2572
        %v2574 = vmax.f32 %v2485, %v2534
        %2575 = vmax.xlane.f32.xlu0 %v2574
        %v2576 = vpop.xlane.xlu0 %2575
        %v2577 = vmax.f32 %v2488, %v2537
        %2578 = vmax.xlane.f32.xlu0 %v2577
        %v2579 = vpop.xlane.xlu0 %2578
        %v2580 = vmax.f32 %v2490, %v2539
        %2581 = vmax.xlane.f32.xlu0 %v2580
        %v2582 = vpop.xlane.xlu0 %2581
        %v2583 = vmax.f32 %v2493, %v2542
        %2584 = vmax.xlane.f32.xlu0 %v2583
        %v2585 = vpop.xlane.xlu0 %2584
        %v2586 = vmax.f32 %v2495, %v2544
        %2587 = vmax.xlane.f32.xlu0 %v2586
        %v2588 = vpop.xlane.xlu0 %2587
        %v2589 = vmax.f32 %v2498, %v2547
        %2590 = vmax.xlane.f32.xlu0 %v2589
        %v2591 = vpop.xlane.xlu0 %2590
        %v2592 = vmax.f32 %v2500, %v2549
        %2593 = vmax.xlane.f32.xlu0 %v2592
        %v2594 = vpop.xlane.xlu0 %2593
        %v2595 = vmax.f32 %v2503, %v2552
        %2596 = vmax.xlane.f32.xlu0 %v2595
        %v2597 = vpop.xlane.xlu0 %2596
        %v2598 = vmax.f32 %v2505, %v2554
        %2599 = vmax.xlane.f32.xlu0 %v2598
        %v2600 = vpop.xlane.xlu0 %2599
        %v2601 = vmax.f32 %v2508, %v2557
        %2602 = vmax.xlane.f32.xlu0 %v2601
        %v2603 = vpop.xlane.xlu0 %2602
        %v2604 = vmax.f32 %v2510, %v2559
        %2605 = vmax.xlane.f32.xlu0 %v2604
        %v2606 = vpop.xlane.xlu0 %2605
        %v2607 = vmax.f32 %v2513, %v2562
        %2608 = vmax.xlane.f32.xlu0 %v2607
        %v2609 = vpop.xlane.xlu0 %2608
        %v2610 = vmax.f32 %v2515, %v2564
        %2611 = vmax.xlane.f32.xlu0 %v2610
        %v2612 = vpop.xlane.xlu0 %2611
        %v2613 = vmax.f32 %v2518, %v2567
        %2614 = vmax.xlane.f32.xlu0 %v2613
        %v2615 = vpop.xlane.xlu0 %2614
        %v2616 = vmax.f32 %v2520, %v2569
        %2617 = vmax.xlane.f32.xlu0 %v2616
        %v2618 = vpop.xlane.xlu0 %2617
        %v2619 = vsub.f32 %v2483, %v2573
        %v2620 = vsub.f32 %v2532, %v2573
        %v2621 = vsub.f32 %v2485, %v2576
        %v2622 = vsub.f32 %v2534, %v2576
        %v2623 = vsub.f32 %v2488, %v2579
        %v2624 = vsub.f32 %v2537, %v2579
        %v2625 = vsub.f32 %v2490, %v2582
        %v2626 = vsub.f32 %v2539, %v2582
        %v2627 = vsub.f32 %v2493, %v2585
        %v2628 = vsub.f32 %v2542, %v2585
        %v2629 = vsub.f32 %v2495, %v2588
        %v2630 = vsub.f32 %v2544, %v2588
        %v2631 = vsub.f32 %v2498, %v2591
        %v2632 = vsub.f32 %v2547, %v2591
        %v2633 = vsub.f32 %v2500, %v2594
        %v2634 = vsub.f32 %v2549, %v2594
        %v2635 = vsub.f32 %v2503, %v2597
        %v2636 = vsub.f32 %v2552, %v2597
        %v2637 = vsub.f32 %v2505, %v2600
        %v2638 = vsub.f32 %v2554, %v2600
        %v2639 = vsub.f32 %v2508, %v2603
        %v2640 = vsub.f32 %v2557, %v2603
        %v2641 = vsub.f32 %v2510, %v2606
        %v2642 = vsub.f32 %v2559, %v2606
        %v2643 = vsub.f32 %v2513, %v2609
        %v2644 = vsub.f32 %v2562, %v2609
        %v2645 = vsub.f32 %v2515, %v2612
        %v2646 = vsub.f32 %v2564, %v2612
        %v2647 = vsub.f32 %v2518, %v2615
        %v2648 = vsub.f32 %v2567, %v2615
        %v2649 = vsub.f32 %v2520, %v2618
        %v2650 = vsub.f32 %v2569, %v2618
        %v2651 = vmul.f32 %v2619, 1.442695
        %v2652 = vpow.pop %v2651
        %v2653 = vmul.f32 %v2620, 1.442695
        %v2654 = vpow.pop %v2653
        %v2655 = vmul.f32 %v2621, 1.442695
        %v2656 = vpow.pop %v2655
        %v2657 = vmul.f32 %v2622, 1.442695
        %v2658 = vpow.pop %v2657
        %v2659 = vmul.f32 %v2623, 1.442695
        %v2660 = vpow.pop %v2659
        %v2661 = vmul.f32 %v2624, 1.442695
        %v2662 = vpow.pop %v2661
        %v2663 = vmul.f32 %v2625, 1.442695
        %v2664 = vpow.pop %v2663
        %v2665 = vmul.f32 %v2626, 1.442695
        %v2666 = vpow.pop %v2665
        %v2667 = vmul.f32 %v2627, 1.442695
        %v2668 = vpow.pop %v2667
        %v2669 = vmul.f32 %v2628, 1.442695
        %v2670 = vpow.pop %v2669
        %v2671 = vmul.f32 %v2629, 1.442695
        %v2672 = vpow.pop %v2671
        %v2673 = vmul.f32 %v2630, 1.442695
        %v2674 = vpow.pop %v2673
        %v2675 = vmul.f32 %v2631, 1.442695
        %v2676 = vpow.pop %v2675
        %v2677 = vmul.f32 %v2632, 1.442695
        %v2678 = vpow.pop %v2677
        %v2679 = vmul.f32 %v2633, 1.442695
        %v2680 = vpow.pop %v2679
        %v2681 = vmul.f32 %v2634, 1.442695
        %v2682 = vpow.pop %v2681
        %v2683 = vmul.f32 %v2635, 1.442695
        %v2684 = vpow.pop %v2683
        %v2685 = vmul.f32 %v2636, 1.442695
        %v2686 = vpow.pop %v2685
        %v2687 = vmul.f32 %v2637, 1.442695
        %v2688 = vpow.pop %v2687
        %v2689 = vmul.f32 %v2638, 1.442695
        %v2690 = vpow.pop %v2689
        %v2691 = vmul.f32 %v2639, 1.442695
        %v2692 = vpow.pop %v2691
        %v2693 = vmul.f32 %v2640, 1.442695
        %v2694 = vpow.pop %v2693
        %v2695 = vmul.f32 %v2641, 1.442695
        %v2696 = vpow.pop %v2695
        %v2697 = vmul.f32 %v2642, 1.442695
        %v2698 = vpow.pop %v2697
        %v2699 = vmul.f32 %v2643, 1.442695
        %v2700 = vpow.pop %v2699
        %v2701 = vmul.f32 %v2644, 1.442695
        %v2702 = vpow.pop %v2701
        %v2703 = vmul.f32 %v2645, 1.442695
        %v2704 = vpow.pop %v2703
        %v2705 = vmul.f32 %v2646, 1.442695
        %v2706 = vpow.pop %v2705
        %v2707 = vmul.f32 %v2647, 1.442695
        %v2708 = vpow.pop %v2707
        %v2709 = vmul.f32 %v2648, 1.442695
        %v2710 = vpow.pop %v2709
        %v2711 = vmul.f32 %v2649, 1.442695
        %v2712 = vpow.pop %v2711
        %v2713 = vmul.f32 %v2650, 1.442695
        %v2714 = vpow.pop %v2713
        %v2715 = vadd.f32 %v2652, %v2654
        %2716 = vadd.xlane.f32.xlu0 %v2715
        %v2717 = vpop.xlane.xlu0 %2716
        %v2718 = vadd.f32 %v2656, %v2658
        %2719 = vadd.xlane.f32.xlu0 %v2718
        %v2720 = vpop.xlane.xlu0 %2719
        %v2721 = vadd.f32 %v2660, %v2662
        %2722 = vadd.xlane.f32.xlu0 %v2721
        %v2723 = vpop.xlane.xlu0 %2722
        %v2724 = vadd.f32 %v2664, %v2666
        %2725 = vadd.xlane.f32.xlu0 %v2724
        %v2726 = vpop.xlane.xlu0 %2725
        %v2727 = vadd.f32 %v2668, %v2670
        %2728 = vadd.xlane.f32.xlu0 %v2727
        %v2729 = vpop.xlane.xlu0 %2728
        %v2730 = vadd.f32 %v2672, %v2674
        %2731 = vadd.xlane.f32.xlu0 %v2730
        %v2732 = vpop.xlane.xlu0 %2731
        %v2733 = vadd.f32 %v2676, %v2678
        %2734 = vadd.xlane.f32.xlu0 %v2733
        %v2735 = vpop.xlane.xlu0 %2734
        %v2736 = vadd.f32 %v2680, %v2682
        %2737 = vadd.xlane.f32.xlu0 %v2736
        %v2738 = vpop.xlane.xlu0 %2737
        %v2739 = vadd.f32 %v2684, %v2686
        %2740 = vadd.xlane.f32.xlu0 %v2739
        %v2741 = vpop.xlane.xlu0 %2740
        %v2742 = vadd.f32 %v2688, %v2690
        %2743 = vadd.xlane.f32.xlu0 %v2742
        %v2744 = vpop.xlane.xlu0 %2743
        %v2745 = vadd.f32 %v2692, %v2694
        %2746 = vadd.xlane.f32.xlu0 %v2745
        %v2747 = vpop.xlane.xlu0 %2746
        %v2748 = vadd.f32 %v2696, %v2698
        %2749 = vadd.xlane.f32.xlu0 %v2748
        %v2750 = vpop.xlane.xlu0 %2749
        %v2751 = vadd.f32 %v2700, %v2702
        %2752 = vadd.xlane.f32.xlu0 %v2751
        %v2753 = vpop.xlane.xlu0 %2752
        %v2754 = vadd.f32 %v2704, %v2706
        %2755 = vadd.xlane.f32.xlu0 %v2754
        %v2756 = vpop.xlane.xlu0 %2755
        %v2757 = vadd.f32 %v2708, %v2710
        %2758 = vadd.xlane.f32.xlu0 %v2757
        %v2759 = vpop.xlane.xlu0 %2758
        %v2760 = vadd.f32 %v2712, %v2714
        %2761 = vadd.xlane.f32.xlu0 %v2760
        %v2762 = vpop.xlane.xlu0 %2761
        %v2763 = vrcp.pop %v2717
        %v2764 = vmul.f32 %v2717, %v2763
        %v2765 = vsub.f32 1.0, %v2764
        %v2766 = vmul.f32 %v2763, %v2765
        %v2767 = vadd.f32 %v2763, %v2766
        %vm2768 = vweird.f32 %v2717
        %vm2769 = vweird.f32 %v2763
        %vm2770 = vmor %vm2768, %vm2769
        %v2771 = vsel %vm2770, %v2763, %v2767
        %v2772 = vand.u32 2147483647, %v2717
        %vm2773 = vcmp.eq.f32.partialorder %v2772, 8.507059e+37
        %v2774 = vand.u32 %v2717, 2147483648
        %v2775 = vor.u32 1.1754944e-38, %v2774
        %v2776 = vsel %vm2773, %v2775, %v2771
        %v2777 = vmul.f32 1.0, %v2776
        %v2778 = vrcp.pop %v2720
        %v2779 = vmul.f32 %v2720, %v2778
        %v2780 = vsub.f32 1.0, %v2779
        %v2781 = vmul.f32 %v2778, %v2780
        %v2782 = vadd.f32 %v2778, %v2781
        %vm2783 = vweird.f32 %v2720
        %vm2784 = vweird.f32 %v2778
        %vm2785 = vmor %vm2783, %vm2784
        %v2786 = vsel %vm2785, %v2778, %v2782
        %v2787 = vand.u32 2147483647, %v2720
        %vm2788 = vcmp.eq.f32.partialorder %v2787, 8.507059e+37
        %v2789 = vand.u32 %v2720, 2147483648
        %v2790 = vor.u32 1.1754944e-38, %v2789
        %v2791 = vsel %vm2788, %v2790, %v2786
        %v2792 = vmul.f32 1.0, %v2791
        %v2793 = vrcp.pop %v2723
        %v2794 = vmul.f32 %v2723, %v2793
        %v2795 = vsub.f32 1.0, %v2794
        %v2796 = vmul.f32 %v2793, %v2795
        %v2797 = vadd.f32 %v2793, %v2796
        %vm2798 = vweird.f32 %v2723
        %vm2799 = vweird.f32 %v2793
        %vm2800 = vmor %vm2798, %vm2799
        %v2801 = vsel %vm2800, %v2793, %v2797
        %v2802 = vand.u32 2147483647, %v2723
        %vm2803 = vcmp.eq.f32.partialorder %v2802, 8.507059e+37
        %v2804 = vand.u32 %v2723, 2147483648
        %v2805 = vor.u32 1.1754944e-38, %v2804
        %v2806 = vsel %vm2803, %v2805, %v2801
        %v2807 = vmul.f32 1.0, %v2806
        %v2808 = vrcp.pop %v2726
        %v2809 = vmul.f32 %v2726, %v2808
        %v2810 = vsub.f32 1.0, %v2809
        %v2811 = vmul.f32 %v2808, %v2810
        %v2812 = vadd.f32 %v2808, %v2811
        %vm2813 = vweird.f32 %v2726
        %vm2814 = vweird.f32 %v2808
        %vm2815 = vmor %vm2813, %vm2814
        %v2816 = vsel %vm2815, %v2808, %v2812
        %v2817 = vand.u32 2147483647, %v2726
        %vm2818 = vcmp.eq.f32.partialorder %v2817, 8.507059e+37
        %v2819 = vand.u32 %v2726, 2147483648
        %v2820 = vor.u32 1.1754944e-38, %v2819
        %v2821 = vsel %vm2818, %v2820, %v2816
        %v2822 = vmul.f32 1.0, %v2821
        %v2823 = vrcp.pop %v2729
        %v2824 = vmul.f32 %v2729, %v2823
        %v2825 = vsub.f32 1.0, %v2824
        %v2826 = vmul.f32 %v2823, %v2825
        %v2827 = vadd.f32 %v2823, %v2826
        %vm2828 = vweird.f32 %v2729
        %vm2829 = vweird.f32 %v2823
        %vm2830 = vmor %vm2828, %vm2829
        %v2831 = vsel %vm2830, %v2823, %v2827
        %v2832 = vand.u32 2147483647, %v2729
        %vm2833 = vcmp.eq.f32.partialorder %v2832, 8.507059e+37
        %v2834 = vand.u32 %v2729, 2147483648
        %v2835 = vor.u32 1.1754944e-38, %v2834
        %v2836 = vsel %vm2833, %v2835, %v2831
        %v2837 = vmul.f32 1.0, %v2836
        %v2838 = vrcp.pop %v2732
        %v2839 = vmul.f32 %v2732, %v2838
        %v2840 = vsub.f32 1.0, %v2839
        %v2841 = vmul.f32 %v2838, %v2840
        %v2842 = vadd.f32 %v2838, %v2841
        %vm2843 = vweird.f32 %v2732
        %vm2844 = vweird.f32 %v2838
        %vm2845 = vmor %vm2843, %vm2844
        %v2846 = vsel %vm2845, %v2838, %v2842
        %v2847 = vand.u32 2147483647, %v2732
        %vm2848 = vcmp.eq.f32.partialorder %v2847, 8.507059e+37
        %v2849 = vand.u32 %v2732, 2147483648
        %v2850 = vor.u32 1.1754944e-38, %v2849
        %v2851 = vsel %vm2848, %v2850, %v2846
        %v2852 = vmul.f32 1.0, %v2851
        %v2853 = vrcp.pop %v2735
        %v2854 = vmul.f32 %v2735, %v2853
        %v2855 = vsub.f32 1.0, %v2854
        %v2856 = vmul.f32 %v2853, %v2855
        %v2857 = vadd.f32 %v2853, %v2856
        %vm2858 = vweird.f32 %v2735
        %vm2859 = vweird.f32 %v2853
        %vm2860 = vmor %vm2858, %vm2859
        %v2861 = vsel %vm2860, %v2853, %v2857
        %v2862 = vand.u32 2147483647, %v2735
        %vm2863 = vcmp.eq.f32.partialorder %v2862, 8.507059e+37
        %v2864 = vand.u32 %v2735, 2147483648
        %v2865 = vor.u32 1.1754944e-38, %v2864
        %v2866 = vsel %vm2863, %v2865, %v2861
        %v2867 = vmul.f32 1.0, %v2866
        %v2868 = vrcp.pop %v2738
        %v2869 = vmul.f32 %v2738, %v2868
        %v2870 = vsub.f32 1.0, %v2869
        %v2871 = vmul.f32 %v2868, %v2870
        %v2872 = vadd.f32 %v2868, %v2871
        %vm2873 = vweird.f32 %v2738
        %vm2874 = vweird.f32 %v2868
        %vm2875 = vmor %vm2873, %vm2874
        %v2876 = vsel %vm2875, %v2868, %v2872
        %v2877 = vand.u32 2147483647, %v2738
        %vm2878 = vcmp.eq.f32.partialorder %v2877, 8.507059e+37
        %v2879 = vand.u32 %v2738, 2147483648
        %v2880 = vor.u32 1.1754944e-38, %v2879
        %v2881 = vsel %vm2878, %v2880, %v2876
        %v2882 = vmul.f32 1.0, %v2881
        %v2883 = vrcp.pop %v2741
        %v2884 = vmul.f32 %v2741, %v2883
        %v2885 = vsub.f32 1.0, %v2884
        %v2886 = vmul.f32 %v2883, %v2885
        %v2887 = vadd.f32 %v2883, %v2886
        %vm2888 = vweird.f32 %v2741
        %vm2889 = vweird.f32 %v2883
        %vm2890 = vmor %vm2888, %vm2889
        %v2891 = vsel %vm2890, %v2883, %v2887
        %v2892 = vand.u32 2147483647, %v2741
        %vm2893 = vcmp.eq.f32.partialorder %v2892, 8.507059e+37
        %v2894 = vand.u32 %v2741, 2147483648
        %v2895 = vor.u32 1.1754944e-38, %v2894
        %v2896 = vsel %vm2893, %v2895, %v2891
        %v2897 = vmul.f32 1.0, %v2896
        %v2898 = vrcp.pop %v2744
        %v2899 = vmul.f32 %v2744, %v2898
        %v2900 = vsub.f32 1.0, %v2899
        %v2901 = vmul.f32 %v2898, %v2900
        %v2902 = vadd.f32 %v2898, %v2901
        %vm2903 = vweird.f32 %v2744
        %vm2904 = vweird.f32 %v2898
        %vm2905 = vmor %vm2903, %vm2904
        %v2906 = vsel %vm2905, %v2898, %v2902
        %v2907 = vand.u32 2147483647, %v2744
        %vm2908 = vcmp.eq.f32.partialorder %v2907, 8.507059e+37
        %v2909 = vand.u32 %v2744, 2147483648
        %v2910 = vor.u32 1.1754944e-38, %v2909
        %v2911 = vsel %vm2908, %v2910, %v2906
        %v2912 = vmul.f32 1.0, %v2911
        %v2913 = vrcp.pop %v2747
        %v2914 = vmul.f32 %v2747, %v2913
        %v2915 = vsub.f32 1.0, %v2914
        %v2916 = vmul.f32 %v2913, %v2915
        %v2917 = vadd.f32 %v2913, %v2916
        %vm2918 = vweird.f32 %v2747
        %vm2919 = vweird.f32 %v2913
        %vm2920 = vmor %vm2918, %vm2919
        %v2921 = vsel %vm2920, %v2913, %v2917
        %v2922 = vand.u32 2147483647, %v2747
        %vm2923 = vcmp.eq.f32.partialorder %v2922, 8.507059e+37
        %v2924 = vand.u32 %v2747, 2147483648
        %v2925 = vor.u32 1.1754944e-38, %v2924
        %v2926 = vsel %vm2923, %v2925, %v2921
        %v2927 = vmul.f32 1.0, %v2926
        %v2928 = vrcp.pop %v2750
        %v2929 = vmul.f32 %v2750, %v2928
        %v2930 = vsub.f32 1.0, %v2929
        %v2931 = vmul.f32 %v2928, %v2930
        %v2932 = vadd.f32 %v2928, %v2931
        %vm2933 = vweird.f32 %v2750
        %vm2934 = vweird.f32 %v2928
        %vm2935 = vmor %vm2933, %vm2934
        %v2936 = vsel %vm2935, %v2928, %v2932
        %v2937 = vand.u32 2147483647, %v2750
        %vm2938 = vcmp.eq.f32.partialorder %v2937, 8.507059e+37
        %v2939 = vand.u32 %v2750, 2147483648
        %v2940 = vor.u32 1.1754944e-38, %v2939
        %v2941 = vsel %vm2938, %v2940, %v2936
        %v2942 = vmul.f32 1.0, %v2941
        %v2943 = vrcp.pop %v2753
        %v2944 = vmul.f32 %v2753, %v2943
        %v2945 = vsub.f32 1.0, %v2944
        %v2946 = vmul.f32 %v2943, %v2945
        %v2947 = vadd.f32 %v2943, %v2946
        %vm2948 = vweird.f32 %v2753
        %vm2949 = vweird.f32 %v2943
        %vm2950 = vmor %vm2948, %vm2949
        %v2951 = vsel %vm2950, %v2943, %v2947
        %v2952 = vand.u32 2147483647, %v2753
        %vm2953 = vcmp.eq.f32.partialorder %v2952, 8.507059e+37
        %v2954 = vand.u32 %v2753, 2147483648
        %v2955 = vor.u32 1.1754944e-38, %v2954
        %v2956 = vsel %vm2953, %v2955, %v2951
        %v2957 = vmul.f32 1.0, %v2956
        %v2958 = vrcp.pop %v2756
        %v2959 = vmul.f32 %v2756, %v2958
        %v2960 = vsub.f32 1.0, %v2959
        %v2961 = vmul.f32 %v2958, %v2960
        %v2962 = vadd.f32 %v2958, %v2961
        %vm2963 = vweird.f32 %v2756
        %vm2964 = vweird.f32 %v2958
        %vm2965 = vmor %vm2963, %vm2964
        %v2966 = vsel %vm2965, %v2958, %v2962
        %v2967 = vand.u32 2147483647, %v2756
        %vm2968 = vcmp.eq.f32.partialorder %v2967, 8.507059e+37
        %v2969 = vand.u32 %v2756, 2147483648
        %v2970 = vor.u32 1.1754944e-38, %v2969
        %v2971 = vsel %vm2968, %v2970, %v2966
        %v2972 = vmul.f32 1.0, %v2971
        %v2973 = vrcp.pop %v2759
        %v2974 = vmul.f32 %v2759, %v2973
        %v2975 = vsub.f32 1.0, %v2974
        %v2976 = vmul.f32 %v2973, %v2975
        %v2977 = vadd.f32 %v2973, %v2976
        %vm2978 = vweird.f32 %v2759
        %vm2979 = vweird.f32 %v2973
        %vm2980 = vmor %vm2978, %vm2979
        %v2981 = vsel %vm2980, %v2973, %v2977
        %v2982 = vand.u32 2147483647, %v2759
        %vm2983 = vcmp.eq.f32.partialorder %v2982, 8.507059e+37
        %v2984 = vand.u32 %v2759, 2147483648
        %v2985 = vor.u32 1.1754944e-38, %v2984
        %v2986 = vsel %vm2983, %v2985, %v2981
        %v2987 = vmul.f32 1.0, %v2986
        %v2988 = vrcp.pop %v2762
        %v2989 = vmul.f32 %v2762, %v2988
        %v2990 = vsub.f32 1.0, %v2989
        %v2991 = vmul.f32 %v2988, %v2990
        %v2992 = vadd.f32 %v2988, %v2991
        %vm2993 = vweird.f32 %v2762
        %vm2994 = vweird.f32 %v2988
        %vm2995 = vmor %vm2993, %vm2994
        %v2996 = vsel %vm2995, %v2988, %v2992
        %v2997 = vand.u32 2147483647, %v2762
        %vm2998 = vcmp.eq.f32.partialorder %v2997, 8.507059e+37
        %v2999 = vand.u32 %v2762, 2147483648
        %v3000 = vor.u32 1.1754944e-38, %v2999
        %v3001 = vsel %vm2998, %v3000, %v2996
        %v3002 = vmul.f32 1.0, %v3001
        %v3003 = vmul.f32 %v2652, %v2777
        %v3004 = vmul.f32 %v2654, %v2777
        %v3005 = vmul.f32 %v2656, %v2792
        %v3006 = vmul.f32 %v2658, %v2792
        %v3007 = vmul.f32 %v2660, %v2807
        %v3008 = vmul.f32 %v2662, %v2807
        %v3009 = vmul.f32 %v2664, %v2822
        %v3010 = vmul.f32 %v2666, %v2822
        %v3011 = vmul.f32 %v2668, %v2837
        %v3012 = vmul.f32 %v2670, %v2837
        %v3013 = vmul.f32 %v2672, %v2852
        %v3014 = vmul.f32 %v2674, %v2852
        %v3015 = vmul.f32 %v2676, %v2867
        %v3016 = vmul.f32 %v2678, %v2867
        %v3017 = vmul.f32 %v2680, %v2882
        %v3018 = vmul.f32 %v2682, %v2882
        %v3019 = vmul.f32 %v2684, %v2897
        %v3020 = vmul.f32 %v2686, %v2897
        %v3021 = vmul.f32 %v2688, %v2912
        %v3022 = vmul.f32 %v2690, %v2912
        %v3023 = vmul.f32 %v2692, %v2927
        %v3024 = vmul.f32 %v2694, %v2927
        %v3025 = vmul.f32 %v2696, %v2942
        %v3026 = vmul.f32 %v2698, %v2942
        %v3027 = vmul.f32 %v2700, %v2957
        %v3028 = vmul.f32 %v2702, %v2957
        %v3029 = vmul.f32 %v2704, %v2972
        %v3030 = vmul.f32 %v2706, %v2972
        %v3031 = vmul.f32 %v2708, %v2987
        %v3032 = vmul.f32 %v2710, %v2987
        %v3033 = vmul.f32 %v2712, %v3002
        %v3034 = vmul.f32 %v2714, %v3002
        %3035 = vst [vmem:[%s304] sm:$0xff] %v3003
        %3036 = vst [vmem:[%s304 + $0x8] sm:$0xff] %v3004
        %3037 = vst [vmem:[%s304 + $0x10] sm:$0xff] %v3005
        %3038 = vst [vmem:[%s304 + $0x18] sm:$0xff] %v3006
        %3039 = vst [vmem:[%s304 + $0x20] sm:$0xff] %v3007
        %3040 = vst [vmem:[%s304 + $0x28] sm:$0xff] %v3008
        %3041 = vst [vmem:[%s304 + $0x30] sm:$0xff] %v3009
        %3042 = vst [vmem:[%s304 + $0x38] sm:$0xff] %v3010
        %3043 = vst [vmem:[%s304 + $0x40] sm:$0xff] %v3011
        %3044 = vst [vmem:[%s304 + $0x48] sm:$0xff] %v3012
        %3045 = vst [vmem:[%s304 + $0x50] sm:$0xff] %v3013
        %3046 = vst [vmem:[%s304 + $0x58] sm:$0xff] %v3014
        %3047 = vst [vmem:[%s304 + $0x60] sm:$0xff] %v3015
        %3048 = vst [vmem:[%s304 + $0x68] sm:$0xff] %v3016
        %3049 = vst [vmem:[%s304 + $0x70] sm:$0xff] %v3017
        %3050 = vst [vmem:[%s304 + $0x78] sm:$0xff] %v3018
        %3051 = vst [vmem:[%s304 + $0x80] sm:$0xff] %v3019
        %3052 = vst [vmem:[%s304 + $0x88] sm:$0xff] %v3020
        %3053 = vst [vmem:[%s304 + $0x90] sm:$0xff] %v3021
        %3054 = vst [vmem:[%s304 + $0x98] sm:$0xff] %v3022
        %3055 = vst [vmem:[%s304 + $0xa0] sm:$0xff] %v3023
        %3056 = vst [vmem:[%s304 + $0xa8] sm:$0xff] %v3024
        %3057 = vst [vmem:[%s304 + $0xb0] sm:$0xff] %v3025
        %3058 = vst [vmem:[%s304 + $0xb8] sm:$0xff] %v3026
        %3059 = vst [vmem:[%s304 + $0xc0] sm:$0xff] %v3027
        %3060 = vst [vmem:[%s304 + $0xc8] sm:$0xff] %v3028
        %3061 = vst [vmem:[%s304 + $0xd0] sm:$0xff] %v3029
        %3062 = vst [vmem:[%s304 + $0xd8] sm:$0xff] %v3030
        %3063 = vst [vmem:[%s304 + $0xe0] sm:$0xff] %v3031
        %3064 = vst [vmem:[%s304 + $0xe8] sm:$0xff] %v3032
        %3065 = vst [vmem:[%s304 + $0xf0] sm:$0xff] %v3033
        %3066 = vst [vmem:[%s304 + $0xf8] sm:$0xff] %v3034
        %v3067 = vpack.c.bf16 %v3005, %v3003
        %v3068 = vpack.c.bf16 %v3006, %v3004
        %v3069 = vpack.c.bf16 %v3009, %v3007
        %v3070 = vpack.c.bf16 %v3010, %v3008
        %v3071 = vpack.c.bf16 %v3013, %v3011
        %v3072 = vpack.c.bf16 %v3014, %v3012
        %v3073 = vpack.c.bf16 %v3017, %v3015
        %v3074 = vpack.c.bf16 %v3018, %v3016
        %v3075 = vpack.c.bf16 %v3021, %v3019
        %v3076 = vpack.c.bf16 %v3022, %v3020
        %v3077 = vpack.c.bf16 %v3025, %v3023
        %v3078 = vpack.c.bf16 %v3026, %v3024
        %v3079 = vpack.c.bf16 %v3029, %v3027
        %v3080 = vpack.c.bf16 %v3030, %v3028
        %v3081 = vpack.c.bf16 %v3033, %v3031
        %v3082 = vpack.c.bf16 %v3034, %v3032
        %v3115 = vunpack.c.l.b16 %v2297
        %v3116 = vunpack.c.l.b16 %v2298
        %v3117 = vunpack.c.l.b16 %v2299
        %v3118 = vunpack.c.l.b16 %v2300
        %v3119 = vunpack.c.l.b16 %v2301
        %v3120 = vunpack.c.l.b16 %v2302
        %v3121 = vunpack.c.l.b16 %v2303
        %v3122 = vunpack.c.l.b16 %v2304
        %v3123 = vunpack.c.l.b16 %v2305
        %v3124 = vunpack.c.l.b16 %v2306
        %v3125 = vunpack.c.l.b16 %v2307
        %v3126 = vunpack.c.l.b16 %v2308
        %v3127 = vunpack.c.l.b16 %v2309
        %v3128 = vunpack.c.l.b16 %v2310
        %v3129 = vunpack.c.l.b16 %v2311
        %v3130 = vunpack.c.l.b16 %v2312
        %v3131 = vunpack.c.l.b16 %v2313
        %v3132 = vunpack.c.l.b16 %v2314
        %v3133 = vunpack.c.l.b16 %v2315
        %v3134 = vunpack.c.l.b16 %v2316
        %v3135 = vunpack.c.l.b16 %v2317
        %v3136 = vunpack.c.l.b16 %v2318
        %v3137 = vunpack.c.l.b16 %v2319
        %v3138 = vunpack.c.l.b16 %v2320
        %v3139 = vunpack.c.l.b16 %v2321
        %v3140 = vunpack.c.l.b16 %v2322
        %v3141 = vunpack.c.l.b16 %v2323
        %v3142 = vunpack.c.l.b16 %v2324
        %v3143 = vunpack.c.l.b16 %v2325
        %v3144 = vunpack.c.l.b16 %v2326
        %v3145 = vunpack.c.l.b16 %v2327
        %v3146 = vunpack.c.l.b16 %v2328
        %v3147 = vpack.c.b16 %v3116, %v3115
        %v3148 = vpack.c.b16 %v3118, %v3117
        %v3149 = vpack.c.b16 %v3120, %v3119
        %v3150 = vpack.c.b16 %v3122, %v3121
        %v3151 = vpack.c.b16 %v3124, %v3123
        %v3152 = vpack.c.b16 %v3126, %v3125
        %v3153 = vpack.c.b16 %v3128, %v3127
        %v3154 = vpack.c.b16 %v3130, %v3129
        %v3155 = vpack.c.b16 %v3132, %v3131
        %v3156 = vpack.c.b16 %v3134, %v3133
        %v3157 = vpack.c.b16 %v3136, %v3135
        %v3158 = vpack.c.b16 %v3138, %v3137
        %v3159 = vpack.c.b16 %v3140, %v3139
        %v3160 = vpack.c.b16 %v3142, %v3141
        %v3161 = vpack.c.b16 %v3144, %v3143
        %v3162 = vpack.c.b16 %v3146, %v3145
        %3179 = vmatpush.bf16.msra.mxu0 %v3154
        %3180 = vmatpush.bf16.msra.mxu0 %v3153
        %3181 = vmatpush.bf16.msra.mxu0 %v3152
        %3182 = vmatpush.bf16.msra.mxu0 %v3151
        %3183 = vmatpush.bf16.msra.mxu0 %v3150
        %3184 = vmatpush.bf16.msra.mxu0 %v3149
        %3185 = vmatpush.bf16.msra.mxu0 %v3148
        %3186 = vmatpush.bf16.msra.mxu0 %v3147
        %3187 = vmatmul.bf16.gmra.mxu0 %v3067
        %v3188 = vpop.f32.mrf.mxu0
        %v3189 = vadd.f32 0.0, %v3188
        %v3190 = vpop.f32.mrf.mxu0
        %v3191 = vadd.f32 0.0, %v3190
        %3192 = vmatmul.bf16.gmra.mxu0 %v3069
        %v3193 = vpop.f32.mrf.mxu0
        %v3194 = vadd.f32 0.0, %v3193
        %v3195 = vpop.f32.mrf.mxu0
        %v3196 = vadd.f32 0.0, %v3195
        %3197 = vmatmul.bf16.gmra.mxu0 %v3071
        %v3198 = vpop.f32.mrf.mxu0
        %v3199 = vadd.f32 0.0, %v3198
        %v3200 = vpop.f32.mrf.mxu0
        %v3201 = vadd.f32 0.0, %v3200
        %3202 = vmatmul.bf16.gmra.mxu0 %v3073
        %v3203 = vpop.f32.mrf.mxu0
        %v3204 = vadd.f32 0.0, %v3203
        %v3205 = vpop.f32.mrf.mxu0
        %v3206 = vadd.f32 0.0, %v3205
        %3207 = vmatmul.bf16.gmra.mxu0 %v3075
        %v3208 = vpop.f32.mrf.mxu0
        %v3209 = vadd.f32 0.0, %v3208
        %v3210 = vpop.f32.mrf.mxu0
        %v3211 = vadd.f32 0.0, %v3210
        %3212 = vmatmul.bf16.gmra.mxu0 %v3077
        %v3213 = vpop.f32.mrf.mxu0
        %v3214 = vadd.f32 0.0, %v3213
        %v3215 = vpop.f32.mrf.mxu0
        %v3216 = vadd.f32 0.0, %v3215
        %3217 = vmatmul.bf16.gmra.mxu0 %v3079
        %v3218 = vpop.f32.mrf.mxu0
        %v3219 = vadd.f32 0.0, %v3218
        %v3220 = vpop.f32.mrf.mxu0
        %v3221 = vadd.f32 0.0, %v3220
        %3222 = vmatmul.bf16.gmra.mxu0 %v3081
        %v3223 = vpop.f32.mrf.mxu0
        %v3224 = vadd.f32 0.0, %v3223
        %v3225 = vpop.f32.mrf.mxu0
        %v3226 = vadd.f32 0.0, %v3225
        %3227 = vdwg.mxu0
        %3228 = vmatpush.bf16.msra.mxu0 %v3162
        %3229 = vmatpush.bf16.msra.mxu0 %v3161
        %3230 = vmatpush.bf16.msra.mxu0 %v3160
        %3231 = vmatpush.bf16.msra.mxu0 %v3159
        %3232 = vmatpush.bf16.msra.mxu0 %v3158
        %3233 = vmatpush.bf16.msra.mxu0 %v3157
        %3234 = vmatpush.bf16.msra.mxu0 %v3156
        %3235 = vmatpush.bf16.msra.mxu0 %v3155
        %3236 = vmatmul.bf16.gmra.mxu0 %v3068
        %v3237 = vpop.f32.mrf.mxu0
        %v3238 = vadd.f32 %v3189, %v3237
        %v3239 = vpop.f32.mrf.mxu0
        %v3240 = vadd.f32 %v3191, %v3239
        %3241 = vmatmul.bf16.gmra.mxu0 %v3070
        %v3242 = vpop.f32.mrf.mxu0
        %v3243 = vadd.f32 %v3194, %v3242
        %v3244 = vpop.f32.mrf.mxu0
        %v3245 = vadd.f32 %v3196, %v3244
        %3246 = vmatmul.bf16.gmra.mxu0 %v3072
        %v3247 = vpop.f32.mrf.mxu0
        %v3248 = vadd.f32 %v3199, %v3247
        %v3249 = vpop.f32.mrf.mxu0
        %v3250 = vadd.f32 %v3201, %v3249
        %3251 = vmatmul.bf16.gmra.mxu0 %v3074
        %v3252 = vpop.f32.mrf.mxu0
        %v3253 = vadd.f32 %v3204, %v3252
        %v3254 = vpop.f32.mrf.mxu0
        %v3255 = vadd.f32 %v3206, %v3254
        %3256 = vmatmul.bf16.gmra.mxu0 %v3076
        %v3257 = vpop.f32.mrf.mxu0
        %v3258 = vadd.f32 %v3209, %v3257
        %v3259 = vpop.f32.mrf.mxu0
        %v3260 = vadd.f32 %v3211, %v3259
        %3261 = vmatmul.bf16.gmra.mxu0 %v3078
        %v3262 = vpop.f32.mrf.mxu0
        %v3263 = vadd.f32 %v3214, %v3262
        %v3264 = vpop.f32.mrf.mxu0
        %v3265 = vadd.f32 %v3216, %v3264
        %3266 = vmatmul.bf16.gmra.mxu0 %v3080
        %v3267 = vpop.f32.mrf.mxu0
        %v3268 = vadd.f32 %v3219, %v3267
        %v3269 = vpop.f32.mrf.mxu0
        %v3270 = vadd.f32 %v3221, %v3269
        %3271 = vmatmul.bf16.gmra.mxu0 %v3082
        %v3272 = vpop.f32.mrf.mxu0
        %v3273 = vadd.f32 %v3224, %v3272
        %v3274 = vpop.f32.mrf.mxu0
        %v3275 = vadd.f32 %v3226, %v3274
        %3276 = vdwg.mxu0
        %v3277 = vpack.c.bf16 %v3238, %v3238
        %v3278 = vpack.c.bf16 %v3240, %v3240
        %v3279 = vpack.c.bf16 %v3243, %v3243
        %v3280 = vpack.c.bf16 %v3245, %v3245
        %v3281 = vpack.c.bf16 %v3248, %v3248
        %v3282 = vpack.c.bf16 %v3250, %v3250
        %v3283 = vpack.c.bf16 %v3253, %v3253
        %v3284 = vpack.c.bf16 %v3255, %v3255
        %v3285 = vpack.c.bf16 %v3258, %v3258
        %v3286 = vpack.c.bf16 %v3260, %v3260
        %v3287 = vpack.c.bf16 %v3263, %v3263
        %v3288 = vpack.c.bf16 %v3265, %v3265
        %v3289 = vpack.c.bf16 %v3268, %v3268
        %v3290 = vpack.c.bf16 %v3270, %v3270
        %v3291 = vpack.c.bf16 %v3273, %v3273
        %v3292 = vpack.c.bf16 %v3275, %v3275
        %3293 = vst [vmem:[#allocation3] sm:$0xf] %v3277
        %3294 = vst [vmem:[#allocation3 + $0x8] sm:$0xf] %v3278
        %3295 = vst [vmem:[#allocation3 + $0x10] sm:$0xf] %v3279
        %3296 = vst [vmem:[#allocation3 + $0x18] sm:$0xf] %v3280
        %3297 = vst [vmem:[#allocation3 + $0x20] sm:$0xf] %v3281
        %3298 = vst [vmem:[#allocation3 + $0x28] sm:$0xf] %v3282
        %3299 = vst [vmem:[#allocation3 + $0x30] sm:$0xf] %v3283
        %3300 = vst [vmem:[#allocation3 + $0x38] sm:$0xf] %v3284
        %3301 = vst [vmem:[#allocation3 + $0x40] sm:$0xf] %v3285
        %3302 = vst [vmem:[#allocation3 + $0x48] sm:$0xf] %v3286
        %3303 = vst [vmem:[#allocation3 + $0x50] sm:$0xf] %v3287
        %3304 = vst [vmem:[#allocation3 + $0x58] sm:$0xf] %v3288
        %3305 = vst [vmem:[#allocation3 + $0x60] sm:$0xf] %v3289
        %3306 = vst [vmem:[#allocation3 + $0x68] sm:$0xf] %v3290
        %3307 = vst [vmem:[#allocation3 + $0x70] sm:$0xf] %v3291
        %3308 = vst [vmem:[#allocation3 + $0x78] sm:$0xf] %v3292
        %v3309 = vld [vmem:[%s2248 + $0x4] sm:$0xf]
        %v3310 = vld [vmem:[%s2248 + $0x1c] sm:$0xf]
        %v3311 = vld [vmem:[%s2248 + $0x34] sm:$0xf]
        %v3312 = vld [vmem:[%s2248 + $0x4c] sm:$0xf]
        %v3313 = vld [vmem:[%s2248 + $0x64] sm:$0xf]
        %v3314 = vld [vmem:[%s2248 + $0x7c] sm:$0xf]
        %v3315 = vld [vmem:[%s2248 + $0x94] sm:$0xf]
        %v3316 = vld [vmem:[%s2248 + $0xac] sm:$0xf]
        %v3317 = vld [vmem:[%s2248 + $0xc4] sm:$0xf]
        %v3318 = vld [vmem:[%s2248 + $0xdc] sm:$0xf]
        %v3319 = vld [vmem:[%s2248 + $0xf4] sm:$0xf]
        %v3320 = vld [vmem:[%s2248 + $0x10c] sm:$0xf]
        %v3321 = vld [vmem:[%s2248 + $0x124] sm:$0xf]
        %v3322 = vld [vmem:[%s2248 + $0x13c] sm:$0xf]
        %v3323 = vld [vmem:[%s2248 + $0x154] sm:$0xf]
        %v3324 = vld [vmem:[%s2248 + $0x16c] sm:$0xf]
        %v3325 = vld [vmem:[#allocation2 + $0xc] sm:$0xf]
        %v3326 = vld [vmem:[#allocation2 + $0x24] sm:$0xf]
        %v3327 = vld [vmem:[#allocation2 + $0x3c] sm:$0xf]
        %v3328 = vld [vmem:[#allocation2 + $0x54] sm:$0xf]
        %v3329 = vld [vmem:[#allocation2 + $0x6c] sm:$0xf]
        %v3330 = vld [vmem:[#allocation2 + $0x84] sm:$0xf]
        %v3331 = vld [vmem:[#allocation2 + $0x9c] sm:$0xf]
        %v3332 = vld [vmem:[#allocation2 + $0xb4] sm:$0xf]
        %v3333 = vld [vmem:[#allocation2 + $0xcc] sm:$0xf]
        %v3334 = vld [vmem:[#allocation2 + $0xe4] sm:$0xf]
        %v3335 = vld [vmem:[#allocation2 + $0xfc] sm:$0xf]
        %v3336 = vld [vmem:[#allocation2 + $0x114] sm:$0xf]
        %v3337 = vld [vmem:[#allocation2 + $0x12c] sm:$0xf]
        %v3338 = vld [vmem:[#allocation2 + $0x144] sm:$0xf]
        %v3339 = vld [vmem:[#allocation2 + $0x15c] sm:$0xf]
        %v3340 = vld [vmem:[#allocation2 + $0x174] sm:$0xf]
        %v3341 = vld [vmem:[#allocation2 + $0x18c] sm:$0xf]
        %v3342 = vld [vmem:[#allocation2 + $0x1a4] sm:$0xf]
        %v3343 = vld [vmem:[#allocation2 + $0x1bc] sm:$0xf]
        %v3344 = vld [vmem:[#allocation2 + $0x1d4] sm:$0xf]
        %v3345 = vld [vmem:[#allocation2 + $0x1ec] sm:$0xf]
        %v3346 = vld [vmem:[#allocation2 + $0x204] sm:$0xf]
        %v3347 = vld [vmem:[#allocation2 + $0x21c] sm:$0xf]
        %v3348 = vld [vmem:[#allocation2 + $0x234] sm:$0xf]
        %v3349 = vld [vmem:[#allocation2 + $0x24c] sm:$0xf]
        %v3350 = vld [vmem:[#allocation2 + $0x264] sm:$0xf]
        %v3351 = vld [vmem:[#allocation2 + $0x27c] sm:$0xf]
        %v3352 = vld [vmem:[#allocation2 + $0x294] sm:$0xf]
        %v3353 = vld [vmem:[#allocation2 + $0x2ac] sm:$0xf]
        %v3354 = vld [vmem:[#allocation2 + $0x2c4] sm:$0xf]
        %v3355 = vld [vmem:[#allocation2 + $0x2dc] sm:$0xf]
        %v3356 = vld [vmem:[#allocation2 + $0x2f4] sm:$0xf]
        %v3357 = vld [vmem:[#allocation2 + $0x14] sm:$0xf]
        %v3358 = vld [vmem:[#allocation2 + $0x2c] sm:$0xf]
        %v3359 = vld [vmem:[#allocation2 + $0x44] sm:$0xf]
        %v3360 = vld [vmem:[#allocation2 + $0x5c] sm:$0xf]
        %v3361 = vld [vmem:[#allocation2 + $0x74] sm:$0xf]
        %v3362 = vld [vmem:[#allocation2 + $0x8c] sm:$0xf]
        %v3363 = vld [vmem:[#allocation2 + $0xa4] sm:$0xf]
        %v3364 = vld [vmem:[#allocation2 + $0xbc] sm:$0xf]
        %v3365 = vld [vmem:[#allocation2 + $0xd4] sm:$0xf]
        %v3366 = vld [vmem:[#allocation2 + $0xec] sm:$0xf]
        %v3367 = vld [vmem:[#allocation2 + $0x104] sm:$0xf]
        %v3368 = vld [vmem:[#allocation2 + $0x11c] sm:$0xf]
        %v3369 = vld [vmem:[#allocation2 + $0x134] sm:$0xf]
        %v3370 = vld [vmem:[#allocation2 + $0x14c] sm:$0xf]
        %v3371 = vld [vmem:[#allocation2 + $0x164] sm:$0xf]
        %v3372 = vld [vmem:[#allocation2 + $0x17c] sm:$0xf]
        %v3373 = vld [vmem:[#allocation2 + $0x194] sm:$0xf]
        %v3374 = vld [vmem:[#allocation2 + $0x1ac] sm:$0xf]
        %v3375 = vld [vmem:[#allocation2 + $0x1c4] sm:$0xf]
        %v3376 = vld [vmem:[#allocation2 + $0x1dc] sm:$0xf]
        %v3377 = vld [vmem:[#allocation2 + $0x1f4] sm:$0xf]
        %v3378 = vld [vmem:[#allocation2 + $0x20c] sm:$0xf]
        %v3379 = vld [vmem:[#allocation2 + $0x224] sm:$0xf]
        %v3380 = vld [vmem:[#allocation2 + $0x23c] sm:$0xf]
        %v3381 = vld [vmem:[#allocation2 + $0x254] sm:$0xf]
        %v3382 = vld [vmem:[#allocation2 + $0x26c] sm:$0xf]
        %v3383 = vld [vmem:[#allocation2 + $0x284] sm:$0xf]
        %v3384 = vld [vmem:[#allocation2 + $0x29c] sm:$0xf]
        %v3385 = vld [vmem:[#allocation2 + $0x2b4] sm:$0xf]
        %v3386 = vld [vmem:[#allocation2 + $0x2cc] sm:$0xf]
        %v3387 = vld [vmem:[#allocation2 + $0x2e4] sm:$0xf]
        %v3388 = vld [vmem:[#allocation2 + $0x2fc] sm:$0xf]
        %v3405 = vunpack.c.l.b16 %v3309
        %v3406 = vunpack.c.l.b16 %v3310
        %v3407 = vunpack.c.l.b16 %v3311
        %v3408 = vunpack.c.l.b16 %v3312
        %v3409 = vunpack.c.l.b16 %v3313
        %v3410 = vunpack.c.l.b16 %v3314
        %v3411 = vunpack.c.l.b16 %v3315
        %v3412 = vunpack.c.l.b16 %v3316
        %v3413 = vunpack.c.l.b16 %v3317
        %v3414 = vunpack.c.l.b16 %v3318
        %v3415 = vunpack.c.l.b16 %v3319
        %v3416 = vunpack.c.l.b16 %v3320
        %v3417 = vunpack.c.l.b16 %v3321
        %v3418 = vunpack.c.l.b16 %v3322
        %v3419 = vunpack.c.l.b16 %v3323
        %v3420 = vunpack.c.l.b16 %v3324
        %v3421 = vpack.c.b16 %v3406, %v3405
        %v3422 = vpack.c.b16 %v3408, %v3407
        %v3423 = vpack.c.b16 %v3410, %v3409
        %v3424 = vpack.c.b16 %v3412, %v3411
        %v3425 = vpack.c.b16 %v3414, %v3413
        %v3426 = vpack.c.b16 %v3416, %v3415
        %v3427 = vpack.c.b16 %v3418, %v3417
        %v3428 = vpack.c.b16 %v3420, %v3419
        %v3469 = vunpack.c.l.b16 %v3325
        %v3470 = vunpack.c.l.b16 %v3326
        %v3471 = vunpack.c.l.b16 %v3327
        %v3472 = vunpack.c.l.b16 %v3328
        %v3473 = vunpack.c.l.b16 %v3329
        %v3474 = vunpack.c.l.b16 %v3330
        %v3475 = vunpack.c.l.b16 %v3331
        %v3476 = vunpack.c.l.b16 %v3332
        %v3477 = vunpack.c.l.b16 %v3333
        %v3478 = vunpack.c.l.b16 %v3334
        %v3479 = vunpack.c.l.b16 %v3335
        %v3480 = vunpack.c.l.b16 %v3336
        %v3481 = vunpack.c.l.b16 %v3337
        %v3482 = vunpack.c.l.b16 %v3338
        %v3483 = vunpack.c.l.b16 %v3339
        %v3484 = vunpack.c.l.b16 %v3340
        %v3485 = vunpack.c.l.b16 %v3341
        %v3486 = vunpack.c.l.b16 %v3342
        %v3487 = vunpack.c.l.b16 %v3343
        %v3488 = vunpack.c.l.b16 %v3344
        %v3489 = vunpack.c.l.b16 %v3345
        %v3490 = vunpack.c.l.b16 %v3346
        %v3491 = vunpack.c.l.b16 %v3347
        %v3492 = vunpack.c.l.b16 %v3348
        %v3493 = vunpack.c.l.b16 %v3349
        %v3494 = vunpack.c.l.b16 %v3350
        %v3495 = vunpack.c.l.b16 %v3351
        %v3496 = vunpack.c.l.b16 %v3352
        %v3497 = vunpack.c.l.b16 %v3353
        %v3498 = vunpack.c.l.b16 %v3354
        %v3499 = vunpack.c.l.b16 %v3355
        %v3500 = vunpack.c.l.b16 %v3356
        %v3501 = vpack.c.b16 %v3470, %v3469
        %v3502 = vpack.c.b16 %v3472, %v3471
        %v3503 = vpack.c.b16 %v3474, %v3473
        %v3504 = vpack.c.b16 %v3476, %v3475
        %v3505 = vpack.c.b16 %v3478, %v3477
        %v3506 = vpack.c.b16 %v3480, %v3479
        %v3507 = vpack.c.b16 %v3482, %v3481
        %v3508 = vpack.c.b16 %v3484, %v3483
        %v3509 = vpack.c.b16 %v3486, %v3485
        %v3510 = vpack.c.b16 %v3488, %v3487
        %v3511 = vpack.c.b16 %v3490, %v3489
        %v3512 = vpack.c.b16 %v3492, %v3491
        %v3513 = vpack.c.b16 %v3494, %v3493
        %v3514 = vpack.c.b16 %v3496, %v3495
        %v3515 = vpack.c.b16 %v3498, %v3497
        %v3516 = vpack.c.b16 %v3500, %v3499
        %3533 = vmatpush.bf16.xpose.msra.mxu0 %v3508
        %3534 = vmatpush.bf16.xpose.msra.mxu0 %v3507
        %3535 = vmatpush.bf16.xpose.msra.mxu0 %v3506
        %3536 = vmatpush.bf16.xpose.msra.mxu0 %v3505
        %3537 = vmatpush.bf16.xpose.msra.mxu0 %v3504
        %3538 = vmatpush.bf16.xpose.msra.mxu0 %v3503
        %3539 = vmatpush.bf16.xpose.msra.mxu0 %v3502
        %3540 = vmatpush.bf16.xpose.msra.mxu0 %v3501
        %3541 = vmatmul.bf16.gmra.mxu0 %v3421
        %v3542 = vpop.f32.mrf.mxu0
        %v3543 = vadd.f32 0.0, %v3542
        %v3544 = vpop.f32.mrf.mxu0
        %v3545 = vadd.f32 0.0, %v3544
        %3546 = vmatmul.bf16.gmra.mxu0 %v3422
        %v3547 = vpop.f32.mrf.mxu0
        %v3548 = vadd.f32 0.0, %v3547
        %v3549 = vpop.f32.mrf.mxu0
        %v3550 = vadd.f32 0.0, %v3549
        %3551 = vmatmul.bf16.gmra.mxu0 %v3423
        %v3552 = vpop.f32.mrf.mxu0
        %v3553 = vadd.f32 0.0, %v3552
        %v3554 = vpop.f32.mrf.mxu0
        %v3555 = vadd.f32 0.0, %v3554
        %3556 = vmatmul.bf16.gmra.mxu0 %v3424
        %v3557 = vpop.f32.mrf.mxu0
        %v3558 = vadd.f32 0.0, %v3557
        %v3559 = vpop.f32.mrf.mxu0
        %v3560 = vadd.f32 0.0, %v3559
        %3561 = vmatmul.bf16.gmra.mxu0 %v3425
        %v3562 = vpop.f32.mrf.mxu0
        %v3563 = vadd.f32 0.0, %v3562
        %v3564 = vpop.f32.mrf.mxu0
        %v3565 = vadd.f32 0.0, %v3564
        %3566 = vmatmul.bf16.gmra.mxu0 %v3426
        %v3567 = vpop.f32.mrf.mxu0
        %v3568 = vadd.f32 0.0, %v3567
        %v3569 = vpop.f32.mrf.mxu0
        %v3570 = vadd.f32 0.0, %v3569
        %3571 = vmatmul.bf16.gmra.mxu0 %v3427
        %v3572 = vpop.f32.mrf.mxu0
        %v3573 = vadd.f32 0.0, %v3572
        %v3574 = vpop.f32.mrf.mxu0
        %v3575 = vadd.f32 0.0, %v3574
        %3576 = vmatmul.bf16.gmra.mxu0 %v3428
        %v3577 = vpop.f32.mrf.mxu0
        %v3578 = vadd.f32 0.0, %v3577
        %v3579 = vpop.f32.mrf.mxu0
        %v3580 = vadd.f32 0.0, %v3579
        %3581 = vdwg.mxu0
        %3582 = vmatpush.bf16.xpose.msra.mxu0 %v3516
        %3583 = vmatpush.bf16.xpose.msra.mxu0 %v3515
        %3584 = vmatpush.bf16.xpose.msra.mxu0 %v3514
        %3585 = vmatpush.bf16.xpose.msra.mxu0 %v3513
        %3586 = vmatpush.bf16.xpose.msra.mxu0 %v3512
        %3587 = vmatpush.bf16.xpose.msra.mxu0 %v3511
        %3588 = vmatpush.bf16.xpose.msra.mxu0 %v3510
        %3589 = vmatpush.bf16.xpose.msra.mxu0 %v3509
        %3590 = vmatmul.bf16.gmra.mxu0 %v3421
        %v3591 = vpop.f32.mrf.mxu0
        %v3592 = vadd.f32 0.0, %v3591
        %v3593 = vpop.f32.mrf.mxu0
        %v3594 = vadd.f32 0.0, %v3593
        %3595 = vmatmul.bf16.gmra.mxu0 %v3422
        %v3596 = vpop.f32.mrf.mxu0
        %v3597 = vadd.f32 0.0, %v3596
        %v3598 = vpop.f32.mrf.mxu0
        %v3599 = vadd.f32 0.0, %v3598
        %3600 = vmatmul.bf16.gmra.mxu0 %v3423
        %v3601 = vpop.f32.mrf.mxu0
        %v3602 = vadd.f32 0.0, %v3601
        %v3603 = vpop.f32.mrf.mxu0
        %v3604 = vadd.f32 0.0, %v3603
        %3605 = vmatmul.bf16.gmra.mxu0 %v3424
        %v3606 = vpop.f32.mrf.mxu0
        %v3607 = vadd.f32 0.0, %v3606
        %v3608 = vpop.f32.mrf.mxu0
        %v3609 = vadd.f32 0.0, %v3608
        %3610 = vmatmul.bf16.gmra.mxu0 %v3425
        %v3611 = vpop.f32.mrf.mxu0
        %v3612 = vadd.f32 0.0, %v3611
        %v3613 = vpop.f32.mrf.mxu0
        %v3614 = vadd.f32 0.0, %v3613
        %3615 = vmatmul.bf16.gmra.mxu0 %v3426
        %v3616 = vpop.f32.mrf.mxu0
        %v3617 = vadd.f32 0.0, %v3616
        %v3618 = vpop.f32.mrf.mxu0
        %v3619 = vadd.f32 0.0, %v3618
        %3620 = vmatmul.bf16.gmra.mxu0 %v3427
        %v3621 = vpop.f32.mrf.mxu0
        %v3622 = vadd.f32 0.0, %v3621
        %v3623 = vpop.f32.mrf.mxu0
        %v3624 = vadd.f32 0.0, %v3623
        %3625 = vmatmul.bf16.gmra.mxu0 %v3428
        %v3626 = vpop.f32.mrf.mxu0
        %v3627 = vadd.f32 0.0, %v3626
        %v3628 = vpop.f32.mrf.mxu0
        %v3629 = vadd.f32 0.0, %v3628
        %3630 = vdwg.mxu0
        %v3631 = vmax.f32 %v3543, %v3592
        %3632 = vmax.xlane.f32.xlu0 %v3631
        %v3633 = vpop.xlane.xlu0 %3632
        %v3634 = vmax.f32 %v3545, %v3594
        %3635 = vmax.xlane.f32.xlu0 %v3634
        %v3636 = vpop.xlane.xlu0 %3635
        %v3637 = vmax.f32 %v3548, %v3597
        %3638 = vmax.xlane.f32.xlu0 %v3637
        %v3639 = vpop.xlane.xlu0 %3638
        %v3640 = vmax.f32 %v3550, %v3599
        %3641 = vmax.xlane.f32.xlu0 %v3640
        %v3642 = vpop.xlane.xlu0 %3641
        %v3643 = vmax.f32 %v3553, %v3602
        %3644 = vmax.xlane.f32.xlu0 %v3643
        %v3645 = vpop.xlane.xlu0 %3644
        %v3646 = vmax.f32 %v3555, %v3604
        %3647 = vmax.xlane.f32.xlu0 %v3646
        %v3648 = vpop.xlane.xlu0 %3647
        %v3649 = vmax.f32 %v3558, %v3607
        %3650 = vmax.xlane.f32.xlu0 %v3649
        %v3651 = vpop.xlane.xlu0 %3650
        %v3652 = vmax.f32 %v3560, %v3609
        %3653 = vmax.xlane.f32.xlu0 %v3652
        %v3654 = vpop.xlane.xlu0 %3653
        %v3655 = vmax.f32 %v3563, %v3612
        %3656 = vmax.xlane.f32.xlu0 %v3655
        %v3657 = vpop.xlane.xlu0 %3656
        %v3658 = vmax.f32 %v3565, %v3614
        %3659 = vmax.xlane.f32.xlu0 %v3658
        %v3660 = vpop.xlane.xlu0 %3659
        %v3661 = vmax.f32 %v3568, %v3617
        %3662 = vmax.xlane.f32.xlu0 %v3661
        %v3663 = vpop.xlane.xlu0 %3662
        %v3664 = vmax.f32 %v3570, %v3619
        %3665 = vmax.xlane.f32.xlu0 %v3664
        %v3666 = vpop.xlane.xlu0 %3665
        %v3667 = vmax.f32 %v3573, %v3622
        %3668 = vmax.xlane.f32.xlu0 %v3667
        %v3669 = vpop.xlane.xlu0 %3668
        %v3670 = vmax.f32 %v3575, %v3624
        %3671 = vmax.xlane.f32.xlu0 %v3670
        %v3672 = vpop.xlane.xlu0 %3671
        %v3673 = vmax.f32 %v3578, %v3627
        %3674 = vmax.xlane.f32.xlu0 %v3673
        %v3675 = vpop.xlane.xlu0 %3674
        %v3676 = vmax.f32 %v3580, %v3629
        %3677 = vmax.xlane.f32.xlu0 %v3676
        %v3678 = vpop.xlane.xlu0 %3677
        %v3679 = vsub.f32 %v3543, %v3633
        %v3680 = vsub.f32 %v3592, %v3633
        %v3681 = vsub.f32 %v3545, %v3636
        %v3682 = vsub.f32 %v3594, %v3636
        %v3683 = vsub.f32 %v3548, %v3639
        %v3684 = vsub.f32 %v3597, %v3639
        %v3685 = vsub.f32 %v3550, %v3642
        %v3686 = vsub.f32 %v3599, %v3642
        %v3687 = vsub.f32 %v3553, %v3645
        %v3688 = vsub.f32 %v3602, %v3645
        %v3689 = vsub.f32 %v3555, %v3648
        %v3690 = vsub.f32 %v3604, %v3648
        %v3691 = vsub.f32 %v3558, %v3651
        %v3692 = vsub.f32 %v3607, %v3651
        %v3693 = vsub.f32 %v3560, %v3654
        %v3694 = vsub.f32 %v3609, %v3654
        %v3695 = vsub.f32 %v3563, %v3657
        %v3696 = vsub.f32 %v3612, %v3657
        %v3697 = vsub.f32 %v3565, %v3660
        %v3698 = vsub.f32 %v3614, %v3660
        %v3699 = vsub.f32 %v3568, %v3663
        %v3700 = vsub.f32 %v3617, %v3663
        %v3701 = vsub.f32 %v3570, %v3666
        %v3702 = vsub.f32 %v3619, %v3666
        %v3703 = vsub.f32 %v3573, %v3669
        %v3704 = vsub.f32 %v3622, %v3669
        %v3705 = vsub.f32 %v3575, %v3672
        %v3706 = vsub.f32 %v3624, %v3672
        %v3707 = vsub.f32 %v3578, %v3675
        %v3708 = vsub.f32 %v3627, %v3675
        %v3709 = vsub.f32 %v3580, %v3678
        %v3710 = vsub.f32 %v3629, %v3678
        %v3711 = vmul.f32 %v3679, 1.442695
        %v3712 = vpow.pop %v3711
        %v3713 = vmul.f32 %v3680, 1.442695
        %v3714 = vpow.pop %v3713
        %v3715 = vmul.f32 %v3681, 1.442695
        %v3716 = vpow.pop %v3715
        %v3717 = vmul.f32 %v3682, 1.442695
        %v3718 = vpow.pop %v3717
        %v3719 = vmul.f32 %v3683, 1.442695
        %v3720 = vpow.pop %v3719
        %v3721 = vmul.f32 %v3684, 1.442695
        %v3722 = vpow.pop %v3721
        %v3723 = vmul.f32 %v3685, 1.442695
        %v3724 = vpow.pop %v3723
        %v3725 = vmul.f32 %v3686, 1.442695
        %v3726 = vpow.pop %v3725
        %v3727 = vmul.f32 %v3687, 1.442695
        %v3728 = vpow.pop %v3727
        %v3729 = vmul.f32 %v3688, 1.442695
        %v3730 = vpow.pop %v3729
        %v3731 = vmul.f32 %v3689, 1.442695
        %v3732 = vpow.pop %v3731
        %v3733 = vmul.f32 %v3690, 1.442695
        %v3734 = vpow.pop %v3733
        %v3735 = vmul.f32 %v3691, 1.442695
        %v3736 = vpow.pop %v3735
        %v3737 = vmul.f32 %v3692, 1.442695
        %v3738 = vpow.pop %v3737
        %v3739 = vmul.f32 %v3693, 1.442695
        %v3740 = vpow.pop %v3739
        %v3741 = vmul.f32 %v3694, 1.442695
        %v3742 = vpow.pop %v3741
        %v3743 = vmul.f32 %v3695, 1.442695
        %v3744 = vpow.pop %v3743
        %v3745 = vmul.f32 %v3696, 1.442695
        %v3746 = vpow.pop %v3745
        %v3747 = vmul.f32 %v3697, 1.442695
        %v3748 = vpow.pop %v3747
        %v3749 = vmul.f32 %v3698, 1.442695
        %v3750 = vpow.pop %v3749
        %v3751 = vmul.f32 %v3699, 1.442695
        %v3752 = vpow.pop %v3751
        %v3753 = vmul.f32 %v3700, 1.442695
        %v3754 = vpow.pop %v3753
        %v3755 = vmul.f32 %v3701, 1.442695
        %v3756 = vpow.pop %v3755
        %v3757 = vmul.f32 %v3702, 1.442695
        %v3758 = vpow.pop %v3757
        %v3759 = vmul.f32 %v3703, 1.442695
        %v3760 = vpow.pop %v3759
        %v3761 = vmul.f32 %v3704, 1.442695
        %v3762 = vpow.pop %v3761
        %v3763 = vmul.f32 %v3705, 1.442695
        %v3764 = vpow.pop %v3763
        %v3765 = vmul.f32 %v3706, 1.442695
        %v3766 = vpow.pop %v3765
        %v3767 = vmul.f32 %v3707, 1.442695
        %v3768 = vpow.pop %v3767
        %v3769 = vmul.f32 %v3708, 1.442695
        %v3770 = vpow.pop %v3769
        %v3771 = vmul.f32 %v3709, 1.442695
        %v3772 = vpow.pop %v3771
        %v3773 = vmul.f32 %v3710, 1.442695
        %v3774 = vpow.pop %v3773
        %v3775 = vadd.f32 %v3712, %v3714
        %3776 = vadd.xlane.f32.xlu0 %v3775
        %v3777 = vpop.xlane.xlu0 %3776
        %v3778 = vadd.f32 %v3716, %v3718
        %3779 = vadd.xlane.f32.xlu0 %v3778
        %v3780 = vpop.xlane.xlu0 %3779
        %v3781 = vadd.f32 %v3720, %v3722
        %3782 = vadd.xlane.f32.xlu0 %v3781
        %v3783 = vpop.xlane.xlu0 %3782
        %v3784 = vadd.f32 %v3724, %v3726
        %3785 = vadd.xlane.f32.xlu0 %v3784
        %v3786 = vpop.xlane.xlu0 %3785
        %v3787 = vadd.f32 %v3728, %v3730
        %3788 = vadd.xlane.f32.xlu0 %v3787
        %v3789 = vpop.xlane.xlu0 %3788
        %v3790 = vadd.f32 %v3732, %v3734
        %3791 = vadd.xlane.f32.xlu0 %v3790
        %v3792 = vpop.xlane.xlu0 %3791
        %v3793 = vadd.f32 %v3736, %v3738
        %3794 = vadd.xlane.f32.xlu0 %v3793
        %v3795 = vpop.xlane.xlu0 %3794
        %v3796 = vadd.f32 %v3740, %v3742
        %3797 = vadd.xlane.f32.xlu0 %v3796
        %v3798 = vpop.xlane.xlu0 %3797
        %v3799 = vadd.f32 %v3744, %v3746
        %3800 = vadd.xlane.f32.xlu0 %v3799
        %v3801 = vpop.xlane.xlu0 %3800
        %v3802 = vadd.f32 %v3748, %v3750
        %3803 = vadd.xlane.f32.xlu0 %v3802
        %v3804 = vpop.xlane.xlu0 %3803
        %v3805 = vadd.f32 %v3752, %v3754
        %3806 = vadd.xlane.f32.xlu0 %v3805
        %v3807 = vpop.xlane.xlu0 %3806
        %v3808 = vadd.f32 %v3756, %v3758
        %3809 = vadd.xlane.f32.xlu0 %v3808
        %v3810 = vpop.xlane.xlu0 %3809
        %v3811 = vadd.f32 %v3760, %v3762
        %3812 = vadd.xlane.f32.xlu0 %v3811
        %v3813 = vpop.xlane.xlu0 %3812
        %v3814 = vadd.f32 %v3764, %v3766
        %3815 = vadd.xlane.f32.xlu0 %v3814
        %v3816 = vpop.xlane.xlu0 %3815
        %v3817 = vadd.f32 %v3768, %v3770
        %3818 = vadd.xlane.f32.xlu0 %v3817
        %v3819 = vpop.xlane.xlu0 %3818
        %v3820 = vadd.f32 %v3772, %v3774
        %3821 = vadd.xlane.f32.xlu0 %v3820
        %v3822 = vpop.xlane.xlu0 %3821
        %v3823 = vrcp.pop %v3777
        %v3824 = vmul.f32 %v3777, %v3823
        %v3825 = vsub.f32 1.0, %v3824
        %v3826 = vmul.f32 %v3823, %v3825
        %v3827 = vadd.f32 %v3823, %v3826
        %vm3828 = vweird.f32 %v3777
        %vm3829 = vweird.f32 %v3823
        %vm3830 = vmor %vm3828, %vm3829
        %v3831 = vsel %vm3830, %v3823, %v3827
        %v3832 = vand.u32 2147483647, %v3777
        %vm3833 = vcmp.eq.f32.partialorder %v3832, 8.507059e+37
        %v3834 = vand.u32 %v3777, 2147483648
        %v3835 = vor.u32 1.1754944e-38, %v3834
        %v3836 = vsel %vm3833, %v3835, %v3831
        %v3837 = vmul.f32 1.0, %v3836
        %v3838 = vrcp.pop %v3780
        %v3839 = vmul.f32 %v3780, %v3838
        %v3840 = vsub.f32 1.0, %v3839
        %v3841 = vmul.f32 %v3838, %v3840
        %v3842 = vadd.f32 %v3838, %v3841
        %vm3843 = vweird.f32 %v3780
        %vm3844 = vweird.f32 %v3838
        %vm3845 = vmor %vm3843, %vm3844
        %v3846 = vsel %vm3845, %v3838, %v3842
        %v3847 = vand.u32 2147483647, %v3780
        %vm3848 = vcmp.eq.f32.partialorder %v3847, 8.507059e+37
        %v3849 = vand.u32 %v3780, 2147483648
        %v3850 = vor.u32 1.1754944e-38, %v3849
        %v3851 = vsel %vm3848, %v3850, %v3846
        %v3852 = vmul.f32 1.0, %v3851
        %v3853 = vrcp.pop %v3783
        %v3854 = vmul.f32 %v3783, %v3853
        %v3855 = vsub.f32 1.0, %v3854
        %v3856 = vmul.f32 %v3853, %v3855
        %v3857 = vadd.f32 %v3853, %v3856
        %vm3858 = vweird.f32 %v3783
        %vm3859 = vweird.f32 %v3853
        %vm3860 = vmor %vm3858, %vm3859
        %v3861 = vsel %vm3860, %v3853, %v3857
        %v3862 = vand.u32 2147483647, %v3783
        %vm3863 = vcmp.eq.f32.partialorder %v3862, 8.507059e+37
        %v3864 = vand.u32 %v3783, 2147483648
        %v3865 = vor.u32 1.1754944e-38, %v3864
        %v3866 = vsel %vm3863, %v3865, %v3861
        %v3867 = vmul.f32 1.0, %v3866
        %v3868 = vrcp.pop %v3786
        %v3869 = vmul.f32 %v3786, %v3868
        %v3870 = vsub.f32 1.0, %v3869
        %v3871 = vmul.f32 %v3868, %v3870
        %v3872 = vadd.f32 %v3868, %v3871
        %vm3873 = vweird.f32 %v3786
        %vm3874 = vweird.f32 %v3868
        %vm3875 = vmor %vm3873, %vm3874
        %v3876 = vsel %vm3875, %v3868, %v3872
        %v3877 = vand.u32 2147483647, %v3786
        %vm3878 = vcmp.eq.f32.partialorder %v3877, 8.507059e+37
        %v3879 = vand.u32 %v3786, 2147483648
        %v3880 = vor.u32 1.1754944e-38, %v3879
        %v3881 = vsel %vm3878, %v3880, %v3876
        %v3882 = vmul.f32 1.0, %v3881
        %v3883 = vrcp.pop %v3789
        %v3884 = vmul.f32 %v3789, %v3883
        %v3885 = vsub.f32 1.0, %v3884
        %v3886 = vmul.f32 %v3883, %v3885
        %v3887 = vadd.f32 %v3883, %v3886
        %vm3888 = vweird.f32 %v3789
        %vm3889 = vweird.f32 %v3883
        %vm3890 = vmor %vm3888, %vm3889
        %v3891 = vsel %vm3890, %v3883, %v3887
        %v3892 = vand.u32 2147483647, %v3789
        %vm3893 = vcmp.eq.f32.partialorder %v3892, 8.507059e+37
        %v3894 = vand.u32 %v3789, 2147483648
        %v3895 = vor.u32 1.1754944e-38, %v3894
        %v3896 = vsel %vm3893, %v3895, %v3891
        %v3897 = vmul.f32 1.0, %v3896
        %v3898 = vrcp.pop %v3792
        %v3899 = vmul.f32 %v3792, %v3898
        %v3900 = vsub.f32 1.0, %v3899
        %v3901 = vmul.f32 %v3898, %v3900
        %v3902 = vadd.f32 %v3898, %v3901
        %vm3903 = vweird.f32 %v3792
        %vm3904 = vweird.f32 %v3898
        %vm3905 = vmor %vm3903, %vm3904
        %v3906 = vsel %vm3905, %v3898, %v3902
        %v3907 = vand.u32 2147483647, %v3792
        %vm3908 = vcmp.eq.f32.partialorder %v3907, 8.507059e+37
        %v3909 = vand.u32 %v3792, 2147483648
        %v3910 = vor.u32 1.1754944e-38, %v3909
        %v3911 = vsel %vm3908, %v3910, %v3906
        %v3912 = vmul.f32 1.0, %v3911
        %v3913 = vrcp.pop %v3795
        %v3914 = vmul.f32 %v3795, %v3913
        %v3915 = vsub.f32 1.0, %v3914
        %v3916 = vmul.f32 %v3913, %v3915
        %v3917 = vadd.f32 %v3913, %v3916
        %vm3918 = vweird.f32 %v3795
        %vm3919 = vweird.f32 %v3913
        %vm3920 = vmor %vm3918, %vm3919
        %v3921 = vsel %vm3920, %v3913, %v3917
        %v3922 = vand.u32 2147483647, %v3795
        %vm3923 = vcmp.eq.f32.partialorder %v3922, 8.507059e+37
        %v3924 = vand.u32 %v3795, 2147483648
        %v3925 = vor.u32 1.1754944e-38, %v3924
        %v3926 = vsel %vm3923, %v3925, %v3921
        %v3927 = vmul.f32 1.0, %v3926
        %v3928 = vrcp.pop %v3798
        %v3929 = vmul.f32 %v3798, %v3928
        %v3930 = vsub.f32 1.0, %v3929
        %v3931 = vmul.f32 %v3928, %v3930
        %v3932 = vadd.f32 %v3928, %v3931
        %vm3933 = vweird.f32 %v3798
        %vm3934 = vweird.f32 %v3928
        %vm3935 = vmor %vm3933, %vm3934
        %v3936 = vsel %vm3935, %v3928, %v3932
        %v3937 = vand.u32 2147483647, %v3798
        %vm3938 = vcmp.eq.f32.partialorder %v3937, 8.507059e+37
        %v3939 = vand.u32 %v3798, 2147483648
        %v3940 = vor.u32 1.1754944e-38, %v3939
        %v3941 = vsel %vm3938, %v3940, %v3936
        %v3942 = vmul.f32 1.0, %v3941
        %v3943 = vrcp.pop %v3801
        %v3944 = vmul.f32 %v3801, %v3943
        %v3945 = vsub.f32 1.0, %v3944
        %v3946 = vmul.f32 %v3943, %v3945
        %v3947 = vadd.f32 %v3943, %v3946
        %vm3948 = vweird.f32 %v3801
        %vm3949 = vweird.f32 %v3943
        %vm3950 = vmor %vm3948, %vm3949
        %v3951 = vsel %vm3950, %v3943, %v3947
        %v3952 = vand.u32 2147483647, %v3801
        %vm3953 = vcmp.eq.f32.partialorder %v3952, 8.507059e+37
        %v3954 = vand.u32 %v3801, 2147483648
        %v3955 = vor.u32 1.1754944e-38, %v3954
        %v3956 = vsel %vm3953, %v3955, %v3951
        %v3957 = vmul.f32 1.0, %v3956
        %v3958 = vrcp.pop %v3804
        %v3959 = vmul.f32 %v3804, %v3958
        %v3960 = vsub.f32 1.0, %v3959
        %v3961 = vmul.f32 %v3958, %v3960
        %v3962 = vadd.f32 %v3958, %v3961
        %vm3963 = vweird.f32 %v3804
        %vm3964 = vweird.f32 %v3958
        %vm3965 = vmor %vm3963, %vm3964
        %v3966 = vsel %vm3965, %v3958, %v3962
        %v3967 = vand.u32 2147483647, %v3804
        %vm3968 = vcmp.eq.f32.partialorder %v3967, 8.507059e+37
        %v3969 = vand.u32 %v3804, 2147483648
        %v3970 = vor.u32 1.1754944e-38, %v3969
        %v3971 = vsel %vm3968, %v3970, %v3966
        %v3972 = vmul.f32 1.0, %v3971
        %v3973 = vrcp.pop %v3807
        %v3974 = vmul.f32 %v3807, %v3973
        %v3975 = vsub.f32 1.0, %v3974
        %v3976 = vmul.f32 %v3973, %v3975
        %v3977 = vadd.f32 %v3973, %v3976
        %vm3978 = vweird.f32 %v3807
        %vm3979 = vweird.f32 %v3973
        %vm3980 = vmor %vm3978, %vm3979
        %v3981 = vsel %vm3980, %v3973, %v3977
        %v3982 = vand.u32 2147483647, %v3807
        %vm3983 = vcmp.eq.f32.partialorder %v3982, 8.507059e+37
        %v3984 = vand.u32 %v3807, 2147483648
        %v3985 = vor.u32 1.1754944e-38, %v3984
        %v3986 = vsel %vm3983, %v3985, %v3981
        %v3987 = vmul.f32 1.0, %v3986
        %v3988 = vrcp.pop %v3810
        %v3989 = vmul.f32 %v3810, %v3988
        %v3990 = vsub.f32 1.0, %v3989
        %v3991 = vmul.f32 %v3988, %v3990
        %v3992 = vadd.f32 %v3988, %v3991
        %vm3993 = vweird.f32 %v3810
        %vm3994 = vweird.f32 %v3988
        %vm3995 = vmor %vm3993, %vm3994
        %v3996 = vsel %vm3995, %v3988, %v3992
        %v3997 = vand.u32 2147483647, %v3810
        %vm3998 = vcmp.eq.f32.partialorder %v3997, 8.507059e+37
        %v3999 = vand.u32 %v3810, 2147483648
        %v4000 = vor.u32 1.1754944e-38, %v3999
        %v4001 = vsel %vm3998, %v4000, %v3996
        %v4002 = vmul.f32 1.0, %v4001
        %v4003 = vrcp.pop %v3813
        %v4004 = vmul.f32 %v3813, %v4003
        %v4005 = vsub.f32 1.0, %v4004
        %v4006 = vmul.f32 %v4003, %v4005
        %v4007 = vadd.f32 %v4003, %v4006
        %vm4008 = vweird.f32 %v3813
        %vm4009 = vweird.f32 %v4003
        %vm4010 = vmor %vm4008, %vm4009
        %v4011 = vsel %vm4010, %v4003, %v4007
        %v4012 = vand.u32 2147483647, %v3813
        %vm4013 = vcmp.eq.f32.partialorder %v4012, 8.507059e+37
        %v4014 = vand.u32 %v3813, 2147483648
        %v4015 = vor.u32 1.1754944e-38, %v4014
        %v4016 = vsel %vm4013, %v4015, %v4011
        %v4017 = vmul.f32 1.0, %v4016
        %v4018 = vrcp.pop %v3816
        %v4019 = vmul.f32 %v3816, %v4018
        %v4020 = vsub.f32 1.0, %v4019
        %v4021 = vmul.f32 %v4018, %v4020
        %v4022 = vadd.f32 %v4018, %v4021
        %vm4023 = vweird.f32 %v3816
        %vm4024 = vweird.f32 %v4018
        %vm4025 = vmor %vm4023, %vm4024
        %v4026 = vsel %vm4025, %v4018, %v4022
        %v4027 = vand.u32 2147483647, %v3816
        %vm4028 = vcmp.eq.f32.partialorder %v4027, 8.507059e+37
        %v4029 = vand.u32 %v3816, 2147483648
        %v4030 = vor.u32 1.1754944e-38, %v4029
        %v4031 = vsel %vm4028, %v4030, %v4026
        %v4032 = vmul.f32 1.0, %v4031
        %v4033 = vrcp.pop %v3819
        %v4034 = vmul.f32 %v3819, %v4033
        %v4035 = vsub.f32 1.0, %v4034
        %v4036 = vmul.f32 %v4033, %v4035
        %v4037 = vadd.f32 %v4033, %v4036
        %vm4038 = vweird.f32 %v3819
        %vm4039 = vweird.f32 %v4033
        %vm4040 = vmor %vm4038, %vm4039
        %v4041 = vsel %vm4040, %v4033, %v4037
        %v4042 = vand.u32 2147483647, %v3819
        %vm4043 = vcmp.eq.f32.partialorder %v4042, 8.507059e+37
        %v4044 = vand.u32 %v3819, 2147483648
        %v4045 = vor.u32 1.1754944e-38, %v4044
        %v4046 = vsel %vm4043, %v4045, %v4041
        %v4047 = vmul.f32 1.0, %v4046
        %v4048 = vrcp.pop %v3822
        %v4049 = vmul.f32 %v3822, %v4048
        %v4050 = vsub.f32 1.0, %v4049
        %v4051 = vmul.f32 %v4048, %v4050
        %v4052 = vadd.f32 %v4048, %v4051
        %vm4053 = vweird.f32 %v3822
        %vm4054 = vweird.f32 %v4048
        %vm4055 = vmor %vm4053, %vm4054
        %v4056 = vsel %vm4055, %v4048, %v4052
        %v4057 = vand.u32 2147483647, %v3822
        %vm4058 = vcmp.eq.f32.partialorder %v4057, 8.507059e+37
        %v4059 = vand.u32 %v3822, 2147483648
        %v4060 = vor.u32 1.1754944e-38, %v4059
        %v4061 = vsel %vm4058, %v4060, %v4056
        %v4062 = vmul.f32 1.0, %v4061
        %v4063 = vmul.f32 %v3712, %v3837
        %v4064 = vmul.f32 %v3714, %v3837
        %v4065 = vmul.f32 %v3716, %v3852
        %v4066 = vmul.f32 %v3718, %v3852
        %v4067 = vmul.f32 %v3720, %v3867
        %v4068 = vmul.f32 %v3722, %v3867
        %v4069 = vmul.f32 %v3724, %v3882
        %v4070 = vmul.f32 %v3726, %v3882
        %v4071 = vmul.f32 %v3728, %v3897
        %v4072 = vmul.f32 %v3730, %v3897
        %v4073 = vmul.f32 %v3732, %v3912
        %v4074 = vmul.f32 %v3734, %v3912
        %v4075 = vmul.f32 %v3736, %v3927
        %v4076 = vmul.f32 %v3738, %v3927
        %v4077 = vmul.f32 %v3740, %v3942
        %v4078 = vmul.f32 %v3742, %v3942
        %v4079 = vmul.f32 %v3744, %v3957
        %v4080 = vmul.f32 %v3746, %v3957
        %v4081 = vmul.f32 %v3748, %v3972
        %v4082 = vmul.f32 %v3750, %v3972
        %v4083 = vmul.f32 %v3752, %v3987
        %v4084 = vmul.f32 %v3754, %v3987
        %v4085 = vmul.f32 %v3756, %v4002
        %v4086 = vmul.f32 %v3758, %v4002
        %v4087 = vmul.f32 %v3760, %v4017
        %v4088 = vmul.f32 %v3762, %v4017
        %v4089 = vmul.f32 %v3764, %v4032
        %v4090 = vmul.f32 %v3766, %v4032
        %v4091 = vmul.f32 %v3768, %v4047
        %v4092 = vmul.f32 %v3770, %v4047
        %v4093 = vmul.f32 %v3772, %v4062
        %v4094 = vmul.f32 %v3774, %v4062
        %s4095 = scalar_lea.vmem %s304, 256 [#allocation11]
        %4096 = vst [vmem:[%s4095] sm:$0xff] %v4063
        %4097 = vst [vmem:[%s4095 + $0x8] sm:$0xff] %v4064
        %4098 = vst [vmem:[%s4095 + $0x10] sm:$0xff] %v4065
        %4099 = vst [vmem:[%s4095 + $0x18] sm:$0xff] %v4066
        %4100 = vst [vmem:[%s4095 + $0x20] sm:$0xff] %v4067
        %4101 = vst [vmem:[%s4095 + $0x28] sm:$0xff] %v4068
        %4102 = vst [vmem:[%s4095 + $0x30] sm:$0xff] %v4069
        %4103 = vst [vmem:[%s4095 + $0x38] sm:$0xff] %v4070
        %4104 = vst [vmem:[%s4095 + $0x40] sm:$0xff] %v4071
        %4105 = vst [vmem:[%s4095 + $0x48] sm:$0xff] %v4072
        %4106 = vst [vmem:[%s4095 + $0x50] sm:$0xff] %v4073
        %4107 = vst [vmem:[%s4095 + $0x58] sm:$0xff] %v4074
        %4108 = vst [vmem:[%s4095 + $0x60] sm:$0xff] %v4075
        %4109 = vst [vmem:[%s4095 + $0x68] sm:$0xff] %v4076
        %4110 = vst [vmem:[%s4095 + $0x70] sm:$0xff] %v4077
        %4111 = vst [vmem:[%s4095 + $0x78] sm:$0xff] %v4078
        %4112 = vst [vmem:[%s4095 + $0x80] sm:$0xff] %v4079
        %4113 = vst [vmem:[%s4095 + $0x88] sm:$0xff] %v4080
        %4114 = vst [vmem:[%s4095 + $0x90] sm:$0xff] %v4081
        %4115 = vst [vmem:[%s4095 + $0x98] sm:$0xff] %v4082
        %4116 = vst [vmem:[%s4095 + $0xa0] sm:$0xff] %v4083
        %4117 = vst [vmem:[%s4095 + $0xa8] sm:$0xff] %v4084
        %4118 = vst [vmem:[%s4095 + $0xb0] sm:$0xff] %v4085
        %4119 = vst [vmem:[%s4095 + $0xb8] sm:$0xff] %v4086
        %4120 = vst [vmem:[%s4095 + $0xc0] sm:$0xff] %v4087
        %4121 = vst [vmem:[%s4095 + $0xc8] sm:$0xff] %v4088
        %4122 = vst [vmem:[%s4095 + $0xd0] sm:$0xff] %v4089
        %4123 = vst [vmem:[%s4095 + $0xd8] sm:$0xff] %v4090
        %4124 = vst [vmem:[%s4095 + $0xe0] sm:$0xff] %v4091
        %4125 = vst [vmem:[%s4095 + $0xe8] sm:$0xff] %v4092
        %4126 = vst [vmem:[%s4095 + $0xf0] sm:$0xff] %v4093
        %4127 = vst [vmem:[%s4095 + $0xf8] sm:$0xff] %v4094
        %v4128 = vpack.c.bf16 %v4065, %v4063
        %v4129 = vpack.c.bf16 %v4066, %v4064
        %v4130 = vpack.c.bf16 %v4069, %v4067
        %v4131 = vpack.c.bf16 %v4070, %v4068
        %v4132 = vpack.c.bf16 %v4073, %v4071
        %v4133 = vpack.c.bf16 %v4074, %v4072
        %v4134 = vpack.c.bf16 %v4077, %v4075
        %v4135 = vpack.c.bf16 %v4078, %v4076
        %v4136 = vpack.c.bf16 %v4081, %v4079
        %v4137 = vpack.c.bf16 %v4082, %v4080
        %v4138 = vpack.c.bf16 %v4085, %v4083
        %v4139 = vpack.c.bf16 %v4086, %v4084
        %v4140 = vpack.c.bf16 %v4089, %v4087
        %v4141 = vpack.c.bf16 %v4090, %v4088
        %v4142 = vpack.c.bf16 %v4093, %v4091
        %v4143 = vpack.c.bf16 %v4094, %v4092
        %v4176 = vunpack.c.l.b16 %v3357
        %v4177 = vunpack.c.l.b16 %v3358
        %v4178 = vunpack.c.l.b16 %v3359
        %v4179 = vunpack.c.l.b16 %v3360
        %v4180 = vunpack.c.l.b16 %v3361
        %v4181 = vunpack.c.l.b16 %v3362
        %v4182 = vunpack.c.l.b16 %v3363
        %v4183 = vunpack.c.l.b16 %v3364
        %v4184 = vunpack.c.l.b16 %v3365
        %v4185 = vunpack.c.l.b16 %v3366
        %v4186 = vunpack.c.l.b16 %v3367
        %v4187 = vunpack.c.l.b16 %v3368
        %v4188 = vunpack.c.l.b16 %v3369
        %v4189 = vunpack.c.l.b16 %v3370
        %v4190 = vunpack.c.l.b16 %v3371
        %v4191 = vunpack.c.l.b16 %v3372
        %v4192 = vunpack.c.l.b16 %v3373
        %v4193 = vunpack.c.l.b16 %v3374
        %v4194 = vunpack.c.l.b16 %v3375
        %v4195 = vunpack.c.l.b16 %v3376
        %v4196 = vunpack.c.l.b16 %v3377
        %v4197 = vunpack.c.l.b16 %v3378
        %v4198 = vunpack.c.l.b16 %v3379
        %v4199 = vunpack.c.l.b16 %v3380
        %v4200 = vunpack.c.l.b16 %v3381
        %v4201 = vunpack.c.l.b16 %v3382
        %v4202 = vunpack.c.l.b16 %v3383
        %v4203 = vunpack.c.l.b16 %v3384
        %v4204 = vunpack.c.l.b16 %v3385
        %v4205 = vunpack.c.l.b16 %v3386
        %v4206 = vunpack.c.l.b16 %v3387
        %v4207 = vunpack.c.l.b16 %v3388
        %v4208 = vpack.c.b16 %v4177, %v4176
        %v4209 = vpack.c.b16 %v4179, %v4178
        %v4210 = vpack.c.b16 %v4181, %v4180
        %v4211 = vpack.c.b16 %v4183, %v4182
        %v4212 = vpack.c.b16 %v4185, %v4184
        %v4213 = vpack.c.b16 %v4187, %v4186
        %v4214 = vpack.c.b16 %v4189, %v4188
        %v4215 = vpack.c.b16 %v4191, %v4190
        %v4216 = vpack.c.b16 %v4193, %v4192
        %v4217 = vpack.c.b16 %v4195, %v4194
        %v4218 = vpack.c.b16 %v4197, %v4196
        %v4219 = vpack.c.b16 %v4199, %v4198
        %v4220 = vpack.c.b16 %v4201, %v4200
        %v4221 = vpack.c.b16 %v4203, %v4202
        %v4222 = vpack.c.b16 %v4205, %v4204
        %v4223 = vpack.c.b16 %v4207, %v4206
        %4240 = vmatpush.bf16.msra.mxu0 %v4215
        %4241 = vmatpush.bf16.msra.mxu0 %v4214
        %4242 = vmatpush.bf16.msra.mxu0 %v4213
        %4243 = vmatpush.bf16.msra.mxu0 %v4212
        %4244 = vmatpush.bf16.msra.mxu0 %v4211
        %4245 = vmatpush.bf16.msra.mxu0 %v4210
        %4246 = vmatpush.bf16.msra.mxu0 %v4209
        %4247 = vmatpush.bf16.msra.mxu0 %v4208
        %4248 = vmatmul.bf16.gmra.mxu0 %v4128
        %v4249 = vpop.f32.mrf.mxu0
        %v4250 = vadd.f32 0.0, %v4249
        %v4251 = vpop.f32.mrf.mxu0
        %v4252 = vadd.f32 0.0, %v4251
        %4253 = vmatmul.bf16.gmra.mxu0 %v4130
        %v4254 = vpop.f32.mrf.mxu0
        %v4255 = vadd.f32 0.0, %v4254
        %v4256 = vpop.f32.mrf.mxu0
        %v4257 = vadd.f32 0.0, %v4256
        %4258 = vmatmul.bf16.gmra.mxu0 %v4132
        %v4259 = vpop.f32.mrf.mxu0
        %v4260 = vadd.f32 0.0, %v4259
        %v4261 = vpop.f32.mrf.mxu0
        %v4262 = vadd.f32 0.0, %v4261
        %4263 = vmatmul.bf16.gmra.mxu0 %v4134
        %v4264 = vpop.f32.mrf.mxu0
        %v4265 = vadd.f32 0.0, %v4264
        %v4266 = vpop.f32.mrf.mxu0
        %v4267 = vadd.f32 0.0, %v4266
        %4268 = vmatmul.bf16.gmra.mxu0 %v4136
        %v4269 = vpop.f32.mrf.mxu0
        %v4270 = vadd.f32 0.0, %v4269
        %v4271 = vpop.f32.mrf.mxu0
        %v4272 = vadd.f32 0.0, %v4271
        %4273 = vmatmul.bf16.gmra.mxu0 %v4138
        %v4274 = vpop.f32.mrf.mxu0
        %v4275 = vadd.f32 0.0, %v4274
        %v4276 = vpop.f32.mrf.mxu0
        %v4277 = vadd.f32 0.0, %v4276
        %4278 = vmatmul.bf16.gmra.mxu0 %v4140
        %v4279 = vpop.f32.mrf.mxu0
        %v4280 = vadd.f32 0.0, %v4279
        %v4281 = vpop.f32.mrf.mxu0
        %v4282 = vadd.f32 0.0, %v4281
        %4283 = vmatmul.bf16.gmra.mxu0 %v4142
        %v4284 = vpop.f32.mrf.mxu0
        %v4285 = vadd.f32 0.0, %v4284
        %v4286 = vpop.f32.mrf.mxu0
        %v4287 = vadd.f32 0.0, %v4286
        %4288 = vdwg.mxu0
        %4289 = vmatpush.bf16.msra.mxu0 %v4223
        %4290 = vmatpush.bf16.msra.mxu0 %v4222
        %4291 = vmatpush.bf16.msra.mxu0 %v4221
        %4292 = vmatpush.bf16.msra.mxu0 %v4220
        %4293 = vmatpush.bf16.msra.mxu0 %v4219
        %4294 = vmatpush.bf16.msra.mxu0 %v4218
        %4295 = vmatpush.bf16.msra.mxu0 %v4217
        %4296 = vmatpush.bf16.msra.mxu0 %v4216
        %4297 = vmatmul.bf16.gmra.mxu0 %v4129
        %v4298 = vpop.f32.mrf.mxu0
        %v4299 = vadd.f32 %v4250, %v4298
        %v4300 = vpop.f32.mrf.mxu0
        %v4301 = vadd.f32 %v4252, %v4300
        %4302 = vmatmul.bf16.gmra.mxu0 %v4131
        %v4303 = vpop.f32.mrf.mxu0
        %v4304 = vadd.f32 %v4255, %v4303
        %v4305 = vpop.f32.mrf.mxu0
        %v4306 = vadd.f32 %v4257, %v4305
        %4307 = vmatmul.bf16.gmra.mxu0 %v4133
        %v4308 = vpop.f32.mrf.mxu0
        %v4309 = vadd.f32 %v4260, %v4308
        %v4310 = vpop.f32.mrf.mxu0
        %v4311 = vadd.f32 %v4262, %v4310
        %4312 = vmatmul.bf16.gmra.mxu0 %v4135
        %v4313 = vpop.f32.mrf.mxu0
        %v4314 = vadd.f32 %v4265, %v4313
        %v4315 = vpop.f32.mrf.mxu0
        %v4316 = vadd.f32 %v4267, %v4315
        %4317 = vmatmul.bf16.gmra.mxu0 %v4137
        %v4318 = vpop.f32.mrf.mxu0
        %v4319 = vadd.f32 %v4270, %v4318
        %v4320 = vpop.f32.mrf.mxu0
        %v4321 = vadd.f32 %v4272, %v4320
        %4322 = vmatmul.bf16.gmra.mxu0 %v4139
        %v4323 = vpop.f32.mrf.mxu0
        %v4324 = vadd.f32 %v4275, %v4323
        %v4325 = vpop.f32.mrf.mxu0
        %v4326 = vadd.f32 %v4277, %v4325
        %4327 = vmatmul.bf16.gmra.mxu0 %v4141
        %v4328 = vpop.f32.mrf.mxu0
        %v4329 = vadd.f32 %v4280, %v4328
        %v4330 = vpop.f32.mrf.mxu0
        %v4331 = vadd.f32 %v4282, %v4330
        %4332 = vmatmul.bf16.gmra.mxu0 %v4143
        %v4333 = vpop.f32.mrf.mxu0
        %v4334 = vadd.f32 %v4285, %v4333
        %v4335 = vpop.f32.mrf.mxu0
        %v4336 = vadd.f32 %v4287, %v4335
        %4337 = vdwg.mxu0
        %v4338 = vpack.c.bf16 %v4299, %v4299
        %v4339 = vpack.c.bf16 %v4301, %v4301
        %v4340 = vpack.c.bf16 %v4304, %v4304
        %v4341 = vpack.c.bf16 %v4306, %v4306
        %v4342 = vpack.c.bf16 %v4309, %v4309
        %v4343 = vpack.c.bf16 %v4311, %v4311
        %v4344 = vpack.c.bf16 %v4314, %v4314
        %v4345 = vpack.c.bf16 %v4316, %v4316
        %v4346 = vpack.c.bf16 %v4319, %v4319
        %v4347 = vpack.c.bf16 %v4321, %v4321
        %v4348 = vpack.c.bf16 %v4324, %v4324
        %v4349 = vpack.c.bf16 %v4326, %v4326
        %v4350 = vpack.c.bf16 %v4329, %v4329
        %v4351 = vpack.c.bf16 %v4331, %v4331
        %v4352 = vpack.c.bf16 %v4334, %v4334
        %v4353 = vpack.c.bf16 %v4336, %v4336
        %4354 = vst [vmem:[#allocation3 + $0x4] sm:$0xf] %v4338
        %4355 = vst [vmem:[#allocation3 + $0xc] sm:$0xf] %v4339
        %4356 = vst [vmem:[#allocation3 + $0x14] sm:$0xf] %v4340
        %4357 = vst [vmem:[#allocation3 + $0x1c] sm:$0xf] %v4341
        %4358 = vst [vmem:[#allocation3 + $0x24] sm:$0xf] %v4342
        %4359 = vst [vmem:[#allocation3 + $0x2c] sm:$0xf] %v4343
        %4360 = vst [vmem:[#allocation3 + $0x34] sm:$0xf] %v4344
        %4361 = vst [vmem:[#allocation3 + $0x3c] sm:$0xf] %v4345
        %4362 = vst [vmem:[#allocation3 + $0x44] sm:$0xf] %v4346
        %4363 = vst [vmem:[#allocation3 + $0x4c] sm:$0xf] %v4347
        %4364 = vst [vmem:[#allocation3 + $0x54] sm:$0xf] %v4348
        %4365 = vst [vmem:[#allocation3 + $0x5c] sm:$0xf] %v4349
        %4366 = vst [vmem:[#allocation3 + $0x64] sm:$0xf] %v4350
        %4367 = vst [vmem:[#allocation3 + $0x6c] sm:$0xf] %v4351
        %4368 = vst [vmem:[#allocation3 + $0x74] sm:$0xf] %v4352
        %4369 = vst [vmem:[#allocation3 + $0x7c] sm:$0xf] %v4353
        %v4370 = vld [vmem:[#allocation3] sm:$0xff]
        %v4371 = vld [vmem:[#allocation3 + $0x8] sm:$0xff]
        %v4372 = vld [vmem:[#allocation3 + $0x10] sm:$0xff]
        %v4373 = vld [vmem:[#allocation3 + $0x18] sm:$0xff]
        %v4374 = vld [vmem:[#allocation3 + $0x20] sm:$0xff]
        %v4375 = vld [vmem:[#allocation3 + $0x28] sm:$0xff]
        %v4376 = vld [vmem:[#allocation3 + $0x30] sm:$0xff]
        %v4377 = vld [vmem:[#allocation3 + $0x38] sm:$0xff]
        %v4378 = vld [vmem:[#allocation3 + $0x40] sm:$0xff]
        %v4379 = vld [vmem:[#allocation3 + $0x48] sm:$0xff]
        %v4380 = vld [vmem:[#allocation3 + $0x50] sm:$0xff]
        %v4381 = vld [vmem:[#allocation3 + $0x58] sm:$0xff]
        %v4382 = vld [vmem:[#allocation3 + $0x60] sm:$0xff]
        %v4383 = vld [vmem:[#allocation3 + $0x68] sm:$0xff]
        %v4384 = vld [vmem:[#allocation3 + $0x70] sm:$0xff]
        %v4385 = vld [vmem:[#allocation3 + $0x78] sm:$0xff]
        %v4386 = vld [vmem:[#allocation9] sm:$0xff]
        %v4387 = vld [vmem:[#allocation9 + $0x8] sm:$0xff]
        %v4388 = vld [vmem:[#allocation9 + $0x10] sm:$0xff]
        %v4389 = vld [vmem:[#allocation9 + $0x18] sm:$0xff]
        %v4390 = vld [vmem:[#allocation9 + $0x20] sm:$0xff]
        %v4391 = vld [vmem:[#allocation9 + $0x28] sm:$0xff]
        %v4392 = vld [vmem:[#allocation9 + $0x30] sm:$0xff]
        %v4393 = vld [vmem:[#allocation9 + $0x38] sm:$0xff]
        %v4394 = vld [vmem:[#allocation9 + $0x40] sm:$0xff]
        %v4395 = vld [vmem:[#allocation9 + $0x48] sm:$0xff]
        %v4396 = vld [vmem:[#allocation9 + $0x50] sm:$0xff]
        %v4397 = vld [vmem:[#allocation9 + $0x58] sm:$0xff]
        %v4398 = vld [vmem:[#allocation9 + $0x60] sm:$0xff]
        %v4399 = vld [vmem:[#allocation9 + $0x68] sm:$0xff]
        %v4400 = vld [vmem:[#allocation9 + $0x70] sm:$0xff]
        %v4401 = vld [vmem:[#allocation9 + $0x78] sm:$0xff]
        %v4402 = vld [vmem:[#allocation9 + $0x80] sm:$0xff]
        %v4403 = vld [vmem:[#allocation9 + $0x88] sm:$0xff]
        %v4404 = vld [vmem:[#allocation9 + $0x90] sm:$0xff]
        %v4405 = vld [vmem:[#allocation9 + $0x98] sm:$0xff]
        %v4406 = vld [vmem:[#allocation9 + $0xa0] sm:$0xff]
        %v4407 = vld [vmem:[#allocation9 + $0xa8] sm:$0xff]
        %v4408 = vld [vmem:[#allocation9 + $0xb0] sm:$0xff]
        %v4409 = vld [vmem:[#allocation9 + $0xb8] sm:$0xff]
        %v4410 = vld [vmem:[#allocation9 + $0xc0] sm:$0xff]
        %v4411 = vld [vmem:[#allocation9 + $0xc8] sm:$0xff]
        %v4412 = vld [vmem:[#allocation9 + $0xd0] sm:$0xff]
        %v4413 = vld [vmem:[#allocation9 + $0xd8] sm:$0xff]
        %v4414 = vld [vmem:[#allocation9 + $0xe0] sm:$0xff]
        %v4415 = vld [vmem:[#allocation9 + $0xe8] sm:$0xff]
        %v4416 = vld [vmem:[#allocation9 + $0xf0] sm:$0xff]
        %v4417 = vld [vmem:[#allocation9 + $0xf8] sm:$0xff]
        %v4418 = vld [vmem:[%s3] sm:$0x3]
        %v4420 = vperm.slane %v4418, 0
        %v4421 = vperm.slane %v4418, 1
        %v4440 = vunpack.c.l.b16 %v4370
        %v4441 = vunpack.c.h.b16 %v4370
        %v4442 = vunpack.c.l.b16 %v4371
        %v4443 = vunpack.c.h.b16 %v4371
        %v4444 = vunpack.c.l.b16 %v4372
        %v4445 = vunpack.c.h.b16 %v4372
        %v4446 = vunpack.c.l.b16 %v4373
        %v4447 = vunpack.c.h.b16 %v4373
        %v4448 = vunpack.c.l.b16 %v4374
        %v4449 = vunpack.c.h.b16 %v4374
        %v4450 = vunpack.c.l.b16 %v4375
        %v4451 = vunpack.c.h.b16 %v4375
        %v4452 = vunpack.c.l.b16 %v4376
        %v4453 = vunpack.c.h.b16 %v4376
        %v4454 = vunpack.c.l.b16 %v4377
        %v4455 = vunpack.c.h.b16 %v4377
        %v4456 = vunpack.c.l.b16 %v4378
        %v4457 = vunpack.c.h.b16 %v4378
        %v4458 = vunpack.c.l.b16 %v4379
        %v4459 = vunpack.c.h.b16 %v4379
        %v4460 = vunpack.c.l.b16 %v4380
        %v4461 = vunpack.c.h.b16 %v4380
        %v4462 = vunpack.c.l.b16 %v4381
        %v4463 = vunpack.c.h.b16 %v4381
        %v4464 = vunpack.c.l.b16 %v4382
        %v4465 = vunpack.c.h.b16 %v4382
        %v4466 = vunpack.c.l.b16 %v4383
        %v4467 = vunpack.c.h.b16 %v4383
        %v4468 = vunpack.c.l.b16 %v4384
        %v4469 = vunpack.c.h.b16 %v4384
        %v4470 = vunpack.c.l.b16 %v4385
        %v4471 = vunpack.c.h.b16 %v4385
        %v4472 = vpack.c.b16 %v4442, %v4440
        %v4473 = vpack.c.b16 %v4443, %v4441
        %v4474 = vpack.c.b16 %v4446, %v4444
        %v4475 = vpack.c.b16 %v4447, %v4445
        %v4476 = vpack.c.b16 %v4450, %v4448
        %v4477 = vpack.c.b16 %v4451, %v4449
        %v4478 = vpack.c.b16 %v4454, %v4452
        %v4479 = vpack.c.b16 %v4455, %v4453
        %v4480 = vpack.c.b16 %v4458, %v4456
        %v4481 = vpack.c.b16 %v4459, %v4457
        %v4482 = vpack.c.b16 %v4462, %v4460
        %v4483 = vpack.c.b16 %v4463, %v4461
        %v4484 = vpack.c.b16 %v4466, %v4464
        %v4485 = vpack.c.b16 %v4467, %v4465
        %v4486 = vpack.c.b16 %v4470, %v4468
        %v4487 = vpack.c.b16 %v4471, %v4469
        %v4536 = vunpack.c.l.b16 %v4386
        %v4537 = vunpack.c.h.b16 %v4386
        %v4538 = vunpack.c.l.b16 %v4387
        %v4539 = vunpack.c.h.b16 %v4387
        %v4540 = vunpack.c.l.b16 %v4388
        %v4541 = vunpack.c.h.b16 %v4388
        %v4542 = vunpack.c.l.b16 %v4389
        %v4543 = vunpack.c.h.b16 %v4389
        %v4544 = vunpack.c.l.b16 %v4390
        %v4545 = vunpack.c.h.b16 %v4390
        %v4546 = vunpack.c.l.b16 %v4391
        %v4547 = vunpack.c.h.b16 %v4391
        %v4548 = vunpack.c.l.b16 %v4392
        %v4549 = vunpack.c.h.b16 %v4392
        %v4550 = vunpack.c.l.b16 %v4393
        %v4551 = vunpack.c.h.b16 %v4393
        %v4552 = vunpack.c.l.b16 %v4394
        %v4553 = vunpack.c.h.b16 %v4394
        %v4554 = vunpack.c.l.b16 %v4395
        %v4555 = vunpack.c.h.b16 %v4395
        %v4556 = vunpack.c.l.b16 %v4396
        %v4557 = vunpack.c.h.b16 %v4396
        %v4558 = vunpack.c.l.b16 %v4397
        %v4559 = vunpack.c.h.b16 %v4397
        %v4560 = vunpack.c.l.b16 %v4398
        %v4561 = vunpack.c.h.b16 %v4398
        %v4562 = vunpack.c.l.b16 %v4399
        %v4563 = vunpack.c.h.b16 %v4399
        %v4564 = vunpack.c.l.b16 %v4400
        %v4565 = vunpack.c.h.b16 %v4400
        %v4566 = vunpack.c.l.b16 %v4401
        %v4567 = vunpack.c.h.b16 %v4401
        %v4568 = vunpack.c.l.b16 %v4402
        %v4569 = vunpack.c.h.b16 %v4402
        %v4570 = vunpack.c.l.b16 %v4403
        %v4571 = vunpack.c.h.b16 %v4403
        %v4572 = vunpack.c.l.b16 %v4404
        %v4573 = vunpack.c.h.b16 %v4404
        %v4574 = vunpack.c.l.b16 %v4405
        %v4575 = vunpack.c.h.b16 %v4405
        %v4576 = vunpack.c.l.b16 %v4406
        %v4577 = vunpack.c.h.b16 %v4406
        %v4578 = vunpack.c.l.b16 %v4407
        %v4579 = vunpack.c.h.b16 %v4407
        %v4580 = vunpack.c.l.b16 %v4408
        %v4581 = vunpack.c.h.b16 %v4408
        %v4582 = vunpack.c.l.b16 %v4409
        %v4583 = vunpack.c.h.b16 %v4409
        %v4584 = vunpack.c.l.b16 %v4410
        %v4585 = vunpack.c.h.b16 %v4410
        %v4586 = vunpack.c.l.b16 %v4411
        %v4587 = vunpack.c.h.b16 %v4411
        %v4588 = vunpack.c.l.b16 %v4412
        %v4589 = vunpack.c.h.b16 %v4412
        %v4590 = vunpack.c.l.b16 %v4413
        %v4591 = vunpack.c.h.b16 %v4413
        %v4592 = vunpack.c.l.b16 %v4414
        %v4593 = vunpack.c.h.b16 %v4414
        %v4594 = vunpack.c.l.b16 %v4415
        %v4595 = vunpack.c.h.b16 %v4415
        %v4596 = vunpack.c.l.b16 %v4416
        %v4597 = vunpack.c.h.b16 %v4416
        %v4598 = vunpack.c.l.b16 %v4417
        %v4599 = vunpack.c.h.b16 %v4417
        %v4600 = vpack.c.b16 %v4538, %v4536
        %v4601 = vpack.c.b16 %v4539, %v4537
        %v4602 = vpack.c.b16 %v4542, %v4540
        %v4603 = vpack.c.b16 %v4543, %v4541
        %v4604 = vpack.c.b16 %v4546, %v4544
        %v4605 = vpack.c.b16 %v4547, %v4545
        %v4606 = vpack.c.b16 %v4550, %v4548
        %v4607 = vpack.c.b16 %v4551, %v4549
        %v4608 = vpack.c.b16 %v4554, %v4552
        %v4609 = vpack.c.b16 %v4555, %v4553
        %v4610 = vpack.c.b16 %v4558, %v4556
        %v4611 = vpack.c.b16 %v4559, %v4557
        %v4612 = vpack.c.b16 %v4562, %v4560
        %v4613 = vpack.c.b16 %v4563, %v4561
        %v4614 = vpack.c.b16 %v4566, %v4564
        %v4615 = vpack.c.b16 %v4567, %v4565
        %v4616 = vpack.c.b16 %v4570, %v4568
        %v4617 = vpack.c.b16 %v4571, %v4569
        %v4618 = vpack.c.b16 %v4574, %v4572
        %v4619 = vpack.c.b16 %v4575, %v4573
        %v4620 = vpack.c.b16 %v4578, %v4576
        %v4621 = vpack.c.b16 %v4579, %v4577
        %v4622 = vpack.c.b16 %v4582, %v4580
        %v4623 = vpack.c.b16 %v4583, %v4581
        %v4624 = vpack.c.b16 %v4586, %v4584
        %v4625 = vpack.c.b16 %v4587, %v4585
        %v4626 = vpack.c.b16 %v4590, %v4588
        %v4627 = vpack.c.b16 %v4591, %v4589
        %v4628 = vpack.c.b16 %v4594, %v4592
        %v4629 = vpack.c.b16 %v4595, %v4593
        %v4630 = vpack.c.b16 %v4598, %v4596
        %v4631 = vpack.c.b16 %v4599, %v4597
        %4664 = vmatpush.bf16.msra.mxu0 %v4614
        %4665 = vmatpush.bf16.msra.mxu0 %v4612
        %4666 = vmatpush.bf16.msra.mxu0 %v4610
        %4667 = vmatpush.bf16.msra.mxu0 %v4608
        %4668 = vmatpush.bf16.msra.mxu0 %v4606
        %4669 = vmatpush.bf16.msra.mxu0 %v4604
        %4670 = vmatpush.bf16.msra.mxu0 %v4602
        %4671 = vmatpush.bf16.msra.mxu0 %v4600
        %4672 = vmatmul.bf16.gmra.mxu0 %v4472
        %v4673 = vpop.f32.mrf.mxu0
        %v4674 = vadd.f32 %v4420, %v4673
        %v4675 = vpop.f32.mrf.mxu0
        %v4676 = vadd.f32 %v4420, %v4675
        %4677 = vmatmul.bf16.gmra.mxu0 %v4474
        %v4678 = vpop.f32.mrf.mxu0
        %v4679 = vadd.f32 %v4420, %v4678
        %v4680 = vpop.f32.mrf.mxu0
        %v4681 = vadd.f32 %v4420, %v4680
        %4682 = vmatmul.bf16.gmra.mxu0 %v4476
        %v4683 = vpop.f32.mrf.mxu0
        %v4684 = vadd.f32 %v4420, %v4683
        %v4685 = vpop.f32.mrf.mxu0
        %v4686 = vadd.f32 %v4420, %v4685
        %4687 = vmatmul.bf16.gmra.mxu0 %v4478
        %v4688 = vpop.f32.mrf.mxu0
        %v4689 = vadd.f32 %v4420, %v4688
        %v4690 = vpop.f32.mrf.mxu0
        %v4691 = vadd.f32 %v4420, %v4690
        %4692 = vmatmul.bf16.gmra.mxu0 %v4480
        %v4693 = vpop.f32.mrf.mxu0
        %v4694 = vadd.f32 %v4420, %v4693
        %v4695 = vpop.f32.mrf.mxu0
        %v4696 = vadd.f32 %v4420, %v4695
        %4697 = vmatmul.bf16.gmra.mxu0 %v4482
        %v4698 = vpop.f32.mrf.mxu0
        %v4699 = vadd.f32 %v4420, %v4698
        %v4700 = vpop.f32.mrf.mxu0
        %v4701 = vadd.f32 %v4420, %v4700
        %4702 = vmatmul.bf16.gmra.mxu0 %v4484
        %v4703 = vpop.f32.mrf.mxu0
        %v4704 = vadd.f32 %v4420, %v4703
        %v4705 = vpop.f32.mrf.mxu0
        %v4706 = vadd.f32 %v4420, %v4705
        %4707 = vmatmul.bf16.gmra.mxu0 %v4486
        %v4708 = vpop.f32.mrf.mxu0
        %v4709 = vadd.f32 %v4420, %v4708
        %v4710 = vpop.f32.mrf.mxu0
        %v4711 = vadd.f32 %v4420, %v4710
        %4712 = vdwg.mxu0
        %4713 = vmatpush.bf16.msra.mxu0 %v4630
        %4714 = vmatpush.bf16.msra.mxu0 %v4628
        %4715 = vmatpush.bf16.msra.mxu0 %v4626
        %4716 = vmatpush.bf16.msra.mxu0 %v4624
        %4717 = vmatpush.bf16.msra.mxu0 %v4622
        %4718 = vmatpush.bf16.msra.mxu0 %v4620
        %4719 = vmatpush.bf16.msra.mxu0 %v4618
        %4720 = vmatpush.bf16.msra.mxu0 %v4616
        %4721 = vmatmul.bf16.gmra.mxu0 %v4473
        %v4722 = vpop.f32.mrf.mxu0
        %v4723 = vadd.f32 %v4674, %v4722
        %v4724 = vpop.f32.mrf.mxu0
        %v4725 = vadd.f32 %v4676, %v4724
        %4726 = vmatmul.bf16.gmra.mxu0 %v4475
        %v4727 = vpop.f32.mrf.mxu0
        %v4728 = vadd.f32 %v4679, %v4727
        %v4729 = vpop.f32.mrf.mxu0
        %v4730 = vadd.f32 %v4681, %v4729
        %4731 = vmatmul.bf16.gmra.mxu0 %v4477
        %v4732 = vpop.f32.mrf.mxu0
        %v4733 = vadd.f32 %v4684, %v4732
        %v4734 = vpop.f32.mrf.mxu0
        %v4735 = vadd.f32 %v4686, %v4734
        %4736 = vmatmul.bf16.gmra.mxu0 %v4479
        %v4737 = vpop.f32.mrf.mxu0
        %v4738 = vadd.f32 %v4689, %v4737
        %v4739 = vpop.f32.mrf.mxu0
        %v4740 = vadd.f32 %v4691, %v4739
        %4741 = vmatmul.bf16.gmra.mxu0 %v4481
        %v4742 = vpop.f32.mrf.mxu0
        %v4743 = vadd.f32 %v4694, %v4742
        %v4744 = vpop.f32.mrf.mxu0
        %v4745 = vadd.f32 %v4696, %v4744
        %4746 = vmatmul.bf16.gmra.mxu0 %v4483
        %v4747 = vpop.f32.mrf.mxu0
        %v4748 = vadd.f32 %v4699, %v4747
        %v4749 = vpop.f32.mrf.mxu0
        %v4750 = vadd.f32 %v4701, %v4749
        %4751 = vmatmul.bf16.gmra.mxu0 %v4485
        %v4752 = vpop.f32.mrf.mxu0
        %v4753 = vadd.f32 %v4704, %v4752
        %v4754 = vpop.f32.mrf.mxu0
        %v4755 = vadd.f32 %v4706, %v4754
        %4756 = vmatmul.bf16.gmra.mxu0 %v4487
        %v4757 = vpop.f32.mrf.mxu0
        %v4758 = vadd.f32 %v4709, %v4757
        %v4759 = vpop.f32.mrf.mxu0
        %v4760 = vadd.f32 %v4711, %v4759
        %4761 = vdwg.mxu0
        %4762 = vmatpush.bf16.msra.mxu0 %v4615
        %4763 = vmatpush.bf16.msra.mxu0 %v4613
        %4764 = vmatpush.bf16.msra.mxu0 %v4611
        %4765 = vmatpush.bf16.msra.mxu0 %v4609
        %4766 = vmatpush.bf16.msra.mxu0 %v4607
        %4767 = vmatpush.bf16.msra.mxu0 %v4605
        %4768 = vmatpush.bf16.msra.mxu0 %v4603
        %4769 = vmatpush.bf16.msra.mxu0 %v4601
        %4770 = vmatmul.bf16.gmra.mxu0 %v4472
        %v4771 = vpop.f32.mrf.mxu0
        %v4772 = vadd.f32 %v4421, %v4771
        %v4773 = vpop.f32.mrf.mxu0
        %v4774 = vadd.f32 %v4421, %v4773
        %4775 = vmatmul.bf16.gmra.mxu0 %v4474
        %v4776 = vpop.f32.mrf.mxu0
        %v4777 = vadd.f32 %v4421, %v4776
        %v4778 = vpop.f32.mrf.mxu0
        %v4779 = vadd.f32 %v4421, %v4778
        %4780 = vmatmul.bf16.gmra.mxu0 %v4476
        %v4781 = vpop.f32.mrf.mxu0
        %v4782 = vadd.f32 %v4421, %v4781
        %v4783 = vpop.f32.mrf.mxu0
        %v4784 = vadd.f32 %v4421, %v4783
        %4785 = vmatmul.bf16.gmra.mxu0 %v4478
        %v4786 = vpop.f32.mrf.mxu0
        %v4787 = vadd.f32 %v4421, %v4786
        %v4788 = vpop.f32.mrf.mxu0
        %v4789 = vadd.f32 %v4421, %v4788
        %4790 = vmatmul.bf16.gmra.mxu0 %v4480
        %v4791 = vpop.f32.mrf.mxu0
        %v4792 = vadd.f32 %v4421, %v4791
        %v4793 = vpop.f32.mrf.mxu0
        %v4794 = vadd.f32 %v4421, %v4793
        %4795 = vmatmul.bf16.gmra.mxu0 %v4482
        %v4796 = vpop.f32.mrf.mxu0
        %v4797 = vadd.f32 %v4421, %v4796
        %v4798 = vpop.f32.mrf.mxu0
        %v4799 = vadd.f32 %v4421, %v4798
        %4800 = vmatmul.bf16.gmra.mxu0 %v4484
        %v4801 = vpop.f32.mrf.mxu0
        %v4802 = vadd.f32 %v4421, %v4801
        %v4803 = vpop.f32.mrf.mxu0
        %v4804 = vadd.f32 %v4421, %v4803
        %4805 = vmatmul.bf16.gmra.mxu0 %v4486
        %v4806 = vpop.f32.mrf.mxu0
        %v4807 = vadd.f32 %v4421, %v4806
        %v4808 = vpop.f32.mrf.mxu0
        %v4809 = vadd.f32 %v4421, %v4808
        %4810 = vdwg.mxu0
        %4811 = vmatpush.bf16.msra.mxu0 %v4631
        %4812 = vmatpush.bf16.msra.mxu0 %v4629
        %4813 = vmatpush.bf16.msra.mxu0 %v4627
        %4814 = vmatpush.bf16.msra.mxu0 %v4625
        %4815 = vmatpush.bf16.msra.mxu0 %v4623
        %4816 = vmatpush.bf16.msra.mxu0 %v4621
        %4817 = vmatpush.bf16.msra.mxu0 %v4619
        %4818 = vmatpush.bf16.msra.mxu0 %v4617
        %4819 = vmatmul.bf16.gmra.mxu0 %v4473
        %v4820 = vpop.f32.mrf.mxu0
        %v4821 = vadd.f32 %v4772, %v4820
        %v4822 = vpop.f32.mrf.mxu0
        %v4823 = vadd.f32 %v4774, %v4822
        %4824 = vmatmul.bf16.gmra.mxu0 %v4475
        %v4825 = vpop.f32.mrf.mxu0
        %v4826 = vadd.f32 %v4777, %v4825
        %v4827 = vpop.f32.mrf.mxu0
        %v4828 = vadd.f32 %v4779, %v4827
        %4829 = vmatmul.bf16.gmra.mxu0 %v4477
        %v4830 = vpop.f32.mrf.mxu0
        %v4831 = vadd.f32 %v4782, %v4830
        %v4832 = vpop.f32.mrf.mxu0
        %v4833 = vadd.f32 %v4784, %v4832
        %4834 = vmatmul.bf16.gmra.mxu0 %v4479
        %v4835 = vpop.f32.mrf.mxu0
        %v4836 = vadd.f32 %v4787, %v4835
        %v4837 = vpop.f32.mrf.mxu0
        %v4838 = vadd.f32 %v4789, %v4837
        %4839 = vmatmul.bf16.gmra.mxu0 %v4481
        %v4840 = vpop.f32.mrf.mxu0
        %v4841 = vadd.f32 %v4792, %v4840
        %v4842 = vpop.f32.mrf.mxu0
        %v4843 = vadd.f32 %v4794, %v4842
        %4844 = vmatmul.bf16.gmra.mxu0 %v4483
        %v4845 = vpop.f32.mrf.mxu0
        %v4846 = vadd.f32 %v4797, %v4845
        %v4847 = vpop.f32.mrf.mxu0
        %v4848 = vadd.f32 %v4799, %v4847
        %4849 = vmatmul.bf16.gmra.mxu0 %v4485
        %v4850 = vpop.f32.mrf.mxu0
        %v4851 = vadd.f32 %v4802, %v4850
        %v4852 = vpop.f32.mrf.mxu0
        %v4853 = vadd.f32 %v4804, %v4852
        %4854 = vmatmul.bf16.gmra.mxu0 %v4487
        %v4855 = vpop.f32.mrf.mxu0
        %v4856 = vadd.f32 %v4807, %v4855
        %v4857 = vpop.f32.mrf.mxu0
        %v4858 = vadd.f32 %v4809, %v4857
        %4859 = vdwg.mxu0
        %4860 = vst [vmem:[%s297] sm:$0xff] %v4723
        %4861 = vst [vmem:[%s297 + $0x8] sm:$0xff] %v4821
        %4862 = vst [vmem:[%s297 + $0x10] sm:$0xff] %v4725
        %4863 = vst [vmem:[%s297 + $0x18] sm:$0xff] %v4823
        %4864 = vst [vmem:[%s297 + $0x20] sm:$0xff] %v4728
        %4865 = vst [vmem:[%s297 + $0x28] sm:$0xff] %v4826
        %4866 = vst [vmem:[%s297 + $0x30] sm:$0xff] %v4730
        %4867 = vst [vmem:[%s297 + $0x38] sm:$0xff] %v4828
        %4868 = vst [vmem:[%s297 + $0x40] sm:$0xff] %v4733
        %4869 = vst [vmem:[%s297 + $0x48] sm:$0xff] %v4831
        %4870 = vst [vmem:[%s297 + $0x50] sm:$0xff] %v4735
        %4871 = vst [vmem:[%s297 + $0x58] sm:$0xff] %v4833
        %4872 = vst [vmem:[%s297 + $0x60] sm:$0xff] %v4738
        %4873 = vst [vmem:[%s297 + $0x68] sm:$0xff] %v4836
        %4874 = vst [vmem:[%s297 + $0x70] sm:$0xff] %v4740
        %4875 = vst [vmem:[%s297 + $0x78] sm:$0xff] %v4838
        %4876 = vst [vmem:[%s297 + $0x80] sm:$0xff] %v4743
        %4877 = vst [vmem:[%s297 + $0x88] sm:$0xff] %v4841
        %4878 = vst [vmem:[%s297 + $0x90] sm:$0xff] %v4745
        %4879 = vst [vmem:[%s297 + $0x98] sm:$0xff] %v4843
        %4880 = vst [vmem:[%s297 + $0xa0] sm:$0xff] %v4748
        %4881 = vst [vmem:[%s297 + $0xa8] sm:$0xff] %v4846
        %4882 = vst [vmem:[%s297 + $0xb0] sm:$0xff] %v4750
        %4883 = vst [vmem:[%s297 + $0xb8] sm:$0xff] %v4848
        %4884 = vst [vmem:[%s297 + $0xc0] sm:$0xff] %v4753
        %4885 = vst [vmem:[%s297 + $0xc8] sm:$0xff] %v4851
        %4886 = vst [vmem:[%s297 + $0xd0] sm:$0xff] %v4755
        %4887 = vst [vmem:[%s297 + $0xd8] sm:$0xff] %v4853
        %4888 = vst [vmem:[%s297 + $0xe0] sm:$0xff] %v4758
        %4889 = vst [vmem:[%s297 + $0xe8] sm:$0xff] %v4856
        %4890 = vst [vmem:[%s297 + $0xf0] sm:$0xff] %v4760
        %4891 = vst [vmem:[%s297 + $0xf8] sm:$0xff] %v4858
        %s4892 = sand.u32 %s138, 1
        %s4893 = scalar_lea.sflag [#allocation6], %s4892
        %s4894 = sand.u32 %s138, 1
        %s4895 = smul.addr %s4894, 256
        %s4896 = scalar_lea.vmem [#allocation10], %s4895
        %s4897 = sand.u32 %s166, 1
        %s4898 = scalar_lea.sflag [#allocation12], %s4897
        %s4899 = sand.u32 %s166, 1
        %s4900 = smul.addr %s4899, 512
        %s4901 = scalar_lea.vmem [#allocation11], %s4900
        // Predicated region
        $region53: #{tpu_custom_call.1} parent=35 // pred_check
          %p4902 = pneg %p148
        $region54: #{tpu_custom_call.1} parent=35 // pred_check_branch
          %4904 = sbr.rel (%p4902) target = $region56
        $region55: #{tpu_custom_call.1} parent=35 // pred_region
          %s4905 = smul.u32 16, %s32
          %4907 = vsyncadd %s4893, 0
          %s4908 = smul.addr %s4905, 2
          %s4909 = smul.addr %s31, 64
          %s4910 = sadd.s32 %s4908, %s4909
          %s4911 = smul.addr %s4910, 8
          %s4912 = scalar_lea.hbm %s4, %s4911
          %s4913 = sshll.u32 %s4896, 4
          %s4914 = int_to_ptr.vmem [resolvable:$true] %s4913
          %s4915 = sshll.u32 %s4912, 4
          %s4916 = int_to_ptr.hbm [resolvable:$true] %s4915
          %4921 = dma.vmem_to_hbm [thread:$0]  %s4914, 4096, %s4916, %s4893, 256, 256, 16
        $region56: #{tpu_custom_call.1} parent=35 // pred_fallthru
          _
        // Predicated region
        $region57: #{tpu_custom_call.1} parent=35 // pred_check
          %p4922 = pneg %p176
        $region58: #{tpu_custom_call.1} parent=35 // pred_check_branch
          %4924 = sbr.rel (%p4922) target = $region60
        $region59: #{tpu_custom_call.1} parent=35 // pred_region
          #allocation14 [shape = 'u32[6]{0}', space=smem, size = 0x18, scoped, tag = 'DMA stride descriptor']
          %s4925 = smul.u32 16, %s32
          %4927 = vsyncadd %s4898, 0
          %s4928 = smul.addr %s4925, 2
          %s4929 = smul.addr %s31, 128
          %s4930 = sadd.s32 %s4928, %s4929
          %s4931 = smul.addr %s4930, 8
          %s4932 = scalar_lea.hbm %s5, %s4931
          %s4934 = sshll.u32 1, 14
          %s4935 = sxor.u32 4294967295, %s4934
          %s4938 = sshll.u32 7, 18
          %s4939 = sxor.u32 4294967295, %s4938
          %s4940 = sand.u32 0, %s4939
          %s4942 = sor.u32 %s4940, 0
          %s4943 = sshll.u32 %s4901, 4
          %s4944 = int_to_ptr.vmem [resolvable:$true] %s4943
          %s4945 = sshll.u32 %s4932, 4
          %s4946 = int_to_ptr.hbm [resolvable:$true] %s4945
          %4952 = sst [smem:[#allocation14]] 4096
          %s4953 = scalar_lea.smem [#allocation14], 1
          %4954 = sst [smem:[%s4953]] 8192
          %s4955 = scalar_lea.smem [#allocation14], 2
          %4956 = sst [smem:[%s4955]] 16
          %s4957 = scalar_lea.smem [#allocation14], 3
          %4958 = sst [smem:[%s4957]] 256
          %s4959 = scalar_lea.smem [#allocation14], 4
          %4960 = sst [smem:[%s4959]] 256
          %s4961 = scalar_lea.smem [#allocation14], 5
          %4962 = sst [smem:[%s4961]] 16
          %4964 = dma.general %s4944, 8192, %s4946, %s4898, [#allocation13], [#allocation14], %s4942, 0
        $region60: #{tpu_custom_call.1} parent=35 // pred_fallthru
          _
      $region36: #{tpu_custom_call.1} parent=5 // pred_fallthru
        _
      %p4965 = scmp.le.s32.totalorder 2, %s22
      // Predicated region
      $region61: #{tpu_custom_call.1} parent=5 // pred_check
        %p4966 = pneg %p4965
      $region62: #{tpu_custom_call.1} parent=5 // pred_check_branch
        %4968 = sbr.rel (%p4966) target = $region64
      $region63: #{tpu_custom_call.1} parent=5 // pred_region
        %s4969 = ssub.s32 %s22, 2
        // Predicated region
        $region65: #{tpu_custom_call.1} parent=63 // pred_check
          %p4970 = pneg %p154
        $region66: #{tpu_custom_call.1} parent=63 // pred_check_branch
          %4972 = sbr.rel (%p4970) target = $region68
        $region67: #{tpu_custom_call.1} parent=63 // pred_region
          %s4973 = sand.u32 %s139, 1
          %s4974 = scalar_lea.sflag [#allocation6], %s4973
          %s4975 = sand.u32 %s139, 1
          %s4976 = smul.addr %s4975, 256
          %s4977 = scalar_lea.vmem [#allocation10], %s4976
          %4979 = dma.done %s4974, 4096
        $region68: #{tpu_custom_call.1} parent=63 // pred_fallthru
          _
        // Predicated region
        $region69: #{tpu_custom_call.1} parent=63 // pred_check
          %p4980 = pneg %p182
        $region70: #{tpu_custom_call.1} parent=63 // pred_check_branch
          %4982 = sbr.rel (%p4980) target = $region72
        $region71: #{tpu_custom_call.1} parent=63 // pred_region
          %s4983 = sand.u32 %s167, 1
          %s4984 = scalar_lea.sflag [#allocation12], %s4983
          %s4985 = sand.u32 %s167, 1
          %s4986 = smul.addr %s4985, 512
          %s4987 = scalar_lea.vmem [#allocation11], %s4986
          %4989 = dma.done %s4984, 8192
        $region72: #{tpu_custom_call.1} parent=63 // pred_fallthru
          _
      $region64: #{tpu_custom_call.1} parent=5 // pred_fallthru
        _
    $region6: #{tpu_custom_call.1} parent=1 // loop_footer
      %s26 = sadd.s32 1, %s22
    $region7: #{tpu_custom_call.1} parent=1 // loop_footer_branch
      %21 = sbr.rel target = $region3
    $region8: #{tpu_custom_call.1} parent=1 // loop_exit
      _
    %4990 = vsyncpa [#allocation5], 1
    %s4991 = scalar_lea.sflag [#allocation5], 1
    %4992 = vsyncpa %s4991, 1
    %4993 = vsyncpa [#allocation8], 1
    %4994 = vsyncpa [#allocation6], 1
    %s4995 = scalar_lea.sflag [#allocation6], 1
    %4996 = vsyncpa %s4995, 1
    %4997 = vsyncpa [#allocation12], 1
    %s4998 = scalar_lea.sflag [#allocation12], 1
    %4999 = vsyncpa %s4998, 1

// kernel: tpu_custom_call.1
$region0: #{tpu_custom_call.1}
  #allocation0 [shape = 'u32[]', space=smem, size = 0x4, offset = 0x4, fixed_abs, tag = 'smem constant byte address 0x4 - core index']
  #allocation1 [shape = 'u32[72,128]{1,0:T(1,128)}', space=vmem, size = 0x9000, scoped, tag = 'internal scratch']
  #allocation2 [shape = 'bf16[256,768]{1,0:T(8,128)(2,1)}', space=vmem, size = 0x60000, scoped, tag = 'scratch operand']
  #allocation3 [shape = 'bf16[128,256]{1,0:T(8,128)(2,1)}', space=vmem, size = 0x10000, scoped, tag = 'scratch operand']
  #allocation13 [shape = 's32[]', space=sflag, size = 0x4, offset = 0, fixed_abs, tag = 'sflag constant byte address 0x0 - dummy sync flag']
  %s0 = inlined_call_operand.hbm [shape: f32[2,256,256], index: 0, kind: input, shape index: {}]
  %s1 = inlined_call_operand.hbm [shape: bf16[256,768], index: 1, kind: input, shape index: {}]
  %s2 = inlined_call_operand.hbm [shape: bf16[256,256], index: 2, kind: input, shape index: {}]
  %s3 = inlined_call_operand.vmem [shape: f32[1,256], index: 3, kind: input, shape index: {}]
  %s4 = inlined_call_operand.hbm [shape: f32[2,256,256], index: 4, kind: output, shape index: {0}]
  %s5 = inlined_call_operand.hbm [shape: f32[2,2,256,256], index: 5, kind: output, shape index: {1}]
  %6 = xla_tuple %s4, %s5
  %s7 = sld [smem:[#allocation0]]
  $region73: #{tpu_custom_call.1} parent=0
    _
  %s9 = ssub.s32 1, %s7
  %s10 = scalar_select 0, %s9, %s7
  $region1: #{tpu_custom_call.1} parent=0
    #allocation4 [shape = 'u8[524288]{0}', space=vmem, size = 0x80000, scoped, tag = 'input window, operand 0']
    #allocation5 [shape = 's32[2]{0}', space=sflag, size = 0x8, scoped, tag = 'scoped memory for tpu_custom_call.1']
    #allocation6 [shape = 's32[2]{0}', space=sflag, size = 0x8, scoped, tag = 'scoped memory for tpu_custom_call.1']
    #allocation7 [shape = 'u8[393216]{0}', space=vmem, size = 0x60000, scoped, tag = 'input window, operand 1, single buffered']
    #allocation8 [shape = 's32[1]{0}', space=sflag, size = 0x4, scoped, tag = 'scoped memory for tpu_custom_call.1']
    #allocation9 [shape = 'u8[131072]{0}', space=vmem, size = 0x20000, scoped, tag = 'input window, operand 2, single buffered']
    #allocation10 [shape = 'u8[262144]{0}', space=vmem, size = 0x40000, scoped, tag = 'output window, operand 0']
    #allocation11 [shape = 'u8[524288]{0}', space=vmem, size = 0x80000, scoped, tag = 'output window, operand 1']
    #allocation12 [shape = 's32[2]{0}', space=sflag, size = 0x8, scoped, tag = 'scoped memory for tpu_custom_call.1']
    %11 = vsyncpa [#allocation5], 0
    %s12 = scalar_lea.sflag [#allocation5], 1
    %13 = vsyncpa %s12, 0
    %14 = vsyncpa [#allocation8], 0
    %15 = vsyncpa [#allocation6], 0
    %s16 = scalar_lea.sflag [#allocation6], 1
    %17 = vsyncpa %s16, 0
    %18 = vsyncpa [#allocation12], 0
    %s19 = scalar_lea.sflag [#allocation12], 1
    %20 = vsyncpa %s19, 0
    loop: start=0, step=1, limit=6
    $region2: #{tpu_custom_call.1} parent=1 // loop_pre_header
      _
    $region3: #{tpu_custom_call.1} parent=1 // loop_header
      %s22 = sphi 0, %s26
      %p23 = scmp.ge.s32.totalorder %s22, 6
      %s29 = sphi 0, %s41
      %s30 = sphi 0, %s37
      %s31 = sphi 0, %s29
      %s32 = sphi 0, %s30
      %s33 = sphi 0, %s31
      %s34 = sphi 0, %s32
      %s44 = sphi 0, %s46
      %s47 = sphi 0, %s44
      %s48 = sphi 0, %s47
      %s64 = sphi 0, %s48
      %s68 = sphi 0, %s68
      %s70 = sphi 0, %s68
      %s71 = sphi 0, %s70
      %s85 = sphi 0, %s71
      %s89 = sphi 0, %s89
      %s91 = sphi 0, %s89
      %s92 = sphi 0, %s91
      %s106 = sphi 0, %s92
      %s110 = sphi 0, %s110
      %s112 = sphi 0, %s110
      %s113 = sphi 0, %s112
      %s127 = sphi 0, %s113
      %s135 = sphi 0, %s137
      %s138 = sphi 0, %s135
      %s139 = sphi 0, %s138
      %s155 = sphi 0, %s139
      %s163 = sphi 0, %s165
      %s166 = sphi 0, %s163
      %s167 = sphi 0, %s166
      %s183 = sphi 0, %s167
    $region4: #{tpu_custom_call.1} parent=1 // loop_header_branch
      %25 = sbr.rel (%p23) target = $region8
    $region5: #{tpu_custom_call.1} parent=1 // loop_body
      %s27 = ssub.s32 %s22, 1
      %s28 = ssub.s32 %s22, 2
      %s35 = sadd.s32 1, %s30
      %p36 = scmp.ge.s32.totalorder %s35, 2
      %s37 = scalar_select %p36, 0, %s35
      %s38 = sadd.s32 1, %s29
      %s39 = scalar_select %p36, %s38, %s29
      %p40 = scmp.ge.s32.totalorder %s39, 2
      %s41 = scalar_select %p40, 0, %s39
      %s42 = ssub.s32 %s29, %s41
      %p43 = scmp.eq.s32.totalorder %s42, 0
      %s45 = sadd.s32 %s44, 1
      %s46 = scalar_select %p43, %s44, %s45
      %p49 = pneg %p43
      %p50 = scmp.eq.s32.totalorder %s22, 3
      %p51 = por %p49, %p50
      %p52 = scmp.ne.s32.totalorder %s44, %s47
      %p53 = scmp.eq.s32.totalorder %s22, 0
      %p54 = por %p52, %p53
      %p55 = scmp.ne.s32.totalorder %s44, %s47
      %p56 = scmp.eq.s32.totalorder %s27, 3
      %p57 = por %p55, %p56
      %p58 = scmp.ne.s32.totalorder %s47, %s48
      %p59 = scmp.eq.s32.totalorder %s27, 0
      %p60 = por %p58, %p59
      %p61 = scmp.ne.s32.totalorder %s47, %s48
      %p62 = scmp.eq.s32.totalorder %s28, 3
      %p63 = por %p61, %p62
      %p65 = scmp.ne.s32.totalorder %s48, %s64
      %p66 = scmp.eq.s32.totalorder %s28, 0
      %p67 = por %p65, %p66
      %s69 = sadd.s32 %s68, 1
      %p72 = scmp.eq.s32.totalorder %s22, 3
      %p73 = scmp.ne.s32.totalorder %s68, %s70
      %p74 = scmp.eq.s32.totalorder %s22, 0
      %p75 = por %p73, %p74
      %p76 = scmp.ne.s32.totalorder %s68, %s70
      %p77 = scmp.eq.s32.totalorder %s27, 3
      %p78 = por %p76, %p77
      %p79 = scmp.ne.s32.totalorder %s70, %s71
      %p80 = scmp.eq.s32.totalorder %s27, 0
      %p81 = por %p79, %p80
      %p82 = scmp.ne.s32.totalorder %s70, %s71
      %p83 = scmp.eq.s32.totalorder %s28, 3
      %p84 = por %p82, %p83
      %p86 = scmp.ne.s32.totalorder %s71, %s85
      %p87 = scmp.eq.s32.totalorder %s28, 0
      %p88 = por %p86, %p87
      %s90 = sadd.s32 %s89, 1
      %p93 = scmp.eq.s32.totalorder %s22, 3
      %p94 = scmp.ne.s32.totalorder %s89, %s91
      %p95 = scmp.eq.s32.totalorder %s22, 0
      %p96 = por %p94, %p95
      %p97 = scmp.ne.s32.totalorder %s89, %s91
      %p98 = scmp.eq.s32.totalorder %s27, 3
      %p99 = por %p97, %p98
      %p100 = scmp.ne.s32.totalorder %s91, %s92
      %p101 = scmp.eq.s32.totalorder %s27, 0
      %p102 = por %p100, %p101
      %p103 = scmp.ne.s32.totalorder %s91, %s92
      %p104 = scmp.eq.s32.totalorder %s28, 3
      %p105 = por %p103, %p104
      %p107 = scmp.ne.s32.totalorder %s92, %s106
      %p108 = scmp.eq.s32.totalorder %s28, 0
      %p109 = por %p107, %p108
      %s111 = sadd.s32 %s110, 1
      %p114 = scmp.eq.s32.totalorder %s22, 3
      %p115 = scmp.ne.s32.totalorder %s110, %s112
      %p116 = scmp.eq.s32.totalorder %s22, 0
      %p117 = por %p115, %p116
      %p118 = scmp.ne.s32.totalorder %s110, %s112
      %p119 = scmp.eq.s32.totalorder %s27, 3
      %p120 = por %p118, %p119
      %p121 = scmp.ne.s32.totalorder %s112, %s113
      %p122 = scmp.eq.s32.totalorder %s27, 0
      %p123 = por %p121, %p122
      %p124 = scmp.ne.s32.totalorder %s112, %s113
      %p125 = scmp.eq.s32.totalorder %s28, 3
      %p126 = por %p124, %p125
      %p128 = scmp.ne.s32.totalorder %s113, %s127
      %p129 = scmp.eq.s32.totalorder %s28, 0
      %p130 = por %p128, %p129
      %s131 = ssub.s32 %s29, %s41
      %s132 = ssub.s32 %s30, %s37
      %s133 = sor.u32 %s131, %s132
      %p134 = scmp.eq.s32.totalorder %s133, 0
      %s136 = sadd.s32 %s135, 1
      %s137 = scalar_select %p134, %s135, %s136
      %p140 = pneg %p134
      %p141 = scmp.eq.s32.totalorder %s22, 3
      %p142 = por %p140, %p141
      %p143 = scmp.ne.s32.totalorder %s135, %s138
      %p144 = scmp.eq.s32.totalorder %s22, 0
      %p145 = por %p143, %p144
      %p146 = scmp.ne.s32.totalorder %s135, %s138
      %p147 = scmp.eq.s32.totalorder %s27, 3
      %p148 = por %p146, %p147
      %p149 = scmp.ne.s32.totalorder %s138, %s139
      %p150 = scmp.eq.s32.totalorder %s27, 0
      %p151 = por %p149, %p150
      %p152 = scmp.ne.s32.totalorder %s138, %s139
      %p153 = scmp.eq.s32.totalorder %s28, 3
      %p154 = por %p152, %p153
      %p156 = scmp.ne.s32.totalorder %s139, %s155
      %p157 = scmp.eq.s32.totalorder %s28, 0
      %p158 = por %p156, %p157
      %s159 = ssub.s32 %s29, %s41
      %s160 = ssub.s32 %s30, %s37
      %s161 = sor.u32 %s159, %s160
      %p162 = scmp.eq.s32.totalorder %s161, 0
      %s164 = sadd.s32 %s163, 1
      %s165 = scalar_select %p162, %s163, %s164
      %p168 = pneg %p162
      %p169 = scmp.eq.s32.totalorder %s22, 3
      %p170 = por %p168, %p169
      %p171 = scmp.ne.s32.totalorder %s163, %s166
      %p172 = scmp.eq.s32.totalorder %s22, 0
      %p173 = por %p171, %p172
      %p174 = scmp.ne.s32.totalorder %s163, %s166
      %p175 = scmp.eq.s32.totalorder %s27, 3
      %p176 = por %p174, %p175
      %p177 = scmp.ne.s32.totalorder %s166, %s167
      %p178 = scmp.eq.s32.totalorder %s27, 0
      %p179 = por %p177, %p178
      %p180 = scmp.ne.s32.totalorder %s166, %s167
      %p181 = scmp.eq.s32.totalorder %s28, 3
      %p182 = por %p180, %p181
      %p184 = scmp.ne.s32.totalorder %s167, %s183
      %p185 = scmp.eq.s32.totalorder %s28, 0
      %p186 = por %p184, %p185
      %p187 = scmp.le.s32.totalorder 1, %s22
      %p188 = scmp.lt.s32.totalorder %s22, 5
      %p189 = pnand %p187, %p188
      %p190 = pneg %p189
      // Predicated region
      $region9: #{tpu_custom_call.1} parent=5 // pred_check
        _
      $region10: #{tpu_custom_call.1} parent=5 // pred_check_branch
        %192 = sbr.rel (%p189) target = $region12
      $region11: #{tpu_custom_call.1} parent=5 // pred_region
        %s193 = ssub.s32 %s22, 1
        // Predicated region
        $region13: #{tpu_custom_call.1} parent=11 // pred_check
          %p194 = pneg %p81
        $region14: #{tpu_custom_call.1} parent=11 // pred_check_branch
          %196 = sbr.rel (%p194) target = $region16
        $region15: #{tpu_custom_call.1} parent=11 // pred_region
          %198 = vsyncadd [#allocation8], 0
          %s199 = sshll.u32 %s1, 4
          %s200 = int_to_ptr.hbm [resolvable:$true] %s199
          %s201 = sshll.u32 [#allocation7], 4
          %s202 = int_to_ptr.vmem [resolvable:$true] %s201
          %207 = dma.hbm_to_vmem [thread:$0]  %s200, 12288, %s202, [#allocation8], 384, 384, 24
        $region16: #{tpu_custom_call.1} parent=11 // pred_fallthru
          _
        // Predicated region
        $region17: #{tpu_custom_call.1} parent=11 // pred_check
          %p208 = pneg %p102
        $region18: #{tpu_custom_call.1} parent=11 // pred_check_branch
          %210 = sbr.rel (%p208) target = $region20
        $region19: #{tpu_custom_call.1} parent=11 // pred_region
          %212 = vsyncadd [#allocation8], 0
          %s213 = sshll.u32 %s2, 4
          %s214 = int_to_ptr.hbm [resolvable:$true] %s213
          %s215 = sshll.u32 [#allocation9], 4
          %s216 = int_to_ptr.vmem [resolvable:$true] %s215
          %221 = dma.hbm_to_vmem [thread:$0]  %s214, 4096, %s216, [#allocation8], 128, 128, 8
        $region20: #{tpu_custom_call.1} parent=11 // pred_fallthru
          _
        // Predicated region
        $region21: #{tpu_custom_call.1} parent=11 // pred_check
          %p222 = pneg %p123
        $region22: #{tpu_custom_call.1} parent=11 // pred_check_branch
          %224 = sbr.rel (%p222) target = $region24
        $region23: #{tpu_custom_call.1} parent=11 // pred_region
          _
        $region24: #{tpu_custom_call.1} parent=11 // pred_fallthru
          _
      $region12: #{tpu_custom_call.1} parent=5 // pred_fallthru
        _
      %p225 = scmp.lt.s32.totalorder %s22, 4
      // Predicated region
      $region25: #{tpu_custom_call.1} parent=5 // pred_check
        %p226 = pneg %p225
      $region26: #{tpu_custom_call.1} parent=5 // pred_check_branch
        %228 = sbr.rel (%p226) target = $region28
      $region27: #{tpu_custom_call.1} parent=5 // pred_region
        // Predicated region
        $region29: #{tpu_custom_call.1} parent=27 // pred_check
          %p229 = pneg %p54
        $region30: #{tpu_custom_call.1} parent=27 // pred_check_branch
          %231 = sbr.rel (%p229) target = $region32
        $region31: #{tpu_custom_call.1} parent=27 // pred_region
          %s232 = sand.u32 %s44, 1
          %s233 = scalar_lea.sflag [#allocation5], %s232
          %s234 = sand.u32 %s44, 1
          %s235 = smul.addr %s234, 512
          %s236 = scalar_lea.vmem [#allocation4], %s235
          %238 = vsyncadd %s233, 0
          %s239 = smul.addr %s29, 64
          %s240 = smul.addr %s239, 8
          %s241 = scalar_lea.hbm %s0, %s240
          %s242 = sshll.u32 %s241, 4
          %s243 = int_to_ptr.hbm [resolvable:$true] %s242
          %s244 = sshll.u32 %s236, 4
          %s245 = int_to_ptr.vmem [resolvable:$true] %s244
          %250 = dma.hbm_to_vmem [thread:$0]  %s243, 8192, %s245, %s233, 256, 256, 16
        $region32: #{tpu_custom_call.1} parent=27 // pred_fallthru
          _
      $region28: #{tpu_custom_call.1} parent=5 // pred_fallthru
        _
      %p251 = scmp.le.s32.totalorder 1, %s22
      %p252 = scmp.lt.s32.totalorder %s22, 5
      %p253 = pnand %p251, %p252
      %p254 = pneg %p253
      // Predicated region
      $region33: #{tpu_custom_call.1} parent=5 // pred_check
        _
      $region34: #{tpu_custom_call.1} parent=5 // pred_check_branch
        %256 = sbr.rel (%p253) target = $region36
      $region35: #{tpu_custom_call.1} parent=5 // pred_region
        %s257 = ssub.s32 %s22, 1
        %s258 = sand.u32 %s47, 1
        %s259 = scalar_lea.sflag [#allocation5], %s258
        %s260 = sand.u32 %s47, 1
        %s261 = smul.addr %s260, 512
        %s262 = scalar_lea.vmem [#allocation4], %s261
        // Predicated region
        $region37: #{tpu_custom_call.1} parent=35 // pred_check
          %p263 = pneg %p60
        $region38: #{tpu_custom_call.1} parent=35 // pred_check_branch
          %265 = sbr.rel (%p263) target = $region40
        $region39: #{tpu_custom_call.1} parent=35 // pred_region
          %267 = dma.done %s259, 8192
        $region40: #{tpu_custom_call.1} parent=35 // pred_fallthru
          _
        // Predicated region
        $region41: #{tpu_custom_call.1} parent=35 // pred_check
          %p268 = pneg %p81
        $region42: #{tpu_custom_call.1} parent=35 // pred_check_branch
          %270 = sbr.rel (%p268) target = $region44
        $region43: #{tpu_custom_call.1} parent=35 // pred_region
          %272 = dma.done [#allocation8], 12288
        $region44: #{tpu_custom_call.1} parent=35 // pred_fallthru
          _
        // Predicated region
        $region45: #{tpu_custom_call.1} parent=35 // pred_check
          %p273 = pneg %p102
        $region46: #{tpu_custom_call.1} parent=35 // pred_check_branch
          %275 = sbr.rel (%p273) target = $region48
        $region47: #{tpu_custom_call.1} parent=35 // pred_region
          %277 = dma.done [#allocation8], 4096
        $region48: #{tpu_custom_call.1} parent=35 // pred_fallthru
          _
        %s278 = sand.u32 %s47, 1
        %s279 = scalar_lea.sflag [#allocation5], %s278
        %s280 = sand.u32 %s47, 1
        %s281 = smul.addr %s280, 512
        %s282 = scalar_lea.vmem [#allocation4], %s281
        %p283 = pneg %p60
        %p284 = pneg %p57
        %p285 = pneg %p81
        %p286 = pneg %p78
        %p287 = pneg %p102
        %p288 = pneg %p99
        %p289 = pneg %p123
        %p290 = pneg %p120
        %p291 = pneg %p151
        %p292 = pneg %p148
        %s293 = sand.u32 %s138, 1
        %s294 = scalar_lea.sflag [#allocation6], %s293
        %s295 = sand.u32 %s138, 1
        %s296 = smul.addr %s295, 256
        %s297 = scalar_lea.vmem [#allocation10], %s296
        %p298 = pneg %p179
        %p299 = pneg %p176
        %s300 = sand.u32 %s166, 1
        %s301 = scalar_lea.sflag [#allocation12], %s300
        %s302 = sand.u32 %s166, 1
        %s303 = smul.addr %s302, 512
        %s304 = scalar_lea.vmem [#allocation11], %s303
        %s305 = smul.u32 16, %s32
        %s306 = smul.u32 16, %s32
        %p307 = scmp.eq.s32.totalorder %s32, 0
        // Predicated region
        $region49: #{tpu_custom_call.1} parent=35 // pred_check
          %p308 = pneg %p307
        $region50: #{tpu_custom_call.1} parent=35 // pred_check_branch
          %310 = sbr.rel (%p308) target = $region52
        $region51: #{tpu_custom_call.1} parent=35 // pred_region
          %v311 = vld [vmem:[%s262] sm:$0xff]
          %v312 = vld [vmem:[%s262 + $0x8] sm:$0xff]
          %v313 = vld [vmem:[%s262 + $0x10] sm:$0xff]
          %v314 = vld [vmem:[%s262 + $0x18] sm:$0xff]
          %v315 = vld [vmem:[%s262 + $0x20] sm:$0xff]
          %v316 = vld [vmem:[%s262 + $0x28] sm:$0xff]
          %v317 = vld [vmem:[%s262 + $0x30] sm:$0xff]
          %v318 = vld [vmem:[%s262 + $0x38] sm:$0xff]
          %v319 = vld [vmem:[%s262 + $0x40] sm:$0xff]
          %v320 = vld [vmem:[%s262 + $0x48] sm:$0xff]
          %v321 = vld [vmem:[%s262 + $0x50] sm:$0xff]
          %v322 = vld [vmem:[%s262 + $0x58] sm:$0xff]
          %v323 = vld [vmem:[%s262 + $0x60] sm:$0xff]
          %v324 = vld [vmem:[%s262 + $0x68] sm:$0xff]
          %v325 = vld [vmem:[%s262 + $0x70] sm:$0xff]
          %v326 = vld [vmem:[%s262 + $0x78] sm:$0xff]
          %v327 = vld [vmem:[%s262 + $0x80] sm:$0xff]
          %v328 = vld [vmem:[%s262 + $0x88] sm:$0xff]
          %v329 = vld [vmem:[%s262 + $0x90] sm:$0xff]
          %v330 = vld [vmem:[%s262 + $0x98] sm:$0xff]
          %v331 = vld [vmem:[%s262 + $0xa0] sm:$0xff]
          %v332 = vld [vmem:[%s262 + $0xa8] sm:$0xff]
          %v333 = vld [vmem:[%s262 + $0xb0] sm:$0xff]
          %v334 = vld [vmem:[%s262 + $0xb8] sm:$0xff]
          %v335 = vld [vmem:[%s262 + $0xc0] sm:$0xff]
          %v336 = vld [vmem:[%s262 + $0xc8] sm:$0xff]
          %v337 = vld [vmem:[%s262 + $0xd0] sm:$0xff]
          %v338 = vld [vmem:[%s262 + $0xd8] sm:$0xff]
          %v339 = vld [vmem:[%s262 + $0xe0] sm:$0xff]
          %v340 = vld [vmem:[%s262 + $0xe8] sm:$0xff]
          %v341 = vld [vmem:[%s262 + $0xf0] sm:$0xff]
          %v342 = vld [vmem:[%s262 + $0xf8] sm:$0xff]
          %v343 = vld [vmem:[%s262 + $0x100] sm:$0xff]
          %v344 = vld [vmem:[%s262 + $0x108] sm:$0xff]
          %v345 = vld [vmem:[%s262 + $0x110] sm:$0xff]
          %v346 = vld [vmem:[%s262 + $0x118] sm:$0xff]
          %v347 = vld [vmem:[%s262 + $0x120] sm:$0xff]
          %v348 = vld [vmem:[%s262 + $0x128] sm:$0xff]
          %v349 = vld [vmem:[%s262 + $0x130] sm:$0xff]
          %v350 = vld [vmem:[%s262 + $0x138] sm:$0xff]
          %v351 = vld [vmem:[%s262 + $0x140] sm:$0xff]
          %v352 = vld [vmem:[%s262 + $0x148] sm:$0xff]
          %v353 = vld [vmem:[%s262 + $0x150] sm:$0xff]
          %v354 = vld [vmem:[%s262 + $0x158] sm:$0xff]
          %v355 = vld [vmem:[%s262 + $0x160] sm:$0xff]
          %v356 = vld [vmem:[%s262 + $0x168] sm:$0xff]
          %v357 = vld [vmem:[%s262 + $0x170] sm:$0xff]
          %v358 = vld [vmem:[%s262 + $0x178] sm:$0xff]
          %v359 = vld [vmem:[%s262 + $0x180] sm:$0xff]
          %v360 = vld [vmem:[%s262 + $0x188] sm:$0xff]
          %v361 = vld [vmem:[%s262 + $0x190] sm:$0xff]
          %v362 = vld [vmem:[%s262 + $0x198] sm:$0xff]
          %v363 = vld [vmem:[%s262 + $0x1a0] sm:$0xff]
          %v364 = vld [vmem:[%s262 + $0x1a8] sm:$0xff]
          %v365 = vld [vmem:[%s262 + $0x1b0] sm:$0xff]
          %v366 = vld [vmem:[%s262 + $0x1b8] sm:$0xff]
          %v367 = vld [vmem:[%s262 + $0x1c0] sm:$0xff]
          %v368 = vld [vmem:[%s262 + $0x1c8] sm:$0xff]
          %v369 = vld [vmem:[%s262 + $0x1d0] sm:$0xff]
          %v370 = vld [vmem:[%s262 + $0x1d8] sm:$0xff]
          %v371 = vld [vmem:[%s262 + $0x1e0] sm:$0xff]
          %v372 = vld [vmem:[%s262 + $0x1e8] sm:$0xff]
          %v373 = vld [vmem:[%s262 + $0x1f0] sm:$0xff]
          %v374 = vld [vmem:[%s262 + $0x1f8] sm:$0xff]
          %v375 = vpack.c.bf16 %v313, %v311
          %v376 = vpack.c.bf16 %v314, %v312
          %v377 = vpack.c.bf16 %v317, %v315
          %v378 = vpack.c.bf16 %v318, %v316
          %v379 = vpack.c.bf16 %v321, %v319
          %v380 = vpack.c.bf16 %v322, %v320
          %v381 = vpack.c.bf16 %v325, %v323
          %v382 = vpack.c.bf16 %v326, %v324
          %v383 = vpack.c.bf16 %v329, %v327
          %v384 = vpack.c.bf16 %v330, %v328
          %v385 = vpack.c.bf16 %v333, %v331
          %v386 = vpack.c.bf16 %v334, %v332
          %v387 = vpack.c.bf16 %v337, %v335
          %v388 = vpack.c.bf16 %v338, %v336
          %v389 = vpack.c.bf16 %v341, %v339
          %v390 = vpack.c.bf16 %v342, %v340
          %v391 = vpack.c.bf16 %v345, %v343
          %v392 = vpack.c.bf16 %v346, %v344
          %v393 = vpack.c.bf16 %v349, %v347
          %v394 = vpack.c.bf16 %v350, %v348
          %v395 = vpack.c.bf16 %v353, %v351
          %v396 = vpack.c.bf16 %v354, %v352
          %v397 = vpack.c.bf16 %v357, %v355
          %v398 = vpack.c.bf16 %v358, %v356
          %v399 = vpack.c.bf16 %v361, %v359
          %v400 = vpack.c.bf16 %v362, %v360
          %v401 = vpack.c.bf16 %v365, %v363
          %v402 = vpack.c.bf16 %v366, %v364
          %v403 = vpack.c.bf16 %v369, %v367
          %v404 = vpack.c.bf16 %v370, %v368
          %v405 = vpack.c.bf16 %v373, %v371
          %v406 = vpack.c.bf16 %v374, %v372
          %v407 = vld [vmem:[#allocation7] sm:$0xff]
          %v408 = vld [vmem:[#allocation7 + $0x8] sm:$0xff]
          %v409 = vld [vmem:[#allocation7 + $0x10] sm:$0xff]
          %v410 = vld [vmem:[#allocation7 + $0x18] sm:$0xff]
          %v411 = vld [vmem:[#allocation7 + $0x20] sm:$0xff]
          %v412 = vld [vmem:[#allocation7 + $0x28] sm:$0xff]
          %v413 = vld [vmem:[#allocation7 + $0x30] sm:$0xff]
          %v414 = vld [vmem:[#allocation7 + $0x38] sm:$0xff]
          %v415 = vld [vmem:[#allocation7 + $0x40] sm:$0xff]
          %v416 = vld [vmem:[#allocation7 + $0x48] sm:$0xff]
          %v417 = vld [vmem:[#allocation7 + $0x50] sm:$0xff]
          %v418 = vld [vmem:[#allocation7 + $0x58] sm:$0xff]
          %v419 = vld [vmem:[#allocation7 + $0x60] sm:$0xff]
          %v420 = vld [vmem:[#allocation7 + $0x68] sm:$0xff]
          %v421 = vld [vmem:[#allocation7 + $0x70] sm:$0xff]
          %v422 = vld [vmem:[#allocation7 + $0x78] sm:$0xff]
          %v423 = vld [vmem:[#allocation7 + $0x80] sm:$0xff]
          %v424 = vld [vmem:[#allocation7 + $0x88] sm:$0xff]
          %v425 = vld [vmem:[#allocation7 + $0x90] sm:$0xff]
          %v426 = vld [vmem:[#allocation7 + $0x98] sm:$0xff]
          %v427 = vld [vmem:[#allocation7 + $0xa0] sm:$0xff]
          %v428 = vld [vmem:[#allocation7 + $0xa8] sm:$0xff]
          %v429 = vld [vmem:[#allocation7 + $0xb0] sm:$0xff]
          %v430 = vld [vmem:[#allocation7 + $0xb8] sm:$0xff]
          %v431 = vld [vmem:[#allocation7 + $0xc0] sm:$0xff]
          %v432 = vld [vmem:[#allocation7 + $0xc8] sm:$0xff]
          %v433 = vld [vmem:[#allocation7 + $0xd0] sm:$0xff]
          %v434 = vld [vmem:[#allocation7 + $0xd8] sm:$0xff]
          %v435 = vld [vmem:[#allocation7 + $0xe0] sm:$0xff]
          %v436 = vld [vmem:[#allocation7 + $0xe8] sm:$0xff]
          %v437 = vld [vmem:[#allocation7 + $0xf0] sm:$0xff]
          %v438 = vld [vmem:[#allocation7 + $0xf8] sm:$0xff]
          %v439 = vld [vmem:[#allocation7 + $0x100] sm:$0xff]
          %v440 = vld [vmem:[#allocation7 + $0x108] sm:$0xff]
          %v441 = vld [vmem:[#allocation7 + $0x110] sm:$0xff]
          %v442 = vld [vmem:[#allocation7 + $0x118] sm:$0xff]
          %v443 = vld [vmem:[#allocation7 + $0x120] sm:$0xff]
          %v444 = vld [vmem:[#allocation7 + $0x128] sm:$0xff]
          %v445 = vld [vmem:[#allocation7 + $0x130] sm:$0xff]
          %v446 = vld [vmem:[#allocation7 + $0x138] sm:$0xff]
          %v447 = vld [vmem:[#allocation7 + $0x140] sm:$0xff]
          %v448 = vld [vmem:[#allocation7 + $0x148] sm:$0xff]
          %v449 = vld [vmem:[#allocation7 + $0x150] sm:$0xff]
          %v450 = vld [vmem:[#allocation7 + $0x158] sm:$0xff]
          %v451 = vld [vmem:[#allocation7 + $0x160] sm:$0xff]
          %v452 = vld [vmem:[#allocation7 + $0x168] sm:$0xff]
          %v453 = vld [vmem:[#allocation7 + $0x170] sm:$0xff]
          %v454 = vld [vmem:[#allocation7 + $0x178] sm:$0xff]
          %v455 = vld [vmem:[#allocation7 + $0x180] sm:$0xff]
          %v456 = vld [vmem:[#allocation7 + $0x188] sm:$0xff]
          %v457 = vld [vmem:[#allocation7 + $0x190] sm:$0xff]
          %v458 = vld [vmem:[#allocation7 + $0x198] sm:$0xff]
          %v459 = vld [vmem:[#allocation7 + $0x1a0] sm:$0xff]
          %v460 = vld [vmem:[#allocation7 + $0x1a8] sm:$0xff]
          %v461 = vld [vmem:[#allocation7 + $0x1b0] sm:$0xff]
          %v462 = vld [vmem:[#allocation7 + $0x1b8] sm:$0xff]
          %v463 = vld [vmem:[#allocation7 + $0x1c0] sm:$0xff]
          %v464 = vld [vmem:[#allocation7 + $0x1c8] sm:$0xff]
          %v465 = vld [vmem:[#allocation7 + $0x1d0] sm:$0xff]
          %v466 = vld [vmem:[#allocation7 + $0x1d8] sm:$0xff]
          %v467 = vld [vmem:[#allocation7 + $0x1e0] sm:$0xff]
          %v468 = vld [vmem:[#allocation7 + $0x1e8] sm:$0xff]
          %v469 = vld [vmem:[#allocation7 + $0x1f0] sm:$0xff]
          %v470 = vld [vmem:[#allocation7 + $0x1f8] sm:$0xff]
          %v471 = vld [vmem:[#allocation7 + $0x200] sm:$0xff]
          %v472 = vld [vmem:[#allocation7 + $0x208] sm:$0xff]
          %v473 = vld [vmem:[#allocation7 + $0x210] sm:$0xff]
          %v474 = vld [vmem:[#allocation7 + $0x218] sm:$0xff]
          %v475 = vld [vmem:[#allocation7 + $0x220] sm:$0xff]
          %v476 = vld [vmem:[#allocation7 + $0x228] sm:$0xff]
          %v477 = vld [vmem:[#allocation7 + $0x230] sm:$0xff]
          %v478 = vld [vmem:[#allocation7 + $0x238] sm:$0xff]
          %v479 = vld [vmem:[#allocation7 + $0x240] sm:$0xff]
          %v480 = vld [vmem:[#allocation7 + $0x248] sm:$0xff]
          %v481 = vld [vmem:[#allocation7 + $0x250] sm:$0xff]
          %v482 = vld [vmem:[#allocation7 + $0x258] sm:$0xff]
          %v483 = vld [vmem:[#allocation7 + $0x260] sm:$0xff]
          %v484 = vld [vmem:[#allocation7 + $0x268] sm:$0xff]
          %v485 = vld [vmem:[#allocation7 + $0x270] sm:$0xff]
          %v486 = vld [vmem:[#allocation7 + $0x278] sm:$0xff]
          %v487 = vld [vmem:[#allocation7 + $0x280] sm:$0xff]
          %v488 = vld [vmem:[#allocation7 + $0x288] sm:$0xff]
          %v489 = vld [vmem:[#allocation7 + $0x290] sm:$0xff]
          %v490 = vld [vmem:[#allocation7 + $0x298] sm:$0xff]
          %v491 = vld [vmem:[#allocation7 + $0x2a0] sm:$0xff]
          %v492 = vld [vmem:[#allocation7 + $0x2a8] sm:$0xff]
          %v493 = vld [vmem:[#allocation7 + $0x2b0] sm:$0xff]
          %v494 = vld [vmem:[#allocation7 + $0x2b8] sm:$0xff]
          %v495 = vld [vmem:[#allocation7 + $0x2c0] sm:$0xff]
          %v496 = vld [vmem:[#allocation7 + $0x2c8] sm:$0xff]
          %v497 = vld [vmem:[#allocation7 + $0x2d0] sm:$0xff]
          %v498 = vld [vmem:[#allocation7 + $0x2d8] sm:$0xff]
          %v499 = vld [vmem:[#allocation7 + $0x2e0] sm:$0xff]
          %v500 = vld [vmem:[#allocation7 + $0x2e8] sm:$0xff]
          %v501 = vld [vmem:[#allocation7 + $0x2f0] sm:$0xff]
          %v502 = vld [vmem:[#allocation7 + $0x2f8] sm:$0xff]
          %v599 = vunpack.c.l.b16 %v407
          %v600 = vunpack.c.h.b16 %v407
          %v601 = vunpack.c.l.b16 %v408
          %v602 = vunpack.c.h.b16 %v408
          %v603 = vunpack.c.l.b16 %v409
          %v604 = vunpack.c.h.b16 %v409
          %v605 = vunpack.c.l.b16 %v410
          %v606 = vunpack.c.h.b16 %v410
          %v607 = vunpack.c.l.b16 %v411
          %v608 = vunpack.c.h.b16 %v411
          %v609 = vunpack.c.l.b16 %v412
          %v610 = vunpack.c.h.b16 %v412
          %v611 = vunpack.c.l.b16 %v413
          %v612 = vunpack.c.h.b16 %v413
          %v613 = vunpack.c.l.b16 %v414
          %v614 = vunpack.c.h.b16 %v414
          %v615 = vunpack.c.l.b16 %v415
          %v616 = vunpack.c.h.b16 %v415
          %v617 = vunpack.c.l.b16 %v416
          %v618 = vunpack.c.h.b16 %v416
          %v619 = vunpack.c.l.b16 %v417
          %v620 = vunpack.c.h.b16 %v417
          %v621 = vunpack.c.l.b16 %v418
          %v622 = vunpack.c.h.b16 %v418
          %v623 = vunpack.c.l.b16 %v419
          %v624 = vunpack.c.h.b16 %v419
          %v625 = vunpack.c.l.b16 %v420
          %v626 = vunpack.c.h.b16 %v420
          %v627 = vunpack.c.l.b16 %v421
          %v628 = vunpack.c.h.b16 %v421
          %v629 = vunpack.c.l.b16 %v422
          %v630 = vunpack.c.h.b16 %v422
          %v631 = vunpack.c.l.b16 %v423
          %v632 = vunpack.c.h.b16 %v423
          %v633 = vunpack.c.l.b16 %v424
          %v634 = vunpack.c.h.b16 %v424
          %v635 = vunpack.c.l.b16 %v425
          %v636 = vunpack.c.h.b16 %v425
          %v637 = vunpack.c.l.b16 %v426
          %v638 = vunpack.c.h.b16 %v426
          %v639 = vunpack.c.l.b16 %v427
          %v640 = vunpack.c.h.b16 %v427
          %v641 = vunpack.c.l.b16 %v428
          %v642 = vunpack.c.h.b16 %v428
          %v643 = vunpack.c.l.b16 %v429
          %v644 = vunpack.c.h.b16 %v429
          %v645 = vunpack.c.l.b16 %v430
          %v646 = vunpack.c.h.b16 %v430
          %v647 = vunpack.c.l.b16 %v431
          %v648 = vunpack.c.h.b16 %v431
          %v649 = vunpack.c.l.b16 %v432
          %v650 = vunpack.c.h.b16 %v432
          %v651 = vunpack.c.l.b16 %v433
          %v652 = vunpack.c.h.b16 %v433
          %v653 = vunpack.c.l.b16 %v434
          %v654 = vunpack.c.h.b16 %v434
          %v655 = vunpack.c.l.b16 %v435
          %v656 = vunpack.c.h.b16 %v435
          %v657 = vunpack.c.l.b16 %v436
          %v658 = vunpack.c.h.b16 %v436
          %v659 = vunpack.c.l.b16 %v437
          %v660 = vunpack.c.h.b16 %v437
          %v661 = vunpack.c.l.b16 %v438
          %v662 = vunpack.c.h.b16 %v438
          %v663 = vunpack.c.l.b16 %v439
          %v664 = vunpack.c.h.b16 %v439
          %v665 = vunpack.c.l.b16 %v440
          %v666 = vunpack.c.h.b16 %v440
          %v667 = vunpack.c.l.b16 %v441
          %v668 = vunpack.c.h.b16 %v441
          %v669 = vunpack.c.l.b16 %v442
          %v670 = vunpack.c.h.b16 %v442
          %v671 = vunpack.c.l.b16 %v443
          %v672 = vunpack.c.h.b16 %v443
          %v673 = vunpack.c.l.b16 %v444
          %v674 = vunpack.c.h.b16 %v444
          %v675 = vunpack.c.l.b16 %v445
          %v676 = vunpack.c.h.b16 %v445
          %v677 = vunpack.c.l.b16 %v446
          %v678 = vunpack.c.h.b16 %v446
          %v679 = vunpack.c.l.b16 %v447
          %v680 = vunpack.c.h.b16 %v447
          %v681 = vunpack.c.l.b16 %v448
          %v682 = vunpack.c.h.b16 %v448
          %v683 = vunpack.c.l.b16 %v449
          %v684 = vunpack.c.h.b16 %v449
          %v685 = vunpack.c.l.b16 %v450
          %v686 = vunpack.c.h.b16 %v450
          %v687 = vunpack.c.l.b16 %v451
          %v688 = vunpack.c.h.b16 %v451
          %v689 = vunpack.c.l.b16 %v452
          %v690 = vunpack.c.h.b16 %v452
          %v691 = vunpack.c.l.b16 %v453
          %v692 = vunpack.c.h.b16 %v453
          %v693 = vunpack.c.l.b16 %v454
          %v694 = vunpack.c.h.b16 %v454
          %v695 = vunpack.c.l.b16 %v455
          %v696 = vunpack.c.h.b16 %v455
          %v697 = vunpack.c.l.b16 %v456
          %v698 = vunpack.c.h.b16 %v456
          %v699 = vunpack.c.l.b16 %v457
          %v700 = vunpack.c.h.b16 %v457
          %v701 = vunpack.c.l.b16 %v458
          %v702 = vunpack.c.h.b16 %v458
          %v703 = vunpack.c.l.b16 %v459
          %v704 = vunpack.c.h.b16 %v459
          %v705 = vunpack.c.l.b16 %v460
          %v706 = vunpack.c.h.b16 %v460
          %v707 = vunpack.c.l.b16 %v461
          %v708 = vunpack.c.h.b16 %v461
          %v709 = vunpack.c.l.b16 %v462
          %v710 = vunpack.c.h.b16 %v462
          %v711 = vunpack.c.l.b16 %v463
          %v712 = vunpack.c.h.b16 %v463
          %v713 = vunpack.c.l.b16 %v464
          %v714 = vunpack.c.h.b16 %v464
          %v715 = vunpack.c.l.b16 %v465
          %v716 = vunpack.c.h.b16 %v465
          %v717 = vunpack.c.l.b16 %v466
          %v718 = vunpack.c.h.b16 %v466
          %v719 = vunpack.c.l.b16 %v467
          %v720 = vunpack.c.h.b16 %v467
          %v721 = vunpack.c.l.b16 %v468
          %v722 = vunpack.c.h.b16 %v468
          %v723 = vunpack.c.l.b16 %v469
          %v724 = vunpack.c.h.b16 %v469
          %v725 = vunpack.c.l.b16 %v470
          %v726 = vunpack.c.h.b16 %v470
          %v727 = vunpack.c.l.b16 %v471
          %v728 = vunpack.c.h.b16 %v471
          %v729 = vunpack.c.l.b16 %v472
          %v730 = vunpack.c.h.b16 %v472
          %v731 = vunpack.c.l.b16 %v473
          %v732 = vunpack.c.h.b16 %v473
          %v733 = vunpack.c.l.b16 %v474
          %v734 = vunpack.c.h.b16 %v474
          %v735 = vunpack.c.l.b16 %v475
          %v736 = vunpack.c.h.b16 %v475
          %v737 = vunpack.c.l.b16 %v476
          %v738 = vunpack.c.h.b16 %v476
          %v739 = vunpack.c.l.b16 %v477
          %v740 = vunpack.c.h.b16 %v477
          %v741 = vunpack.c.l.b16 %v478
          %v742 = vunpack.c.h.b16 %v478
          %v743 = vunpack.c.l.b16 %v479
          %v744 = vunpack.c.h.b16 %v479
          %v745 = vunpack.c.l.b16 %v480
          %v746 = vunpack.c.h.b16 %v480
          %v747 = vunpack.c.l.b16 %v481
          %v748 = vunpack.c.h.b16 %v481
          %v749 = vunpack.c.l.b16 %v482
          %v750 = vunpack.c.h.b16 %v482
          %v751 = vunpack.c.l.b16 %v483
          %v752 = vunpack.c.h.b16 %v483
          %v753 = vunpack.c.l.b16 %v484
          %v754 = vunpack.c.h.b16 %v484
          %v755 = vunpack.c.l.b16 %v485
          %v756 = vunpack.c.h.b16 %v485
          %v757 = vunpack.c.l.b16 %v486
          %v758 = vunpack.c.h.b16 %v486
          %v759 = vunpack.c.l.b16 %v487
          %v760 = vunpack.c.h.b16 %v487
          %v761 = vunpack.c.l.b16 %v488
          %v762 = vunpack.c.h.b16 %v488
          %v763 = vunpack.c.l.b16 %v489
          %v764 = vunpack.c.h.b16 %v489
          %v765 = vunpack.c.l.b16 %v490
          %v766 = vunpack.c.h.b16 %v490
          %v767 = vunpack.c.l.b16 %v491
          %v768 = vunpack.c.h.b16 %v491
          %v769 = vunpack.c.l.b16 %v492
          %v770 = vunpack.c.h.b16 %v492
          %v771 = vunpack.c.l.b16 %v493
          %v772 = vunpack.c.h.b16 %v493
          %v773 = vunpack.c.l.b16 %v494
          %v774 = vunpack.c.h.b16 %v494
          %v775 = vunpack.c.l.b16 %v495
          %v776 = vunpack.c.h.b16 %v495
          %v777 = vunpack.c.l.b16 %v496
          %v778 = vunpack.c.h.b16 %v496
          %v779 = vunpack.c.l.b16 %v497
          %v780 = vunpack.c.h.b16 %v497
          %v781 = vunpack.c.l.b16 %v498
          %v782 = vunpack.c.h.b16 %v498
          %v783 = vunpack.c.l.b16 %v499
          %v784 = vunpack.c.h.b16 %v499
          %v785 = vunpack.c.l.b16 %v500
          %v786 = vunpack.c.h.b16 %v500
          %v787 = vunpack.c.l.b16 %v501
          %v788 = vunpack.c.h.b16 %v501
          %v789 = vunpack.c.l.b16 %v502
          %v790 = vunpack.c.h.b16 %v502
          %v791 = vpack.c.b16 %v605, %v599
          %v792 = vpack.c.b16 %v606, %v600
          %v793 = vpack.c.b16 %v607, %v601
          %v794 = vpack.c.b16 %v608, %v602
          %v795 = vpack.c.b16 %v609, %v603
          %v796 = vpack.c.b16 %v610, %v604
          %v797 = vpack.c.b16 %v617, %v611
          %v798 = vpack.c.b16 %v618, %v612
          %v799 = vpack.c.b16 %v619, %v613
          %v800 = vpack.c.b16 %v620, %v614
          %v801 = vpack.c.b16 %v621, %v615
          %v802 = vpack.c.b16 %v622, %v616
          %v803 = vpack.c.b16 %v629, %v623
          %v804 = vpack.c.b16 %v630, %v624
          %v805 = vpack.c.b16 %v631, %v625
          %v806 = vpack.c.b16 %v632, %v626
          %v807 = vpack.c.b16 %v633, %v627
          %v808 = vpack.c.b16 %v634, %v628
          %v809 = vpack.c.b16 %v641, %v635
          %v810 = vpack.c.b16 %v642, %v636
          %v811 = vpack.c.b16 %v643, %v637
          %v812 = vpack.c.b16 %v644, %v638
          %v813 = vpack.c.b16 %v645, %v639
          %v814 = vpack.c.b16 %v646, %v640
          %v815 = vpack.c.b16 %v653, %v647
          %v816 = vpack.c.b16 %v654, %v648
          %v817 = vpack.c.b16 %v655, %v649
          %v818 = vpack.c.b16 %v656, %v650
          %v819 = vpack.c.b16 %v657, %v651
          %v820 = vpack.c.b16 %v658, %v652
          %v821 = vpack.c.b16 %v665, %v659
          %v822 = vpack.c.b16 %v666, %v660
          %v823 = vpack.c.b16 %v667, %v661
          %v824 = vpack.c.b16 %v668, %v662
          %v825 = vpack.c.b16 %v669, %v663
          %v826 = vpack.c.b16 %v670, %v664
          %v827 = vpack.c.b16 %v677, %v671
          %v828 = vpack.c.b16 %v678, %v672
          %v829 = vpack.c.b16 %v679, %v673
          %v830 = vpack.c.b16 %v680, %v674
          %v831 = vpack.c.b16 %v681, %v675
          %v832 = vpack.c.b16 %v682, %v676
          %v833 = vpack.c.b16 %v689, %v683
          %v834 = vpack.c.b16 %v690, %v684
          %v835 = vpack.c.b16 %v691, %v685
          %v836 = vpack.c.b16 %v692, %v686
          %v837 = vpack.c.b16 %v693, %v687
          %v838 = vpack.c.b16 %v694, %v688
          %v839 = vpack.c.b16 %v701, %v695
          %v840 = vpack.c.b16 %v702, %v696
          %v841 = vpack.c.b16 %v703, %v697
          %v842 = vpack.c.b16 %v704, %v698
          %v843 = vpack.c.b16 %v705, %v699
          %v844 = vpack.c.b16 %v706, %v700
          %v845 = vpack.c.b16 %v713, %v707
          %v846 = vpack.c.b16 %v714, %v708
          %v847 = vpack.c.b16 %v715, %v709
          %v848 = vpack.c.b16 %v716, %v710
          %v849 = vpack.c.b16 %v717, %v711
          %v850 = vpack.c.b16 %v718, %v712
          %v851 = vpack.c.b16 %v725, %v719
          %v852 = vpack.c.b16 %v726, %v720
          %v853 = vpack.c.b16 %v727, %v721
          %v854 = vpack.c.b16 %v728, %v722
          %v855 = vpack.c.b16 %v729, %v723
          %v856 = vpack.c.b16 %v730, %v724
          %v857 = vpack.c.b16 %v737, %v731
          %v858 = vpack.c.b16 %v738, %v732
          %v859 = vpack.c.b16 %v739, %v733
          %v860 = vpack.c.b16 %v740, %v734
          %v861 = vpack.c.b16 %v741, %v735
          %v862 = vpack.c.b16 %v742, %v736
          %v863 = vpack.c.b16 %v749, %v743
          %v864 = vpack.c.b16 %v750, %v744
          %v865 = vpack.c.b16 %v751, %v745
          %v866 = vpack.c.b16 %v752, %v746
          %v867 = vpack.c.b16 %v753, %v747
          %v868 = vpack.c.b16 %v754, %v748
          %v869 = vpack.c.b16 %v761, %v755
          %v870 = vpack.c.b16 %v762, %v756
          %v871 = vpack.c.b16 %v763, %v757
          %v872 = vpack.c.b16 %v764, %v758
          %v873 = vpack.c.b16 %v765, %v759
          %v874 = vpack.c.b16 %v766, %v760
          %v875 = vpack.c.b16 %v773, %v767
          %v876 = vpack.c.b16 %v774, %v768
          %v877 = vpack.c.b16 %v775, %v769
          %v878 = vpack.c.b16 %v776, %v770
          %v879 = vpack.c.b16 %v777, %v771
          %v880 = vpack.c.b16 %v778, %v772
          %v881 = vpack.c.b16 %v785, %v779
          %v882 = vpack.c.b16 %v786, %v780
          %v883 = vpack.c.b16 %v787, %v781
          %v884 = vpack.c.b16 %v788, %v782
          %v885 = vpack.c.b16 %v789, %v783
          %v886 = vpack.c.b16 %v790, %v784
          %983 = vmatpush.bf16.msra.mxu0 %v833
          %984 = vmatpush.bf16.msra.mxu0 %v827
          %985 = vmatpush.bf16.msra.mxu0 %v821
          %986 = vmatpush.bf16.msra.mxu0 %v815
          %987 = vmatpush.bf16.msra.mxu0 %v809
          %988 = vmatpush.bf16.msra.mxu0 %v803
          %989 = vmatpush.bf16.msra.mxu0 %v797
          %990 = vmatpush.bf16.msra.mxu0 %v791
          %991 = vmatmul.bf16.gmra.mxu0 %v375
          %v992 = vpop.f32.mrf.mxu0
          %v993 = vadd.f32 0.0, %v992
          %v994 = vpop.f32.mrf.mxu0
          %v995 = vadd.f32 0.0, %v994
          %996 = vmatmul.bf16.gmra.mxu0 %v377
          %v997 = vpop.f32.mrf.mxu0
          %v998 = vadd.f32 0.0, %v997
          %v999 = vpop.f32.mrf.mxu0
          %v1000 = vadd.f32 0.0, %v999
          %1001 = vmatmul.bf16.gmra.mxu0 %v379
          %v1002 = vpop.f32.mrf.mxu0
          %v1003 = vadd.f32 0.0, %v1002
          %v1004 = vpop.f32.mrf.mxu0
          %v1005 = vadd.f32 0.0, %v1004
          %1006 = vmatmul.bf16.gmra.mxu0 %v381
          %v1007 = vpop.f32.mrf.mxu0
          %v1008 = vadd.f32 0.0, %v1007
          %v1009 = vpop.f32.mrf.mxu0
          %v1010 = vadd.f32 0.0, %v1009
          %1011 = vmatmul.bf16.gmra.mxu0 %v383
          %v1012 = vpop.f32.mrf.mxu0
          %v1013 = vadd.f32 0.0, %v1012
          %v1014 = vpop.f32.mrf.mxu0
          %v1015 = vadd.f32 0.0, %v1014
          %1016 = vmatmul.bf16.gmra.mxu0 %v385
          %v1017 = vpop.f32.mrf.mxu0
          %v1018 = vadd.f32 0.0, %v1017
          %v1019 = vpop.f32.mrf.mxu0
          %v1020 = vadd.f32 0.0, %v1019
          %1021 = vmatmul.bf16.gmra.mxu0 %v387
          %v1022 = vpop.f32.mrf.mxu0
          %v1023 = vadd.f32 0.0, %v1022
          %v1024 = vpop.f32.mrf.mxu0
          %v1025 = vadd.f32 0.0, %v1024
          %1026 = vmatmul.bf16.gmra.mxu0 %v389
          %v1027 = vpop.f32.mrf.mxu0
          %v1028 = vadd.f32 0.0, %v1027
          %v1029 = vpop.f32.mrf.mxu0
          %v1030 = vadd.f32 0.0, %v1029
          %1031 = vmatmul.bf16.gmra.mxu0 %v391
          %v1032 = vpop.f32.mrf.mxu0
          %v1033 = vadd.f32 0.0, %v1032
          %v1034 = vpop.f32.mrf.mxu0
          %v1035 = vadd.f32 0.0, %v1034
          %1036 = vmatmul.bf16.gmra.mxu0 %v393
          %v1037 = vpop.f32.mrf.mxu0
          %v1038 = vadd.f32 0.0, %v1037
          %v1039 = vpop.f32.mrf.mxu0
          %v1040 = vadd.f32 0.0, %v1039
          %1041 = vmatmul.bf16.gmra.mxu0 %v395
          %v1042 = vpop.f32.mrf.mxu0
          %v1043 = vadd.f32 0.0, %v1042
          %v1044 = vpop.f32.mrf.mxu0
          %v1045 = vadd.f32 0.0, %v1044
          %1046 = vmatmul.bf16.gmra.mxu0 %v397
          %v1047 = vpop.f32.mrf.mxu0
          %v1048 = vadd.f32 0.0, %v1047
          %v1049 = vpop.f32.mrf.mxu0
          %v1050 = vadd.f32 0.0, %v1049
          %1051 = vmatmul.bf16.gmra.mxu0 %v399
          %v1052 = vpop.f32.mrf.mxu0
          %v1053 = vadd.f32 0.0, %v1052
          %v1054 = vpop.f32.mrf.mxu0
          %v1055 = vadd.f32 0.0, %v1054
          %1056 = vmatmul.bf16.gmra.mxu0 %v401
          %v1057 = vpop.f32.mrf.mxu0
          %v1058 = vadd.f32 0.0, %v1057
          %v1059 = vpop.f32.mrf.mxu0
          %v1060 = vadd.f32 0.0, %v1059
          %1061 = vmatmul.bf16.gmra.mxu0 %v403
          %v1062 = vpop.f32.mrf.mxu0
          %v1063 = vadd.f32 0.0, %v1062
          %v1064 = vpop.f32.mrf.mxu0
          %v1065 = vadd.f32 0.0, %v1064
          %1066 = vmatmul.bf16.gmra.mxu0 %v405
          %v1067 = vpop.f32.mrf.mxu0
          %v1068 = vadd.f32 0.0, %v1067
          %v1069 = vpop.f32.mrf.mxu0
          %v1070 = vadd.f32 0.0, %v1069
          %1071 = vdwg.mxu0
          %1072 = vmatpush.bf16.msra.mxu0 %v881
          %1073 = vmatpush.bf16.msra.mxu0 %v875
          %1074 = vmatpush.bf16.msra.mxu0 %v869
          %1075 = vmatpush.bf16.msra.mxu0 %v863
          %1076 = vmatpush.bf16.msra.mxu0 %v857
          %1077 = vmatpush.bf16.msra.mxu0 %v851
          %1078 = vmatpush.bf16.msra.mxu0 %v845
          %1079 = vmatpush.bf16.msra.mxu0 %v839
          %1080 = vmatmul.bf16.gmra.mxu0 %v376
          %v1081 = vpop.f32.mrf.mxu0
          %v1082 = vadd.f32 %v993, %v1081
          %v1083 = vpop.f32.mrf.mxu0
          %v1084 = vadd.f32 %v995, %v1083
          %1085 = vmatmul.bf16.gmra.mxu0 %v378
          %v1086 = vpop.f32.mrf.mxu0
          %v1087 = vadd.f32 %v998, %v1086
          %v1088 = vpop.f32.mrf.mxu0
          %v1089 = vadd.f32 %v1000, %v1088
          %1090 = vmatmul.bf16.gmra.mxu0 %v380
          %v1091 = vpop.f32.mrf.mxu0
          %v1092 = vadd.f32 %v1003, %v1091
          %v1093 = vpop.f32.mrf.mxu0
          %v1094 = vadd.f32 %v1005, %v1093
          %1095 = vmatmul.bf16.gmra.mxu0 %v382
          %v1096 = vpop.f32.mrf.mxu0
          %v1097 = vadd.f32 %v1008, %v1096
          %v1098 = vpop.f32.mrf.mxu0
          %v1099 = vadd.f32 %v1010, %v1098
          %1100 = vmatmul.bf16.gmra.mxu0 %v384
          %v1101 = vpop.f32.mrf.mxu0
          %v1102 = vadd.f32 %v1013, %v1101
          %v1103 = vpop.f32.mrf.mxu0
          %v1104 = vadd.f32 %v1015, %v1103
          %1105 = vmatmul.bf16.gmra.mxu0 %v386
          %v1106 = vpop.f32.mrf.mxu0
          %v1107 = vadd.f32 %v1018, %v1106
          %v1108 = vpop.f32.mrf.mxu0
          %v1109 = vadd.f32 %v1020, %v1108
          %1110 = vmatmul.bf16.gmra.mxu0 %v388
          %v1111 = vpop.f32.mrf.mxu0
          %v1112 = vadd.f32 %v1023, %v1111
          %v1113 = vpop.f32.mrf.mxu0
          %v1114 = vadd.f32 %v1025, %v1113
          %1115 = vmatmul.bf16.gmra.mxu0 %v390
          %v1116 = vpop.f32.mrf.mxu0
          %v1117 = vadd.f32 %v1028, %v1116
          %v1118 = vpop.f32.mrf.mxu0
          %v1119 = vadd.f32 %v1030, %v1118
          %1120 = vmatmul.bf16.gmra.mxu0 %v392
          %v1121 = vpop.f32.mrf.mxu0
          %v1122 = vadd.f32 %v1033, %v1121
          %v1123 = vpop.f32.mrf.mxu0
          %v1124 = vadd.f32 %v1035, %v1123
          %1125 = vmatmul.bf16.gmra.mxu0 %v394
          %v1126 = vpop.f32.mrf.mxu0
          %v1127 = vadd.f32 %v1038, %v1126
          %v1128 = vpop.f32.mrf.mxu0
          %v1129 = vadd.f32 %v1040, %v1128
          %1130 = vmatmul.bf16.gmra.mxu0 %v396
          %v1131 = vpop.f32.mrf.mxu0
          %v1132 = vadd.f32 %v1043, %v1131
          %v1133 = vpop.f32.mrf.mxu0
          %v1134 = vadd.f32 %v1045, %v1133
          %1135 = vmatmul.bf16.gmra.mxu0 %v398
          %v1136 = vpop.f32.mrf.mxu0
          %v1137 = vadd.f32 %v1048, %v1136
          %v1138 = vpop.f32.mrf.mxu0
          %v1139 = vadd.f32 %v1050, %v1138
          %1140 = vmatmul.bf16.gmra.mxu0 %v400
          %v1141 = vpop.f32.mrf.mxu0
          %v1142 = vadd.f32 %v1053, %v1141
          %v1143 = vpop.f32.mrf.mxu0
          %v1144 = vadd.f32 %v1055, %v1143
          %1145 = vmatmul.bf16.gmra.mxu0 %v402
          %v1146 = vpop.f32.mrf.mxu0
          %v1147 = vadd.f32 %v1058, %v1146
          %v1148 = vpop.f32.mrf.mxu0
          %v1149 = vadd.f32 %v1060, %v1148
          %1150 = vmatmul.bf16.gmra.mxu0 %v404
          %v1151 = vpop.f32.mrf.mxu0
          %v1152 = vadd.f32 %v1063, %v1151
          %v1153 = vpop.f32.mrf.mxu0
          %v1154 = vadd.f32 %v1065, %v1153
          %1155 = vmatmul.bf16.gmra.mxu0 %v406
          %v1156 = vpop.f32.mrf.mxu0
          %v1157 = vadd.f32 %v1068, %v1156
          %v1158 = vpop.f32.mrf.mxu0
          %v1159 = vadd.f32 %v1070, %v1158
          %1160 = vdwg.mxu0
          %1161 = vmatpush.bf16.msra.mxu0 %v834
          %1162 = vmatpush.bf16.msra.mxu0 %v828
          %1163 = vmatpush.bf16.msra.mxu0 %v822
          %1164 = vmatpush.bf16.msra.mxu0 %v816
          %1165 = vmatpush.bf16.msra.mxu0 %v810
          %1166 = vmatpush.bf16.msra.mxu0 %v804
          %1167 = vmatpush.bf16.msra.mxu0 %v798
          %1168 = vmatpush.bf16.msra.mxu0 %v792
          %1169 = vmatmul.bf16.gmra.mxu0 %v375
          %v1170 = vpop.f32.mrf.mxu0
          %v1171 = vadd.f32 0.0, %v1170
          %v1172 = vpop.f32.mrf.mxu0
          %v1173 = vadd.f32 0.0, %v1172
          %1174 = vmatmul.bf16.gmra.mxu0 %v377
          %v1175 = vpop.f32.mrf.mxu0
          %v1176 = vadd.f32 0.0, %v1175
          %v1177 = vpop.f32.mrf.mxu0
          %v1178 = vadd.f32 0.0, %v1177
          %1179 = vmatmul.bf16.gmra.mxu0 %v379
          %v1180 = vpop.f32.mrf.mxu0
          %v1181 = vadd.f32 0.0, %v1180
          %v1182 = vpop.f32.mrf.mxu0
          %v1183 = vadd.f32 0.0, %v1182
          %1184 = vmatmul.bf16.gmra.mxu0 %v381
          %v1185 = vpop.f32.mrf.mxu0
          %v1186 = vadd.f32 0.0, %v1185
          %v1187 = vpop.f32.mrf.mxu0
          %v1188 = vadd.f32 0.0, %v1187
          %1189 = vmatmul.bf16.gmra.mxu0 %v383
          %v1190 = vpop.f32.mrf.mxu0
          %v1191 = vadd.f32 0.0, %v1190
          %v1192 = vpop.f32.mrf.mxu0
          %v1193 = vadd.f32 0.0, %v1192
          %1194 = vmatmul.bf16.gmra.mxu0 %v385
          %v1195 = vpop.f32.mrf.mxu0
          %v1196 = vadd.f32 0.0, %v1195
          %v1197 = vpop.f32.mrf.mxu0
          %v1198 = vadd.f32 0.0, %v1197
          %1199 = vmatmul.bf16.gmra.mxu0 %v387
          %v1200 = vpop.f32.mrf.mxu0
          %v1201 = vadd.f32 0.0, %v1200
          %v1202 = vpop.f32.mrf.mxu0
          %v1203 = vadd.f32 0.0, %v1202
          %1204 = vmatmul.bf16.gmra.mxu0 %v389
          %v1205 = vpop.f32.mrf.mxu0
          %v1206 = vadd.f32 0.0, %v1205
          %v1207 = vpop.f32.mrf.mxu0
          %v1208 = vadd.f32 0.0, %v1207
          %1209 = vmatmul.bf16.gmra.mxu0 %v391
          %v1210 = vpop.f32.mrf.mxu0
          %v1211 = vadd.f32 0.0, %v1210
          %v1212 = vpop.f32.mrf.mxu0
          %v1213 = vadd.f32 0.0, %v1212
          %1214 = vmatmul.bf16.gmra.mxu0 %v393
          %v1215 = vpop.f32.mrf.mxu0
          %v1216 = vadd.f32 0.0, %v1215
          %v1217 = vpop.f32.mrf.mxu0
          %v1218 = vadd.f32 0.0, %v1217
          %1219 = vmatmul.bf16.gmra.mxu0 %v395
          %v1220 = vpop.f32.mrf.mxu0
          %v1221 = vadd.f32 0.0, %v1220
          %v1222 = vpop.f32.mrf.mxu0
          %v1223 = vadd.f32 0.0, %v1222
          %1224 = vmatmul.bf16.gmra.mxu0 %v397
          %v1225 = vpop.f32.mrf.mxu0
          %v1226 = vadd.f32 0.0, %v1225
          %v1227 = vpop.f32.mrf.mxu0
          %v1228 = vadd.f32 0.0, %v1227
          %1229 = vmatmul.bf16.gmra.mxu0 %v399
          %v1230 = vpop.f32.mrf.mxu0
          %v1231 = vadd.f32 0.0, %v1230
          %v1232 = vpop.f32.mrf.mxu0
          %v1233 = vadd.f32 0.0, %v1232
          %1234 = vmatmul.bf16.gmra.mxu0 %v401
          %v1235 = vpop.f32.mrf.mxu0
          %v1236 = vadd.f32 0.0, %v1235
          %v1237 = vpop.f32.mrf.mxu0
          %v1238 = vadd.f32 0.0, %v1237
          %1239 = vmatmul.bf16.gmra.mxu0 %v403
          %v1240 = vpop.f32.mrf.mxu0
          %v1241 = vadd.f32 0.0, %v1240
          %v1242 = vpop.f32.mrf.mxu0
          %v1243 = vadd.f32 0.0, %v1242
          %1244 = vmatmul.bf16.gmra.mxu0 %v405
          %v1245 = vpop.f32.mrf.mxu0
          %v1246 = vadd.f32 0.0, %v1245
          %v1247 = vpop.f32.mrf.mxu0
          %v1248 = vadd.f32 0.0, %v1247
          %1249 = vdwg.mxu0
          %1250 = vmatpush.bf16.msra.mxu0 %v882
          %1251 = vmatpush.bf16.msra.mxu0 %v876
          %1252 = vmatpush.bf16.msra.mxu0 %v870
          %1253 = vmatpush.bf16.msra.mxu0 %v864
          %1254 = vmatpush.bf16.msra.mxu0 %v858
          %1255 = vmatpush.bf16.msra.mxu0 %v852
          %1256 = vmatpush.bf16.msra.mxu0 %v846
          %1257 = vmatpush.bf16.msra.mxu0 %v840
          %1258 = vmatmul.bf16.gmra.mxu0 %v376
          %v1259 = vpop.f32.mrf.mxu0
          %v1260 = vadd.f32 %v1171, %v1259
          %v1261 = vpop.f32.mrf.mxu0
          %v1262 = vadd.f32 %v1173, %v1261
          %1263 = vmatmul.bf16.gmra.mxu0 %v378
          %v1264 = vpop.f32.mrf.mxu0
          %v1265 = vadd.f32 %v1176, %v1264
          %v1266 = vpop.f32.mrf.mxu0
          %v1267 = vadd.f32 %v1178, %v1266
          %1268 = vmatmul.bf16.gmra.mxu0 %v380
          %v1269 = vpop.f32.mrf.mxu0
          %v1270 = vadd.f32 %v1181, %v1269
          %v1271 = vpop.f32.mrf.mxu0
          %v1272 = vadd.f32 %v1183, %v1271
          %1273 = vmatmul.bf16.gmra.mxu0 %v382
          %v1274 = vpop.f32.mrf.mxu0
          %v1275 = vadd.f32 %v1186, %v1274
          %v1276 = vpop.f32.mrf.mxu0
          %v1277 = vadd.f32 %v1188, %v1276
          %1278 = vmatmul.bf16.gmra.mxu0 %v384
          %v1279 = vpop.f32.mrf.mxu0
          %v1280 = vadd.f32 %v1191, %v1279
          %v1281 = vpop.f32.mrf.mxu0
          %v1282 = vadd.f32 %v1193, %v1281
          %1283 = vmatmul.bf16.gmra.mxu0 %v386
          %v1284 = vpop.f32.mrf.mxu0
          %v1285 = vadd.f32 %v1196, %v1284
          %v1286 = vpop.f32.mrf.mxu0
          %v1287 = vadd.f32 %v1198, %v1286
          %1288 = vmatmul.bf16.gmra.mxu0 %v388
          %v1289 = vpop.f32.mrf.mxu0
          %v1290 = vadd.f32 %v1201, %v1289
          %v1291 = vpop.f32.mrf.mxu0
          %v1292 = vadd.f32 %v1203, %v1291
          %1293 = vmatmul.bf16.gmra.mxu0 %v390
          %v1294 = vpop.f32.mrf.mxu0
          %v1295 = vadd.f32 %v1206, %v1294
          %v1296 = vpop.f32.mrf.mxu0
          %v1297 = vadd.f32 %v1208, %v1296
          %1298 = vmatmul.bf16.gmra.mxu0 %v392
          %v1299 = vpop.f32.mrf.mxu0
          %v1300 = vadd.f32 %v1211, %v1299
          %v1301 = vpop.f32.mrf.mxu0
          %v1302 = vadd.f32 %v1213, %v1301
          %1303 = vmatmul.bf16.gmra.mxu0 %v394
          %v1304 = vpop.f32.mrf.mxu0
          %v1305 = vadd.f32 %v1216, %v1304
          %v1306 = vpop.f32.mrf.mxu0
          %v1307 = vadd.f32 %v1218, %v1306
          %1308 = vmatmul.bf16.gmra.mxu0 %v396
          %v1309 = vpop.f32.mrf.mxu0
          %v1310 = vadd.f32 %v1221, %v1309
          %v1311 = vpop.f32.mrf.mxu0
          %v1312 = vadd.f32 %v1223, %v1311
          %1313 = vmatmul.bf16.gmra.mxu0 %v398
          %v1314 = vpop.f32.mrf.mxu0
          %v1315 = vadd.f32 %v1226, %v1314
          %v1316 = vpop.f32.mrf.mxu0
          %v1317 = vadd.f32 %v1228, %v1316
          %1318 = vmatmul.bf16.gmra.mxu0 %v400
          %v1319 = vpop.f32.mrf.mxu0
          %v1320 = vadd.f32 %v1231, %v1319
          %v1321 = vpop.f32.mrf.mxu0
          %v1322 = vadd.f32 %v1233, %v1321
          %1323 = vmatmul.bf16.gmra.mxu0 %v402
          %v1324 = vpop.f32.mrf.mxu0
          %v1325 = vadd.f32 %v1236, %v1324
          %v1326 = vpop.f32.mrf.mxu0
          %v1327 = vadd.f32 %v1238, %v1326
          %1328 = vmatmul.bf16.gmra.mxu0 %v404
          %v1329 = vpop.f32.mrf.mxu0
          %v1330 = vadd.f32 %v1241, %v1329
          %v1331 = vpop.f32.mrf.mxu0
          %v1332 = vadd.f32 %v1243, %v1331
          %1333 = vmatmul.bf16.gmra.mxu0 %v406
          %v1334 = vpop.f32.mrf.mxu0
          %v1335 = vadd.f32 %v1246, %v1334
          %v1336 = vpop.f32.mrf.mxu0
          %v1337 = vadd.f32 %v1248, %v1336
          %1338 = vdwg.mxu0
          %1339 = vmatpush.bf16.msra.mxu0 %v835
          %1340 = vmatpush.bf16.msra.mxu0 %v829
          %1341 = vmatpush.bf16.msra.mxu0 %v823
          %1342 = vmatpush.bf16.msra.mxu0 %v817
          %1343 = vmatpush.bf16.msra.mxu0 %v811
          %1344 = vmatpush.bf16.msra.mxu0 %v805
          %1345 = vmatpush.bf16.msra.mxu0 %v799
          %1346 = vmatpush.bf16.msra.mxu0 %v793
          %1347 = vmatmul.bf16.gmra.mxu0 %v375
          %v1348 = vpop.f32.mrf.mxu0
          %v1349 = vadd.f32 0.0, %v1348
          %v1350 = vpop.f32.mrf.mxu0
          %v1351 = vadd.f32 0.0, %v1350
          %1352 = vmatmul.bf16.gmra.mxu0 %v377
          %v1353 = vpop.f32.mrf.mxu0
          %v1354 = vadd.f32 0.0, %v1353
          %v1355 = vpop.f32.mrf.mxu0
          %v1356 = vadd.f32 0.0, %v1355
          %1357 = vmatmul.bf16.gmra.mxu0 %v379
          %v1358 = vpop.f32.mrf.mxu0
          %v1359 = vadd.f32 0.0, %v1358
          %v1360 = vpop.f32.mrf.mxu0
          %v1361 = vadd.f32 0.0, %v1360
          %1362 = vmatmul.bf16.gmra.mxu0 %v381
          %v1363 = vpop.f32.mrf.mxu0
          %v1364 = vadd.f32 0.0, %v1363
          %v1365 = vpop.f32.mrf.mxu0
          %v1366 = vadd.f32 0.0, %v1365
          %1367 = vmatmul.bf16.gmra.mxu0 %v383
          %v1368 = vpop.f32.mrf.mxu0
          %v1369 = vadd.f32 0.0, %v1368
          %v1370 = vpop.f32.mrf.mxu0
          %v1371 = vadd.f32 0.0, %v1370
          %1372 = vmatmul.bf16.gmra.mxu0 %v385
          %v1373 = vpop.f32.mrf.mxu0
          %v1374 = vadd.f32 0.0, %v1373
          %v1375 = vpop.f32.mrf.mxu0
          %v1376 = vadd.f32 0.0, %v1375
          %1377 = vmatmul.bf16.gmra.mxu0 %v387
          %v1378 = vpop.f32.mrf.mxu0
          %v1379 = vadd.f32 0.0, %v1378
          %v1380 = vpop.f32.mrf.mxu0
          %v1381 = vadd.f32 0.0, %v1380
          %1382 = vmatmul.bf16.gmra.mxu0 %v389
          %v1383 = vpop.f32.mrf.mxu0
          %v1384 = vadd.f32 0.0, %v1383
          %v1385 = vpop.f32.mrf.mxu0
          %v1386 = vadd.f32 0.0, %v1385
          %1387 = vmatmul.bf16.gmra.mxu0 %v391
          %v1388 = vpop.f32.mrf.mxu0
          %v1389 = vadd.f32 0.0, %v1388
          %v1390 = vpop.f32.mrf.mxu0
          %v1391 = vadd.f32 0.0, %v1390
          %1392 = vmatmul.bf16.gmra.mxu0 %v393
          %v1393 = vpop.f32.mrf.mxu0
          %v1394 = vadd.f32 0.0, %v1393
          %v1395 = vpop.f32.mrf.mxu0
          %v1396 = vadd.f32 0.0, %v1395
          %1397 = vmatmul.bf16.gmra.mxu0 %v395
          %v1398 = vpop.f32.mrf.mxu0
          %v1399 = vadd.f32 0.0, %v1398
          %v1400 = vpop.f32.mrf.mxu0
          %v1401 = vadd.f32 0.0, %v1400
          %1402 = vmatmul.bf16.gmra.mxu0 %v397
          %v1403 = vpop.f32.mrf.mxu0
          %v1404 = vadd.f32 0.0, %v1403
          %v1405 = vpop.f32.mrf.mxu0
          %v1406 = vadd.f32 0.0, %v1405
          %1407 = vmatmul.bf16.gmra.mxu0 %v399
          %v1408 = vpop.f32.mrf.mxu0
          %v1409 = vadd.f32 0.0, %v1408
          %v1410 = vpop.f32.mrf.mxu0
          %v1411 = vadd.f32 0.0, %v1410
          %1412 = vmatmul.bf16.gmra.mxu0 %v401
          %v1413 = vpop.f32.mrf.mxu0
          %v1414 = vadd.f32 0.0, %v1413
          %v1415 = vpop.f32.mrf.mxu0
          %v1416 = vadd.f32 0.0, %v1415
          %1417 = vmatmul.bf16.gmra.mxu0 %v403
          %v1418 = vpop.f32.mrf.mxu0
          %v1419 = vadd.f32 0.0, %v1418
          %v1420 = vpop.f32.mrf.mxu0
          %v1421 = vadd.f32 0.0, %v1420
          %1422 = vmatmul.bf16.gmra.mxu0 %v405
          %v1423 = vpop.f32.mrf.mxu0
          %v1424 = vadd.f32 0.0, %v1423
          %v1425 = vpop.f32.mrf.mxu0
          %v1426 = vadd.f32 0.0, %v1425
          %1427 = vdwg.mxu0
          %1428 = vmatpush.bf16.msra.mxu0 %v883
          %1429 = vmatpush.bf16.msra.mxu0 %v877
          %1430 = vmatpush.bf16.msra.mxu0 %v871
          %1431 = vmatpush.bf16.msra.mxu0 %v865
          %1432 = vmatpush.bf16.msra.mxu0 %v859
          %1433 = vmatpush.bf16.msra.mxu0 %v853
          %1434 = vmatpush.bf16.msra.mxu0 %v847
          %1435 = vmatpush.bf16.msra.mxu0 %v841
          %1436 = vmatmul.bf16.gmra.mxu0 %v376
          %v1437 = vpop.f32.mrf.mxu0
          %v1438 = vadd.f32 %v1349, %v1437
          %v1439 = vpop.f32.mrf.mxu0
          %v1440 = vadd.f32 %v1351, %v1439
          %1441 = vmatmul.bf16.gmra.mxu0 %v378
          %v1442 = vpop.f32.mrf.mxu0
          %v1443 = vadd.f32 %v1354, %v1442
          %v1444 = vpop.f32.mrf.mxu0
          %v1445 = vadd.f32 %v1356, %v1444
          %1446 = vmatmul.bf16.gmra.mxu0 %v380
          %v1447 = vpop.f32.mrf.mxu0
          %v1448 = vadd.f32 %v1359, %v1447
          %v1449 = vpop.f32.mrf.mxu0
          %v1450 = vadd.f32 %v1361, %v1449
          %1451 = vmatmul.bf16.gmra.mxu0 %v382
          %v1452 = vpop.f32.mrf.mxu0
          %v1453 = vadd.f32 %v1364, %v1452
          %v1454 = vpop.f32.mrf.mxu0
          %v1455 = vadd.f32 %v1366, %v1454
          %1456 = vmatmul.bf16.gmra.mxu0 %v384
          %v1457 = vpop.f32.mrf.mxu0
          %v1458 = vadd.f32 %v1369, %v1457
          %v1459 = vpop.f32.mrf.mxu0
          %v1460 = vadd.f32 %v1371, %v1459
          %1461 = vmatmul.bf16.gmra.mxu0 %v386
          %v1462 = vpop.f32.mrf.mxu0
          %v1463 = vadd.f32 %v1374, %v1462
          %v1464 = vpop.f32.mrf.mxu0
          %v1465 = vadd.f32 %v1376, %v1464
          %1466 = vmatmul.bf16.gmra.mxu0 %v388
          %v1467 = vpop.f32.mrf.mxu0
          %v1468 = vadd.f32 %v1379, %v1467
          %v1469 = vpop.f32.mrf.mxu0
          %v1470 = vadd.f32 %v1381, %v1469
          %1471 = vmatmul.bf16.gmra.mxu0 %v390
          %v1472 = vpop.f32.mrf.mxu0
          %v1473 = vadd.f32 %v1384, %v1472
          %v1474 = vpop.f32.mrf.mxu0
          %v1475 = vadd.f32 %v1386, %v1474
          %1476 = vmatmul.bf16.gmra.mxu0 %v392
          %v1477 = vpop.f32.mrf.mxu0
          %v1478 = vadd.f32 %v1389, %v1477
          %v1479 = vpop.f32.mrf.mxu0
          %v1480 = vadd.f32 %v1391, %v1479
          %1481 = vmatmul.bf16.gmra.mxu0 %v394
          %v1482 = vpop.f32.mrf.mxu0
          %v1483 = vadd.f32 %v1394, %v1482
          %v1484 = vpop.f32.mrf.mxu0
          %v1485 = vadd.f32 %v1396, %v1484
          %1486 = vmatmul.bf16.gmra.mxu0 %v396
          %v1487 = vpop.f32.mrf.mxu0
          %v1488 = vadd.f32 %v1399, %v1487
          %v1489 = vpop.f32.mrf.mxu0
          %v1490 = vadd.f32 %v1401, %v1489
          %1491 = vmatmul.bf16.gmra.mxu0 %v398
          %v1492 = vpop.f32.mrf.mxu0
          %v1493 = vadd.f32 %v1404, %v1492
          %v1494 = vpop.f32.mrf.mxu0
          %v1495 = vadd.f32 %v1406, %v1494
          %1496 = vmatmul.bf16.gmra.mxu0 %v400
          %v1497 = vpop.f32.mrf.mxu0
          %v1498 = vadd.f32 %v1409, %v1497
          %v1499 = vpop.f32.mrf.mxu0
          %v1500 = vadd.f32 %v1411, %v1499
          %1501 = vmatmul.bf16.gmra.mxu0 %v402
          %v1502 = vpop.f32.mrf.mxu0
          %v1503 = vadd.f32 %v1414, %v1502
          %v1504 = vpop.f32.mrf.mxu0
          %v1505 = vadd.f32 %v1416, %v1504
          %1506 = vmatmul.bf16.gmra.mxu0 %v404
          %v1507 = vpop.f32.mrf.mxu0
          %v1508 = vadd.f32 %v1419, %v1507
          %v1509 = vpop.f32.mrf.mxu0
          %v1510 = vadd.f32 %v1421, %v1509
          %1511 = vmatmul.bf16.gmra.mxu0 %v406
          %v1512 = vpop.f32.mrf.mxu0
          %v1513 = vadd.f32 %v1424, %v1512
          %v1514 = vpop.f32.mrf.mxu0
          %v1515 = vadd.f32 %v1426, %v1514
          %1516 = vdwg.mxu0
          %1517 = vmatpush.bf16.msra.mxu0 %v836
          %1518 = vmatpush.bf16.msra.mxu0 %v830
          %1519 = vmatpush.bf16.msra.mxu0 %v824
          %1520 = vmatpush.bf16.msra.mxu0 %v818
          %1521 = vmatpush.bf16.msra.mxu0 %v812
          %1522 = vmatpush.bf16.msra.mxu0 %v806
          %1523 = vmatpush.bf16.msra.mxu0 %v800
          %1524 = vmatpush.bf16.msra.mxu0 %v794
          %1525 = vmatmul.bf16.gmra.mxu0 %v375
          %v1526 = vpop.f32.mrf.mxu0
          %v1527 = vadd.f32 0.0, %v1526
          %v1528 = vpop.f32.mrf.mxu0
          %v1529 = vadd.f32 0.0, %v1528
          %1530 = vmatmul.bf16.gmra.mxu0 %v377
          %v1531 = vpop.f32.mrf.mxu0
          %v1532 = vadd.f32 0.0, %v1531
          %v1533 = vpop.f32.mrf.mxu0
          %v1534 = vadd.f32 0.0, %v1533
          %1535 = vmatmul.bf16.gmra.mxu0 %v379
          %v1536 = vpop.f32.mrf.mxu0
          %v1537 = vadd.f32 0.0, %v1536
          %v1538 = vpop.f32.mrf.mxu0
          %v1539 = vadd.f32 0.0, %v1538
          %1540 = vmatmul.bf16.gmra.mxu0 %v381
          %v1541 = vpop.f32.mrf.mxu0
          %v1542 = vadd.f32 0.0, %v1541
          %v1543 = vpop.f32.mrf.mxu0
          %v1544 = vadd.f32 0.0, %v1543
          %1545 = vmatmul.bf16.gmra.mxu0 %v383
          %v1546 = vpop.f32.mrf.mxu0
          %v1547 = vadd.f32 0.0, %v1546
          %v1548 = vpop.f32.mrf.mxu0
          %v1549 = vadd.f32 0.0, %v1548
          %1550 = vmatmul.bf16.gmra.mxu0 %v385
          %v1551 = vpop.f32.mrf.mxu0
          %v1552 = vadd.f32 0.0, %v1551
          %v1553 = vpop.f32.mrf.mxu0
          %v1554 = vadd.f32 0.0, %v1553
          %1555 = vmatmul.bf16.gmra.mxu0 %v387
          %v1556 = vpop.f32.mrf.mxu0
          %v1557 = vadd.f32 0.0, %v1556
          %v1558 = vpop.f32.mrf.mxu0
          %v1559 = vadd.f32 0.0, %v1558
          %1560 = vmatmul.bf16.gmra.mxu0 %v389
          %v1561 = vpop.f32.mrf.mxu0
          %v1562 = vadd.f32 0.0, %v1561
          %v1563 = vpop.f32.mrf.mxu0
          %v1564 = vadd.f32 0.0, %v1563
          %1565 = vmatmul.bf16.gmra.mxu0 %v391
          %v1566 = vpop.f32.mrf.mxu0
          %v1567 = vadd.f32 0.0, %v1566
          %v1568 = vpop.f32.mrf.mxu0
          %v1569 = vadd.f32 0.0, %v1568
          %1570 = vmatmul.bf16.gmra.mxu0 %v393
          %v1571 = vpop.f32.mrf.mxu0
          %v1572 = vadd.f32 0.0, %v1571
          %v1573 = vpop.f32.mrf.mxu0
          %v1574 = vadd.f32 0.0, %v1573
          %1575 = vmatmul.bf16.gmra.mxu0 %v395
          %v1576 = vpop.f32.mrf.mxu0
          %v1577 = vadd.f32 0.0, %v1576
          %v1578 = vpop.f32.mrf.mxu0
          %v1579 = vadd.f32 0.0, %v1578
          %1580 = vmatmul.bf16.gmra.mxu0 %v397
          %v1581 = vpop.f32.mrf.mxu0
          %v1582 = vadd.f32 0.0, %v1581
          %v1583 = vpop.f32.mrf.mxu0
          %v1584 = vadd.f32 0.0, %v1583
          %1585 = vmatmul.bf16.gmra.mxu0 %v399
          %v1586 = vpop.f32.mrf.mxu0
          %v1587 = vadd.f32 0.0, %v1586
          %v1588 = vpop.f32.mrf.mxu0
          %v1589 = vadd.f32 0.0, %v1588
          %1590 = vmatmul.bf16.gmra.mxu0 %v401
          %v1591 = vpop.f32.mrf.mxu0
          %v1592 = vadd.f32 0.0, %v1591
          %v1593 = vpop.f32.mrf.mxu0
          %v1594 = vadd.f32 0.0, %v1593
          %1595 = vmatmul.bf16.gmra.mxu0 %v403
          %v1596 = vpop.f32.mrf.mxu0
          %v1597 = vadd.f32 0.0, %v1596
          %v1598 = vpop.f32.mrf.mxu0
          %v1599 = vadd.f32 0.0, %v1598
          %1600 = vmatmul.bf16.gmra.mxu0 %v405
          %v1601 = vpop.f32.mrf.mxu0
          %v1602 = vadd.f32 0.0, %v1601
          %v1603 = vpop.f32.mrf.mxu0
          %v1604 = vadd.f32 0.0, %v1603
          %1605 = vdwg.mxu0
          %1606 = vmatpush.bf16.msra.mxu0 %v884
          %1607 = vmatpush.bf16.msra.mxu0 %v878
          %1608 = vmatpush.bf16.msra.mxu0 %v872
          %1609 = vmatpush.bf16.msra.mxu0 %v866
          %1610 = vmatpush.bf16.msra.mxu0 %v860
          %1611 = vmatpush.bf16.msra.mxu0 %v854
          %1612 = vmatpush.bf16.msra.mxu0 %v848
          %1613 = vmatpush.bf16.msra.mxu0 %v842
          %1614 = vmatmul.bf16.gmra.mxu0 %v376
          %v1615 = vpop.f32.mrf.mxu0
          %v1616 = vadd.f32 %v1527, %v1615
          %v1617 = vpop.f32.mrf.mxu0
          %v1618 = vadd.f32 %v1529, %v1617
          %1619 = vmatmul.bf16.gmra.mxu0 %v378
          %v1620 = vpop.f32.mrf.mxu0
          %v1621 = vadd.f32 %v1532, %v1620
          %v1622 = vpop.f32.mrf.mxu0
          %v1623 = vadd.f32 %v1534, %v1622
          %1624 = vmatmul.bf16.gmra.mxu0 %v380
          %v1625 = vpop.f32.mrf.mxu0
          %v1626 = vadd.f32 %v1537, %v1625
          %v1627 = vpop.f32.mrf.mxu0
          %v1628 = vadd.f32 %v1539, %v1627
          %1629 = vmatmul.bf16.gmra.mxu0 %v382
          %v1630 = vpop.f32.mrf.mxu0
          %v1631 = vadd.f32 %v1542, %v1630
          %v1632 = vpop.f32.mrf.mxu0
          %v1633 = vadd.f32 %v1544, %v1632
          %1634 = vmatmul.bf16.gmra.mxu0 %v384
          %v1635 = vpop.f32.mrf.mxu0
          %v1636 = vadd.f32 %v1547, %v1635
          %v1637 = vpop.f32.mrf.mxu0
          %v1638 = vadd.f32 %v1549, %v1637
          %1639 = vmatmul.bf16.gmra.mxu0 %v386
          %v1640 = vpop.f32.mrf.mxu0
          %v1641 = vadd.f32 %v1552, %v1640
          %v1642 = vpop.f32.mrf.mxu0
          %v1643 = vadd.f32 %v1554, %v1642
          %1644 = vmatmul.bf16.gmra.mxu0 %v388
          %v1645 = vpop.f32.mrf.mxu0
          %v1646 = vadd.f32 %v1557, %v1645
          %v1647 = vpop.f32.mrf.mxu0
          %v1648 = vadd.f32 %v1559, %v1647
          %1649 = vmatmul.bf16.gmra.mxu0 %v390
          %v1650 = vpop.f32.mrf.mxu0
          %v1651 = vadd.f32 %v1562, %v1650
          %v1652 = vpop.f32.mrf.mxu0
          %v1653 = vadd.f32 %v1564, %v1652
          %1654 = vmatmul.bf16.gmra.mxu0 %v392
          %v1655 = vpop.f32.mrf.mxu0
          %v1656 = vadd.f32 %v1567, %v1655
          %v1657 = vpop.f32.mrf.mxu0
          %v1658 = vadd.f32 %v1569, %v1657
          %1659 = vmatmul.bf16.gmra.mxu0 %v394
          %v1660 = vpop.f32.mrf.mxu0
          %v1661 = vadd.f32 %v1572, %v1660
          %v1662 = vpop.f32.mrf.mxu0
          %v1663 = vadd.f32 %v1574, %v1662
          %1664 = vmatmul.bf16.gmra.mxu0 %v396
          %v1665 = vpop.f32.mrf.mxu0
          %v1666 = vadd.f32 %v1577, %v1665
          %v1667 = vpop.f32.mrf.mxu0
          %v1668 = vadd.f32 %v1579, %v1667
          %1669 = vmatmul.bf16.gmra.mxu0 %v398
          %v1670 = vpop.f32.mrf.mxu0
          %v1671 = vadd.f32 %v1582, %v1670
          %v1672 = vpop.f32.mrf.mxu0
          %v1673 = vadd.f32 %v1584, %v1672
          %1674 = vmatmul.bf16.gmra.mxu0 %v400
          %v1675 = vpop.f32.mrf.mxu0
          %v1676 = vadd.f32 %v1587, %v1675
          %v1677 = vpop.f32.mrf.mxu0
          %v1678 = vadd.f32 %v1589, %v1677
          %1679 = vmatmul.bf16.gmra.mxu0 %v402
          %v1680 = vpop.f32.mrf.mxu0
          %v1681 = vadd.f32 %v1592, %v1680
          %v1682 = vpop.f32.mrf.mxu0
          %v1683 = vadd.f32 %v1594, %v1682
          %1684 = vmatmul.bf16.gmra.mxu0 %v404
          %v1685 = vpop.f32.mrf.mxu0
          %v1686 = vadd.f32 %v1597, %v1685
          %v1687 = vpop.f32.mrf.mxu0
          %v1688 = vadd.f32 %v1599, %v1687
          %1689 = vmatmul.bf16.gmra.mxu0 %v406
          %v1690 = vpop.f32.mrf.mxu0
          %v1691 = vadd.f32 %v1602, %v1690
          %v1692 = vpop.f32.mrf.mxu0
          %v1693 = vadd.f32 %v1604, %v1692
          %1694 = vdwg.mxu0
          %1695 = vmatpush.bf16.msra.mxu0 %v837
          %1696 = vmatpush.bf16.msra.mxu0 %v831
          %1697 = vmatpush.bf16.msra.mxu0 %v825
          %1698 = vmatpush.bf16.msra.mxu0 %v819
          %1699 = vmatpush.bf16.msra.mxu0 %v813
          %1700 = vmatpush.bf16.msra.mxu0 %v807
          %1701 = vmatpush.bf16.msra.mxu0 %v801
          %1702 = vmatpush.bf16.msra.mxu0 %v795
          %1703 = vmatmul.bf16.gmra.mxu0 %v375
          %v1704 = vpop.f32.mrf.mxu0
          %v1705 = vadd.f32 0.0, %v1704
          %v1706 = vpop.f32.mrf.mxu0
          %v1707 = vadd.f32 0.0, %v1706
          %1708 = vmatmul.bf16.gmra.mxu0 %v377
          %v1709 = vpop.f32.mrf.mxu0
          %v1710 = vadd.f32 0.0, %v1709
          %v1711 = vpop.f32.mrf.mxu0
          %v1712 = vadd.f32 0.0, %v1711
          %1713 = vmatmul.bf16.gmra.mxu0 %v379
          %v1714 = vpop.f32.mrf.mxu0
          %v1715 = vadd.f32 0.0, %v1714
          %v1716 = vpop.f32.mrf.mxu0
          %v1717 = vadd.f32 0.0, %v1716
          %1718 = vmatmul.bf16.gmra.mxu0 %v381
          %v1719 = vpop.f32.mrf.mxu0
          %v1720 = vadd.f32 0.0, %v1719
          %v1721 = vpop.f32.mrf.mxu0
          %v1722 = vadd.f32 0.0, %v1721
          %1723 = vmatmul.bf16.gmra.mxu0 %v383
          %v1724 = vpop.f32.mrf.mxu0
          %v1725 = vadd.f32 0.0, %v1724
          %v1726 = vpop.f32.mrf.mxu0
          %v1727 = vadd.f32 0.0, %v1726
          %1728 = vmatmul.bf16.gmra.mxu0 %v385
          %v1729 = vpop.f32.mrf.mxu0
          %v1730 = vadd.f32 0.0, %v1729
          %v1731 = vpop.f32.mrf.mxu0
          %v1732 = vadd.f32 0.0, %v1731
          %1733 = vmatmul.bf16.gmra.mxu0 %v387
          %v1734 = vpop.f32.mrf.mxu0
          %v1735 = vadd.f32 0.0, %v1734
          %v1736 = vpop.f32.mrf.mxu0
          %v1737 = vadd.f32 0.0, %v1736
          %1738 = vmatmul.bf16.gmra.mxu0 %v389
          %v1739 = vpop.f32.mrf.mxu0
          %v1740 = vadd.f32 0.0, %v1739
          %v1741 = vpop.f32.mrf.mxu0
          %v1742 = vadd.f32 0.0, %v1741
          %1743 = vmatmul.bf16.gmra.mxu0 %v391
          %v1744 = vpop.f32.mrf.mxu0
          %v1745 = vadd.f32 0.0, %v1744
          %v1746 = vpop.f32.mrf.mxu0
          %v1747 = vadd.f32 0.0, %v1746
          %1748 = vmatmul.bf16.gmra.mxu0 %v393
          %v1749 = vpop.f32.mrf.mxu0
          %v1750 = vadd.f32 0.0, %v1749
          %v1751 = vpop.f32.mrf.mxu0
          %v1752 = vadd.f32 0.0, %v1751
          %1753 = vmatmul.bf16.gmra.mxu0 %v395
          %v1754 = vpop.f32.mrf.mxu0
          %v1755 = vadd.f32 0.0, %v1754
          %v1756 = vpop.f32.mrf.mxu0
          %v1757 = vadd.f32 0.0, %v1756
          %1758 = vmatmul.bf16.gmra.mxu0 %v397
          %v1759 = vpop.f32.mrf.mxu0
          %v1760 = vadd.f32 0.0, %v1759
          %v1761 = vpop.f32.mrf.mxu0
          %v1762 = vadd.f32 0.0, %v1761
          %1763 = vmatmul.bf16.gmra.mxu0 %v399
          %v1764 = vpop.f32.mrf.mxu0
          %v1765 = vadd.f32 0.0, %v1764
          %v1766 = vpop.f32.mrf.mxu0
          %v1767 = vadd.f32 0.0, %v1766
          %1768 = vmatmul.bf16.gmra.mxu0 %v401
          %v1769 = vpop.f32.mrf.mxu0
          %v1770 = vadd.f32 0.0, %v1769
          %v1771 = vpop.f32.mrf.mxu0
          %v1772 = vadd.f32 0.0, %v1771
          %1773 = vmatmul.bf16.gmra.mxu0 %v403
          %v1774 = vpop.f32.mrf.mxu0
          %v1775 = vadd.f32 0.0, %v1774
          %v1776 = vpop.f32.mrf.mxu0
          %v1777 = vadd.f32 0.0, %v1776
          %1778 = vmatmul.bf16.gmra.mxu0 %v405
          %v1779 = vpop.f32.mrf.mxu0
          %v1780 = vadd.f32 0.0, %v1779
          %v1781 = vpop.f32.mrf.mxu0
          %v1782 = vadd.f32 0.0, %v1781
          %1783 = vdwg.mxu0
          %1784 = vmatpush.bf16.msra.mxu0 %v885
          %1785 = vmatpush.bf16.msra.mxu0 %v879
          %1786 = vmatpush.bf16.msra.mxu0 %v873
          %1787 = vmatpush.bf16.msra.mxu0 %v867
          %1788 = vmatpush.bf16.msra.mxu0 %v861
          %1789 = vmatpush.bf16.msra.mxu0 %v855
          %1790 = vmatpush.bf16.msra.mxu0 %v849
          %1791 = vmatpush.bf16.msra.mxu0 %v843
          %1792 = vmatmul.bf16.gmra.mxu0 %v376
          %v1793 = vpop.f32.mrf.mxu0
          %v1794 = vadd.f32 %v1705, %v1793
          %v1795 = vpop.f32.mrf.mxu0
          %v1796 = vadd.f32 %v1707, %v1795
          %1797 = vmatmul.bf16.gmra.mxu0 %v378
          %v1798 = vpop.f32.mrf.mxu0
          %v1799 = vadd.f32 %v1710, %v1798
          %v1800 = vpop.f32.mrf.mxu0
          %v1801 = vadd.f32 %v1712, %v1800
          %1802 = vmatmul.bf16.gmra.mxu0 %v380
          %v1803 = vpop.f32.mrf.mxu0
          %v1804 = vadd.f32 %v1715, %v1803
          %v1805 = vpop.f32.mrf.mxu0
          %v1806 = vadd.f32 %v1717, %v1805
          %1807 = vmatmul.bf16.gmra.mxu0 %v382
          %v1808 = vpop.f32.mrf.mxu0
          %v1809 = vadd.f32 %v1720, %v1808
          %v1810 = vpop.f32.mrf.mxu0
          %v1811 = vadd.f32 %v1722, %v1810
          %1812 = vmatmul.bf16.gmra.mxu0 %v384
          %v1813 = vpop.f32.mrf.mxu0
          %v1814 = vadd.f32 %v1725, %v1813
          %v1815 = vpop.f32.mrf.mxu0
          %v1816 = vadd.f32 %v1727, %v1815
          %1817 = vmatmul.bf16.gmra.mxu0 %v386
          %v1818 = vpop.f32.mrf.mxu0
          %v1819 = vadd.f32 %v1730, %v1818
          %v1820 = vpop.f32.mrf.mxu0
          %v1821 = vadd.f32 %v1732, %v1820
          %1822 = vmatmul.bf16.gmra.mxu0 %v388
          %v1823 = vpop.f32.mrf.mxu0
          %v1824 = vadd.f32 %v1735, %v1823
          %v1825 = vpop.f32.mrf.mxu0
          %v1826 = vadd.f32 %v1737, %v1825
          %1827 = vmatmul.bf16.gmra.mxu0 %v390
          %v1828 = vpop.f32.mrf.mxu0
          %v1829 = vadd.f32 %v1740, %v1828
          %v1830 = vpop.f32.mrf.mxu0
          %v1831 = vadd.f32 %v1742, %v1830
          %1832 = vmatmul.bf16.gmra.mxu0 %v392
          %v1833 = vpop.f32.mrf.mxu0
          %v1834 = vadd.f32 %v1745, %v1833
          %v1835 = vpop.f32.mrf.mxu0
          %v1836 = vadd.f32 %v1747, %v1835
          %1837 = vmatmul.bf16.gmra.mxu0 %v394
          %v1838 = vpop.f32.mrf.mxu0
          %v1839 = vadd.f32 %v1750, %v1838
          %v1840 = vpop.f32.mrf.mxu0
          %v1841 = vadd.f32 %v1752, %v1840
          %1842 = vmatmul.bf16.gmra.mxu0 %v396
          %v1843 = vpop.f32.mrf.mxu0
          %v1844 = vadd.f32 %v1755, %v1843
          %v1845 = vpop.f32.mrf.mxu0
          %v1846 = vadd.f32 %v1757, %v1845
          %1847 = vmatmul.bf16.gmra.mxu0 %v398
          %v1848 = vpop.f32.mrf.mxu0
          %v1849 = vadd.f32 %v1760, %v1848
          %v1850 = vpop.f32.mrf.mxu0
          %v1851 = vadd.f32 %v1762, %v1850
          %1852 = vmatmul.bf16.gmra.mxu0 %v400
          %v1853 = vpop.f32.mrf.mxu0
          %v1854 = vadd.f32 %v1765, %v1853
          %v1855 = vpop.f32.mrf.mxu0
          %v1856 = vadd.f32 %v1767, %v1855
          %1857 = vmatmul.bf16.gmra.mxu0 %v402
          %v1858 = vpop.f32.mrf.mxu0
          %v1859 = vadd.f32 %v1770, %v1858
          %v1860 = vpop.f32.mrf.mxu0
          %v1861 = vadd.f32 %v1772, %v1860
          %1862 = vmatmul.bf16.gmra.mxu0 %v404
          %v1863 = vpop.f32.mrf.mxu0
          %v1864 = vadd.f32 %v1775, %v1863
          %v1865 = vpop.f32.mrf.mxu0
          %v1866 = vadd.f32 %v1777, %v1865
          %1867 = vmatmul.bf16.gmra.mxu0 %v406
          %v1868 = vpop.f32.mrf.mxu0
          %v1869 = vadd.f32 %v1780, %v1868
          %v1870 = vpop.f32.mrf.mxu0
          %v1871 = vadd.f32 %v1782, %v1870
          %1872 = vdwg.mxu0
          %1873 = vmatpush.bf16.msra.mxu0 %v838
          %1874 = vmatpush.bf16.msra.mxu0 %v832
          %1875 = vmatpush.bf16.msra.mxu0 %v826
          %1876 = vmatpush.bf16.msra.mxu0 %v820
          %1877 = vmatpush.bf16.msra.mxu0 %v814
          %1878 = vmatpush.bf16.msra.mxu0 %v808
          %1879 = vmatpush.bf16.msra.mxu0 %v802
          %1880 = vmatpush.bf16.msra.mxu0 %v796
          %1881 = vmatmul.bf16.gmra.mxu0 %v375
          %v1882 = vpop.f32.mrf.mxu0
          %v1883 = vadd.f32 0.0, %v1882
          %v1884 = vpop.f32.mrf.mxu0
          %v1885 = vadd.f32 0.0, %v1884
          %1886 = vmatmul.bf16.gmra.mxu0 %v377
          %v1887 = vpop.f32.mrf.mxu0
          %v1888 = vadd.f32 0.0, %v1887
          %v1889 = vpop.f32.mrf.mxu0
          %v1890 = vadd.f32 0.0, %v1889
          %1891 = vmatmul.bf16.gmra.mxu0 %v379
          %v1892 = vpop.f32.mrf.mxu0
          %v1893 = vadd.f32 0.0, %v1892
          %v1894 = vpop.f32.mrf.mxu0
          %v1895 = vadd.f32 0.0, %v1894
          %1896 = vmatmul.bf16.gmra.mxu0 %v381
          %v1897 = vpop.f32.mrf.mxu0
          %v1898 = vadd.f32 0.0, %v1897
          %v1899 = vpop.f32.mrf.mxu0
          %v1900 = vadd.f32 0.0, %v1899
          %1901 = vmatmul.bf16.gmra.mxu0 %v383
          %v1902 = vpop.f32.mrf.mxu0
          %v1903 = vadd.f32 0.0, %v1902
          %v1904 = vpop.f32.mrf.mxu0
          %v1905 = vadd.f32 0.0, %v1904
          %1906 = vmatmul.bf16.gmra.mxu0 %v385
          %v1907 = vpop.f32.mrf.mxu0
          %v1908 = vadd.f32 0.0, %v1907
          %v1909 = vpop.f32.mrf.mxu0
          %v1910 = vadd.f32 0.0, %v1909
          %1911 = vmatmul.bf16.gmra.mxu0 %v387
          %v1912 = vpop.f32.mrf.mxu0
          %v1913 = vadd.f32 0.0, %v1912
          %v1914 = vpop.f32.mrf.mxu0
          %v1915 = vadd.f32 0.0, %v1914
          %1916 = vmatmul.bf16.gmra.mxu0 %v389
          %v1917 = vpop.f32.mrf.mxu0
          %v1918 = vadd.f32 0.0, %v1917
          %v1919 = vpop.f32.mrf.mxu0
          %v1920 = vadd.f32 0.0, %v1919
          %1921 = vmatmul.bf16.gmra.mxu0 %v391
          %v1922 = vpop.f32.mrf.mxu0
          %v1923 = vadd.f32 0.0, %v1922
          %v1924 = vpop.f32.mrf.mxu0
          %v1925 = vadd.f32 0.0, %v1924
          %1926 = vmatmul.bf16.gmra.mxu0 %v393
          %v1927 = vpop.f32.mrf.mxu0
          %v1928 = vadd.f32 0.0, %v1927
          %v1929 = vpop.f32.mrf.mxu0
          %v1930 = vadd.f32 0.0, %v1929
          %1931 = vmatmul.bf16.gmra.mxu0 %v395
          %v1932 = vpop.f32.mrf.mxu0
          %v1933 = vadd.f32 0.0, %v1932
          %v1934 = vpop.f32.mrf.mxu0
          %v1935 = vadd.f32 0.0, %v1934
          %1936 = vmatmul.bf16.gmra.mxu0 %v397
          %v1937 = vpop.f32.mrf.mxu0
          %v1938 = vadd.f32 0.0, %v1937
          %v1939 = vpop.f32.mrf.mxu0
          %v1940 = vadd.f32 0.0, %v1939
          %1941 = vmatmul.bf16.gmra.mxu0 %v399
          %v1942 = vpop.f32.mrf.mxu0
          %v1943 = vadd.f32 0.0, %v1942
          %v1944 = vpop.f32.mrf.mxu0
          %v1945 = vadd.f32 0.0, %v1944
          %1946 = vmatmul.bf16.gmra.mxu0 %v401
          %v1947 = vpop.f32.mrf.mxu0
          %v1948 = vadd.f32 0.0, %v1947
          %v1949 = vpop.f32.mrf.mxu0
          %v1950 = vadd.f32 0.0, %v1949
          %1951 = vmatmul.bf16.gmra.mxu0 %v403
          %v1952 = vpop.f32.mrf.mxu0
          %v1953 = vadd.f32 0.0, %v1952
          %v1954 = vpop.f32.mrf.mxu0
          %v1955 = vadd.f32 0.0, %v1954
          %1956 = vmatmul.bf16.gmra.mxu0 %v405
          %v1957 = vpop.f32.mrf.mxu0
          %v1958 = vadd.f32 0.0, %v1957
          %v1959 = vpop.f32.mrf.mxu0
          %v1960 = vadd.f32 0.0, %v1959
          %1961 = vdwg.mxu0
          %1962 = vmatpush.bf16.msra.mxu0 %v886
          %1963 = vmatpush.bf16.msra.mxu0 %v880
          %1964 = vmatpush.bf16.msra.mxu0 %v874
          %1965 = vmatpush.bf16.msra.mxu0 %v868
          %1966 = vmatpush.bf16.msra.mxu0 %v862
          %1967 = vmatpush.bf16.msra.mxu0 %v856
          %1968 = vmatpush.bf16.msra.mxu0 %v850
          %1969 = vmatpush.bf16.msra.mxu0 %v844
          %1970 = vmatmul.bf16.gmra.mxu0 %v376
          %v1971 = vpop.f32.mrf.mxu0
          %v1972 = vadd.f32 %v1883, %v1971
          %v1973 = vpop.f32.mrf.mxu0
          %v1974 = vadd.f32 %v1885, %v1973
          %1975 = vmatmul.bf16.gmra.mxu0 %v378
          %v1976 = vpop.f32.mrf.mxu0
          %v1977 = vadd.f32 %v1888, %v1976
          %v1978 = vpop.f32.mrf.mxu0
          %v1979 = vadd.f32 %v1890, %v1978
          %1980 = vmatmul.bf16.gmra.mxu0 %v380
          %v1981 = vpop.f32.mrf.mxu0
          %v1982 = vadd.f32 %v1893, %v1981
          %v1983 = vpop.f32.mrf.mxu0
          %v1984 = vadd.f32 %v1895, %v1983
          %1985 = vmatmul.bf16.gmra.mxu0 %v382
          %v1986 = vpop.f32.mrf.mxu0
          %v1987 = vadd.f32 %v1898, %v1986
          %v1988 = vpop.f32.mrf.mxu0
          %v1989 = vadd.f32 %v1900, %v1988
          %1990 = vmatmul.bf16.gmra.mxu0 %v384
          %v1991 = vpop.f32.mrf.mxu0
          %v1992 = vadd.f32 %v1903, %v1991
          %v1993 = vpop.f32.mrf.mxu0
          %v1994 = vadd.f32 %v1905, %v1993
          %1995 = vmatmul.bf16.gmra.mxu0 %v386
          %v1996 = vpop.f32.mrf.mxu0
          %v1997 = vadd.f32 %v1908, %v1996
          %v1998 = vpop.f32.mrf.mxu0
          %v1999 = vadd.f32 %v1910, %v1998
          %2000 = vmatmul.bf16.gmra.mxu0 %v388
          %v2001 = vpop.f32.mrf.mxu0
          %v2002 = vadd.f32 %v1913, %v2001
          %v2003 = vpop.f32.mrf.mxu0
          %v2004 = vadd.f32 %v1915, %v2003
          %2005 = vmatmul.bf16.gmra.mxu0 %v390
          %v2006 = vpop.f32.mrf.mxu0
          %v2007 = vadd.f32 %v1918, %v2006
          %v2008 = vpop.f32.mrf.mxu0
          %v2009 = vadd.f32 %v1920, %v2008
          %2010 = vmatmul.bf16.gmra.mxu0 %v392
          %v2011 = vpop.f32.mrf.mxu0
          %v2012 = vadd.f32 %v1923, %v2011
          %v2013 = vpop.f32.mrf.mxu0
          %v2014 = vadd.f32 %v1925, %v2013
          %2015 = vmatmul.bf16.gmra.mxu0 %v394
          %v2016 = vpop.f32.mrf.mxu0
          %v2017 = vadd.f32 %v1928, %v2016
          %v2018 = vpop.f32.mrf.mxu0
          %v2019 = vadd.f32 %v1930, %v2018
          %2020 = vmatmul.bf16.gmra.mxu0 %v396
          %v2021 = vpop.f32.mrf.mxu0
          %v2022 = vadd.f32 %v1933, %v2021
          %v2023 = vpop.f32.mrf.mxu0
          %v2024 = vadd.f32 %v1935, %v2023
          %2025 = vmatmul.bf16.gmra.mxu0 %v398
          %v2026 = vpop.f32.mrf.mxu0
          %v2027 = vadd.f32 %v1938, %v2026
          %v2028 = vpop.f32.mrf.mxu0
          %v2029 = vadd.f32 %v1940, %v2028
          %2030 = vmatmul.bf16.gmra.mxu0 %v400
          %v2031 = vpop.f32.mrf.mxu0
          %v2032 = vadd.f32 %v1943, %v2031
          %v2033 = vpop.f32.mrf.mxu0
          %v2034 = vadd.f32 %v1945, %v2033
          %2035 = vmatmul.bf16.gmra.mxu0 %v402
          %v2036 = vpop.f32.mrf.mxu0
          %v2037 = vadd.f32 %v1948, %v2036
          %v2038 = vpop.f32.mrf.mxu0
          %v2039 = vadd.f32 %v1950, %v2038
          %2040 = vmatmul.bf16.gmra.mxu0 %v404
          %v2041 = vpop.f32.mrf.mxu0
          %v2042 = vadd.f32 %v1953, %v2041
          %v2043 = vpop.f32.mrf.mxu0
          %v2044 = vadd.f32 %v1955, %v2043
          %2045 = vmatmul.bf16.gmra.mxu0 %v406
          %v2046 = vpop.f32.mrf.mxu0
          %v2047 = vadd.f32 %v1958, %v2046
          %v2048 = vpop.f32.mrf.mxu0
          %v2049 = vadd.f32 %v1960, %v2048
          %2050 = vdwg.mxu0
          %v2051 = vpack.c.bf16 %v1260, %v1082
          %v2052 = vpack.c.bf16 %v1616, %v1438
          %v2053 = vpack.c.bf16 %v1972, %v1794
          %v2054 = vpack.c.bf16 %v1262, %v1084
          %v2055 = vpack.c.bf16 %v1618, %v1440
          %v2056 = vpack.c.bf16 %v1974, %v1796
          %v2057 = vpack.c.bf16 %v1265, %v1087
          %v2058 = vpack.c.bf16 %v1621, %v1443
          %v2059 = vpack.c.bf16 %v1977, %v1799
          %v2060 = vpack.c.bf16 %v1267, %v1089
          %v2061 = vpack.c.bf16 %v1623, %v1445
          %v2062 = vpack.c.bf16 %v1979, %v1801
          %v2063 = vpack.c.bf16 %v1270, %v1092
          %v2064 = vpack.c.bf16 %v1626, %v1448
          %v2065 = vpack.c.bf16 %v1982, %v1804
          %v2066 = vpack.c.bf16 %v1272, %v1094
          %v2067 = vpack.c.bf16 %v1628, %v1450
          %v2068 = vpack.c.bf16 %v1984, %v1806
          %v2069 = vpack.c.bf16 %v1275, %v1097
          %v2070 = vpack.c.bf16 %v1631, %v1453
          %v2071 = vpack.c.bf16 %v1987, %v1809
          %v2072 = vpack.c.bf16 %v1277, %v1099
          %v2073 = vpack.c.bf16 %v1633, %v1455
          %v2074 = vpack.c.bf16 %v1989, %v1811
          %v2075 = vpack.c.bf16 %v1280, %v1102
          %v2076 = vpack.c.bf16 %v1636, %v1458
          %v2077 = vpack.c.bf16 %v1992, %v1814
          %v2078 = vpack.c.bf16 %v1282, %v1104
          %v2079 = vpack.c.bf16 %v1638, %v1460
          %v2080 = vpack.c.bf16 %v1994, %v1816
          %v2081 = vpack.c.bf16 %v1285, %v1107
          %v2082 = vpack.c.bf16 %v1641, %v1463
          %v2083 = vpack.c.bf16 %v1997, %v1819
          %v2084 = vpack.c.bf16 %v1287, %v1109
          %v2085 = vpack.c.bf16 %v1643, %v1465
          %v2086 = vpack.c.bf16 %v1999, %v1821
          %v2087 = vpack.c.bf16 %v1290, %v1112
          %v2088 = vpack.c.bf16 %v1646, %v1468
          %v2089 = vpack.c.bf16 %v2002, %v1824
          %v2090 = vpack.c.bf16 %v1292, %v1114
          %v2091 = vpack.c.bf16 %v1648, %v1470
          %v2092 = vpack.c.bf16 %v2004, %v1826
          %v2093 = vpack.c.bf16 %v1295, %v1117
          %v2094 = vpack.c.bf16 %v1651, %v1473
          %v2095 = vpack.c.bf16 %v2007, %v1829
          %v2096 = vpack.c.bf16 %v1297, %v1119
          %v2097 = vpack.c.bf16 %v1653, %v1475
          %v2098 = vpack.c.bf16 %v2009, %v1831
          %v2099 = vpack.c.bf16 %v1300, %v1122
          %v2100 = vpack.c.bf16 %v1656, %v1478
          %v2101 = vpack.c.bf16 %v2012, %v1834
          %v2102 = vpack.c.bf16 %v1302, %v1124
          %v2103 = vpack.c.bf16 %v1658, %v1480
          %v2104 = vpack.c.bf16 %v2014, %v1836
          %v2105 = vpack.c.bf16 %v1305, %v1127
          %v2106 = vpack.c.bf16 %v1661, %v1483
          %v2107 = vpack.c.bf16 %v2017, %v1839
          %v2108 = vpack.c.bf16 %v1307, %v1129
          %v2109 = vpack.c.bf16 %v1663, %v1485
          %v2110 = vpack.c.bf16 %v2019, %v1841
          %v2111 = vpack.c.bf16 %v1310, %v1132
          %v2112 = vpack.c.bf16 %v1666, %v1488
          %v2113 = vpack.c.bf16 %v2022, %v1844
          %v2114 = vpack.c.bf16 %v1312, %v1134
          %v2115 = vpack.c.bf16 %v1668, %v1490
          %v2116 = vpack.c.bf16 %v2024, %v1846
          %v2117 = vpack.c.bf16 %v1315, %v1137
          %v2118 = vpack.c.bf16 %v1671, %v1493
          %v2119 = vpack.c.bf16 %v2027, %v1849
          %v2120 = vpack.c.bf16 %v1317, %v1139
          %v2121 = vpack.c.bf16 %v1673, %v1495
          %v2122 = vpack.c.bf16 %v2029, %v1851
          %v2123 = vpack.c.bf16 %v1320, %v1142
          %v2124 = vpack.c.bf16 %v1676, %v1498
          %v2125 = vpack.c.bf16 %v2032, %v1854
          %v2126 = vpack.c.bf16 %v1322, %v1144
          %v2127 = vpack.c.bf16 %v1678, %v1500
          %v2128 = vpack.c.bf16 %v2034, %v1856
          %v2129 = vpack.c.bf16 %v1325, %v1147
          %v2130 = vpack.c.bf16 %v1681, %v1503
          %v2131 = vpack.c.bf16 %v2037, %v1859
          %v2132 = vpack.c.bf16 %v1327, %v1149
          %v2133 = vpack.c.bf16 %v1683, %v1505
          %v2134 = vpack.c.bf16 %v2039, %v1861
          %v2135 = vpack.c.bf16 %v1330, %v1152
          %v2136 = vpack.c.bf16 %v1686, %v1508
          %v2137 = vpack.c.bf16 %v2042, %v1864
          %v2138 = vpack.c.bf16 %v1332, %v1154
          %v2139 = vpack.c.bf16 %v1688, %v1510
          %v2140 = vpack.c.bf16 %v2044, %v1866
          %v2141 = vpack.c.bf16 %v1335, %v1157
          %v2142 = vpack.c.bf16 %v1691, %v1513
          %v2143 = vpack.c.bf16 %v2047, %v1869
          %v2144 = vpack.c.bf16 %v1337, %v1159
          %v2145 = vpack.c.bf16 %v1693, %v1515
          %v2146 = vpack.c.bf16 %v2049, %v1871
          %2147 = vst [vmem:[#allocation2] sm:$0xff] %v2051
          %2148 = vst [vmem:[#allocation2 + $0x8] sm:$0xff] %v2052
          %2149 = vst [vmem:[#allocation2 + $0x10] sm:$0xff] %v2053
          %2150 = vst [vmem:[#allocation2 + $0x18] sm:$0xff] %v2054
          %2151 = vst [vmem:[#allocation2 + $0x20] sm:$0xff] %v2055
          %2152 = vst [vmem:[#allocation2 + $0x28] sm:$0xff] %v2056
          %2153 = vst [vmem:[#allocation2 + $0x30] sm:$0xff] %v2057
          %2154 = vst [vmem:[#allocation2 + $0x38] sm:$0xff] %v2058
          %2155 = vst [vmem:[#allocation2 + $0x40] sm:$0xff] %v2059
          %2156 = vst [vmem:[#allocation2 + $0x48] sm:$0xff] %v2060
          %2157 = vst [vmem:[#allocation2 + $0x50] sm:$0xff] %v2061
          %2158 = vst [vmem:[#allocation2 + $0x58] sm:$0xff] %v2062
          %2159 = vst [vmem:[#allocation2 + $0x60] sm:$0xff] %v2063
          %2160 = vst [vmem:[#allocation2 + $0x68] sm:$0xff] %v2064
          %2161 = vst [vmem:[#allocation2 + $0x70] sm:$0xff] %v2065
          %2162 = vst [vmem:[#allocation2 + $0x78] sm:$0xff] %v2066
          %2163 = vst [vmem:[#allocation2 + $0x80] sm:$0xff] %v2067
          %2164 = vst [vmem:[#allocation2 + $0x88] sm:$0xff] %v2068
          %2165 = vst [vmem:[#allocation2 + $0x90] sm:$0xff] %v2069
          %2166 = vst [vmem:[#allocation2 + $0x98] sm:$0xff] %v2070
          %2167 = vst [vmem:[#allocation2 + $0xa0] sm:$0xff] %v2071
          %2168 = vst [vmem:[#allocation2 + $0xa8] sm:$0xff] %v2072
          %2169 = vst [vmem:[#allocation2 + $0xb0] sm:$0xff] %v2073
          %2170 = vst [vmem:[#allocation2 + $0xb8] sm:$0xff] %v2074
          %2171 = vst [vmem:[#allocation2 + $0xc0] sm:$0xff] %v2075
          %2172 = vst [vmem:[#allocation2 + $0xc8] sm:$0xff] %v2076
          %2173 = vst [vmem:[#allocation2 + $0xd0] sm:$0xff] %v2077
          %2174 = vst [vmem:[#allocation2 + $0xd8] sm:$0xff] %v2078
          %2175 = vst [vmem:[#allocation2 + $0xe0] sm:$0xff] %v2079
          %2176 = vst [vmem:[#allocation2 + $0xe8] sm:$0xff] %v2080
          %2177 = vst [vmem:[#allocation2 + $0xf0] sm:$0xff] %v2081
          %2178 = vst [vmem:[#allocation2 + $0xf8] sm:$0xff] %v2082
          %2179 = vst [vmem:[#allocation2 + $0x100] sm:$0xff] %v2083
          %2180 = vst [vmem:[#allocation2 + $0x108] sm:$0xff] %v2084
          %2181 = vst [vmem:[#allocation2 + $0x110] sm:$0xff] %v2085
          %2182 = vst [vmem:[#allocation2 + $0x118] sm:$0xff] %v2086
          %2183 = vst [vmem:[#allocation2 + $0x120] sm:$0xff] %v2087
          %2184 = vst [vmem:[#allocation2 + $0x128] sm:$0xff] %v2088
          %2185 = vst [vmem:[#allocation2 + $0x130] sm:$0xff] %v2089
          %2186 = vst [vmem:[#allocation2 + $0x138] sm:$0xff] %v2090
          %2187 = vst [vmem:[#allocation2 + $0x140] sm:$0xff] %v2091
          %2188 = vst [vmem:[#allocation2 + $0x148] sm:$0xff] %v2092
          %2189 = vst [vmem:[#allocation2 + $0x150] sm:$0xff] %v2093
          %2190 = vst [vmem:[#allocation2 + $0x158] sm:$0xff] %v2094
          %2191 = vst [vmem:[#allocation2 + $0x160] sm:$0xff] %v2095
          %2192 = vst [vmem:[#allocation2 + $0x168] sm:$0xff] %v2096
          %2193 = vst [vmem:[#allocation2 + $0x170] sm:$0xff] %v2097
          %2194 = vst [vmem:[#allocation2 + $0x178] sm:$0xff] %v2098
          %2195 = vst [vmem:[#allocation2 + $0x180] sm:$0xff] %v2099
          %2196 = vst [vmem:[#allocation2 + $0x188] sm:$0xff] %v2100
          %2197 = vst [vmem:[#allocation2 + $0x190] sm:$0xff] %v2101
          %2198 = vst [vmem:[#allocation2 + $0x198] sm:$0xff] %v2102
          %2199 = vst [vmem:[#allocation2 + $0x1a0] sm:$0xff] %v2103
          %2200 = vst [vmem:[#allocation2 + $0x1a8] sm:$0xff] %v2104
          %2201 = vst [vmem:[#allocation2 + $0x1b0] sm:$0xff] %v2105
          %2202 = vst [vmem:[#allocation2 + $0x1b8] sm:$0xff] %v2106
          %2203 = vst [vmem:[#allocation2 + $0x1c0] sm:$0xff] %v2107
          %2204 = vst [vmem:[#allocation2 + $0x1c8] sm:$0xff] %v2108
          %2205 = vst [vmem:[#allocation2 + $0x1d0] sm:$0xff] %v2109
          %2206 = vst [vmem:[#allocation2 + $0x1d8] sm:$0xff] %v2110
          %2207 = vst [vmem:[#allocation2 + $0x1e0] sm:$0xff] %v2111
          %2208 = vst [vmem:[#allocation2 + $0x1e8] sm:$0xff] %v2112
          %2209 = vst [vmem:[#allocation2 + $0x1f0] sm:$0xff] %v2113
          %2210 = vst [vmem:[#allocation2 + $0x1f8] sm:$0xff] %v2114
          %2211 = vst [vmem:[#allocation2 + $0x200] sm:$0xff] %v2115
          %2212 = vst [vmem:[#allocation2 + $0x208] sm:$0xff] %v2116
          %2213 = vst [vmem:[#allocation2 + $0x210] sm:$0xff] %v2117
          %2214 = vst [vmem:[#allocation2 + $0x218] sm:$0xff] %v2118
          %2215 = vst [vmem:[#allocation2 + $0x220] sm:$0xff] %v2119
          %2216 = vst [vmem:[#allocation2 + $0x228] sm:$0xff] %v2120
          %2217 = vst [vmem:[#allocation2 + $0x230] sm:$0xff] %v2121
          %2218 = vst [vmem:[#allocation2 + $0x238] sm:$0xff] %v2122
          %2219 = vst [vmem:[#allocation2 + $0x240] sm:$0xff] %v2123
          %2220 = vst [vmem:[#allocation2 + $0x248] sm:$0xff] %v2124
          %2221 = vst [vmem:[#allocation2 + $0x250] sm:$0xff] %v2125
          %2222 = vst [vmem:[#allocation2 + $0x258] sm:$0xff] %v2126
          %2223 = vst [vmem:[#allocation2 + $0x260] sm:$0xff] %v2127
          %2224 = vst [vmem:[#allocation2 + $0x268] sm:$0xff] %v2128
          %2225 = vst [vmem:[#allocation2 + $0x270] sm:$0xff] %v2129
          %2226 = vst [vmem:[#allocation2 + $0x278] sm:$0xff] %v2130
          %2227 = vst [vmem:[#allocation2 + $0x280] sm:$0xff] %v2131
          %2228 = vst [vmem:[#allocation2 + $0x288] sm:$0xff] %v2132
          %2229 = vst [vmem:[#allocation2 + $0x290] sm:$0xff] %v2133
          %2230 = vst [vmem:[#allocation2 + $0x298] sm:$0xff] %v2134
          %2231 = vst [vmem:[#allocation2 + $0x2a0] sm:$0xff] %v2135
          %2232 = vst [vmem:[#allocation2 + $0x2a8] sm:$0xff] %v2136
          %2233 = vst [vmem:[#allocation2 + $0x2b0] sm:$0xff] %v2137
          %2234 = vst [vmem:[#allocation2 + $0x2b8] sm:$0xff] %v2138
          %2235 = vst [vmem:[#allocation2 + $0x2c0] sm:$0xff] %v2139
          %2236 = vst [vmem:[#allocation2 + $0x2c8] sm:$0xff] %v2140
          %2237 = vst [vmem:[#allocation2 + $0x2d0] sm:$0xff] %v2141
          %2238 = vst [vmem:[#allocation2 + $0x2d8] sm:$0xff] %v2142
          %2239 = vst [vmem:[#allocation2 + $0x2e0] sm:$0xff] %v2143
          %2240 = vst [vmem:[#allocation2 + $0x2e8] sm:$0xff] %v2144
          %2241 = vst [vmem:[#allocation2 + $0x2f0] sm:$0xff] %v2145
          %2242 = vst [vmem:[#allocation2 + $0x2f8] sm:$0xff] %v2146
        $region52: #{tpu_custom_call.1} parent=35 // pred_fallthru
          _
        %s2243 = smul.u32 %s32, 128
        %s2244 = sshra.s32 %s2243, 3
        %s2245 = sand.u32 %s2243, 7
        %s2246 = smul.u32 %s2244, 6
        %s2247 = smul.addr %s2246, 4
        %s2248 = scalar_lea.vmem [#allocation2], %s2247
        %v2249 = vld [vmem:[%s2248] sm:$0xf]
        %v2250 = vld [vmem:[%s2248 + $0x18] sm:$0xf]
        %v2251 = vld [vmem:[%s2248 + $0x30] sm:$0xf]
        %v2252 = vld [vmem:[%s2248 + $0x48] sm:$0xf]
        %v2253 = vld [vmem:[%s2248 + $0x60] sm:$0xf]
        %v2254 = vld [vmem:[%s2248 + $0x78] sm:$0xf]
        %v2255 = vld [vmem:[%s2248 + $0x90] sm:$0xf]
        %v2256 = vld [vmem:[%s2248 + $0xa8] sm:$0xf]
        %v2257 = vld [vmem:[%s2248 + $0xc0] sm:$0xf]
        %v2258 = vld [vmem:[%s2248 + $0xd8] sm:$0xf]
        %v2259 = vld [vmem:[%s2248 + $0xf0] sm:$0xf]
        %v2260 = vld [vmem:[%s2248 + $0x108] sm:$0xf]
        %v2261 = vld [vmem:[%s2248 + $0x120] sm:$0xf]
        %v2262 = vld [vmem:[%s2248 + $0x138] sm:$0xf]
        %v2263 = vld [vmem:[%s2248 + $0x150] sm:$0xf]
        %v2264 = vld [vmem:[%s2248 + $0x168] sm:$0xf]
        %v2265 = vld [vmem:[#allocation2 + $0x8] sm:$0xf]
        %v2266 = vld [vmem:[#allocation2 + $0x20] sm:$0xf]
        %v2267 = vld [vmem:[#allocation2 + $0x38] sm:$0xf]
        %v2268 = vld [vmem:[#allocation2 + $0x50] sm:$0xf]
        %v2269 = vld [vmem:[#allocation2 + $0x68] sm:$0xf]
        %v2270 = vld [vmem:[#allocation2 + $0x80] sm:$0xf]
        %v2271 = vld [vmem:[#allocation2 + $0x98] sm:$0xf]
        %v2272 = vld [vmem:[#allocation2 + $0xb0] sm:$0xf]
        %v2273 = vld [vmem:[#allocation2 + $0xc8] sm:$0xf]
        %v2274 = vld [vmem:[#allocation2 + $0xe0] sm:$0xf]
        %v2275 = vld [vmem:[#allocation2 + $0xf8] sm:$0xf]
        %v2276 = vld [vmem:[#allocation2 + $0x110] sm:$0xf]
        %v2277 = vld [vmem:[#allocation2 + $0x128] sm:$0xf]
        %v2278 = vld [vmem:[#allocation2 + $0x140] sm:$0xf]
        %v2279 = vld [vmem:[#allocation2 + $0x158] sm:$0xf]
        %v2280 = vld [vmem:[#allocation2 + $0x170] sm:$0xf]
        %v2281 = vld [vmem:[#allocation2 + $0x188] sm:$0xf]
        %v2282 = vld [vmem:[#allocation2 + $0x1a0] sm:$0xf]
        %v2283 = vld [vmem:[#allocation2 + $0x1b8] sm:$0xf]
        %v2284 = vld [vmem:[#allocation2 + $0x1d0] sm:$0xf]
        %v2285 = vld [vmem:[#allocation2 + $0x1e8] sm:$0xf]
        %v2286 = vld [vmem:[#allocation2 + $0x200] sm:$0xf]
        %v2287 = vld [vmem:[#allocation2 + $0x218] sm:$0xf]
        %v2288 = vld [vmem:[#allocation2 + $0x230] sm:$0xf]
        %v2289 = vld [vmem:[#allocation2 + $0x248] sm:$0xf]
        %v2290 = vld [vmem:[#allocation2 + $0x260] sm:$0xf]
        %v2291 = vld [vmem:[#allocation2 + $0x278] sm:$0xf]
        %v2292 = vld [vmem:[#allocation2 + $0x290] sm:$0xf]
        %v2293 = vld [vmem:[#allocation2 + $0x2a8] sm:$0xf]
        %v2294 = vld [vmem:[#allocation2 + $0x2c0] sm:$0xf]
        %v2295 = vld [vmem:[#allocation2 + $0x2d8] sm:$0xf]
        %v2296 = vld [vmem:[#allocation2 + $0x2f0] sm:$0xf]
        %v2297 = vld [vmem:[#allocation2 + $0x10] sm:$0xf]
        %v2298 = vld [vmem:[#allocation2 + $0x28] sm:$0xf]
        %v2299 = vld [vmem:[#allocation2 + $0x40] sm:$0xf]
        %v2300 = vld [vmem:[#allocation2 + $0x58] sm:$0xf]
        %v2301 = vld [vmem:[#allocation2 + $0x70] sm:$0xf]
        %v2302 = vld [vmem:[#allocation2 + $0x88] sm:$0xf]
        %v2303 = vld [vmem:[#allocation2 + $0xa0] sm:$0xf]
        %v2304 = vld [vmem:[#allocation2 + $0xb8] sm:$0xf]
        %v2305 = vld [vmem:[#allocation2 + $0xd0] sm:$0xf]
        %v2306 = vld [vmem:[#allocation2 + $0xe8] sm:$0xf]
        %v2307 = vld [vmem:[#allocation2 + $0x100] sm:$0xf]
        %v2308 = vld [vmem:[#allocation2 + $0x118] sm:$0xf]
        %v2309 = vld [vmem:[#allocation2 + $0x130] sm:$0xf]
        %v2310 = vld [vmem:[#allocation2 + $0x148] sm:$0xf]
        %v2311 = vld [vmem:[#allocation2 + $0x160] sm:$0xf]
        %v2312 = vld [vmem:[#allocation2 + $0x178] sm:$0xf]
        %v2313 = vld [vmem:[#allocation2 + $0x190] sm:$0xf]
        %v2314 = vld [vmem:[#allocation2 + $0x1a8] sm:$0xf]
        %v2315 = vld [vmem:[#allocation2 + $0x1c0] sm:$0xf]
        %v2316 = vld [vmem:[#allocation2 + $0x1d8] sm:$0xf]
        %v2317 = vld [vmem:[#allocation2 + $0x1f0] sm:$0xf]
        %v2318 = vld [vmem:[#allocation2 + $0x208] sm:$0xf]
        %v2319 = vld [vmem:[#allocation2 + $0x220] sm:$0xf]
        %v2320 = vld [vmem:[#allocation2 + $0x238] sm:$0xf]
        %v2321 = vld [vmem:[#allocation2 + $0x250] sm:$0xf]
        %v2322 = vld [vmem:[#allocation2 + $0x268] sm:$0xf]
        %v2323 = vld [vmem:[#allocation2 + $0x280] sm:$0xf]
        %v2324 = vld [vmem:[#allocation2 + $0x298] sm:$0xf]
        %v2325 = vld [vmem:[#allocation2 + $0x2b0] sm:$0xf]
        %v2326 = vld [vmem:[#allocation2 + $0x2c8] sm:$0xf]
        %v2327 = vld [vmem:[#allocation2 + $0x2e0] sm:$0xf]
        %v2328 = vld [vmem:[#allocation2 + $0x2f8] sm:$0xf]
        %v2345 = vunpack.c.l.b16 %v2249
        %v2346 = vunpack.c.l.b16 %v2250
        %v2347 = vunpack.c.l.b16 %v2251
        %v2348 = vunpack.c.l.b16 %v2252
        %v2349 = vunpack.c.l.b16 %v2253
        %v2350 = vunpack.c.l.b16 %v2254
        %v2351 = vunpack.c.l.b16 %v2255
        %v2352 = vunpack.c.l.b16 %v2256
        %v2353 = vunpack.c.l.b16 %v2257
        %v2354 = vunpack.c.l.b16 %v2258
        %v2355 = vunpack.c.l.b16 %v2259
        %v2356 = vunpack.c.l.b16 %v2260
        %v2357 = vunpack.c.l.b16 %v2261
        %v2358 = vunpack.c.l.b16 %v2262
        %v2359 = vunpack.c.l.b16 %v2263
        %v2360 = vunpack.c.l.b16 %v2264
        %v2361 = vpack.c.b16 %v2346, %v2345
        %v2362 = vpack.c.b16 %v2348, %v2347
        %v2363 = vpack.c.b16 %v2350, %v2349
        %v2364 = vpack.c.b16 %v2352, %v2351
        %v2365 = vpack.c.b16 %v2354, %v2353
        %v2366 = vpack.c.b16 %v2356, %v2355
        %v2367 = vpack.c.b16 %v2358, %v2357
        %v2368 = vpack.c.b16 %v2360, %v2359
        %v2409 = vunpack.c.l.b16 %v2265
        %v2410 = vunpack.c.l.b16 %v2266
        %v2411 = vunpack.c.l.b16 %v2267
        %v2412 = vunpack.c.l.b16 %v2268
        %v2413 = vunpack.c.l.b16 %v2269
        %v2414 = vunpack.c.l.b16 %v2270
        %v2415 = vunpack.c.l.b16 %v2271
        %v2416 = vunpack.c.l.b16 %v2272
        %v2417 = vunpack.c.l.b16 %v2273
        %v2418 = vunpack.c.l.b16 %v2274
        %v2419 = vunpack.c.l.b16 %v2275
        %v2420 = vunpack.c.l.b16 %v2276
        %v2421 = vunpack.c.l.b16 %v2277
        %v2422 = vunpack.c.l.b16 %v2278
        %v2423 = vunpack.c.l.b16 %v2279
        %v2424 = vunpack.c.l.b16 %v2280
        %v2425 = vunpack.c.l.b16 %v2281
        %v2426 = vunpack.c.l.b16 %v2282
        %v2427 = vunpack.c.l.b16 %v2283
        %v2428 = vunpack.c.l.b16 %v2284
        %v2429 = vunpack.c.l.b16 %v2285
        %v2430 = vunpack.c.l.b16 %v2286
        %v2431 = vunpack.c.l.b16 %v2287
        %v2432 = vunpack.c.l.b16 %v2288
        %v2433 = vunpack.c.l.b16 %v2289
        %v2434 = vunpack.c.l.b16 %v2290
        %v2435 = vunpack.c.l.b16 %v2291
        %v2436 = vunpack.c.l.b16 %v2292
        %v2437 = vunpack.c.l.b16 %v2293
        %v2438 = vunpack.c.l.b16 %v2294
        %v2439 = vunpack.c.l.b16 %v2295
        %v2440 = vunpack.c.l.b16 %v2296
        %v2441 = vpack.c.b16 %v2410, %v2409
        %v2442 = vpack.c.b16 %v2412, %v2411
        %v2443 = vpack.c.b16 %v2414, %v2413
        %v2444 = vpack.c.b16 %v2416, %v2415
        %v2445 = vpack.c.b16 %v2418, %v2417
        %v2446 = vpack.c.b16 %v2420, %v2419
        %v2447 = vpack.c.b16 %v2422, %v2421
        %v2448 = vpack.c.b16 %v2424, %v2423
        %v2449 = vpack.c.b16 %v2426, %v2425
        %v2450 = vpack.c.b16 %v2428, %v2427
        %v2451 = vpack.c.b16 %v2430, %v2429
        %v2452 = vpack.c.b16 %v2432, %v2431
        %v2453 = vpack.c.b16 %v2434, %v2433
        %v2454 = vpack.c.b16 %v2436, %v2435
        %v2455 = vpack.c.b16 %v2438, %v2437
        %v2456 = vpack.c.b16 %v2440, %v2439
        %2473 = vmatpush.bf16.xpose.msra.mxu0 %v2448
        %2474 = vmatpush.bf16.xpose.msra.mxu0 %v2447
        %2475 = vmatpush.bf16.xpose.msra.mxu0 %v2446
        %2476 = vmatpush.bf16.xpose.msra.mxu0 %v2445
        %2477 = vmatpush.bf16.xpose.msra.mxu0 %v2444
        %2478 = vmatpush.bf16.xpose.msra.mxu0 %v2443
        %2479 = vmatpush.bf16.xpose.msra.mxu0 %v2442
        %2480 = vmatpush.bf16.xpose.msra.mxu0 %v2441
        %2481 = vmatmul.bf16.gmra.mxu0 %v2361
        %v2482 = vpop.f32.mrf.mxu0
        %v2483 = vadd.f32 0.0, %v2482
        %v2484 = vpop.f32.mrf.mxu0
        %v2485 = vadd.f32 0.0, %v2484
        %2486 = vmatmul.bf16.gmra.mxu0 %v2362
        %v2487 = vpop.f32.mrf.mxu0
        %v2488 = vadd.f32 0.0, %v2487
        %v2489 = vpop.f32.mrf.mxu0
        %v2490 = vadd.f32 0.0, %v2489
        %2491 = vmatmul.bf16.gmra.mxu0 %v2363
        %v2492 = vpop.f32.mrf.mxu0
        %v2493 = vadd.f32 0.0, %v2492
        %v2494 = vpop.f32.mrf.mxu0
        %v2495 = vadd.f32 0.0, %v2494
        %2496 = vmatmul.bf16.gmra.mxu0 %v2364
        %v2497 = vpop.f32.mrf.mxu0
        %v2498 = vadd.f32 0.0, %v2497
        %v2499 = vpop.f32.mrf.mxu0
        %v2500 = vadd.f32 0.0, %v2499
        %2501 = vmatmul.bf16.gmra.mxu0 %v2365
        %v2502 = vpop.f32.mrf.mxu0
        %v2503 = vadd.f32 0.0, %v2502
        %v2504 = vpop.f32.mrf.mxu0
        %v2505 = vadd.f32 0.0, %v2504
        %2506 = vmatmul.bf16.gmra.mxu0 %v2366
        %v2507 = vpop.f32.mrf.mxu0
        %v2508 = vadd.f32 0.0, %v2507
        %v2509 = vpop.f32.mrf.mxu0
        %v2510 = vadd.f32 0.0, %v2509
        %2511 = vmatmul.bf16.gmra.mxu0 %v2367
        %v2512 = vpop.f32.mrf.mxu0
        %v2513 = vadd.f32 0.0, %v2512
        %v2514 = vpop.f32.mrf.mxu0
        %v2515 = vadd.f32 0.0, %v2514
        %2516 = vmatmul.bf16.gmra.mxu0 %v2368
        %v2517 = vpop.f32.mrf.mxu0
        %v2518 = vadd.f32 0.0, %v2517
        %v2519 = vpop.f32.mrf.mxu0
        %v2520 = vadd.f32 0.0, %v2519
        %2521 = vdwg.mxu0
        %2522 = vmatpush.bf16.xpose.msra.mxu0 %v2456
        %2523 = vmatpush.bf16.xpose.msra.mxu0 %v2455
        %2524 = vmatpush.bf16.xpose.msra.mxu0 %v2454
        %2525 = vmatpush.bf16.xpose.msra.mxu0 %v2453
        %2526 = vmatpush.bf16.xpose.msra.mxu0 %v2452
        %2527 = vmatpush.bf16.xpose.msra.mxu0 %v2451
        %2528 = vmatpush.bf16.xpose.msra.mxu0 %v2450
        %2529 = vmatpush.bf16.xpose.msra.mxu0 %v2449
        %2530 = vmatmul.bf16.gmra.mxu0 %v2361
        %v2531 = vpop.f32.mrf.mxu0
        %v2532 = vadd.f32 0.0, %v2531
        %v2533 = vpop.f32.mrf.mxu0
        %v2534 = vadd.f32 0.0, %v2533
        %2535 = vmatmul.bf16.gmra.mxu0 %v2362
        %v2536 = vpop.f32.mrf.mxu0
        %v2537 = vadd.f32 0.0, %v2536
        %v2538 = vpop.f32.mrf.mxu0
        %v2539 = vadd.f32 0.0, %v2538
        %2540 = vmatmul.bf16.gmra.mxu0 %v2363
        %v2541 = vpop.f32.mrf.mxu0
        %v2542 = vadd.f32 0.0, %v2541
        %v2543 = vpop.f32.mrf.mxu0
        %v2544 = vadd.f32 0.0, %v2543
        %2545 = vmatmul.bf16.gmra.mxu0 %v2364
        %v2546 = vpop.f32.mrf.mxu0
        %v2547 = vadd.f32 0.0, %v2546
        %v2548 = vpop.f32.mrf.mxu0
        %v2549 = vadd.f32 0.0, %v2548
        %2550 = vmatmul.bf16.gmra.mxu0 %v2365
        %v2551 = vpop.f32.mrf.mxu0
        %v2552 = vadd.f32 0.0, %v2551
        %v2553 = vpop.f32.mrf.mxu0
        %v2554 = vadd.f32 0.0, %v2553
        %2555 = vmatmul.bf16.gmra.mxu0 %v2366
        %v2556 = vpop.f32.mrf.mxu0
        %v2557 = vadd.f32 0.0, %v2556
        %v2558 = vpop.f32.mrf.mxu0
        %v2559 = vadd.f32 0.0, %v2558
        %2560 = vmatmul.bf16.gmra.mxu0 %v2367
        %v2561 = vpop.f32.mrf.mxu0
        %v2562 = vadd.f32 0.0, %v2561
        %v2563 = vpop.f32.mrf.mxu0
        %v2564 = vadd.f32 0.0, %v2563
        %2565 = vmatmul.bf16.gmra.mxu0 %v2368
        %v2566 = vpop.f32.mrf.mxu0
        %v2567 = vadd.f32 0.0, %v2566
        %v2568 = vpop.f32.mrf.mxu0
        %v2569 = vadd.f32 0.0, %v2568
        %2570 = vdwg.mxu0
        %v2571 = vmax.f32 %v2483, %v2532
        %2572 = vmax.xlane.f32.xlu0 %v2571
        %v2573 = vpop.xlane.xlu0 %2572
        %v2574 = vmax.f32 %v2485, %v2534
        %2575 = vmax.xlane.f32.xlu0 %v2574
        %v2576 = vpop.xlane.xlu0 %2575
        %v2577 = vmax.f32 %v2488, %v2537
        %2578 = vmax.xlane.f32.xlu0 %v2577
        %v2579 = vpop.xlane.xlu0 %2578
        %v2580 = vmax.f32 %v2490, %v2539
        %2581 = vmax.xlane.f32.xlu0 %v2580
        %v2582 = vpop.xlane.xlu0 %2581
        %v2583 = vmax.f32 %v2493, %v2542
        %2584 = vmax.xlane.f32.xlu0 %v2583
        %v2585 = vpop.xlane.xlu0 %2584
        %v2586 = vmax.f32 %v2495, %v2544
        %2587 = vmax.xlane.f32.xlu0 %v2586
        %v2588 = vpop.xlane.xlu0 %2587
        %v2589 = vmax.f32 %v2498, %v2547
        %2590 = vmax.xlane.f32.xlu0 %v2589
        %v2591 = vpop.xlane.xlu0 %2590
        %v2592 = vmax.f32 %v2500, %v2549
        %2593 = vmax.xlane.f32.xlu0 %v2592
        %v2594 = vpop.xlane.xlu0 %2593
        %v2595 = vmax.f32 %v2503, %v2552
        %2596 = vmax.xlane.f32.xlu0 %v2595
        %v2597 = vpop.xlane.xlu0 %2596
        %v2598 = vmax.f32 %v2505, %v2554
        %2599 = vmax.xlane.f32.xlu0 %v2598
        %v2600 = vpop.xlane.xlu0 %2599
        %v2601 = vmax.f32 %v2508, %v2557
        %2602 = vmax.xlane.f32.xlu0 %v2601
        %v2603 = vpop.xlane.xlu0 %2602
        %v2604 = vmax.f32 %v2510, %v2559
        %2605 = vmax.xlane.f32.xlu0 %v2604
        %v2606 = vpop.xlane.xlu0 %2605
        %v2607 = vmax.f32 %v2513, %v2562
        %2608 = vmax.xlane.f32.xlu0 %v2607
        %v2609 = vpop.xlane.xlu0 %2608
        %v2610 = vmax.f32 %v2515, %v2564
        %2611 = vmax.xlane.f32.xlu0 %v2610
        %v2612 = vpop.xlane.xlu0 %2611
        %v2613 = vmax.f32 %v2518, %v2567
        %2614 = vmax.xlane.f32.xlu0 %v2613
        %v2615 = vpop.xlane.xlu0 %2614
        %v2616 = vmax.f32 %v2520, %v2569
        %2617 = vmax.xlane.f32.xlu0 %v2616
        %v2618 = vpop.xlane.xlu0 %2617
        %v2619 = vsub.f32 %v2483, %v2573
        %v2620 = vsub.f32 %v2532, %v2573
        %v2621 = vsub.f32 %v2485, %v2576
        %v2622 = vsub.f32 %v2534, %v2576
        %v2623 = vsub.f32 %v2488, %v2579
        %v2624 = vsub.f32 %v2537, %v2579
        %v2625 = vsub.f32 %v2490, %v2582
        %v2626 = vsub.f32 %v2539, %v2582
        %v2627 = vsub.f32 %v2493, %v2585
        %v2628 = vsub.f32 %v2542, %v2585
        %v2629 = vsub.f32 %v2495, %v2588
        %v2630 = vsub.f32 %v2544, %v2588
        %v2631 = vsub.f32 %v2498, %v2591
        %v2632 = vsub.f32 %v2547, %v2591
        %v2633 = vsub.f32 %v2500, %v2594
        %v2634 = vsub.f32 %v2549, %v2594
        %v2635 = vsub.f32 %v2503, %v2597
        %v2636 = vsub.f32 %v2552, %v2597
        %v2637 = vsub.f32 %v2505, %v2600
        %v2638 = vsub.f32 %v2554, %v2600
        %v2639 = vsub.f32 %v2508, %v2603
        %v2640 = vsub.f32 %v2557, %v2603
        %v2641 = vsub.f32 %v2510, %v2606
        %v2642 = vsub.f32 %v2559, %v2606
        %v2643 = vsub.f32 %v2513, %v2609
        %v2644 = vsub.f32 %v2562, %v2609
        %v2645 = vsub.f32 %v2515, %v2612
        %v2646 = vsub.f32 %v2564, %v2612
        %v2647 = vsub.f32 %v2518, %v2615
        %v2648 = vsub.f32 %v2567, %v2615
        %v2649 = vsub.f32 %v2520, %v2618
        %v2650 = vsub.f32 %v2569, %v2618
        %v2651 = vmul.f32 %v2619, 1.442695
        %v2652 = vpow.pop %v2651
        %v2653 = vmul.f32 %v2620, 1.442695
        %v2654 = vpow.pop %v2653
        %v2655 = vmul.f32 %v2621, 1.442695
        %v2656 = vpow.pop %v2655
        %v2657 = vmul.f32 %v2622, 1.442695
        %v2658 = vpow.pop %v2657
        %v2659 = vmul.f32 %v2623, 1.442695
        %v2660 = vpow.pop %v2659
        %v2661 = vmul.f32 %v2624, 1.442695
        %v2662 = vpow.pop %v2661
        %v2663 = vmul.f32 %v2625, 1.442695
        %v2664 = vpow.pop %v2663
        %v2665 = vmul.f32 %v2626, 1.442695
        %v2666 = vpow.pop %v2665
        %v2667 = vmul.f32 %v2627, 1.442695
        %v2668 = vpow.pop %v2667
        %v2669 = vmul.f32 %v2628, 1.442695
        %v2670 = vpow.pop %v2669
        %v2671 = vmul.f32 %v2629, 1.442695
        %v2672 = vpow.pop %v2671
        %v2673 = vmul.f32 %v2630, 1.442695
        %v2674 = vpow.pop %v2673
        %v2675 = vmul.f32 %v2631, 1.442695
        %v2676 = vpow.pop %v2675
        %v2677 = vmul.f32 %v2632, 1.442695
        %v2678 = vpow.pop %v2677
        %v2679 = vmul.f32 %v2633, 1.442695
        %v2680 = vpow.pop %v2679
        %v2681 = vmul.f32 %v2634, 1.442695
        %v2682 = vpow.pop %v2681
        %v2683 = vmul.f32 %v2635, 1.442695
        %v2684 = vpow.pop %v2683
        %v2685 = vmul.f32 %v2636, 1.442695
        %v2686 = vpow.pop %v2685
        %v2687 = vmul.f32 %v2637, 1.442695
        %v2688 = vpow.pop %v2687
        %v2689 = vmul.f32 %v2638, 1.442695
        %v2690 = vpow.pop %v2689
        %v2691 = vmul.f32 %v2639, 1.442695
        %v2692 = vpow.pop %v2691
        %v2693 = vmul.f32 %v2640, 1.442695
        %v2694 = vpow.pop %v2693
        %v2695 = vmul.f32 %v2641, 1.442695
        %v2696 = vpow.pop %v2695
        %v2697 = vmul.f32 %v2642, 1.442695
        %v2698 = vpow.pop %v2697
        %v2699 = vmul.f32 %v2643, 1.442695
        %v2700 = vpow.pop %v2699
        %v2701 = vmul.f32 %v2644, 1.442695
        %v2702 = vpow.pop %v2701
        %v2703 = vmul.f32 %v2645, 1.442695
        %v2704 = vpow.pop %v2703
        %v2705 = vmul.f32 %v2646, 1.442695
        %v2706 = vpow.pop %v2705
        %v2707 = vmul.f32 %v2647, 1.442695
        %v2708 = vpow.pop %v2707
        %v2709 = vmul.f32 %v2648, 1.442695
        %v2710 = vpow.pop %v2709
        %v2711 = vmul.f32 %v2649, 1.442695
        %v2712 = vpow.pop %v2711
        %v2713 = vmul.f32 %v2650, 1.442695
        %v2714 = vpow.pop %v2713
        %v2715 = vadd.f32 %v2652, %v2654
        %2716 = vadd.xlane.f32.xlu0 %v2715
        %v2717 = vpop.xlane.xlu0 %2716
        %v2718 = vadd.f32 %v2656, %v2658
        %2719 = vadd.xlane.f32.xlu0 %v2718
        %v2720 = vpop.xlane.xlu0 %2719
        %v2721 = vadd.f32 %v2660, %v2662
        %2722 = vadd.xlane.f32.xlu0 %v2721
        %v2723 = vpop.xlane.xlu0 %2722
        %v2724 = vadd.f32 %v2664, %v2666
        %2725 = vadd.xlane.f32.xlu0 %v2724
        %v2726 = vpop.xlane.xlu0 %2725
        %v2727 = vadd.f32 %v2668, %v2670
        %2728 = vadd.xlane.f32.xlu0 %v2727
        %v2729 = vpop.xlane.xlu0 %2728
        %v2730 = vadd.f32 %v2672, %v2674
        %2731 = vadd.xlane.f32.xlu0 %v2730
        %v2732 = vpop.xlane.xlu0 %2731
        %v2733 = vadd.f32 %v2676, %v2678
        %2734 = vadd.xlane.f32.xlu0 %v2733
        %v2735 = vpop.xlane.xlu0 %2734
        %v2736 = vadd.f32 %v2680, %v2682
        %2737 = vadd.xlane.f32.xlu0 %v2736
        %v2738 = vpop.xlane.xlu0 %2737
        %v2739 = vadd.f32 %v2684, %v2686
        %2740 = vadd.xlane.f32.xlu0 %v2739
        %v2741 = vpop.xlane.xlu0 %2740
        %v2742 = vadd.f32 %v2688, %v2690
        %2743 = vadd.xlane.f32.xlu0 %v2742
        %v2744 = vpop.xlane.xlu0 %2743
        %v2745 = vadd.f32 %v2692, %v2694
        %2746 = vadd.xlane.f32.xlu0 %v2745
        %v2747 = vpop.xlane.xlu0 %2746
        %v2748 = vadd.f32 %v2696, %v2698
        %2749 = vadd.xlane.f32.xlu0 %v2748
        %v2750 = vpop.xlane.xlu0 %2749
        %v2751 = vadd.f32 %v2700, %v2702
        %2752 = vadd.xlane.f32.xlu0 %v2751
        %v2753 = vpop.xlane.xlu0 %2752
        %v2754 = vadd.f32 %v2704, %v2706
        %2755 = vadd.xlane.f32.xlu0 %v2754
        %v2756 = vpop.xlane.xlu0 %2755
        %v2757 = vadd.f32 %v2708, %v2710
        %2758 = vadd.xlane.f32.xlu0 %v2757
        %v2759 = vpop.xlane.xlu0 %2758
        %v2760 = vadd.f32 %v2712, %v2714
        %2761 = vadd.xlane.f32.xlu0 %v2760
        %v2762 = vpop.xlane.xlu0 %2761
        %v2763 = vrcp.pop %v2717
        %v2764 = vmul.f32 %v2717, %v2763
        %v2765 = vsub.f32 1.0, %v2764
        %v2766 = vmul.f32 %v2763, %v2765
        %v2767 = vadd.f32 %v2763, %v2766
        %vm2768 = vweird.f32 %v2717
        %vm2769 = vweird.f32 %v2763
        %vm2770 = vmor %vm2768, %vm2769
        %v2771 = vsel %vm2770, %v2763, %v2767
        %v2772 = vand.u32 2147483647, %v2717
        %vm2773 = vcmp.eq.f32.partialorder %v2772, 8.507059e+37
        %v2774 = vand.u32 %v2717, 2147483648
        %v2775 = vor.u32 1.1754944e-38, %v2774
        %v2776 = vsel %vm2773, %v2775, %v2771
        %v2777 = vmul.f32 1.0, %v2776
        %v2778 = vrcp.pop %v2720
        %v2779 = vmul.f32 %v2720, %v2778
        %v2780 = vsub.f32 1.0, %v2779
        %v2781 = vmul.f32 %v2778, %v2780
        %v2782 = vadd.f32 %v2778, %v2781
        %vm2783 = vweird.f32 %v2720
        %vm2784 = vweird.f32 %v2778
        %vm2785 = vmor %vm2783, %vm2784
        %v2786 = vsel %vm2785, %v2778, %v2782
        %v2787 = vand.u32 2147483647, %v2720
        %vm2788 = vcmp.eq.f32.partialorder %v2787, 8.507059e+37
        %v2789 = vand.u32 %v2720, 2147483648
        %v2790 = vor.u32 1.1754944e-38, %v2789
        %v2791 = vsel %vm2788, %v2790, %v2786
        %v2792 = vmul.f32 1.0, %v2791
        %v2793 = vrcp.pop %v2723
        %v2794 = vmul.f32 %v2723, %v2793
        %v2795 = vsub.f32 1.0, %v2794
        %v2796 = vmul.f32 %v2793, %v2795
        %v2797 = vadd.f32 %v2793, %v2796
        %vm2798 = vweird.f32 %v2723
        %vm2799 = vweird.f32 %v2793
        %vm2800 = vmor %vm2798, %vm2799
        %v2801 = vsel %vm2800, %v2793, %v2797
        %v2802 = vand.u32 2147483647, %v2723
        %vm2803 = vcmp.eq.f32.partialorder %v2802, 8.507059e+37
        %v2804 = vand.u32 %v2723, 2147483648
        %v2805 = vor.u32 1.1754944e-38, %v2804
        %v2806 = vsel %vm2803, %v2805, %v2801
        %v2807 = vmul.f32 1.0, %v2806
        %v2808 = vrcp.pop %v2726
        %v2809 = vmul.f32 %v2726, %v2808
        %v2810 = vsub.f32 1.0, %v2809
        %v2811 = vmul.f32 %v2808, %v2810
        %v2812 = vadd.f32 %v2808, %v2811
        %vm2813 = vweird.f32 %v2726
        %vm2814 = vweird.f32 %v2808
        %vm2815 = vmor %vm2813, %vm2814
        %v2816 = vsel %vm2815, %v2808, %v2812
        %v2817 = vand.u32 2147483647, %v2726
        %vm2818 = vcmp.eq.f32.partialorder %v2817, 8.507059e+37
        %v2819 = vand.u32 %v2726, 2147483648
        %v2820 = vor.u32 1.1754944e-38, %v2819
        %v2821 = vsel %vm2818, %v2820, %v2816
        %v2822 = vmul.f32 1.0, %v2821
        %v2823 = vrcp.pop %v2729
        %v2824 = vmul.f32 %v2729, %v2823
        %v2825 = vsub.f32 1.0, %v2824
        %v2826 = vmul.f32 %v2823, %v2825
        %v2827 = vadd.f32 %v2823, %v2826
        %vm2828 = vweird.f32 %v2729
        %vm2829 = vweird.f32 %v2823
        %vm2830 = vmor %vm2828, %vm2829
        %v2831 = vsel %vm2830, %v2823, %v2827
        %v2832 = vand.u32 2147483647, %v2729
        %vm2833 = vcmp.eq.f32.partialorder %v2832, 8.507059e+37
        %v2834 = vand.u32 %v2729, 2147483648
        %v2835 = vor.u32 1.1754944e-38, %v2834
        %v2836 = vsel %vm2833, %v2835, %v2831
        %v2837 = vmul.f32 1.0, %v2836
        %v2838 = vrcp.pop %v2732
        %v2839 = vmul.f32 %v2732, %v2838
        %v2840 = vsub.f32 1.0, %v2839
        %v2841 = vmul.f32 %v2838, %v2840
        %v2842 = vadd.f32 %v2838, %v2841
        %vm2843 = vweird.f32 %v2732
        %vm2844 = vweird.f32 %v2838
        %vm2845 = vmor %vm2843, %vm2844
        %v2846 = vsel %vm2845, %v2838, %v2842
        %v2847 = vand.u32 2147483647, %v2732
        %vm2848 = vcmp.eq.f32.partialorder %v2847, 8.507059e+37
        %v2849 = vand.u32 %v2732, 2147483648
        %v2850 = vor.u32 1.1754944e-38, %v2849
        %v2851 = vsel %vm2848, %v2850, %v2846
        %v2852 = vmul.f32 1.0, %v2851
        %v2853 = vrcp.pop %v2735
        %v2854 = vmul.f32 %v2735, %v2853
        %v2855 = vsub.f32 1.0, %v2854
        %v2856 = vmul.f32 %v2853, %v2855
        %v2857 = vadd.f32 %v2853, %v2856
        %vm2858 = vweird.f32 %v2735
        %vm2859 = vweird.f32 %v2853
        %vm2860 = vmor %vm2858, %vm2859
        %v2861 = vsel %vm2860, %v2853, %v2857
        %v2862 = vand.u32 2147483647, %v2735
        %vm2863 = vcmp.eq.f32.partialorder %v2862, 8.507059e+37
        %v2864 = vand.u32 %v2735, 2147483648
        %v2865 = vor.u32 1.1754944e-38, %v2864
        %v2866 = vsel %vm2863, %v2865, %v2861
        %v2867 = vmul.f32 1.0, %v2866
        %v2868 = vrcp.pop %v2738
        %v2869 = vmul.f32 %v2738, %v2868
        %v2870 = vsub.f32 1.0, %v2869
        %v2871 = vmul.f32 %v2868, %v2870
        %v2872 = vadd.f32 %v2868, %v2871
        %vm2873 = vweird.f32 %v2738
        %vm2874 = vweird.f32 %v2868
        %vm2875 = vmor %vm2873, %vm2874
        %v2876 = vsel %vm2875, %v2868, %v2872
        %v2877 = vand.u32 2147483647, %v2738
        %vm2878 = vcmp.eq.f32.partialorder %v2877, 8.507059e+37
        %v2879 = vand.u32 %v2738, 2147483648
        %v2880 = vor.u32 1.1754944e-38, %v2879
        %v2881 = vsel %vm2878, %v2880, %v2876
        %v2882 = vmul.f32 1.0, %v2881
        %v2883 = vrcp.pop %v2741
        %v2884 = vmul.f32 %v2741, %v2883
        %v2885 = vsub.f32 1.0, %v2884
        %v2886 = vmul.f32 %v2883, %v2885
        %v2887 = vadd.f32 %v2883, %v2886
        %vm2888 = vweird.f32 %v2741
        %vm2889 = vweird.f32 %v2883
        %vm2890 = vmor %vm2888, %vm2889
        %v2891 = vsel %vm2890, %v2883, %v2887
        %v2892 = vand.u32 2147483647, %v2741
        %vm2893 = vcmp.eq.f32.partialorder %v2892, 8.507059e+37
        %v2894 = vand.u32 %v2741, 2147483648
        %v2895 = vor.u32 1.1754944e-38, %v2894
        %v2896 = vsel %vm2893, %v2895, %v2891
        %v2897 = vmul.f32 1.0, %v2896
        %v2898 = vrcp.pop %v2744
        %v2899 = vmul.f32 %v2744, %v2898
        %v2900 = vsub.f32 1.0, %v2899
        %v2901 = vmul.f32 %v2898, %v2900
        %v2902 = vadd.f32 %v2898, %v2901
        %vm2903 = vweird.f32 %v2744
        %vm2904 = vweird.f32 %v2898
        %vm2905 = vmor %vm2903, %vm2904
        %v2906 = vsel %vm2905, %v2898, %v2902
        %v2907 = vand.u32 2147483647, %v2744
        %vm2908 = vcmp.eq.f32.partialorder %v2907, 8.507059e+37
        %v2909 = vand.u32 %v2744, 2147483648
        %v2910 = vor.u32 1.1754944e-38, %v2909
        %v2911 = vsel %vm2908, %v2910, %v2906
        %v2912 = vmul.f32 1.0, %v2911
        %v2913 = vrcp.pop %v2747
        %v2914 = vmul.f32 %v2747, %v2913
        %v2915 = vsub.f32 1.0, %v2914
        %v2916 = vmul.f32 %v2913, %v2915
        %v2917 = vadd.f32 %v2913, %v2916
        %vm2918 = vweird.f32 %v2747
        %vm2919 = vweird.f32 %v2913
        %vm2920 = vmor %vm2918, %vm2919
        %v2921 = vsel %vm2920, %v2913, %v2917
        %v2922 = vand.u32 2147483647, %v2747
        %vm2923 = vcmp.eq.f32.partialorder %v2922, 8.507059e+37
        %v2924 = vand.u32 %v2747, 2147483648
        %v2925 = vor.u32 1.1754944e-38, %v2924
        %v2926 = vsel %vm2923, %v2925, %v2921
        %v2927 = vmul.f32 1.0, %v2926
        %v2928 = vrcp.pop %v2750
        %v2929 = vmul.f32 %v2750, %v2928
        %v2930 = vsub.f32 1.0, %v2929
        %v2931 = vmul.f32 %v2928, %v2930
        %v2932 = vadd.f32 %v2928, %v2931
        %vm2933 = vweird.f32 %v2750
        %vm2934 = vweird.f32 %v2928
        %vm2935 = vmor %vm2933, %vm2934
        %v2936 = vsel %vm2935, %v2928, %v2932
        %v2937 = vand.u32 2147483647, %v2750
        %vm2938 = vcmp.eq.f32.partialorder %v2937, 8.507059e+37
        %v2939 = vand.u32 %v2750, 2147483648
        %v2940 = vor.u32 1.1754944e-38, %v2939
        %v2941 = vsel %vm2938, %v2940, %v2936
        %v2942 = vmul.f32 1.0, %v2941
        %v2943 = vrcp.pop %v2753
        %v2944 = vmul.f32 %v2753, %v2943
        %v2945 = vsub.f32 1.0, %v2944
        %v2946 = vmul.f32 %v2943, %v2945
        %v2947 = vadd.f32 %v2943, %v2946
        %vm2948 = vweird.f32 %v2753
        %vm2949 = vweird.f32 %v2943
        %vm2950 = vmor %vm2948, %vm2949
        %v2951 = vsel %vm2950, %v2943, %v2947
        %v2952 = vand.u32 2147483647, %v2753
        %vm2953 = vcmp.eq.f32.partialorder %v2952, 8.507059e+37
        %v2954 = vand.u32 %v2753, 2147483648
        %v2955 = vor.u32 1.1754944e-38, %v2954
        %v2956 = vsel %vm2953, %v2955, %v2951
        %v2957 = vmul.f32 1.0, %v2956
        %v2958 = vrcp.pop %v2756
        %v2959 = vmul.f32 %v2756, %v2958
        %v2960 = vsub.f32 1.0, %v2959
        %v2961 = vmul.f32 %v2958, %v2960
        %v2962 = vadd.f32 %v2958, %v2961
        %vm2963 = vweird.f32 %v2756
        %vm2964 = vweird.f32 %v2958
        %vm2965 = vmor %vm2963, %vm2964
        %v2966 = vsel %vm2965, %v2958, %v2962
        %v2967 = vand.u32 2147483647, %v2756
        %vm2968 = vcmp.eq.f32.partialorder %v2967, 8.507059e+37
        %v2969 = vand.u32 %v2756, 2147483648
        %v2970 = vor.u32 1.1754944e-38, %v2969
        %v2971 = vsel %vm2968, %v2970, %v2966
        %v2972 = vmul.f32 1.0, %v2971
        %v2973 = vrcp.pop %v2759
        %v2974 = vmul.f32 %v2759, %v2973
        %v2975 = vsub.f32 1.0, %v2974
        %v2976 = vmul.f32 %v2973, %v2975
        %v2977 = vadd.f32 %v2973, %v2976
        %vm2978 = vweird.f32 %v2759
        %vm2979 = vweird.f32 %v2973
        %vm2980 = vmor %vm2978, %vm2979
        %v2981 = vsel %vm2980, %v2973, %v2977
        %v2982 = vand.u32 2147483647, %v2759
        %vm2983 = vcmp.eq.f32.partialorder %v2982, 8.507059e+37
        %v2984 = vand.u32 %v2759, 2147483648
        %v2985 = vor.u32 1.1754944e-38, %v2984
        %v2986 = vsel %vm2983, %v2985, %v2981
        %v2987 = vmul.f32 1.0, %v2986
        %v2988 = vrcp.pop %v2762
        %v2989 = vmul.f32 %v2762, %v2988
        %v2990 = vsub.f32 1.0, %v2989
        %v2991 = vmul.f32 %v2988, %v2990
        %v2992 = vadd.f32 %v2988, %v2991
        %vm2993 = vweird.f32 %v2762
        %vm2994 = vweird.f32 %v2988
        %vm2995 = vmor %vm2993, %vm2994
        %v2996 = vsel %vm2995, %v2988, %v2992
        %v2997 = vand.u32 2147483647, %v2762
        %vm2998 = vcmp.eq.f32.partialorder %v2997, 8.507059e+37
        %v2999 = vand.u32 %v2762, 2147483648
        %v3000 = vor.u32 1.1754944e-38, %v2999
        %v3001 = vsel %vm2998, %v3000, %v2996
        %v3002 = vmul.f32 1.0, %v3001
        %v3003 = vmul.f32 %v2652, %v2777
        %v3004 = vmul.f32 %v2654, %v2777
        %v3005 = vmul.f32 %v2656, %v2792
        %v3006 = vmul.f32 %v2658, %v2792
        %v3007 = vmul.f32 %v2660, %v2807
        %v3008 = vmul.f32 %v2662, %v2807
        %v3009 = vmul.f32 %v2664, %v2822
        %v3010 = vmul.f32 %v2666, %v2822
        %v3011 = vmul.f32 %v2668, %v2837
        %v3012 = vmul.f32 %v2670, %v2837
        %v3013 = vmul.f32 %v2672, %v2852
        %v3014 = vmul.f32 %v2674, %v2852
        %v3015 = vmul.f32 %v2676, %v2867
        %v3016 = vmul.f32 %v2678, %v2867
        %v3017 = vmul.f32 %v2680, %v2882
        %v3018 = vmul.f32 %v2682, %v2882
        %v3019 = vmul.f32 %v2684, %v2897
        %v3020 = vmul.f32 %v2686, %v2897
        %v3021 = vmul.f32 %v2688, %v2912
        %v3022 = vmul.f32 %v2690, %v2912
        %v3023 = vmul.f32 %v2692, %v2927
        %v3024 = vmul.f32 %v2694, %v2927
        %v3025 = vmul.f32 %v2696, %v2942
        %v3026 = vmul.f32 %v2698, %v2942
        %v3027 = vmul.f32 %v2700, %v2957
        %v3028 = vmul.f32 %v2702, %v2957
        %v3029 = vmul.f32 %v2704, %v2972
        %v3030 = vmul.f32 %v2706, %v2972
        %v3031 = vmul.f32 %v2708, %v2987
        %v3032 = vmul.f32 %v2710, %v2987
        %v3033 = vmul.f32 %v2712, %v3002
        %v3034 = vmul.f32 %v2714, %v3002
        %3035 = vst [vmem:[%s304] sm:$0xff] %v3003
        %3036 = vst [vmem:[%s304 + $0x8] sm:$0xff] %v3004
        %3037 = vst [vmem:[%s304 + $0x10] sm:$0xff] %v3005
        %3038 = vst [vmem:[%s304 + $0x18] sm:$0xff] %v3006
        %3039 = vst [vmem:[%s304 + $0x20] sm:$0xff] %v3007
        %3040 = vst [vmem:[%s304 + $0x28] sm:$0xff] %v3008
        %3041 = vst [vmem:[%s304 + $0x30] sm:$0xff] %v3009
        %3042 = vst [vmem:[%s304 + $0x38] sm:$0xff] %v3010
        %3043 = vst [vmem:[%s304 + $0x40] sm:$0xff] %v3011
        %3044 = vst [vmem:[%s304 + $0x48] sm:$0xff] %v3012
        %3045 = vst [vmem:[%s304 + $0x50] sm:$0xff] %v3013
        %3046 = vst [vmem:[%s304 + $0x58] sm:$0xff] %v3014
        %3047 = vst [vmem:[%s304 + $0x60] sm:$0xff] %v3015
        %3048 = vst [vmem:[%s304 + $0x68] sm:$0xff] %v3016
        %3049 = vst [vmem:[%s304 + $0x70] sm:$0xff] %v3017
        %3050 = vst [vmem:[%s304 + $0x78] sm:$0xff] %v3018
        %3051 = vst [vmem:[%s304 + $0x80] sm:$0xff] %v3019
        %3052 = vst [vmem:[%s304 + $0x88] sm:$0xff] %v3020
        %3053 = vst [vmem:[%s304 + $0x90] sm:$0xff] %v3021
        %3054 = vst [vmem:[%s304 + $0x98] sm:$0xff] %v3022
        %3055 = vst [vmem:[%s304 + $0xa0] sm:$0xff] %v3023
        %3056 = vst [vmem:[%s304 + $0xa8] sm:$0xff] %v3024
        %3057 = vst [vmem:[%s304 + $0xb0] sm:$0xff] %v3025
        %3058 = vst [vmem:[%s304 + $0xb8] sm:$0xff] %v3026
        %3059 = vst [vmem:[%s304 + $0xc0] sm:$0xff] %v3027
        %3060 = vst [vmem:[%s304 + $0xc8] sm:$0xff] %v3028
        %3061 = vst [vmem:[%s304 + $0xd0] sm:$0xff] %v3029
        %3062 = vst [vmem:[%s304 + $0xd8] sm:$0xff] %v3030
        %3063 = vst [vmem:[%s304 + $0xe0] sm:$0xff] %v3031
        %3064 = vst [vmem:[%s304 + $0xe8] sm:$0xff] %v3032
        %3065 = vst [vmem:[%s304 + $0xf0] sm:$0xff] %v3033
        %3066 = vst [vmem:[%s304 + $0xf8] sm:$0xff] %v3034
        %v3067 = vpack.c.bf16 %v3005, %v3003
        %v3068 = vpack.c.bf16 %v3006, %v3004
        %v3069 = vpack.c.bf16 %v3009, %v3007
        %v3070 = vpack.c.bf16 %v3010, %v3008
        %v3071 = vpack.c.bf16 %v3013, %v3011
        %v3072 = vpack.c.bf16 %v3014, %v3012
        %v3073 = vpack.c.bf16 %v3017, %v3015
        %v3074 = vpack.c.bf16 %v3018, %v3016
        %v3075 = vpack.c.bf16 %v3021, %v3019
        %v3076 = vpack.c.bf16 %v3022, %v3020
        %v3077 = vpack.c.bf16 %v3025, %v3023
        %v3078 = vpack.c.bf16 %v3026, %v3024
        %v3079 = vpack.c.bf16 %v3029, %v3027
        %v3080 = vpack.c.bf16 %v3030, %v3028
        %v3081 = vpack.c.bf16 %v3033, %v3031
        %v3082 = vpack.c.bf16 %v3034, %v3032
        %v3115 = vunpack.c.l.b16 %v2297
        %v3116 = vunpack.c.l.b16 %v2298
        %v3117 = vunpack.c.l.b16 %v2299
        %v3118 = vunpack.c.l.b16 %v2300
        %v3119 = vunpack.c.l.b16 %v2301
        %v3120 = vunpack.c.l.b16 %v2302
        %v3121 = vunpack.c.l.b16 %v2303
        %v3122 = vunpack.c.l.b16 %v2304
        %v3123 = vunpack.c.l.b16 %v2305
        %v3124 = vunpack.c.l.b16 %v2306
        %v3125 = vunpack.c.l.b16 %v2307
        %v3126 = vunpack.c.l.b16 %v2308
        %v3127 = vunpack.c.l.b16 %v2309
        %v3128 = vunpack.c.l.b16 %v2310
        %v3129 = vunpack.c.l.b16 %v2311
        %v3130 = vunpack.c.l.b16 %v2312
        %v3131 = vunpack.c.l.b16 %v2313
        %v3132 = vunpack.c.l.b16 %v2314
        %v3133 = vunpack.c.l.b16 %v2315
        %v3134 = vunpack.c.l.b16 %v2316
        %v3135 = vunpack.c.l.b16 %v2317
        %v3136 = vunpack.c.l.b16 %v2318
        %v3137 = vunpack.c.l.b16 %v2319
        %v3138 = vunpack.c.l.b16 %v2320
        %v3139 = vunpack.c.l.b16 %v2321
        %v3140 = vunpack.c.l.b16 %v2322
        %v3141 = vunpack.c.l.b16 %v2323
        %v3142 = vunpack.c.l.b16 %v2324
        %v3143 = vunpack.c.l.b16 %v2325
        %v3144 = vunpack.c.l.b16 %v2326
        %v3145 = vunpack.c.l.b16 %v2327
        %v3146 = vunpack.c.l.b16 %v2328
        %v3147 = vpack.c.b16 %v3116, %v3115
        %v3148 = vpack.c.b16 %v3118, %v3117
        %v3149 = vpack.c.b16 %v3120, %v3119
        %v3150 = vpack.c.b16 %v3122, %v3121
        %v3151 = vpack.c.b16 %v3124, %v3123
        %v3152 = vpack.c.b16 %v3126, %v3125
        %v3153 = vpack.c.b16 %v3128, %v3127
        %v3154 = vpack.c.b16 %v3130, %v3129
        %v3155 = vpack.c.b16 %v3132, %v3131
        %v3156 = vpack.c.b16 %v3134, %v3133
        %v3157 = vpack.c.b16 %v3136, %v3135
        %v3158 = vpack.c.b16 %v3138, %v3137
        %v3159 = vpack.c.b16 %v3140, %v3139
        %v3160 = vpack.c.b16 %v3142, %v3141
        %v3161 = vpack.c.b16 %v3144, %v3143
        %v3162 = vpack.c.b16 %v3146, %v3145
        %3179 = vmatpush.bf16.msra.mxu0 %v3154
        %3180 = vmatpush.bf16.msra.mxu0 %v3153
        %3181 = vmatpush.bf16.msra.mxu0 %v3152
        %3182 = vmatpush.bf16.msra.mxu0 %v3151
        %3183 = vmatpush.bf16.msra.mxu0 %v3150
        %3184 = vmatpush.bf16.msra.mxu0 %v3149
        %3185 = vmatpush.bf16.msra.mxu0 %v3148
        %3186 = vmatpush.bf16.msra.mxu0 %v3147
        %3187 = vmatmul.bf16.gmra.mxu0 %v3067
        %v3188 = vpop.f32.mrf.mxu0
        %v3189 = vadd.f32 0.0, %v3188
        %v3190 = vpop.f32.mrf.mxu0
        %v3191 = vadd.f32 0.0, %v3190
        %3192 = vmatmul.bf16.gmra.mxu0 %v3069
        %v3193 = vpop.f32.mrf.mxu0
        %v3194 = vadd.f32 0.0, %v3193
        %v3195 = vpop.f32.mrf.mxu0
        %v3196 = vadd.f32 0.0, %v3195
        %3197 = vmatmul.bf16.gmra.mxu0 %v3071
        %v3198 = vpop.f32.mrf.mxu0
        %v3199 = vadd.f32 0.0, %v3198
        %v3200 = vpop.f32.mrf.mxu0
        %v3201 = vadd.f32 0.0, %v3200
        %3202 = vmatmul.bf16.gmra.mxu0 %v3073
        %v3203 = vpop.f32.mrf.mxu0
        %v3204 = vadd.f32 0.0, %v3203
        %v3205 = vpop.f32.mrf.mxu0
        %v3206 = vadd.f32 0.0, %v3205
        %3207 = vmatmul.bf16.gmra.mxu0 %v3075
        %v3208 = vpop.f32.mrf.mxu0
        %v3209 = vadd.f32 0.0, %v3208
        %v3210 = vpop.f32.mrf.mxu0
        %v3211 = vadd.f32 0.0, %v3210
        %3212 = vmatmul.bf16.gmra.mxu0 %v3077
        %v3213 = vpop.f32.mrf.mxu0
        %v3214 = vadd.f32 0.0, %v3213
        %v3215 = vpop.f32.mrf.mxu0
        %v3216 = vadd.f32 0.0, %v3215
        %3217 = vmatmul.bf16.gmra.mxu0 %v3079
        %v3218 = vpop.f32.mrf.mxu0
        %v3219 = vadd.f32 0.0, %v3218
        %v3220 = vpop.f32.mrf.mxu0
        %v3221 = vadd.f32 0.0, %v3220
        %3222 = vmatmul.bf16.gmra.mxu0 %v3081
        %v3223 = vpop.f32.mrf.mxu0
        %v3224 = vadd.f32 0.0, %v3223
        %v3225 = vpop.f32.mrf.mxu0
        %v3226 = vadd.f32 0.0, %v3225
        %3227 = vdwg.mxu0
        %3228 = vmatpush.bf16.msra.mxu0 %v3162
        %3229 = vmatpush.bf16.msra.mxu0 %v3161
        %3230 = vmatpush.bf16.msra.mxu0 %v3160
        %3231 = vmatpush.bf16.msra.mxu0 %v3159
        %3232 = vmatpush.bf16.msra.mxu0 %v3158
        %3233 = vmatpush.bf16.msra.mxu0 %v3157
        %3234 = vmatpush.bf16.msra.mxu0 %v3156
        %3235 = vmatpush.bf16.msra.mxu0 %v3155
        %3236 = vmatmul.bf16.gmra.mxu0 %v3068
        %v3237 = vpop.f32.mrf.mxu0
        %v3238 = vadd.f32 %v3189, %v3237
        %v3239 = vpop.f32.mrf.mxu0
        %v3240 = vadd.f32 %v3191, %v3239
        %3241 = vmatmul.bf16.gmra.mxu0 %v3070
        %v3242 = vpop.f32.mrf.mxu0
        %v3243 = vadd.f32 %v3194, %v3242
        %v3244 = vpop.f32.mrf.mxu0
        %v3245 = vadd.f32 %v3196, %v3244
        %3246 = vmatmul.bf16.gmra.mxu0 %v3072
        %v3247 = vpop.f32.mrf.mxu0
        %v3248 = vadd.f32 %v3199, %v3247
        %v3249 = vpop.f32.mrf.mxu0
        %v3250 = vadd.f32 %v3201, %v3249
        %3251 = vmatmul.bf16.gmra.mxu0 %v3074
        %v3252 = vpop.f32.mrf.mxu0
        %v3253 = vadd.f32 %v3204, %v3252
        %v3254 = vpop.f32.mrf.mxu0
        %v3255 = vadd.f32 %v3206, %v3254
        %3256 = vmatmul.bf16.gmra.mxu0 %v3076
        %v3257 = vpop.f32.mrf.mxu0
        %v3258 = vadd.f32 %v3209, %v3257
        %v3259 = vpop.f32.mrf.mxu0
        %v3260 = vadd.f32 %v3211, %v3259
        %3261 = vmatmul.bf16.gmra.mxu0 %v3078
        %v3262 = vpop.f32.mrf.mxu0
        %v3263 = vadd.f32 %v3214, %v3262
        %v3264 = vpop.f32.mrf.mxu0
        %v3265 = vadd.f32 %v3216, %v3264
        %3266 = vmatmul.bf16.gmra.mxu0 %v3080
        %v3267 = vpop.f32.mrf.mxu0
        %v3268 = vadd.f32 %v3219, %v3267
        %v3269 = vpop.f32.mrf.mxu0
        %v3270 = vadd.f32 %v3221, %v3269
        %3271 = vmatmul.bf16.gmra.mxu0 %v3082
        %v3272 = vpop.f32.mrf.mxu0
        %v3273 = vadd.f32 %v3224, %v3272
        %v3274 = vpop.f32.mrf.mxu0
        %v3275 = vadd.f32 %v3226, %v3274
        %3276 = vdwg.mxu0
        %v3277 = vpack.c.bf16 %v3238, %v3238
        %v3278 = vpack.c.bf16 %v3240, %v3240
        %v3279 = vpack.c.bf16 %v3243, %v3243
        %v3280 = vpack.c.bf16 %v3245, %v3245
        %v3281 = vpack.c.bf16 %v3248, %v3248
        %v3282 = vpack.c.bf16 %v3250, %v3250
        %v3283 = vpack.c.bf16 %v3253, %v3253
        %v3284 = vpack.c.bf16 %v3255, %v3255
        %v3285 = vpack.c.bf16 %v3258, %v3258
        %v3286 = vpack.c.bf16 %v3260, %v3260
        %v3287 = vpack.c.bf16 %v3263, %v3263
        %v3288 = vpack.c.bf16 %v3265, %v3265
        %v3289 = vpack.c.bf16 %v3268, %v3268
        %v3290 = vpack.c.bf16 %v3270, %v3270
        %v3291 = vpack.c.bf16 %v3273, %v3273
        %v3292 = vpack.c.bf16 %v3275, %v3275
        %3293 = vst [vmem:[#allocation3] sm:$0xf] %v3277
        %3294 = vst [vmem:[#allocation3 + $0x8] sm:$0xf] %v3278
        %3295 = vst [vmem:[#allocation3 + $0x10] sm:$0xf] %v3279
        %3296 = vst [vmem:[#allocation3 + $0x18] sm:$0xf] %v3280
        %3297 = vst [vmem:[#allocation3 + $0x20] sm:$0xf] %v3281
        %3298 = vst [vmem:[#allocation3 + $0x28] sm:$0xf] %v3282
        %3299 = vst [vmem:[#allocation3 + $0x30] sm:$0xf] %v3283
        %3300 = vst [vmem:[#allocation3 + $0x38] sm:$0xf] %v3284
        %3301 = vst [vmem:[#allocation3 + $0x40] sm:$0xf] %v3285
        %3302 = vst [vmem:[#allocation3 + $0x48] sm:$0xf] %v3286
        %3303 = vst [vmem:[#allocation3 + $0x50] sm:$0xf] %v3287
        %3304 = vst [vmem:[#allocation3 + $0x58] sm:$0xf] %v3288
        %3305 = vst [vmem:[#allocation3 + $0x60] sm:$0xf] %v3289
        %3306 = vst [vmem:[#allocation3 + $0x68] sm:$0xf] %v3290
        %3307 = vst [vmem:[#allocation3 + $0x70] sm:$0xf] %v3291
        %3308 = vst [vmem:[#allocation3 + $0x78] sm:$0xf] %v3292
        %v3309 = vld [vmem:[%s2248 + $0x4] sm:$0xf]
        %v3310 = vld [vmem:[%s2248 + $0x1c] sm:$0xf]
        %v3311 = vld [vmem:[%s2248 + $0x34] sm:$0xf]
        %v3312 = vld [vmem:[%s2248 + $0x4c] sm:$0xf]
        %v3313 = vld [vmem:[%s2248 + $0x64] sm:$0xf]
        %v3314 = vld [vmem:[%s2248 + $0x7c] sm:$0xf]
        %v3315 = vld [vmem:[%s2248 + $0x94] sm:$0xf]
        %v3316 = vld [vmem:[%s2248 + $0xac] sm:$0xf]
        %v3317 = vld [vmem:[%s2248 + $0xc4] sm:$0xf]
        %v3318 = vld [vmem:[%s2248 + $0xdc] sm:$0xf]
        %v3319 = vld [vmem:[%s2248 + $0xf4] sm:$0xf]
        %v3320 = vld [vmem:[%s2248 + $0x10c] sm:$0xf]
        %v3321 = vld [vmem:[%s2248 + $0x124] sm:$0xf]
        %v3322 = vld [vmem:[%s2248 + $0x13c] sm:$0xf]
        %v3323 = vld [vmem:[%s2248 + $0x154] sm:$0xf]
        %v3324 = vld [vmem:[%s2248 + $0x16c] sm:$0xf]
        %v3325 = vld [vmem:[#allocation2 + $0xc] sm:$0xf]
        %v3326 = vld [vmem:[#allocation2 + $0x24] sm:$0xf]
        %v3327 = vld [vmem:[#allocation2 + $0x3c] sm:$0xf]
        %v3328 = vld [vmem:[#allocation2 + $0x54] sm:$0xf]
        %v3329 = vld [vmem:[#allocation2 + $0x6c] sm:$0xf]
        %v3330 = vld [vmem:[#allocation2 + $0x84] sm:$0xf]
        %v3331 = vld [vmem:[#allocation2 + $0x9c] sm:$0xf]
        %v3332 = vld [vmem:[#allocation2 + $0xb4] sm:$0xf]
        %v3333 = vld [vmem:[#allocation2 + $0xcc] sm:$0xf]
        %v3334 = vld [vmem:[#allocation2 + $0xe4] sm:$0xf]
        %v3335 = vld [vmem:[#allocation2 + $0xfc] sm:$0xf]
        %v3336 = vld [vmem:[#allocation2 + $0x114] sm:$0xf]
        %v3337 = vld [vmem:[#allocation2 + $0x12c] sm:$0xf]
        %v3338 = vld [vmem:[#allocation2 + $0x144] sm:$0xf]
        %v3339 = vld [vmem:[#allocation2 + $0x15c] sm:$0xf]
        %v3340 = vld [vmem:[#allocation2 + $0x174] sm:$0xf]
        %v3341 = vld [vmem:[#allocation2 + $0x18c] sm:$0xf]
        %v3342 = vld [vmem:[#allocation2 + $0x1a4] sm:$0xf]
        %v3343 = vld [vmem:[#allocation2 + $0x1bc] sm:$0xf]
        %v3344 = vld [vmem:[#allocation2 + $0x1d4] sm:$0xf]
        %v3345 = vld [vmem:[#allocation2 + $0x1ec] sm:$0xf]
        %v3346 = vld [vmem:[#allocation2 + $0x204] sm:$0xf]
        %v3347 = vld [vmem:[#allocation2 + $0x21c] sm:$0xf]
        %v3348 = vld [vmem:[#allocation2 + $0x234] sm:$0xf]
        %v3349 = vld [vmem:[#allocation2 + $0x24c] sm:$0xf]
        %v3350 = vld [vmem:[#allocation2 + $0x264] sm:$0xf]
        %v3351 = vld [vmem:[#allocation2 + $0x27c] sm:$0xf]
        %v3352 = vld [vmem:[#allocation2 + $0x294] sm:$0xf]
        %v3353 = vld [vmem:[#allocation2 + $0x2ac] sm:$0xf]
        %v3354 = vld [vmem:[#allocation2 + $0x2c4] sm:$0xf]
        %v3355 = vld [vmem:[#allocation2 + $0x2dc] sm:$0xf]
        %v3356 = vld [vmem:[#allocation2 + $0x2f4] sm:$0xf]
        %v3357 = vld [vmem:[#allocation2 + $0x14] sm:$0xf]
        %v3358 = vld [vmem:[#allocation2 + $0x2c] sm:$0xf]
        %v3359 = vld [vmem:[#allocation2 + $0x44] sm:$0xf]
        %v3360 = vld [vmem:[#allocation2 + $0x5c] sm:$0xf]
        %v3361 = vld [vmem:[#allocation2 + $0x74] sm:$0xf]
        %v3362 = vld [vmem:[#allocation2 + $0x8c] sm:$0xf]
        %v3363 = vld [vmem:[#allocation2 + $0xa4] sm:$0xf]
        %v3364 = vld [vmem:[#allocation2 + $0xbc] sm:$0xf]
        %v3365 = vld [vmem:[#allocation2 + $0xd4] sm:$0xf]
        %v3366 = vld [vmem:[#allocation2 + $0xec] sm:$0xf]
        %v3367 = vld [vmem:[#allocation2 + $0x104] sm:$0xf]
        %v3368 = vld [vmem:[#allocation2 + $0x11c] sm:$0xf]
        %v3369 = vld [vmem:[#allocation2 + $0x134] sm:$0xf]
        %v3370 = vld [vmem:[#allocation2 + $0x14c] sm:$0xf]
        %v3371 = vld [vmem:[#allocation2 + $0x164] sm:$0xf]
        %v3372 = vld [vmem:[#allocation2 + $0x17c] sm:$0xf]
        %v3373 = vld [vmem:[#allocation2 + $0x194] sm:$0xf]
        %v3374 = vld [vmem:[#allocation2 + $0x1ac] sm:$0xf]
        %v3375 = vld [vmem:[#allocation2 + $0x1c4] sm:$0xf]
        %v3376 = vld [vmem:[#allocation2 + $0x1dc] sm:$0xf]
        %v3377 = vld [vmem:[#allocation2 + $0x1f4] sm:$0xf]
        %v3378 = vld [vmem:[#allocation2 + $0x20c] sm:$0xf]
        %v3379 = vld [vmem:[#allocation2 + $0x224] sm:$0xf]
        %v3380 = vld [vmem:[#allocation2 + $0x23c] sm:$0xf]
        %v3381 = vld [vmem:[#allocation2 + $0x254] sm:$0xf]
        %v3382 = vld [vmem:[#allocation2 + $0x26c] sm:$0xf]
        %v3383 = vld [vmem:[#allocation2 + $0x284] sm:$0xf]
        %v3384 = vld [vmem:[#allocation2 + $0x29c] sm:$0xf]
        %v3385 = vld [vmem:[#allocation2 + $0x2b4] sm:$0xf]
        %v3386 = vld [vmem:[#allocation2 + $0x2cc] sm:$0xf]
        %v3387 = vld [vmem:[#allocation2 + $0x2e4] sm:$0xf]
        %v3388 = vld [vmem:[#allocation2 + $0x2fc] sm:$0xf]
        %v3405 = vunpack.c.l.b16 %v3309
        %v3406 = vunpack.c.l.b16 %v3310
        %v3407 = vunpack.c.l.b16 %v3311
        %v3408 = vunpack.c.l.b16 %v3312
        %v3409 = vunpack.c.l.b16 %v3313
        %v3410 = vunpack.c.l.b16 %v3314
        %v3411 = vunpack.c.l.b16 %v3315
        %v3412 = vunpack.c.l.b16 %v3316
        %v3413 = vunpack.c.l.b16 %v3317
        %v3414 = vunpack.c.l.b16 %v3318
        %v3415 = vunpack.c.l.b16 %v3319
        %v3416 = vunpack.c.l.b16 %v3320
        %v3417 = vunpack.c.l.b16 %v3321
        %v3418 = vunpack.c.l.b16 %v3322
        %v3419 = vunpack.c.l.b16 %v3323
        %v3420 = vunpack.c.l.b16 %v3324
        %v3421 = vpack.c.b16 %v3406, %v3405
        %v3422 = vpack.c.b16 %v3408, %v3407
        %v3423 = vpack.c.b16 %v3410, %v3409
        %v3424 = vpack.c.b16 %v3412, %v3411
        %v3425 = vpack.c.b16 %v3414, %v3413
        %v3426 = vpack.c.b16 %v3416, %v3415
        %v3427 = vpack.c.b16 %v3418, %v3417
        %v3428 = vpack.c.b16 %v3420, %v3419
        %v3469 = vunpack.c.l.b16 %v3325
        %v3470 = vunpack.c.l.b16 %v3326
        %v3471 = vunpack.c.l.b16 %v3327
        %v3472 = vunpack.c.l.b16 %v3328
        %v3473 = vunpack.c.l.b16 %v3329
        %v3474 = vunpack.c.l.b16 %v3330
        %v3475 = vunpack.c.l.b16 %v3331
        %v3476 = vunpack.c.l.b16 %v3332
        %v3477 = vunpack.c.l.b16 %v3333
        %v3478 = vunpack.c.l.b16 %v3334
        %v3479 = vunpack.c.l.b16 %v3335
        %v3480 = vunpack.c.l.b16 %v3336
        %v3481 = vunpack.c.l.b16 %v3337
        %v3482 = vunpack.c.l.b16 %v3338
        %v3483 = vunpack.c.l.b16 %v3339
        %v3484 = vunpack.c.l.b16 %v3340
        %v3485 = vunpack.c.l.b16 %v3341
        %v3486 = vunpack.c.l.b16 %v3342
        %v3487 = vunpack.c.l.b16 %v3343
        %v3488 = vunpack.c.l.b16 %v3344
        %v3489 = vunpack.c.l.b16 %v3345
        %v3490 = vunpack.c.l.b16 %v3346
        %v3491 = vunpack.c.l.b16 %v3347
        %v3492 = vunpack.c.l.b16 %v3348
        %v3493 = vunpack.c.l.b16 %v3349
        %v3494 = vunpack.c.l.b16 %v3350
        %v3495 = vunpack.c.l.b16 %v3351
        %v3496 = vunpack.c.l.b16 %v3352
        %v3497 = vunpack.c.l.b16 %v3353
        %v3498 = vunpack.c.l.b16 %v3354
        %v3499 = vunpack.c.l.b16 %v3355
        %v3500 = vunpack.c.l.b16 %v3356
        %v3501 = vpack.c.b16 %v3470, %v3469
        %v3502 = vpack.c.b16 %v3472, %v3471
        %v3503 = vpack.c.b16 %v3474, %v3473
        %v3504 = vpack.c.b16 %v3476, %v3475
        %v3505 = vpack.c.b16 %v3478, %v3477
        %v3506 = vpack.c.b16 %v3480, %v3479
        %v3507 = vpack.c.b16 %v3482, %v3481
        %v3508 = vpack.c.b16 %v3484, %v3483
        %v3509 = vpack.c.b16 %v3486, %v3485
        %v3510 = vpack.c.b16 %v3488, %v3487
        %v3511 = vpack.c.b16 %v3490, %v3489
        %v3512 = vpack.c.b16 %v3492, %v3491
        %v3513 = vpack.c.b16 %v3494, %v3493
        %v3514 = vpack.c.b16 %v3496, %v3495
        %v3515 = vpack.c.b16 %v3498, %v3497
        %v3516 = vpack.c.b16 %v3500, %v3499
        %3533 = vmatpush.bf16.xpose.msra.mxu0 %v3508
        %3534 = vmatpush.bf16.xpose.msra.mxu0 %v3507
        %3535 = vmatpush.bf16.xpose.msra.mxu0 %v3506
        %3536 = vmatpush.bf16.xpose.msra.mxu0 %v3505
        %3537 = vmatpush.bf16.xpose.msra.mxu0 %v3504
        %3538 = vmatpush.bf16.xpose.msra.mxu0 %v3503
        %3539 = vmatpush.bf16.xpose.msra.mxu0 %v3502
        %3540 = vmatpush.bf16.xpose.msra.mxu0 %v3501
        %3541 = vmatmul.bf16.gmra.mxu0 %v3421
        %v3542 = vpop.f32.mrf.mxu0
        %v3543 = vadd.f32 0.0, %v3542
        %v3544 = vpop.f32.mrf.mxu0
        %v3545 = vadd.f32 0.0, %v3544
        %3546 = vmatmul.bf16.gmra.mxu0 %v3422
        %v3547 = vpop.f32.mrf.mxu0
        %v3548 = vadd.f32 0.0, %v3547
        %v3549 = vpop.f32.mrf.mxu0
        %v3550 = vadd.f32 0.0, %v3549
        %3551 = vmatmul.bf16.gmra.mxu0 %v3423
        %v3552 = vpop.f32.mrf.mxu0
        %v3553 = vadd.f32 0.0, %v3552
        %v3554 = vpop.f32.mrf.mxu0
        %v3555 = vadd.f32 0.0, %v3554
        %3556 = vmatmul.bf16.gmra.mxu0 %v3424
        %v3557 = vpop.f32.mrf.mxu0
        %v3558 = vadd.f32 0.0, %v3557
        %v3559 = vpop.f32.mrf.mxu0
        %v3560 = vadd.f32 0.0, %v3559
        %3561 = vmatmul.bf16.gmra.mxu0 %v3425
        %v3562 = vpop.f32.mrf.mxu0
        %v3563 = vadd.f32 0.0, %v3562
        %v3564 = vpop.f32.mrf.mxu0
        %v3565 = vadd.f32 0.0, %v3564
        %3566 = vmatmul.bf16.gmra.mxu0 %v3426
        %v3567 = vpop.f32.mrf.mxu0
        %v3568 = vadd.f32 0.0, %v3567
        %v3569 = vpop.f32.mrf.mxu0
        %v3570 = vadd.f32 0.0, %v3569
        %3571 = vmatmul.bf16.gmra.mxu0 %v3427
        %v3572 = vpop.f32.mrf.mxu0
        %v3573 = vadd.f32 0.0, %v3572
        %v3574 = vpop.f32.mrf.mxu0
        %v3575 = vadd.f32 0.0, %v3574
        %3576 = vmatmul.bf16.gmra.mxu0 %v3428
        %v3577 = vpop.f32.mrf.mxu0
        %v3578 = vadd.f32 0.0, %v3577
        %v3579 = vpop.f32.mrf.mxu0
        %v3580 = vadd.f32 0.0, %v3579
        %3581 = vdwg.mxu0
        %3582 = vmatpush.bf16.xpose.msra.mxu0 %v3516
        %3583 = vmatpush.bf16.xpose.msra.mxu0 %v3515
        %3584 = vmatpush.bf16.xpose.msra.mxu0 %v3514
        %3585 = vmatpush.bf16.xpose.msra.mxu0 %v3513
        %3586 = vmatpush.bf16.xpose.msra.mxu0 %v3512
        %3587 = vmatpush.bf16.xpose.msra.mxu0 %v3511
        %3588 = vmatpush.bf16.xpose.msra.mxu0 %v3510
        %3589 = vmatpush.bf16.xpose.msra.mxu0 %v3509
        %3590 = vmatmul.bf16.gmra.mxu0 %v3421
        %v3591 = vpop.f32.mrf.mxu0
        %v3592 = vadd.f32 0.0, %v3591
        %v3593 = vpop.f32.mrf.mxu0
        %v3594 = vadd.f32 0.0, %v3593
        %3595 = vmatmul.bf16.gmra.mxu0 %v3422
        %v3596 = vpop.f32.mrf.mxu0
        %v3597 = vadd.f32 0.0, %v3596
        %v3598 = vpop.f32.mrf.mxu0
        %v3599 = vadd.f32 0.0, %v3598
        %3600 = vmatmul.bf16.gmra.mxu0 %v3423
        %v3601 = vpop.f32.mrf.mxu0
        %v3602 = vadd.f32 0.0, %v3601
        %v3603 = vpop.f32.mrf.mxu0
        %v3604 = vadd.f32 0.0, %v3603
        %3605 = vmatmul.bf16.gmra.mxu0 %v3424
        %v3606 = vpop.f32.mrf.mxu0
        %v3607 = vadd.f32 0.0, %v3606
        %v3608 = vpop.f32.mrf.mxu0
        %v3609 = vadd.f32 0.0, %v3608
        %3610 = vmatmul.bf16.gmra.mxu0 %v3425
        %v3611 = vpop.f32.mrf.mxu0
        %v3612 = vadd.f32 0.0, %v3611
        %v3613 = vpop.f32.mrf.mxu0
        %v3614 = vadd.f32 0.0, %v3613
        %3615 = vmatmul.bf16.gmra.mxu0 %v3426
        %v3616 = vpop.f32.mrf.mxu0
        %v3617 = vadd.f32 0.0, %v3616
        %v3618 = vpop.f32.mrf.mxu0
        %v3619 = vadd.f32 0.0, %v3618
        %3620 = vmatmul.bf16.gmra.mxu0 %v3427
        %v3621 = vpop.f32.mrf.mxu0
        %v3622 = vadd.f32 0.0, %v3621
        %v3623 = vpop.f32.mrf.mxu0
        %v3624 = vadd.f32 0.0, %v3623
        %3625 = vmatmul.bf16.gmra.mxu0 %v3428
        %v3626 = vpop.f32.mrf.mxu0
        %v3627 = vadd.f32 0.0, %v3626
        %v3628 = vpop.f32.mrf.mxu0
        %v3629 = vadd.f32 0.0, %v3628
        %3630 = vdwg.mxu0
        %v3631 = vmax.f32 %v3543, %v3592
        %3632 = vmax.xlane.f32.xlu0 %v3631
        %v3633 = vpop.xlane.xlu0 %3632
        %v3634 = vmax.f32 %v3545, %v3594
        %3635 = vmax.xlane.f32.xlu0 %v3634
        %v3636 = vpop.xlane.xlu0 %3635
        %v3637 = vmax.f32 %v3548, %v3597
        %3638 = vmax.xlane.f32.xlu0 %v3637
        %v3639 = vpop.xlane.xlu0 %3638
        %v3640 = vmax.f32 %v3550, %v3599
        %3641 = vmax.xlane.f32.xlu0 %v3640
        %v3642 = vpop.xlane.xlu0 %3641
        %v3643 = vmax.f32 %v3553, %v3602
        %3644 = vmax.xlane.f32.xlu0 %v3643
        %v3645 = vpop.xlane.xlu0 %3644
        %v3646 = vmax.f32 %v3555, %v3604
        %3647 = vmax.xlane.f32.xlu0 %v3646
        %v3648 = vpop.xlane.xlu0 %3647
        %v3649 = vmax.f32 %v3558, %v3607
        %3650 = vmax.xlane.f32.xlu0 %v3649
        %v3651 = vpop.xlane.xlu0 %3650
        %v3652 = vmax.f32 %v3560, %v3609
        %3653 = vmax.xlane.f32.xlu0 %v3652
        %v3654 = vpop.xlane.xlu0 %3653
        %v3655 = vmax.f32 %v3563, %v3612
        %3656 = vmax.xlane.f32.xlu0 %v3655
        %v3657 = vpop.xlane.xlu0 %3656
        %v3658 = vmax.f32 %v3565, %v3614
        %3659 = vmax.xlane.f32.xlu0 %v3658
        %v3660 = vpop.xlane.xlu0 %3659
        %v3661 = vmax.f32 %v3568, %v3617
        %3662 = vmax.xlane.f32.xlu0 %v3661
        %v3663 = vpop.xlane.xlu0 %3662
        %v3664 = vmax.f32 %v3570, %v3619
        %3665 = vmax.xlane.f32.xlu0 %v3664
        %v3666 = vpop.xlane.xlu0 %3665
        %v3667 = vmax.f32 %v3573, %v3622
        %3668 = vmax.xlane.f32.xlu0 %v3667
        %v3669 = vpop.xlane.xlu0 %3668
        %v3670 = vmax.f32 %v3575, %v3624
        %3671 = vmax.xlane.f32.xlu0 %v3670
        %v3672 = vpop.xlane.xlu0 %3671
        %v3673 = vmax.f32 %v3578, %v3627
        %3674 = vmax.xlane.f32.xlu0 %v3673
        %v3675 = vpop.xlane.xlu0 %3674
        %v3676 = vmax.f32 %v3580, %v3629
        %3677 = vmax.xlane.f32.xlu0 %v3676
        %v3678 = vpop.xlane.xlu0 %3677
        %v3679 = vsub.f32 %v3543, %v3633
        %v3680 = vsub.f32 %v3592, %v3633
        %v3681 = vsub.f32 %v3545, %v3636
        %v3682 = vsub.f32 %v3594, %v3636
        %v3683 = vsub.f32 %v3548, %v3639
        %v3684 = vsub.f32 %v3597, %v3639
        %v3685 = vsub.f32 %v3550, %v3642
        %v3686 = vsub.f32 %v3599, %v3642
        %v3687 = vsub.f32 %v3553, %v3645
        %v3688 = vsub.f32 %v3602, %v3645
        %v3689 = vsub.f32 %v3555, %v3648
        %v3690 = vsub.f32 %v3604, %v3648
        %v3691 = vsub.f32 %v3558, %v3651
        %v3692 = vsub.f32 %v3607, %v3651
        %v3693 = vsub.f32 %v3560, %v3654
        %v3694 = vsub.f32 %v3609, %v3654
        %v3695 = vsub.f32 %v3563, %v3657
        %v3696 = vsub.f32 %v3612, %v3657
        %v3697 = vsub.f32 %v3565, %v3660
        %v3698 = vsub.f32 %v3614, %v3660
        %v3699 = vsub.f32 %v3568, %v3663
        %v3700 = vsub.f32 %v3617, %v3663
        %v3701 = vsub.f32 %v3570, %v3666
        %v3702 = vsub.f32 %v3619, %v3666
        %v3703 = vsub.f32 %v3573, %v3669
        %v3704 = vsub.f32 %v3622, %v3669
        %v3705 = vsub.f32 %v3575, %v3672
        %v3706 = vsub.f32 %v3624, %v3672
        %v3707 = vsub.f32 %v3578, %v3675
        %v3708 = vsub.f32 %v3627, %v3675
        %v3709 = vsub.f32 %v3580, %v3678
        %v3710 = vsub.f32 %v3629, %v3678
        %v3711 = vmul.f32 %v3679, 1.442695
        %v3712 = vpow.pop %v3711
        %v3713 = vmul.f32 %v3680, 1.442695
        %v3714 = vpow.pop %v3713
        %v3715 = vmul.f32 %v3681, 1.442695
        %v3716 = vpow.pop %v3715
        %v3717 = vmul.f32 %v3682, 1.442695
        %v3718 = vpow.pop %v3717
        %v3719 = vmul.f32 %v3683, 1.442695
        %v3720 = vpow.pop %v3719
        %v3721 = vmul.f32 %v3684, 1.442695
        %v3722 = vpow.pop %v3721
        %v3723 = vmul.f32 %v3685, 1.442695
        %v3724 = vpow.pop %v3723
        %v3725 = vmul.f32 %v3686, 1.442695
        %v3726 = vpow.pop %v3725
        %v3727 = vmul.f32 %v3687, 1.442695
        %v3728 = vpow.pop %v3727
        %v3729 = vmul.f32 %v3688, 1.442695
        %v3730 = vpow.pop %v3729
        %v3731 = vmul.f32 %v3689, 1.442695
        %v3732 = vpow.pop %v3731
        %v3733 = vmul.f32 %v3690, 1.442695
        %v3734 = vpow.pop %v3733
        %v3735 = vmul.f32 %v3691, 1.442695
        %v3736 = vpow.pop %v3735
        %v3737 = vmul.f32 %v3692, 1.442695
        %v3738 = vpow.pop %v3737
        %v3739 = vmul.f32 %v3693, 1.442695
        %v3740 = vpow.pop %v3739
        %v3741 = vmul.f32 %v3694, 1.442695
        %v3742 = vpow.pop %v3741
        %v3743 = vmul.f32 %v3695, 1.442695
        %v3744 = vpow.pop %v3743
        %v3745 = vmul.f32 %v3696, 1.442695
        %v3746 = vpow.pop %v3745
        %v3747 = vmul.f32 %v3697, 1.442695
        %v3748 = vpow.pop %v3747
        %v3749 = vmul.f32 %v3698, 1.442695
        %v3750 = vpow.pop %v3749
        %v3751 = vmul.f32 %v3699, 1.442695
        %v3752 = vpow.pop %v3751
        %v3753 = vmul.f32 %v3700, 1.442695
        %v3754 = vpow.pop %v3753
        %v3755 = vmul.f32 %v3701, 1.442695
        %v3756 = vpow.pop %v3755
        %v3757 = vmul.f32 %v3702, 1.442695
        %v3758 = vpow.pop %v3757
        %v3759 = vmul.f32 %v3703, 1.442695
        %v3760 = vpow.pop %v3759
        %v3761 = vmul.f32 %v3704, 1.442695
        %v3762 = vpow.pop %v3761
        %v3763 = vmul.f32 %v3705, 1.442695
        %v3764 = vpow.pop %v3763
        %v3765 = vmul.f32 %v3706, 1.442695
        %v3766 = vpow.pop %v3765
        %v3767 = vmul.f32 %v3707, 1.442695
        %v3768 = vpow.pop %v3767
        %v3769 = vmul.f32 %v3708, 1.442695
        %v3770 = vpow.pop %v3769
        %v3771 = vmul.f32 %v3709, 1.442695
        %v3772 = vpow.pop %v3771
        %v3773 = vmul.f32 %v3710, 1.442695
        %v3774 = vpow.pop %v3773
        %v3775 = vadd.f32 %v3712, %v3714
        %3776 = vadd.xlane.f32.xlu0 %v3775
        %v3777 = vpop.xlane.xlu0 %3776
        %v3778 = vadd.f32 %v3716, %v3718
        %3779 = vadd.xlane.f32.xlu0 %v3778
        %v3780 = vpop.xlane.xlu0 %3779
        %v3781 = vadd.f32 %v3720, %v3722
        %3782 = vadd.xlane.f32.xlu0 %v3781
        %v3783 = vpop.xlane.xlu0 %3782
        %v3784 = vadd.f32 %v3724, %v3726
        %3785 = vadd.xlane.f32.xlu0 %v3784
        %v3786 = vpop.xlane.xlu0 %3785
        %v3787 = vadd.f32 %v3728, %v3730
        %3788 = vadd.xlane.f32.xlu0 %v3787
        %v3789 = vpop.xlane.xlu0 %3788
        %v3790 = vadd.f32 %v3732, %v3734
        %3791 = vadd.xlane.f32.xlu0 %v3790
        %v3792 = vpop.xlane.xlu0 %3791
        %v3793 = vadd.f32 %v3736, %v3738
        %3794 = vadd.xlane.f32.xlu0 %v3793
        %v3795 = vpop.xlane.xlu0 %3794
        %v3796 = vadd.f32 %v3740, %v3742
        %3797 = vadd.xlane.f32.xlu0 %v3796
        %v3798 = vpop.xlane.xlu0 %3797
        %v3799 = vadd.f32 %v3744, %v3746
        %3800 = vadd.xlane.f32.xlu0 %v3799
        %v3801 = vpop.xlane.xlu0 %3800
        %v3802 = vadd.f32 %v3748, %v3750
        %3803 = vadd.xlane.f32.xlu0 %v3802
        %v3804 = vpop.xlane.xlu0 %3803
        %v3805 = vadd.f32 %v3752, %v3754
        %3806 = vadd.xlane.f32.xlu0 %v3805
        %v3807 = vpop.xlane.xlu0 %3806
        %v3808 = vadd.f32 %v3756, %v3758
        %3809 = vadd.xlane.f32.xlu0 %v3808
        %v3810 = vpop.xlane.xlu0 %3809
        %v3811 = vadd.f32 %v3760, %v3762
        %3812 = vadd.xlane.f32.xlu0 %v3811
        %v3813 = vpop.xlane.xlu0 %3812
        %v3814 = vadd.f32 %v3764, %v3766
        %3815 = vadd.xlane.f32.xlu0 %v3814
        %v3816 = vpop.xlane.xlu0 %3815
        %v3817 = vadd.f32 %v3768, %v3770
        %3818 = vadd.xlane.f32.xlu0 %v3817
        %v3819 = vpop.xlane.xlu0 %3818
        %v3820 = vadd.f32 %v3772, %v3774
        %3821 = vadd.xlane.f32.xlu0 %v3820
        %v3822 = vpop.xlane.xlu0 %3821
        %v3823 = vrcp.pop %v3777
        %v3824 = vmul.f32 %v3777, %v3823
        %v3825 = vsub.f32 1.0, %v3824
        %v3826 = vmul.f32 %v3823, %v3825
        %v3827 = vadd.f32 %v3823, %v3826
        %vm3828 = vweird.f32 %v3777
        %vm3829 = vweird.f32 %v3823
        %vm3830 = vmor %vm3828, %vm3829
        %v3831 = vsel %vm3830, %v3823, %v3827
        %v3832 = vand.u32 2147483647, %v3777
        %vm3833 = vcmp.eq.f32.partialorder %v3832, 8.507059e+37
        %v3834 = vand.u32 %v3777, 2147483648
        %v3835 = vor.u32 1.1754944e-38, %v3834
        %v3836 = vsel %vm3833, %v3835, %v3831
        %v3837 = vmul.f32 1.0, %v3836
        %v3838 = vrcp.pop %v3780
        %v3839 = vmul.f32 %v3780, %v3838
        %v3840 = vsub.f32 1.0, %v3839
        %v3841 = vmul.f32 %v3838, %v3840
        %v3842 = vadd.f32 %v3838, %v3841
        %vm3843 = vweird.f32 %v3780
        %vm3844 = vweird.f32 %v3838
        %vm3845 = vmor %vm3843, %vm3844
        %v3846 = vsel %vm3845, %v3838, %v3842
        %v3847 = vand.u32 2147483647, %v3780
        %vm3848 = vcmp.eq.f32.partialorder %v3847, 8.507059e+37
        %v3849 = vand.u32 %v3780, 2147483648
        %v3850 = vor.u32 1.1754944e-38, %v3849
        %v3851 = vsel %vm3848, %v3850, %v3846
        %v3852 = vmul.f32 1.0, %v3851
        %v3853 = vrcp.pop %v3783
        %v3854 = vmul.f32 %v3783, %v3853
        %v3855 = vsub.f32 1.0, %v3854
        %v3856 = vmul.f32 %v3853, %v3855
        %v3857 = vadd.f32 %v3853, %v3856
        %vm3858 = vweird.f32 %v3783
        %vm3859 = vweird.f32 %v3853
        %vm3860 = vmor %vm3858, %vm3859
        %v3861 = vsel %vm3860, %v3853, %v3857
        %v3862 = vand.u32 2147483647, %v3783
        %vm3863 = vcmp.eq.f32.partialorder %v3862, 8.507059e+37
        %v3864 = vand.u32 %v3783, 2147483648
        %v3865 = vor.u32 1.1754944e-38, %v3864
        %v3866 = vsel %vm3863, %v3865, %v3861
        %v3867 = vmul.f32 1.0, %v3866
        %v3868 = vrcp.pop %v3786
        %v3869 = vmul.f32 %v3786, %v3868
        %v3870 = vsub.f32 1.0, %v3869
        %v3871 = vmul.f32 %v3868, %v3870
        %v3872 = vadd.f32 %v3868, %v3871
        %vm3873 = vweird.f32 %v3786
        %vm3874 = vweird.f32 %v3868
        %vm3875 = vmor %vm3873, %vm3874
        %v3876 = vsel %vm3875, %v3868, %v3872
        %v3877 = vand.u32 2147483647, %v3786
        %vm3878 = vcmp.eq.f32.partialorder %v3877, 8.507059e+37
        %v3879 = vand.u32 %v3786, 2147483648
        %v3880 = vor.u32 1.1754944e-38, %v3879
        %v3881 = vsel %vm3878, %v3880, %v3876
        %v3882 = vmul.f32 1.0, %v3881
        %v3883 = vrcp.pop %v3789
        %v3884 = vmul.f32 %v3789, %v3883
        %v3885 = vsub.f32 1.0, %v3884
        %v3886 = vmul.f32 %v3883, %v3885
        %v3887 = vadd.f32 %v3883, %v3886
        %vm3888 = vweird.f32 %v3789
        %vm3889 = vweird.f32 %v3883
        %vm3890 = vmor %vm3888, %vm3889
        %v3891 = vsel %vm3890, %v3883, %v3887
        %v3892 = vand.u32 2147483647, %v3789
        %vm3893 = vcmp.eq.f32.partialorder %v3892, 8.507059e+37
        %v3894 = vand.u32 %v3789, 2147483648
        %v3895 = vor.u32 1.1754944e-38, %v3894
        %v3896 = vsel %vm3893, %v3895, %v3891
        %v3897 = vmul.f32 1.0, %v3896
        %v3898 = vrcp.pop %v3792
        %v3899 = vmul.f32 %v3792, %v3898
        %v3900 = vsub.f32 1.0, %v3899
        %v3901 = vmul.f32 %v3898, %v3900
        %v3902 = vadd.f32 %v3898, %v3901
        %vm3903 = vweird.f32 %v3792
        %vm3904 = vweird.f32 %v3898
        %vm3905 = vmor %vm3903, %vm3904
        %v3906 = vsel %vm3905, %v3898, %v3902
        %v3907 = vand.u32 2147483647, %v3792
        %vm3908 = vcmp.eq.f32.partialorder %v3907, 8.507059e+37
        %v3909 = vand.u32 %v3792, 2147483648
        %v3910 = vor.u32 1.1754944e-38, %v3909
        %v3911 = vsel %vm3908, %v3910, %v3906
        %v3912 = vmul.f32 1.0, %v3911
        %v3913 = vrcp.pop %v3795
        %v3914 = vmul.f32 %v3795, %v3913
        %v3915 = vsub.f32 1.0, %v3914
        %v3916 = vmul.f32 %v3913, %v3915
        %v3917 = vadd.f32 %v3913, %v3916
        %vm3918 = vweird.f32 %v3795
        %vm3919 = vweird.f32 %v3913
        %vm3920 = vmor %vm3918, %vm3919
        %v3921 = vsel %vm3920, %v3913, %v3917
        %v3922 = vand.u32 2147483647, %v3795
        %vm3923 = vcmp.eq.f32.partialorder %v3922, 8.507059e+37
        %v3924 = vand.u32 %v3795, 2147483648
        %v3925 = vor.u32 1.1754944e-38, %v3924
        %v3926 = vsel %vm3923, %v3925, %v3921
        %v3927 = vmul.f32 1.0, %v3926
        %v3928 = vrcp.pop %v3798
        %v3929 = vmul.f32 %v3798, %v3928
        %v3930 = vsub.f32 1.0, %v3929
        %v3931 = vmul.f32 %v3928, %v3930
        %v3932 = vadd.f32 %v3928, %v3931
        %vm3933 = vweird.f32 %v3798
        %vm3934 = vweird.f32 %v3928
        %vm3935 = vmor %vm3933, %vm3934
        %v3936 = vsel %vm3935, %v3928, %v3932
        %v3937 = vand.u32 2147483647, %v3798
        %vm3938 = vcmp.eq.f32.partialorder %v3937, 8.507059e+37
        %v3939 = vand.u32 %v3798, 2147483648
        %v3940 = vor.u32 1.1754944e-38, %v3939
        %v3941 = vsel %vm3938, %v3940, %v3936
        %v3942 = vmul.f32 1.0, %v3941
        %v3943 = vrcp.pop %v3801
        %v3944 = vmul.f32 %v3801, %v3943
        %v3945 = vsub.f32 1.0, %v3944
        %v3946 = vmul.f32 %v3943, %v3945
        %v3947 = vadd.f32 %v3943, %v3946
        %vm3948 = vweird.f32 %v3801
        %vm3949 = vweird.f32 %v3943
        %vm3950 = vmor %vm3948, %vm3949
        %v3951 = vsel %vm3950, %v3943, %v3947
        %v3952 = vand.u32 2147483647, %v3801
        %vm3953 = vcmp.eq.f32.partialorder %v3952, 8.507059e+37
        %v3954 = vand.u32 %v3801, 2147483648
        %v3955 = vor.u32 1.1754944e-38, %v3954
        %v3956 = vsel %vm3953, %v3955, %v3951
        %v3957 = vmul.f32 1.0, %v3956
        %v3958 = vrcp.pop %v3804
        %v3959 = vmul.f32 %v3804, %v3958
        %v3960 = vsub.f32 1.0, %v3959
        %v3961 = vmul.f32 %v3958, %v3960
        %v3962 = vadd.f32 %v3958, %v3961
        %vm3963 = vweird.f32 %v3804
        %vm3964 = vweird.f32 %v3958
        %vm3965 = vmor %vm3963, %vm3964
        %v3966 = vsel %vm3965, %v3958, %v3962
        %v3967 = vand.u32 2147483647, %v3804
        %vm3968 = vcmp.eq.f32.partialorder %v3967, 8.507059e+37
        %v3969 = vand.u32 %v3804, 2147483648
        %v3970 = vor.u32 1.1754944e-38, %v3969
        %v3971 = vsel %vm3968, %v3970, %v3966
        %v3972 = vmul.f32 1.0, %v3971
        %v3973 = vrcp.pop %v3807
        %v3974 = vmul.f32 %v3807, %v3973
        %v3975 = vsub.f32 1.0, %v3974
        %v3976 = vmul.f32 %v3973, %v3975
        %v3977 = vadd.f32 %v3973, %v3976
        %vm3978 = vweird.f32 %v3807
        %vm3979 = vweird.f32 %v3973
        %vm3980 = vmor %vm3978, %vm3979
        %v3981 = vsel %vm3980, %v3973, %v3977
        %v3982 = vand.u32 2147483647, %v3807
        %vm3983 = vcmp.eq.f32.partialorder %v3982, 8.507059e+37
        %v3984 = vand.u32 %v3807, 2147483648
        %v3985 = vor.u32 1.1754944e-38, %v3984
        %v3986 = vsel %vm3983, %v3985, %v3981
        %v3987 = vmul.f32 1.0, %v3986
        %v3988 = vrcp.pop %v3810
        %v3989 = vmul.f32 %v3810, %v3988
        %v3990 = vsub.f32 1.0, %v3989
        %v3991 = vmul.f32 %v3988, %v3990
        %v3992 = vadd.f32 %v3988, %v3991
        %vm3993 = vweird.f32 %v3810
        %vm3994 = vweird.f32 %v3988
        %vm3995 = vmor %vm3993, %vm3994
        %v3996 = vsel %vm3995, %v3988, %v3992
        %v3997 = vand.u32 2147483647, %v3810
        %vm3998 = vcmp.eq.f32.partialorder %v3997, 8.507059e+37
        %v3999 = vand.u32 %v3810, 2147483648
        %v4000 = vor.u32 1.1754944e-38, %v3999
        %v4001 = vsel %vm3998, %v4000, %v3996
        %v4002 = vmul.f32 1.0, %v4001
        %v4003 = vrcp.pop %v3813
        %v4004 = vmul.f32 %v3813, %v4003
        %v4005 = vsub.f32 1.0, %v4004
        %v4006 = vmul.f32 %v4003, %v4005
        %v4007 = vadd.f32 %v4003, %v4006
        %vm4008 = vweird.f32 %v3813
        %vm4009 = vweird.f32 %v4003
        %vm4010 = vmor %vm4008, %vm4009
        %v4011 = vsel %vm4010, %v4003, %v4007
        %v4012 = vand.u32 2147483647, %v3813
        %vm4013 = vcmp.eq.f32.partialorder %v4012, 8.507059e+37
        %v4014 = vand.u32 %v3813, 2147483648
        %v4015 = vor.u32 1.1754944e-38, %v4014
        %v4016 = vsel %vm4013, %v4015, %v4011
        %v4017 = vmul.f32 1.0, %v4016
        %v4018 = vrcp.pop %v3816
        %v4019 = vmul.f32 %v3816, %v4018
        %v4020 = vsub.f32 1.0, %v4019
        %v4021 = vmul.f32 %v4018, %v4020
        %v4022 = vadd.f32 %v4018, %v4021
        %vm4023 = vweird.f32 %v3816
        %vm4024 = vweird.f32 %v4018
        %vm4025 = vmor %vm4023, %vm4024
        %v4026 = vsel %vm4025, %v4018, %v4022
        %v4027 = vand.u32 2147483647, %v3816
        %vm4028 = vcmp.eq.f32.partialorder %v4027, 8.507059e+37
        %v4029 = vand.u32 %v3816, 2147483648
        %v4030 = vor.u32 1.1754944e-38, %v4029
        %v4031 = vsel %vm4028, %v4030, %v4026
        %v4032 = vmul.f32 1.0, %v4031
        %v4033 = vrcp.pop %v3819
        %v4034 = vmul.f32 %v3819, %v4033
        %v4035 = vsub.f32 1.0, %v4034
        %v4036 = vmul.f32 %v4033, %v4035
        %v4037 = vadd.f32 %v4033, %v4036
        %vm4038 = vweird.f32 %v3819
        %vm4039 = vweird.f32 %v4033
        %vm4040 = vmor %vm4038, %vm4039
        %v4041 = vsel %vm4040, %v4033, %v4037
        %v4042 = vand.u32 2147483647, %v3819
        %vm4043 = vcmp.eq.f32.partialorder %v4042, 8.507059e+37
        %v4044 = vand.u32 %v3819, 2147483648
        %v4045 = vor.u32 1.1754944e-38, %v4044
        %v4046 = vsel %vm4043, %v4045, %v4041
        %v4047 = vmul.f32 1.0, %v4046
        %v4048 = vrcp.pop %v3822
        %v4049 = vmul.f32 %v3822, %v4048
        %v4050 = vsub.f32 1.0, %v4049
        %v4051 = vmul.f32 %v4048, %v4050
        %v4052 = vadd.f32 %v4048, %v4051
        %vm4053 = vweird.f32 %v3822
        %vm4054 = vweird.f32 %v4048
        %vm4055 = vmor %vm4053, %vm4054
        %v4056 = vsel %vm4055, %v4048, %v4052
        %v4057 = vand.u32 2147483647, %v3822
        %vm4058 = vcmp.eq.f32.partialorder %v4057, 8.507059e+37
        %v4059 = vand.u32 %v3822, 2147483648
        %v4060 = vor.u32 1.1754944e-38, %v4059
        %v4061 = vsel %vm4058, %v4060, %v4056
        %v4062 = vmul.f32 1.0, %v4061
        %v4063 = vmul.f32 %v3712, %v3837
        %v4064 = vmul.f32 %v3714, %v3837
        %v4065 = vmul.f32 %v3716, %v3852
        %v4066 = vmul.f32 %v3718, %v3852
        %v4067 = vmul.f32 %v3720, %v3867
        %v4068 = vmul.f32 %v3722, %v3867
        %v4069 = vmul.f32 %v3724, %v3882
        %v4070 = vmul.f32 %v3726, %v3882
        %v4071 = vmul.f32 %v3728, %v3897
        %v4072 = vmul.f32 %v3730, %v3897
        %v4073 = vmul.f32 %v3732, %v3912
        %v4074 = vmul.f32 %v3734, %v3912
        %v4075 = vmul.f32 %v3736, %v3927
        %v4076 = vmul.f32 %v3738, %v3927
        %v4077 = vmul.f32 %v3740, %v3942
        %v4078 = vmul.f32 %v3742, %v3942
        %v4079 = vmul.f32 %v3744, %v3957
        %v4080 = vmul.f32 %v3746, %v3957
        %v4081 = vmul.f32 %v3748, %v3972
        %v4082 = vmul.f32 %v3750, %v3972
        %v4083 = vmul.f32 %v3752, %v3987
        %v4084 = vmul.f32 %v3754, %v3987
        %v4085 = vmul.f32 %v3756, %v4002
        %v4086 = vmul.f32 %v3758, %v4002
        %v4087 = vmul.f32 %v3760, %v4017
        %v4088 = vmul.f32 %v3762, %v4017
        %v4089 = vmul.f32 %v3764, %v4032
        %v4090 = vmul.f32 %v3766, %v4032
        %v4091 = vmul.f32 %v3768, %v4047
        %v4092 = vmul.f32 %v3770, %v4047
        %v4093 = vmul.f32 %v3772, %v4062
        %v4094 = vmul.f32 %v3774, %v4062
        %s4095 = scalar_lea.vmem %s304, 256 [#allocation11]
        %4096 = vst [vmem:[%s4095] sm:$0xff] %v4063
        %4097 = vst [vmem:[%s4095 + $0x8] sm:$0xff] %v4064
        %4098 = vst [vmem:[%s4095 + $0x10] sm:$0xff] %v4065
        %4099 = vst [vmem:[%s4095 + $0x18] sm:$0xff] %v4066
        %4100 = vst [vmem:[%s4095 + $0x20] sm:$0xff] %v4067
        %4101 = vst [vmem:[%s4095 + $0x28] sm:$0xff] %v4068
        %4102 = vst [vmem:[%s4095 + $0x30] sm:$0xff] %v4069
        %4103 = vst [vmem:[%s4095 + $0x38] sm:$0xff] %v4070
        %4104 = vst [vmem:[%s4095 + $0x40] sm:$0xff] %v4071
        %4105 = vst [vmem:[%s4095 + $0x48] sm:$0xff] %v4072
        %4106 = vst [vmem:[%s4095 + $0x50] sm:$0xff] %v4073
        %4107 = vst [vmem:[%s4095 + $0x58] sm:$0xff] %v4074
        %4108 = vst [vmem:[%s4095 + $0x60] sm:$0xff] %v4075
        %4109 = vst [vmem:[%s4095 + $0x68] sm:$0xff] %v4076
        %4110 = vst [vmem:[%s4095 + $0x70] sm:$0xff] %v4077
        %4111 = vst [vmem:[%s4095 + $0x78] sm:$0xff] %v4078
        %4112 = vst [vmem:[%s4095 + $0x80] sm:$0xff] %v4079
        %4113 = vst [vmem:[%s4095 + $0x88] sm:$0xff] %v4080
        %4114 = vst [vmem:[%s4095 + $0x90] sm:$0xff] %v4081
        %4115 = vst [vmem:[%s4095 + $0x98] sm:$0xff] %v4082
        %4116 = vst [vmem:[%s4095 + $0xa0] sm:$0xff] %v4083
        %4117 = vst [vmem:[%s4095 + $0xa8] sm:$0xff] %v4084
        %4118 = vst [vmem:[%s4095 + $0xb0] sm:$0xff] %v4085
        %4119 = vst [vmem:[%s4095 + $0xb8] sm:$0xff] %v4086
        %4120 = vst [vmem:[%s4095 + $0xc0] sm:$0xff] %v4087
        %4121 = vst [vmem:[%s4095 + $0xc8] sm:$0xff] %v4088
        %4122 = vst [vmem:[%s4095 + $0xd0] sm:$0xff] %v4089
        %4123 = vst [vmem:[%s4095 + $0xd8] sm:$0xff] %v4090
        %4124 = vst [vmem:[%s4095 + $0xe0] sm:$0xff] %v4091
        %4125 = vst [vmem:[%s4095 + $0xe8] sm:$0xff] %v4092
        %4126 = vst [vmem:[%s4095 + $0xf0] sm:$0xff] %v4093
        %4127 = vst [vmem:[%s4095 + $0xf8] sm:$0xff] %v4094
        %v4128 = vpack.c.bf16 %v4065, %v4063
        %v4129 = vpack.c.bf16 %v4066, %v4064
        %v4130 = vpack.c.bf16 %v4069, %v4067
        %v4131 = vpack.c.bf16 %v4070, %v4068
        %v4132 = vpack.c.bf16 %v4073, %v4071
        %v4133 = vpack.c.bf16 %v4074, %v4072
        %v4134 = vpack.c.bf16 %v4077, %v4075
        %v4135 = vpack.c.bf16 %v4078, %v4076
        %v4136 = vpack.c.bf16 %v4081, %v4079
        %v4137 = vpack.c.bf16 %v4082, %v4080
        %v4138 = vpack.c.bf16 %v4085, %v4083
        %v4139 = vpack.c.bf16 %v4086, %v4084
        %v4140 = vpack.c.bf16 %v4089, %v4087
        %v4141 = vpack.c.bf16 %v4090, %v4088
        %v4142 = vpack.c.bf16 %v4093, %v4091
        %v4143 = vpack.c.bf16 %v4094, %v4092
        %v4176 = vunpack.c.l.b16 %v3357
        %v4177 = vunpack.c.l.b16 %v3358
        %v4178 = vunpack.c.l.b16 %v3359
        %v4179 = vunpack.c.l.b16 %v3360
        %v4180 = vunpack.c.l.b16 %v3361
        %v4181 = vunpack.c.l.b16 %v3362
        %v4182 = vunpack.c.l.b16 %v3363
        %v4183 = vunpack.c.l.b16 %v3364
        %v4184 = vunpack.c.l.b16 %v3365
        %v4185 = vunpack.c.l.b16 %v3366
        %v4186 = vunpack.c.l.b16 %v3367
        %v4187 = vunpack.c.l.b16 %v3368
        %v4188 = vunpack.c.l.b16 %v3369
        %v4189 = vunpack.c.l.b16 %v3370
        %v4190 = vunpack.c.l.b16 %v3371
        %v4191 = vunpack.c.l.b16 %v3372
        %v4192 = vunpack.c.l.b16 %v3373
        %v4193 = vunpack.c.l.b16 %v3374
        %v4194 = vunpack.c.l.b16 %v3375
        %v4195 = vunpack.c.l.b16 %v3376
        %v4196 = vunpack.c.l.b16 %v3377
        %v4197 = vunpack.c.l.b16 %v3378
        %v4198 = vunpack.c.l.b16 %v3379
        %v4199 = vunpack.c.l.b16 %v3380
        %v4200 = vunpack.c.l.b16 %v3381
        %v4201 = vunpack.c.l.b16 %v3382
        %v4202 = vunpack.c.l.b16 %v3383
        %v4203 = vunpack.c.l.b16 %v3384
        %v4204 = vunpack.c.l.b16 %v3385
        %v4205 = vunpack.c.l.b16 %v3386
        %v4206 = vunpack.c.l.b16 %v3387
        %v4207 = vunpack.c.l.b16 %v3388
        %v4208 = vpack.c.b16 %v4177, %v4176
        %v4209 = vpack.c.b16 %v4179, %v4178
        %v4210 = vpack.c.b16 %v4181, %v4180
        %v4211 = vpack.c.b16 %v4183, %v4182
        %v4212 = vpack.c.b16 %v4185, %v4184
        %v4213 = vpack.c.b16 %v4187, %v4186
        %v4214 = vpack.c.b16 %v4189, %v4188
        %v4215 = vpack.c.b16 %v4191, %v4190
        %v4216 = vpack.c.b16 %v4193, %v4192
        %v4217 = vpack.c.b16 %v4195, %v4194
        %v4218 = vpack.c.b16 %v4197, %v4196
        %v4219 = vpack.c.b16 %v4199, %v4198
        %v4220 = vpack.c.b16 %v4201, %v4200
        %v4221 = vpack.c.b16 %v4203, %v4202
        %v4222 = vpack.c.b16 %v4205, %v4204
        %v4223 = vpack.c.b16 %v4207, %v4206
        %4240 = vmatpush.bf16.msra.mxu0 %v4215
        %4241 = vmatpush.bf16.msra.mxu0 %v4214
        %4242 = vmatpush.bf16.msra.mxu0 %v4213
        %4243 = vmatpush.bf16.msra.mxu0 %v4212
        %4244 = vmatpush.bf16.msra.mxu0 %v4211
        %4245 = vmatpush.bf16.msra.mxu0 %v4210
        %4246 = vmatpush.bf16.msra.mxu0 %v4209
        %4247 = vmatpush.bf16.msra.mxu0 %v4208
        %4248 = vmatmul.bf16.gmra.mxu0 %v4128
        %v4249 = vpop.f32.mrf.mxu0
        %v4250 = vadd.f32 0.0, %v4249
        %v4251 = vpop.f32.mrf.mxu0
        %v4252 = vadd.f32 0.0, %v4251
        %4253 = vmatmul.bf16.gmra.mxu0 %v4130
        %v4254 = vpop.f32.mrf.mxu0
        %v4255 = vadd.f32 0.0, %v4254
        %v4256 = vpop.f32.mrf.mxu0
        %v4257 = vadd.f32 0.0, %v4256
        %4258 = vmatmul.bf16.gmra.mxu0 %v4132
        %v4259 = vpop.f32.mrf.mxu0
        %v4260 = vadd.f32 0.0, %v4259
        %v4261 = vpop.f32.mrf.mxu0
        %v4262 = vadd.f32 0.0, %v4261
        %4263 = vmatmul.bf16.gmra.mxu0 %v4134
        %v4264 = vpop.f32.mrf.mxu0
        %v4265 = vadd.f32 0.0, %v4264
        %v4266 = vpop.f32.mrf.mxu0
        %v4267 = vadd.f32 0.0, %v4266
        %4268 = vmatmul.bf16.gmra.mxu0 %v4136
        %v4269 = vpop.f32.mrf.mxu0
        %v4270 = vadd.f32 0.0, %v4269
        %v4271 = vpop.f32.mrf.mxu0
        %v4272 = vadd.f32 0.0, %v4271
        %4273 = vmatmul.bf16.gmra.mxu0 %v4138
        %v4274 = vpop.f32.mrf.mxu0
        %v4275 = vadd.f32 0.0, %v4274
        %v4276 = vpop.f32.mrf.mxu0
        %v4277 = vadd.f32 0.0, %v4276
        %4278 = vmatmul.bf16.gmra.mxu0 %v4140
        %v4279 = vpop.f32.mrf.mxu0
        %v4280 = vadd.f32 0.0, %v4279
        %v4281 = vpop.f32.mrf.mxu0
        %v4282 = vadd.f32 0.0, %v4281
        %4283 = vmatmul.bf16.gmra.mxu0 %v4142
        %v4284 = vpop.f32.mrf.mxu0
        %v4285 = vadd.f32 0.0, %v4284
        %v4286 = vpop.f32.mrf.mxu0
        %v4287 = vadd.f32 0.0, %v4286
        %4288 = vdwg.mxu0
        %4289 = vmatpush.bf16.msra.mxu0 %v4223
        %4290 = vmatpush.bf16.msra.mxu0 %v4222
        %4291 = vmatpush.bf16.msra.mxu0 %v4221
        %4292 = vmatpush.bf16.msra.mxu0 %v4220
        %4293 = vmatpush.bf16.msra.mxu0 %v4219
        %4294 = vmatpush.bf16.msra.mxu0 %v4218
        %4295 = vmatpush.bf16.msra.mxu0 %v4217
        %4296 = vmatpush.bf16.msra.mxu0 %v4216
        %4297 = vmatmul.bf16.gmra.mxu0 %v4129
        %v4298 = vpop.f32.mrf.mxu0
        %v4299 = vadd.f32 %v4250, %v4298
        %v4300 = vpop.f32.mrf.mxu0
        %v4301 = vadd.f32 %v4252, %v4300
        %4302 = vmatmul.bf16.gmra.mxu0 %v4131
        %v4303 = vpop.f32.mrf.mxu0
        %v4304 = vadd.f32 %v4255, %v4303
        %v4305 = vpop.f32.mrf.mxu0
        %v4306 = vadd.f32 %v4257, %v4305
        %4307 = vmatmul.bf16.gmra.mxu0 %v4133
        %v4308 = vpop.f32.mrf.mxu0
        %v4309 = vadd.f32 %v4260, %v4308
        %v4310 = vpop.f32.mrf.mxu0
        %v4311 = vadd.f32 %v4262, %v4310
        %4312 = vmatmul.bf16.gmra.mxu0 %v4135
        %v4313 = vpop.f32.mrf.mxu0
        %v4314 = vadd.f32 %v4265, %v4313
        %v4315 = vpop.f32.mrf.mxu0
        %v4316 = vadd.f32 %v4267, %v4315
        %4317 = vmatmul.bf16.gmra.mxu0 %v4137
        %v4318 = vpop.f32.mrf.mxu0
        %v4319 = vadd.f32 %v4270, %v4318
        %v4320 = vpop.f32.mrf.mxu0
        %v4321 = vadd.f32 %v4272, %v4320
        %4322 = vmatmul.bf16.gmra.mxu0 %v4139
        %v4323 = vpop.f32.mrf.mxu0
        %v4324 = vadd.f32 %v4275, %v4323
        %v4325 = vpop.f32.mrf.mxu0
        %v4326 = vadd.f32 %v4277, %v4325
        %4327 = vmatmul.bf16.gmra.mxu0 %v4141
        %v4328 = vpop.f32.mrf.mxu0
        %v4329 = vadd.f32 %v4280, %v4328
        %v4330 = vpop.f32.mrf.mxu0
        %v4331 = vadd.f32 %v4282, %v4330
        %4332 = vmatmul.bf16.gmra.mxu0 %v4143
        %v4333 = vpop.f32.mrf.mxu0
        %v4334 = vadd.f32 %v4285, %v4333
        %v4335 = vpop.f32.mrf.mxu0
        %v4336 = vadd.f32 %v4287, %v4335
        %4337 = vdwg.mxu0
        %v4338 = vpack.c.bf16 %v4299, %v4299
        %v4339 = vpack.c.bf16 %v4301, %v4301
        %v4340 = vpack.c.bf16 %v4304, %v4304
        %v4341 = vpack.c.bf16 %v4306, %v4306
        %v4342 = vpack.c.bf16 %v4309, %v4309
        %v4343 = vpack.c.bf16 %v4311, %v4311
        %v4344 = vpack.c.bf16 %v4314, %v4314
        %v4345 = vpack.c.bf16 %v4316, %v4316
        %v4346 = vpack.c.bf16 %v4319, %v4319
        %v4347 = vpack.c.bf16 %v4321, %v4321
        %v4348 = vpack.c.bf16 %v4324, %v4324
        %v4349 = vpack.c.bf16 %v4326, %v4326
        %v4350 = vpack.c.bf16 %v4329, %v4329
        %v4351 = vpack.c.bf16 %v4331, %v4331
        %v4352 = vpack.c.bf16 %v4334, %v4334
        %v4353 = vpack.c.bf16 %v4336, %v4336
        %4354 = vst [vmem:[#allocation3 + $0x4] sm:$0xf] %v4338
        %4355 = vst [vmem:[#allocation3 + $0xc] sm:$0xf] %v4339
        %4356 = vst [vmem:[#allocation3 + $0x14] sm:$0xf] %v4340
        %4357 = vst [vmem:[#allocation3 + $0x1c] sm:$0xf] %v4341
        %4358 = vst [vmem:[#allocation3 + $0x24] sm:$0xf] %v4342
        %4359 = vst [vmem:[#allocation3 + $0x2c] sm:$0xf] %v4343
        %4360 = vst [vmem:[#allocation3 + $0x34] sm:$0xf] %v4344
        %4361 = vst [vmem:[#allocation3 + $0x3c] sm:$0xf] %v4345
        %4362 = vst [vmem:[#allocation3 + $0x44] sm:$0xf] %v4346
        %4363 = vst [vmem:[#allocation3 + $0x4c] sm:$0xf] %v4347
        %4364 = vst [vmem:[#allocation3 + $0x54] sm:$0xf] %v4348
        %4365 = vst [vmem:[#allocation3 + $0x5c] sm:$0xf] %v4349
        %4366 = vst [vmem:[#allocation3 + $0x64] sm:$0xf] %v4350
        %4367 = vst [vmem:[#allocation3 + $0x6c] sm:$0xf] %v4351
        %4368 = vst [vmem:[#allocation3 + $0x74] sm:$0xf] %v4352
        %4369 = vst [vmem:[#allocation3 + $0x7c] sm:$0xf] %v4353
        %v4370 = vld [vmem:[#allocation3] sm:$0xff]
        %v4371 = vld [vmem:[#allocation3 + $0x8] sm:$0xff]
        %v4372 = vld [vmem:[#allocation3 + $0x10] sm:$0xff]
        %v4373 = vld [vmem:[#allocation3 + $0x18] sm:$0xff]
        %v4374 = vld [vmem:[#allocation3 + $0x20] sm:$0xff]
        %v4375 = vld [vmem:[#allocation3 + $0x28] sm:$0xff]
        %v4376 = vld [vmem:[#allocation3 + $0x30] sm:$0xff]
        %v4377 = vld [vmem:[#allocation3 + $0x38] sm:$0xff]
        %v4378 = vld [vmem:[#allocation3 + $0x40] sm:$0xff]
        %v4379 = vld [vmem:[#allocation3 + $0x48] sm:$0xff]
        %v4380 = vld [vmem:[#allocation3 + $0x50] sm:$0xff]
        %v4381 = vld [vmem:[#allocation3 + $0x58] sm:$0xff]
        %v4382 = vld [vmem:[#allocation3 + $0x60] sm:$0xff]
        %v4383 = vld [vmem:[#allocation3 + $0x68] sm:$0xff]
        %v4384 = vld [vmem:[#allocation3 + $0x70] sm:$0xff]
        %v4385 = vld [vmem:[#allocation3 + $0x78] sm:$0xff]
        %v4386 = vld [vmem:[#allocation9] sm:$0xff]
        %v4387 = vld [vmem:[#allocation9 + $0x8] sm:$0xff]
        %v4388 = vld [vmem:[#allocation9 + $0x10] sm:$0xff]
        %v4389 = vld [vmem:[#allocation9 + $0x18] sm:$0xff]
        %v4390 = vld [vmem:[#allocation9 + $0x20] sm:$0xff]
        %v4391 = vld [vmem:[#allocation9 + $0x28] sm:$0xff]
        %v4392 = vld [vmem:[#allocation9 + $0x30] sm:$0xff]
        %v4393 = vld [vmem:[#allocation9 + $0x38] sm:$0xff]
        %v4394 = vld [vmem:[#allocation9 + $0x40] sm:$0xff]
        %v4395 = vld [vmem:[#allocation9 + $0x48] sm:$0xff]
        %v4396 = vld [vmem:[#allocation9 + $0x50] sm:$0xff]
        %v4397 = vld [vmem:[#allocation9 + $0x58] sm:$0xff]
        %v4398 = vld [vmem:[#allocation9 + $0x60] sm:$0xff]
        %v4399 = vld [vmem:[#allocation9 + $0x68] sm:$0xff]
        %v4400 = vld [vmem:[#allocation9 + $0x70] sm:$0xff]
        %v4401 = vld [vmem:[#allocation9 + $0x78] sm:$0xff]
        %v4402 = vld [vmem:[#allocation9 + $0x80] sm:$0xff]
        %v4403 = vld [vmem:[#allocation9 + $0x88] sm:$0xff]
        %v4404 = vld [vmem:[#allocation9 + $0x90] sm:$0xff]
        %v4405 = vld [vmem:[#allocation9 + $0x98] sm:$0xff]
        %v4406 = vld [vmem:[#allocation9 + $0xa0] sm:$0xff]
        %v4407 = vld [vmem:[#allocation9 + $0xa8] sm:$0xff]
        %v4408 = vld [vmem:[#allocation9 + $0xb0] sm:$0xff]
        %v4409 = vld [vmem:[#allocation9 + $0xb8] sm:$0xff]
        %v4410 = vld [vmem:[#allocation9 + $0xc0] sm:$0xff]
        %v4411 = vld [vmem:[#allocation9 + $0xc8] sm:$0xff]
        %v4412 = vld [vmem:[#allocation9 + $0xd0] sm:$0xff]
        %v4413 = vld [vmem:[#allocation9 + $0xd8] sm:$0xff]
        %v4414 = vld [vmem:[#allocation9 + $0xe0] sm:$0xff]
        %v4415 = vld [vmem:[#allocation9 + $0xe8] sm:$0xff]
        %v4416 = vld [vmem:[#allocation9 + $0xf0] sm:$0xff]
        %v4417 = vld [vmem:[#allocation9 + $0xf8] sm:$0xff]
        %v4418 = vld [vmem:[%s3] sm:$0x3]
        %v4420 = vperm.slane %v4418, 0
        %v4421 = vperm.slane %v4418, 1
        %v4440 = vunpack.c.l.b16 %v4370
        %v4441 = vunpack.c.h.b16 %v4370
        %v4442 = vunpack.c.l.b16 %v4371
        %v4443 = vunpack.c.h.b16 %v4371
        %v4444 = vunpack.c.l.b16 %v4372
        %v4445 = vunpack.c.h.b16 %v4372
        %v4446 = vunpack.c.l.b16 %v4373
        %v4447 = vunpack.c.h.b16 %v4373
        %v4448 = vunpack.c.l.b16 %v4374
        %v4449 = vunpack.c.h.b16 %v4374
        %v4450 = vunpack.c.l.b16 %v4375
        %v4451 = vunpack.c.h.b16 %v4375
        %v4452 = vunpack.c.l.b16 %v4376
        %v4453 = vunpack.c.h.b16 %v4376
        %v4454 = vunpack.c.l.b16 %v4377
        %v4455 = vunpack.c.h.b16 %v4377
        %v4456 = vunpack.c.l.b16 %v4378
        %v4457 = vunpack.c.h.b16 %v4378
        %v4458 = vunpack.c.l.b16 %v4379
        %v4459 = vunpack.c.h.b16 %v4379
        %v4460 = vunpack.c.l.b16 %v4380
        %v4461 = vunpack.c.h.b16 %v4380
        %v4462 = vunpack.c.l.b16 %v4381
        %v4463 = vunpack.c.h.b16 %v4381
        %v4464 = vunpack.c.l.b16 %v4382
        %v4465 = vunpack.c.h.b16 %v4382
        %v4466 = vunpack.c.l.b16 %v4383
        %v4467 = vunpack.c.h.b16 %v4383
        %v4468 = vunpack.c.l.b16 %v4384
        %v4469 = vunpack.c.h.b16 %v4384
        %v4470 = vunpack.c.l.b16 %v4385
        %v4471 = vunpack.c.h.b16 %v4385
        %v4472 = vpack.c.b16 %v4442, %v4440
        %v4473 = vpack.c.b16 %v4443, %v4441
        %v4474 = vpack.c.b16 %v4446, %v4444
        %v4475 = vpack.c.b16 %v4447, %v4445
        %v4476 = vpack.c.b16 %v4450, %v4448
        %v4477 = vpack.c.b16 %v4451, %v4449
        %v4478 = vpack.c.b16 %v4454, %v4452
        %v4479 = vpack.c.b16 %v4455, %v4453
        %v4480 = vpack.c.b16 %v4458, %v4456
        %v4481 = vpack.c.b16 %v4459, %v4457
        %v4482 = vpack.c.b16 %v4462, %v4460
        %v4483 = vpack.c.b16 %v4463, %v4461
        %v4484 = vpack.c.b16 %v4466, %v4464
        %v4485 = vpack.c.b16 %v4467, %v4465
        %v4486 = vpack.c.b16 %v4470, %v4468
        %v4487 = vpack.c.b16 %v4471, %v4469
        %v4536 = vunpack.c.l.b16 %v4386
        %v4537 = vunpack.c.h.b16 %v4386
        %v4538 = vunpack.c.l.b16 %v4387
        %v4539 = vunpack.c.h.b16 %v4387
        %v4540 = vunpack.c.l.b16 %v4388
        %v4541 = vunpack.c.h.b16 %v4388
        %v4542 = vunpack.c.l.b16 %v4389
        %v4543 = vunpack.c.h.b16 %v4389
        %v4544 = vunpack.c.l.b16 %v4390
        %v4545 = vunpack.c.h.b16 %v4390
        %v4546 = vunpack.c.l.b16 %v4391
        %v4547 = vunpack.c.h.b16 %v4391
        %v4548 = vunpack.c.l.b16 %v4392
        %v4549 = vunpack.c.h.b16 %v4392
        %v4550 = vunpack.c.l.b16 %v4393
        %v4551 = vunpack.c.h.b16 %v4393
        %v4552 = vunpack.c.l.b16 %v4394
        %v4553 = vunpack.c.h.b16 %v4394
        %v4554 = vunpack.c.l.b16 %v4395
        %v4555 = vunpack.c.h.b16 %v4395
        %v4556 = vunpack.c.l.b16 %v4396
        %v4557 = vunpack.c.h.b16 %v4396
        %v4558 = vunpack.c.l.b16 %v4397
        %v4559 = vunpack.c.h.b16 %v4397
        %v4560 = vunpack.c.l.b16 %v4398
        %v4561 = vunpack.c.h.b16 %v4398
        %v4562 = vunpack.c.l.b16 %v4399
        %v4563 = vunpack.c.h.b16 %v4399
        %v4564 = vunpack.c.l.b16 %v4400
        %v4565 = vunpack.c.h.b16 %v4400
        %v4566 = vunpack.c.l.b16 %v4401
        %v4567 = vunpack.c.h.b16 %v4401
        %v4568 = vunpack.c.l.b16 %v4402
        %v4569 = vunpack.c.h.b16 %v4402
        %v4570 = vunpack.c.l.b16 %v4403
        %v4571 = vunpack.c.h.b16 %v4403
        %v4572 = vunpack.c.l.b16 %v4404
        %v4573 = vunpack.c.h.b16 %v4404
        %v4574 = vunpack.c.l.b16 %v4405
        %v4575 = vunpack.c.h.b16 %v4405
        %v4576 = vunpack.c.l.b16 %v4406
        %v4577 = vunpack.c.h.b16 %v4406
        %v4578 = vunpack.c.l.b16 %v4407
        %v4579 = vunpack.c.h.b16 %v4407
        %v4580 = vunpack.c.l.b16 %v4408
        %v4581 = vunpack.c.h.b16 %v4408
        %v4582 = vunpack.c.l.b16 %v4409
        %v4583 = vunpack.c.h.b16 %v4409
        %v4584 = vunpack.c.l.b16 %v4410
        %v4585 = vunpack.c.h.b16 %v4410
        %v4586 = vunpack.c.l.b16 %v4411
        %v4587 = vunpack.c.h.b16 %v4411
        %v4588 = vunpack.c.l.b16 %v4412
        %v4589 = vunpack.c.h.b16 %v4412
        %v4590 = vunpack.c.l.b16 %v4413
        %v4591 = vunpack.c.h.b16 %v4413
        %v4592 = vunpack.c.l.b16 %v4414
        %v4593 = vunpack.c.h.b16 %v4414
        %v4594 = vunpack.c.l.b16 %v4415
        %v4595 = vunpack.c.h.b16 %v4415
        %v4596 = vunpack.c.l.b16 %v4416
        %v4597 = vunpack.c.h.b16 %v4416
        %v4598 = vunpack.c.l.b16 %v4417
        %v4599 = vunpack.c.h.b16 %v4417
        %v4600 = vpack.c.b16 %v4538, %v4536
        %v4601 = vpack.c.b16 %v4539, %v4537
        %v4602 = vpack.c.b16 %v4542, %v4540
        %v4603 = vpack.c.b16 %v4543, %v4541
        %v4604 = vpack.c.b16 %v4546, %v4544
        %v4605 = vpack.c.b16 %v4547, %v4545
        %v4606 = vpack.c.b16 %v4550, %v4548
        %v4607 = vpack.c.b16 %v4551, %v4549
        %v4608 = vpack.c.b16 %v4554, %v4552
        %v4609 = vpack.c.b16 %v4555, %v4553
        %v4610 = vpack.c.b16 %v4558, %v4556
        %v4611 = vpack.c.b16 %v4559, %v4557
        %v4612 = vpack.c.b16 %v4562, %v4560
        %v4613 = vpack.c.b16 %v4563, %v4561
        %v4614 = vpack.c.b16 %v4566, %v4564
        %v4615 = vpack.c.b16 %v4567, %v4565
        %v4616 = vpack.c.b16 %v4570, %v4568
        %v4617 = vpack.c.b16 %v4571, %v4569
        %v4618 = vpack.c.b16 %v4574, %v4572
        %v4619 = vpack.c.b16 %v4575, %v4573
        %v4620 = vpack.c.b16 %v4578, %v4576
        %v4621 = vpack.c.b16 %v4579, %v4577
        %v4622 = vpack.c.b16 %v4582, %v4580
        %v4623 = vpack.c.b16 %v4583, %v4581
        %v4624 = vpack.c.b16 %v4586, %v4584
        %v4625 = vpack.c.b16 %v4587, %v4585
        %v4626 = vpack.c.b16 %v4590, %v4588
        %v4627 = vpack.c.b16 %v4591, %v4589
        %v4628 = vpack.c.b16 %v4594, %v4592
        %v4629 = vpack.c.b16 %v4595, %v4593
        %v4630 = vpack.c.b16 %v4598, %v4596
        %v4631 = vpack.c.b16 %v4599, %v4597
        %4664 = vmatpush.bf16.msra.mxu0 %v4614
        %4665 = vmatpush.bf16.msra.mxu0 %v4612
        %4666 = vmatpush.bf16.msra.mxu0 %v4610
        %4667 = vmatpush.bf16.msra.mxu0 %v4608
        %4668 = vmatpush.bf16.msra.mxu0 %v4606
        %4669 = vmatpush.bf16.msra.mxu0 %v4604
        %4670 = vmatpush.bf16.msra.mxu0 %v4602
        %4671 = vmatpush.bf16.msra.mxu0 %v4600
        %4672 = vmatmul.bf16.gmra.mxu0 %v4472
        %v4673 = vpop.f32.mrf.mxu0
        %v4674 = vadd.f32 %v4420, %v4673
        %v4675 = vpop.f32.mrf.mxu0
        %v4676 = vadd.f32 %v4420, %v4675
        %4677 = vmatmul.bf16.gmra.mxu0 %v4474
        %v4678 = vpop.f32.mrf.mxu0
        %v4679 = vadd.f32 %v4420, %v4678
        %v4680 = vpop.f32.mrf.mxu0
        %v4681 = vadd.f32 %v4420, %v4680
        %4682 = vmatmul.bf16.gmra.mxu0 %v4476
        %v4683 = vpop.f32.mrf.mxu0
        %v4684 = vadd.f32 %v4420, %v4683
        %v4685 = vpop.f32.mrf.mxu0
        %v4686 = vadd.f32 %v4420, %v4685
        %4687 = vmatmul.bf16.gmra.mxu0 %v4478
        %v4688 = vpop.f32.mrf.mxu0
        %v4689 = vadd.f32 %v4420, %v4688
        %v4690 = vpop.f32.mrf.mxu0
        %v4691 = vadd.f32 %v4420, %v4690
        %4692 = vmatmul.bf16.gmra.mxu0 %v4480
        %v4693 = vpop.f32.mrf.mxu0
        %v4694 = vadd.f32 %v4420, %v4693
        %v4695 = vpop.f32.mrf.mxu0
        %v4696 = vadd.f32 %v4420, %v4695
        %4697 = vmatmul.bf16.gmra.mxu0 %v4482
        %v4698 = vpop.f32.mrf.mxu0
        %v4699 = vadd.f32 %v4420, %v4698
        %v4700 = vpop.f32.mrf.mxu0
        %v4701 = vadd.f32 %v4420, %v4700
        %4702 = vmatmul.bf16.gmra.mxu0 %v4484
        %v4703 = vpop.f32.mrf.mxu0
        %v4704 = vadd.f32 %v4420, %v4703
        %v4705 = vpop.f32.mrf.mxu0
        %v4706 = vadd.f32 %v4420, %v4705
        %4707 = vmatmul.bf16.gmra.mxu0 %v4486
        %v4708 = vpop.f32.mrf.mxu0
        %v4709 = vadd.f32 %v4420, %v4708
        %v4710 = vpop.f32.mrf.mxu0
        %v4711 = vadd.f32 %v4420, %v4710
        %4712 = vdwg.mxu0
        %4713 = vmatpush.bf16.msra.mxu0 %v4630
        %4714 = vmatpush.bf16.msra.mxu0 %v4628
        %4715 = vmatpush.bf16.msra.mxu0 %v4626
        %4716 = vmatpush.bf16.msra.mxu0 %v4624
        %4717 = vmatpush.bf16.msra.mxu0 %v4622
        %4718 = vmatpush.bf16.msra.mxu0 %v4620
        %4719 = vmatpush.bf16.msra.mxu0 %v4618
        %4720 = vmatpush.bf16.msra.mxu0 %v4616
        %4721 = vmatmul.bf16.gmra.mxu0 %v4473
        %v4722 = vpop.f32.mrf.mxu0
        %v4723 = vadd.f32 %v4674, %v4722
        %v4724 = vpop.f32.mrf.mxu0
        %v4725 = vadd.f32 %v4676, %v4724
        %4726 = vmatmul.bf16.gmra.mxu0 %v4475
        %v4727 = vpop.f32.mrf.mxu0
        %v4728 = vadd.f32 %v4679, %v4727
        %v4729 = vpop.f32.mrf.mxu0
        %v4730 = vadd.f32 %v4681, %v4729
        %4731 = vmatmul.bf16.gmra.mxu0 %v4477
        %v4732 = vpop.f32.mrf.mxu0
        %v4733 = vadd.f32 %v4684, %v4732
        %v4734 = vpop.f32.mrf.mxu0
        %v4735 = vadd.f32 %v4686, %v4734
        %4736 = vmatmul.bf16.gmra.mxu0 %v4479
        %v4737 = vpop.f32.mrf.mxu0
        %v4738 = vadd.f32 %v4689, %v4737
        %v4739 = vpop.f32.mrf.mxu0
        %v4740 = vadd.f32 %v4691, %v4739
        %4741 = vmatmul.bf16.gmra.mxu0 %v4481
        %v4742 = vpop.f32.mrf.mxu0
        %v4743 = vadd.f32 %v4694, %v4742
        %v4744 = vpop.f32.mrf.mxu0
        %v4745 = vadd.f32 %v4696, %v4744
        %4746 = vmatmul.bf16.gmra.mxu0 %v4483
        %v4747 = vpop.f32.mrf.mxu0
        %v4748 = vadd.f32 %v4699, %v4747
        %v4749 = vpop.f32.mrf.mxu0
        %v4750 = vadd.f32 %v4701, %v4749
        %4751 = vmatmul.bf16.gmra.mxu0 %v4485
        %v4752 = vpop.f32.mrf.mxu0
        %v4753 = vadd.f32 %v4704, %v4752
        %v4754 = vpop.f32.mrf.mxu0
        %v4755 = vadd.f32 %v4706, %v4754
        %4756 = vmatmul.bf16.gmra.mxu0 %v4487
        %v4757 = vpop.f32.mrf.mxu0
        %v4758 = vadd.f32 %v4709, %v4757
        %v4759 = vpop.f32.mrf.mxu0
        %v4760 = vadd.f32 %v4711, %v4759
        %4761 = vdwg.mxu0
        %4762 = vmatpush.bf16.msra.mxu0 %v4615
        %4763 = vmatpush.bf16.msra.mxu0 %v4613
        %4764 = vmatpush.bf16.msra.mxu0 %v4611
        %4765 = vmatpush.bf16.msra.mxu0 %v4609
        %4766 = vmatpush.bf16.msra.mxu0 %v4607
        %4767 = vmatpush.bf16.msra.mxu0 %v4605
        %4768 = vmatpush.bf16.msra.mxu0 %v4603
        %4769 = vmatpush.bf16.msra.mxu0 %v4601
        %4770 = vmatmul.bf16.gmra.mxu0 %v4472
        %v4771 = vpop.f32.mrf.mxu0
        %v4772 = vadd.f32 %v4421, %v4771
        %v4773 = vpop.f32.mrf.mxu0
        %v4774 = vadd.f32 %v4421, %v4773
        %4775 = vmatmul.bf16.gmra.mxu0 %v4474
        %v4776 = vpop.f32.mrf.mxu0
        %v4777 = vadd.f32 %v4421, %v4776
        %v4778 = vpop.f32.mrf.mxu0
        %v4779 = vadd.f32 %v4421, %v4778
        %4780 = vmatmul.bf16.gmra.mxu0 %v4476
        %v4781 = vpop.f32.mrf.mxu0
        %v4782 = vadd.f32 %v4421, %v4781
        %v4783 = vpop.f32.mrf.mxu0
        %v4784 = vadd.f32 %v4421, %v4783
        %4785 = vmatmul.bf16.gmra.mxu0 %v4478
        %v4786 = vpop.f32.mrf.mxu0
        %v4787 = vadd.f32 %v4421, %v4786
        %v4788 = vpop.f32.mrf.mxu0
        %v4789 = vadd.f32 %v4421, %v4788
        %4790 = vmatmul.bf16.gmra.mxu0 %v4480
        %v4791 = vpop.f32.mrf.mxu0
        %v4792 = vadd.f32 %v4421, %v4791
        %v4793 = vpop.f32.mrf.mxu0
        %v4794 = vadd.f32 %v4421, %v4793
        %4795 = vmatmul.bf16.gmra.mxu0 %v4482
        %v4796 = vpop.f32.mrf.mxu0
        %v4797 = vadd.f32 %v4421, %v4796
        %v4798 = vpop.f32.mrf.mxu0
        %v4799 = vadd.f32 %v4421, %v4798
        %4800 = vmatmul.bf16.gmra.mxu0 %v4484
        %v4801 = vpop.f32.mrf.mxu0
        %v4802 = vadd.f32 %v4421, %v4801
        %v4803 = vpop.f32.mrf.mxu0
        %v4804 = vadd.f32 %v4421, %v4803
        %4805 = vmatmul.bf16.gmra.mxu0 %v4486
        %v4806 = vpop.f32.mrf.mxu0
        %v4807 = vadd.f32 %v4421, %v4806
        %v4808 = vpop.f32.mrf.mxu0
        %v4809 = vadd.f32 %v4421, %v4808
        %4810 = vdwg.mxu0
        %4811 = vmatpush.bf16.msra.mxu0 %v4631
        %4812 = vmatpush.bf16.msra.mxu0 %v4629
        %4813 = vmatpush.bf16.msra.mxu0 %v4627
        %4814 = vmatpush.bf16.msra.mxu0 %v4625
        %4815 = vmatpush.bf16.msra.mxu0 %v4623
        %4816 = vmatpush.bf16.msra.mxu0 %v4621
        %4817 = vmatpush.bf16.msra.mxu0 %v4619
        %4818 = vmatpush.bf16.msra.mxu0 %v4617
        %4819 = vmatmul.bf16.gmra.mxu0 %v4473
        %v4820 = vpop.f32.mrf.mxu0
        %v4821 = vadd.f32 %v4772, %v4820
        %v4822 = vpop.f32.mrf.mxu0
        %v4823 = vadd.f32 %v4774, %v4822
        %4824 = vmatmul.bf16.gmra.mxu0 %v4475
        %v4825 = vpop.f32.mrf.mxu0
        %v4826 = vadd.f32 %v4777, %v4825
        %v4827 = vpop.f32.mrf.mxu0
        %v4828 = vadd.f32 %v4779, %v4827
        %4829 = vmatmul.bf16.gmra.mxu0 %v4477
        %v4830 = vpop.f32.mrf.mxu0
        %v4831 = vadd.f32 %v4782, %v4830
        %v4832 = vpop.f32.mrf.mxu0
        %v4833 = vadd.f32 %v4784, %v4832
        %4834 = vmatmul.bf16.gmra.mxu0 %v4479
        %v4835 = vpop.f32.mrf.mxu0
        %v4836 = vadd.f32 %v4787, %v4835
        %v4837 = vpop.f32.mrf.mxu0
        %v4838 = vadd.f32 %v4789, %v4837
        %4839 = vmatmul.bf16.gmra.mxu0 %v4481
        %v4840 = vpop.f32.mrf.mxu0
        %v4841 = vadd.f32 %v4792, %v4840
        %v4842 = vpop.f32.mrf.mxu0
        %v4843 = vadd.f32 %v4794, %v4842
        %4844 = vmatmul.bf16.gmra.mxu0 %v4483
        %v4845 = vpop.f32.mrf.mxu0
        %v4846 = vadd.f32 %v4797, %v4845
        %v4847 = vpop.f32.mrf.mxu0
        %v4848 = vadd.f32 %v4799, %v4847
        %4849 = vmatmul.bf16.gmra.mxu0 %v4485
        %v4850 = vpop.f32.mrf.mxu0
        %v4851 = vadd.f32 %v4802, %v4850
        %v4852 = vpop.f32.mrf.mxu0
        %v4853 = vadd.f32 %v4804, %v4852
        %4854 = vmatmul.bf16.gmra.mxu0 %v4487
        %v4855 = vpop.f32.mrf.mxu0
        %v4856 = vadd.f32 %v4807, %v4855
        %v4857 = vpop.f32.mrf.mxu0
        %v4858 = vadd.f32 %v4809, %v4857
        %4859 = vdwg.mxu0
        %4860 = vst [vmem:[%s297] sm:$0xff] %v4723
        %4861 = vst [vmem:[%s297 + $0x8] sm:$0xff] %v4821
        %4862 = vst [vmem:[%s297 + $0x10] sm:$0xff] %v4725
        %4863 = vst [vmem:[%s297 + $0x18] sm:$0xff] %v4823
        %4864 = vst [vmem:[%s297 + $0x20] sm:$0xff] %v4728
        %4865 = vst [vmem:[%s297 + $0x28] sm:$0xff] %v4826
        %4866 = vst [vmem:[%s297 + $0x30] sm:$0xff] %v4730
        %4867 = vst [vmem:[%s297 + $0x38] sm:$0xff] %v4828
        %4868 = vst [vmem:[%s297 + $0x40] sm:$0xff] %v4733
        %4869 = vst [vmem:[%s297 + $0x48] sm:$0xff] %v4831
        %4870 = vst [vmem:[%s297 + $0x50] sm:$0xff] %v4735
        %4871 = vst [vmem:[%s297 + $0x58] sm:$0xff] %v4833
        %4872 = vst [vmem:[%s297 + $0x60] sm:$0xff] %v4738
        %4873 = vst [vmem:[%s297 + $0x68] sm:$0xff] %v4836
        %4874 = vst [vmem:[%s297 + $0x70] sm:$0xff] %v4740
        %4875 = vst [vmem:[%s297 + $0x78] sm:$0xff] %v4838
        %4876 = vst [vmem:[%s297 + $0x80] sm:$0xff] %v4743
        %4877 = vst [vmem:[%s297 + $0x88] sm:$0xff] %v4841
        %4878 = vst [vmem:[%s297 + $0x90] sm:$0xff] %v4745
        %4879 = vst [vmem:[%s297 + $0x98] sm:$0xff] %v4843
        %4880 = vst [vmem:[%s297 + $0xa0] sm:$0xff] %v4748
        %4881 = vst [vmem:[%s297 + $0xa8] sm:$0xff] %v4846
        %4882 = vst [vmem:[%s297 + $0xb0] sm:$0xff] %v4750
        %4883 = vst [vmem:[%s297 + $0xb8] sm:$0xff] %v4848
        %4884 = vst [vmem:[%s297 + $0xc0] sm:$0xff] %v4753
        %4885 = vst [vmem:[%s297 + $0xc8] sm:$0xff] %v4851
        %4886 = vst [vmem:[%s297 + $0xd0] sm:$0xff] %v4755
        %4887 = vst [vmem:[%s297 + $0xd8] sm:$0xff] %v4853
        %4888 = vst [vmem:[%s297 + $0xe0] sm:$0xff] %v4758
        %4889 = vst [vmem:[%s297 + $0xe8] sm:$0xff] %v4856
        %4890 = vst [vmem:[%s297 + $0xf0] sm:$0xff] %v4760
        %4891 = vst [vmem:[%s297 + $0xf8] sm:$0xff] %v4858
        %s4892 = sand.u32 %s138, 1
        %s4893 = scalar_lea.sflag [#allocation6], %s4892
        %s4894 = sand.u32 %s138, 1
        %s4895 = smul.addr %s4894, 256
        %s4896 = scalar_lea.vmem [#allocation10], %s4895
        %s4897 = sand.u32 %s166, 1
        %s4898 = scalar_lea.sflag [#allocation12], %s4897
        %s4899 = sand.u32 %s166, 1
        %s4900 = smul.addr %s4899, 512
        %s4901 = scalar_lea.vmem [#allocation11], %s4900
        // Predicated region
        $region53: #{tpu_custom_call.1} parent=35 // pred_check
          %p4902 = pneg %p148
        $region54: #{tpu_custom_call.1} parent=35 // pred_check_branch
          %4904 = sbr.rel (%p4902) target = $region56
        $region55: #{tpu_custom_call.1} parent=35 // pred_region
          %s4905 = smul.u32 16, %s32
          %4907 = vsyncadd %s4893, 0
          %s4908 = smul.addr %s4905, 2
          %s4909 = smul.addr %s31, 64
          %s4910 = sadd.s32 %s4908, %s4909
          %s4911 = smul.addr %s4910, 8
          %s4912 = scalar_lea.hbm %s4, %s4911
          %s4913 = sshll.u32 %s4896, 4
          %s4914 = int_to_ptr.vmem [resolvable:$true] %s4913
          %s4915 = sshll.u32 %s4912, 4
          %s4916 = int_to_ptr.hbm [resolvable:$true] %s4915
          %4921 = dma.vmem_to_hbm [thread:$0]  %s4914, 4096, %s4916, %s4893, 256, 256, 16
        $region56: #{tpu_custom_call.1} parent=35 // pred_fallthru
          _
        // Predicated region
        $region57: #{tpu_custom_call.1} parent=35 // pred_check
          %p4922 = pneg %p176
        $region58: #{tpu_custom_call.1} parent=35 // pred_check_branch
          %4924 = sbr.rel (%p4922) target = $region60
        $region59: #{tpu_custom_call.1} parent=35 // pred_region
          #allocation14 [shape = 'u32[6]{0}', space=smem, size = 0x18, scoped, tag = 'DMA stride descriptor']
          %s4925 = smul.u32 16, %s32
          %4927 = vsyncadd %s4898, 0
          %s4928 = smul.addr %s4925, 2
          %s4929 = smul.addr %s31, 128
          %s4930 = sadd.s32 %s4928, %s4929
          %s4931 = smul.addr %s4930, 8
          %s4932 = scalar_lea.hbm %s5, %s4931
          %s4934 = sshll.u32 1, 14
          %s4935 = sxor.u32 4294967295, %s4934
          %s4938 = sshll.u32 7, 18
          %s4939 = sxor.u32 4294967295, %s4938
          %s4940 = sand.u32 0, %s4939
          %s4942 = sor.u32 %s4940, 0
          %s4943 = sshll.u32 %s4901, 4
          %s4944 = int_to_ptr.vmem [resolvable:$true] %s4943
          %s4945 = sshll.u32 %s4932, 4
          %s4946 = int_to_ptr.hbm [resolvable:$true] %s4945
          %4952 = sst [smem:[#allocation14]] 4096
          %s4953 = scalar_lea.smem [#allocation14], 1
          %4954 = sst [smem:[%s4953]] 8192
          %s4955 = scalar_lea.smem [#allocation14], 2
          %4956 = sst [smem:[%s4955]] 16
          %s4957 = scalar_lea.smem [#allocation14], 3
          %4958 = sst [smem:[%s4957]] 256
          %s4959 = scalar_lea.smem [#allocation14], 4
          %4960 = sst [smem:[%s4959]] 256
          %s4961 = scalar_lea.smem [#allocation14], 5
          %4962 = sst [smem:[%s4961]] 16
          %4964 = dma.general %s4944, 8192, %s4946, %s4898, [#allocation13], [#allocation14], %s4942, 0
        $region60: #{tpu_custom_call.1} parent=35 // pred_fallthru
          _
      $region36: #{tpu_custom_call.1} parent=5 // pred_fallthru
        _
      %p4965 = scmp.le.s32.totalorder 2, %s22
      // Predicated region
      $region61: #{tpu_custom_call.1} parent=5 // pred_check
        %p4966 = pneg %p4965
      $region62: #{tpu_custom_call.1} parent=5 // pred_check_branch
        %4968 = sbr.rel (%p4966) target = $region64
      $region63: #{tpu_custom_call.1} parent=5 // pred_region
        %s4969 = ssub.s32 %s22, 2
        // Predicated region
        $region65: #{tpu_custom_call.1} parent=63 // pred_check
          %p4970 = pneg %p154
        $region66: #{tpu_custom_call.1} parent=63 // pred_check_branch
          %4972 = sbr.rel (%p4970) target = $region68
        $region67: #{tpu_custom_call.1} parent=63 // pred_region
          %s4973 = sand.u32 %s139, 1
          %s4974 = scalar_lea.sflag [#allocation6], %s4973
          %s4975 = sand.u32 %s139, 1
          %s4976 = smul.addr %s4975, 256
          %s4977 = scalar_lea.vmem [#allocation10], %s4976
          %4979 = dma.done %s4974, 4096
        $region68: #{tpu_custom_call.1} parent=63 // pred_fallthru
          _
        // Predicated region
        $region69: #{tpu_custom_call.1} parent=63 // pred_check
          %p4980 = pneg %p182
        $region70: #{tpu_custom_call.1} parent=63 // pred_check_branch
          %4982 = sbr.rel (%p4980) target = $region72
        $region71: #{tpu_custom_call.1} parent=63 // pred_region
          %s4983 = sand.u32 %s167, 1
          %s4984 = scalar_lea.sflag [#allocation12], %s4983
          %s4985 = sand.u32 %s167, 1
          %s4986 = smul.addr %s4985, 512
          %s4987 = scalar_lea.vmem [#allocation11], %s4986
          %4989 = dma.done %s4984, 8192
        $region72: #{tpu_custom_call.1} parent=63 // pred_fallthru
          _
      $region64: #{tpu_custom_call.1} parent=5 // pred_fallthru
        _
    $region6: #{tpu_custom_call.1} parent=1 // loop_footer
      %s26 = sadd.s32 1, %s22
    $region7: #{tpu_custom_call.1} parent=1 // loop_footer_branch
      %21 = sbr.rel target = $region3
    $region8: #{tpu_custom_call.1} parent=1 // loop_exit
      _
    %4990 = vsyncpa [#allocation5], 1
    %s4991 = scalar_lea.sflag [#allocation5], 1
    %4992 = vsyncpa %s4991, 1
    %4993 = vsyncpa [#allocation8], 1
    %4994 = vsyncpa [#allocation6], 1
    %s4995 = scalar_lea.sflag [#allocation6], 1
    %4996 = vsyncpa %s4995, 1
    %4997 = vsyncpa [#allocation12], 1
    %s4998 = scalar_lea.sflag [#allocation12], 1
    %4999 = vsyncpa %s4998, 1

</llo_original>
